<compile_context>
chip_gen: v6e
topology: v6e:2x2x1
jax: 0.10.0
libtpu: 0.0.40
codegen_flags: <defaults>
</compile_context>

<pallas_src>
import jax
import jax.numpy as jnp
from jax.experimental import pallas as pl
from jax.experimental.pallas import tpu as pltpu

C_IO = 480      # conv2d86 in  / conv2d87 out  (kept at 480: full-dim blocks, no pad)
C_MID = 80      # conv2d86 out / conv2d87 in
C_MID_P = 128   # mid channel dim padded to a full lane width for the contractions
EPS = 1e-5


# ---------------------------------------------------------------------------
# Single fused kernel: everything resident in VMEM for one grid step.
#   y  = x @ W1                       (conv2d86)
#   a1 = g1 * rsqrt(var(y) + eps)     (BN1 scale; additive part cancels in BN2)
#   v  = y*a1 + r                     (BN1 * residual add)
#   z  = v @ W2                       (conv2d87)
#   out= z*a2 + (b2 - mean(z)*a2)     (BN2, train-mode batch stats)
# ---------------------------------------------------------------------------
def _make_fused_kernel(inv_m: float):
    f32 = jnp.float32

    def kernel(x_ref, r_ref, w1_ref, w2_ref, g1_ref, g2_ref, b2_ref, o_ref):
        # ---- conv2d86 (1x1 conv == matmul), bf16 x bf16 -> f32 on the MXU ----
        y = jnp.dot(x_ref[...], w1_ref[...], preferred_element_type=f32)   # (M, 128)

        # ---- BN1 batch statistics (train mode, biased variance) -------------
        mean1 = jnp.sum(y, axis=0, keepdims=True) * inv_m                  # (1, 128)
        var1 = jnp.maximum(
            jnp.sum(y * y, axis=0, keepdims=True) * inv_m - mean1 * mean1, 0.0)
        a1 = g1_ref[...] * jax.lax.rsqrt(var1 + EPS)                       # pad ch -> 0

        # The additive BN1 term (b1 - mean1*a1) is a per-channel constant; after
        # the second 1x1 conv it is again per-channel and is cancelled exactly by
        # BN2's mean subtraction (train mode), so it is never formed.
        v = (y * a1 + r_ref[...]).astype(jnp.bfloat16)                     # (M, 128)

        # ---- conv2d87 (1x1 conv == matmul) -----------------------------------
        z = jnp.dot(v, w2_ref[...], preferred_element_type=f32)            # (M, 480)

        # ---- BN2 batch statistics + fused apply ------------------------------
        mean2 = jnp.sum(z, axis=0, keepdims=True) * inv_m
        var2 = jnp.maximum(
            jnp.sum(z * z, axis=0, keepdims=True) * inv_m - mean2 * mean2, 0.0)
        a2 = g2_ref[...] * jax.lax.rsqrt(var2 + EPS)
        c2 = b2_ref[...] - mean2 * a2
        o_ref[...] = z * a2 + c2

    return kernel


def fused_forward(x259, x247, w1, g1, b1, w2, g2, b2):
    """x259: (N, 480, H, W) NCHW; x247: (N, 80, H, W) NCHW. Returns (N, 480, H, W).

    w1: (480, 80) matmul form of conv2d86 weight; w2: (80, 480) of conv2d87.
    BatchNorm runs in training mode (batch statistics, biased variance).
    `b1` is accepted for interface fidelity but — exactly, because BN2 is also in
    train mode — the additive part of BN1 cancels inside BN2 and does not affect
    the output.  Running BN statistics are not updated (forward activations only).
    """
    del b1
    n, c_in, h, w = x259.shape
    assert c_in == C_IO and x247.shape == (n, C_MID, h, w)
    m = n * h * w
    f32 = jnp.float32

    # Fully fused single-call kernel: the whole working set lives in VMEM
    # (~8-10 KB per spatial position including compiler temporaries), so keep M
    # well inside the 32 MiB scoped VMEM limit on every TPU generation.
    assert m <= 2048, (
        "fused single-call kernel is sized for the module's 1x480x28x28 shape")
    # TODO(synk): for large N*H*W, tile M with a grid and accumulate Y^T Y / Y^T R
    # / R^T R Gram matrices in stage 1 so BN2 stats need no second pass over HBM.

    # ---- layout glue: NCHW -> channels-last (M, C) -------------------------
    # TODO(synk): keep the surrounding model in NHWC to remove these transposes
    # (module I/O is NCHW per the PyTorch spec, so one copy each way remains).
    x_flat = jnp.transpose(x259, (0, 2, 3, 1)).reshape(m, C_IO).astype(jnp.bfloat16)
    r_flat = jnp.transpose(x247, (0, 2, 3, 1)).reshape(m, C_MID).astype(f32)
    r_flat = jnp.pad(r_flat, ((0, 0), (0, C_MID_P - C_MID)))          # (M, 128) f32

    w1p = jnp.pad(w1.astype(f32),
                  ((0, 0), (0, C_MID_P - C_MID))).astype(jnp.bfloat16)  # (480, 128)
    w2p = jnp.pad(w2.astype(f32),
                  ((0, C_MID_P - C_MID), (0, 0))).astype(jnp.bfloat16)  # (128, 480)
    g1p = jnp.pad(g1.astype(f32), (0, C_MID_P - C_MID)).reshape(1, C_MID_P)
    g2r = g2.astype(f32).reshape(1, C_IO)
    b2r = b2.astype(f32).reshape(1, C_IO)

    out_flat = pl.pallas_call(
        _make_fused_kernel(1.0 / float(m)),
        grid=(1,),
        in_specs=[
            pl.BlockSpec((m, C_IO), lambda i: (0, 0)),        # x        (bf16)
            pl.BlockSpec((m, C_MID_P), lambda i: (0, 0)),     # residual (f32)
            pl.BlockSpec((C_IO, C_MID_P), lambda i: (0, 0)),  # W1       (bf16)
            pl.BlockSpec((C_MID_P, C_IO), lambda i: (0, 0)),  # W2       (bf16)
            pl.BlockSpec((1, C_MID_P), lambda i: (0, 0)),     # gamma1
            pl.BlockSpec((1, C_IO), lambda i: (0, 0)),        # gamma2
            pl.BlockSpec((1, C_IO), lambda i: (0, 0)),        # beta2
        ],
        out_specs=pl.BlockSpec((m, C_IO), lambda i: (0, 0)),
        out_shape=jax.ShapeDtypeStruct((m, C_IO), f32),
        compiler_params=pltpu.CompilerParams(
            dimension_semantics=("arbitrary",),
            vmem_limit_bytes=32 * 1024 * 1024,
        ),
    )(x_flat, r_flat, w1p, w2p, g1p, g2r, b2r)

    # (M, 480) -> NHWC -> NCHW (module I/O is NCHW).
    out = out_flat.reshape(n, h, w, C_IO)
    return jnp.transpose(out, (0, 3, 1, 2))


# ---------------------------------------------------------------------------
# Plain-JAX reference of the literal module forward (train-mode BN), with the
# same bf16 rounding applied at the matmul inputs so the comparison isolates
# kernel logic rather than precision policy.
# ---------------------------------------------------------------------------
def reference_forward(x259, x247, w1, g1, b1, w2, g2, b2):
    n, _, h, w = x259.shape
    m = n * h * w
    bf = lambda t: t.astype(jnp.bfloat16).astype(jnp.float32)
    x = bf(jnp.transpose(x259, (0, 2, 3, 1)).reshape(m, C_IO))
    r = jnp.transpose(x247, (0, 2, 3, 1)).reshape(m, C_MID).astype(jnp.float32)
    y = x @ bf(w1)
    mu1 = jnp.mean(y, axis=0)
    v1 = jnp.mean((y - mu1) ** 2, axis=0)
    y = (y - mu1) * jax.lax.rsqrt(v1 + EPS) * g1 + b1
    v = bf(y + r)
    z = v @ bf(w2)
    mu2 = jnp.mean(z, axis=0)
    v2 = jnp.mean((z - mu2) ** 2, axis=0)
    z = (z - mu2) * jax.lax.rsqrt(v2 + EPS) * g2 + b2
    return jnp.transpose(z.reshape(n, h, w, C_IO), (0, 3, 1, 2))


if __name__ == "__main__":
    key = jax.random.PRNGKey(0)
    k1, k2, k3, k4, k5, k6, k7, k8 = jax.random.split(key, 8)

    # Shapes from the module spec: x259 (1, 480, 28, 28), x247 (1, 80, 28, 28).
    N, H, W = 1, 28, 28
    x259 = jax.random.normal(k1, (N, C_IO, H, W), dtype=jnp.float32)   # conv2d86 input
    x247 = jax.random.normal(k2, (N, C_MID, H, W), dtype=jnp.float32)  # residual

    # conv2d86: torch weight (80, 480, 1, 1) -> matmul form (Cin=480, Cout=80)
    w1 = (jax.random.normal(k3, (C_IO, C_MID), dtype=jnp.float32)
          * (1.0 / jnp.sqrt(jnp.float32(C_IO))))
    # conv2d87: torch weight (480, 80, 1, 1) -> matmul form (Cin=80, Cout=480)
    w2 = (jax.random.normal(k4, (C_MID, C_IO), dtype=jnp.float32)
          * (1.0 / jnp.sqrt(jnp.float32(C_MID))))
    # batchnorm affine params (deterministic, non-trivial)
    g1 = 1.0 + 0.1 * jax.random.normal(k5, (C_MID,), dtype=jnp.float32)
    b1 = 0.1 * jax.random.normal(k6, (C_MID,), dtype=jnp.float32)
    g2 = 1.0 + 0.1 * jax.random.normal(k7, (C_IO,), dtype=jnp.float32)
    b2 = 0.1 * jax.random.normal(k8, (C_IO,), dtype=jnp.float32)

    out = fused_forward(x259, x247, w1, g1, b1, w2, g2, b2)
    out = jax.block_until_ready(out)
    assert out.shape == (N, C_IO, H, W)

    ref = jax.block_until_ready(reference_forward(x259, x247, w1, g1, b1, w2, g2, b2))
    max_err = float(jnp.max(jnp.abs(out - ref)))
    assert max_err < 5e-2, f"max abs error vs reference: {max_err}"

    print("KERNEL_OK")
</pallas_src>

<mosaic_0001>
module attributes {stable_mosaic.version = 11 : i64} {
  func.func @kernel(%arg0: i32, %arg1: memref<784x480xbf16, #tpu.memory_space<vmem>>, %arg2: memref<784x128xf32, #tpu.memory_space<vmem>>, %arg3: memref<480x128xbf16, #tpu.memory_space<vmem>>, %arg4: memref<128x480xbf16, #tpu.memory_space<vmem>>, %arg5: memref<1x128xf32, #tpu.memory_space<vmem>>, %arg6: memref<1x480xf32, #tpu.memory_space<vmem>>, %arg7: memref<1x480xf32, #tpu.memory_space<vmem>>, %arg8: memref<784x480xf32, #tpu.memory_space<vmem>>) attributes {dimension_semantics = [#tpu.dimension_semantics<arbitrary>], iteration_bounds = array<i64: 1>, scalar_prefetch = 0 : i64, scratch_operands = 0 : i64, tpu.core_type = #tpu.core_type<tc>, window_params = [{pipeline_mode = #tpu.pipeline_mode<synchronous>, transform_indices = @transform_0, window_bounds = array<i64: 784, 480>}, {pipeline_mode = #tpu.pipeline_mode<synchronous>, transform_indices = @transform_1, window_bounds = array<i64: 784, 128>}, {pipeline_mode = #tpu.pipeline_mode<synchronous>, transform_indices = @transform_2, window_bounds = array<i64: 480, 128>}, {pipeline_mode = #tpu.pipeline_mode<synchronous>, transform_indices = @transform_3, window_bounds = array<i64: 128, 480>}, {pipeline_mode = #tpu.pipeline_mode<synchronous>, transform_indices = @transform_4, window_bounds = array<i64: 1, 128>}, {pipeline_mode = #tpu.pipeline_mode<synchronous>, transform_indices = @transform_5, window_bounds = array<i64: 1, 480>}, {pipeline_mode = #tpu.pipeline_mode<synchronous>, transform_indices = @transform_6, window_bounds = array<i64: 1, 480>}, {pipeline_mode = #tpu.pipeline_mode<synchronous>, transform_indices = @transform_7, window_bounds = array<i64: 784, 480>}]} {
    %c0 = arith.constant 0 : index
    %c0_0 = arith.constant 0 : index
    %0 = vector.load %arg1[%c0, %c0_0] : memref<784x480xbf16, #tpu.memory_space<vmem>>, vector<784x480xbf16>
    %c0_1 = arith.constant 0 : index
    %c0_2 = arith.constant 0 : index
    %1 = vector.load %arg3[%c0_1, %c0_2] : memref<480x128xbf16, #tpu.memory_space<vmem>>, vector<480x128xbf16>
    %cst = arith.constant dense<0.000000e+00> : vector<784x128xf32>
    %2 = tpu.matmul %0, %1, %cst {dimension_numbers = #tpu.dot_dimension_numbers<[1], [0], [0], [1], [0, 0, 1, 1], [], []>} : vector<784x480xbf16>, vector<480x128xbf16>, vector<784x128xf32> -> vector<784x128xf32>
    %cst_3 = arith.constant dense<0.000000e+00> : vector<128xf32>
    %3 = vector.multi_reduction <add>, %2, %cst_3 [0] : vector<784x128xf32> to vector<128xf32>
    %4 = vector.shape_cast %3 : vector<128xf32> to vector<1x128xf32>
    %cst_4 = arith.constant 0.00127551018 : f32
    %5 = vector.broadcast %cst_4 : f32 to vector<1x128xf32>
    %6 = arith.mulf %4, %5 : vector<1x128xf32>
    %7 = arith.mulf %2, %2 : vector<784x128xf32>
    %cst_5 = arith.constant dense<0.000000e+00> : vector<128xf32>
    %8 = vector.multi_reduction <add>, %7, %cst_5 [0] : vector<784x128xf32> to vector<128xf32>
    %9 = vector.shape_cast %8 : vector<128xf32> to vector<1x128xf32>
    %cst_6 = arith.constant 0.00127551018 : f32
    %10 = vector.broadcast %cst_6 : f32 to vector<1x128xf32>
    %11 = arith.mulf %9, %10 : vector<1x128xf32>
    %12 = arith.mulf %6, %6 : vector<1x128xf32>
    %13 = arith.subf %11, %12 : vector<1x128xf32>
    %cst_7 = arith.constant 0.000000e+00 : f32
    %14 = vector.broadcast %cst_7 : f32 to vector<1x128xf32>
    %15 = arith.maximumf %13, %14 : vector<1x128xf32>
    %c0_8 = arith.constant 0 : index
    %c0_9 = arith.constant 0 : index
    %16 = vector.load %arg5[%c0_8, %c0_9] : memref<1x128xf32, #tpu.memory_space<vmem>>, vector<1x128xf32>
    %cst_10 = arith.constant 9.99999974E-6 : f32
    %17 = vector.broadcast %cst_10 : f32 to vector<1x128xf32>
    %18 = arith.addf %15, %17 : vector<1x128xf32>
    %19 = math.rsqrt %18 : vector<1x128xf32>
    %20 = arith.mulf %16, %19 : vector<1x128xf32>
    %21 = vector.broadcast %20 : vector<1x128xf32> to vector<784x128xf32>
    %22 = arith.mulf %2, %21 : vector<784x128xf32>
    %c0_11 = arith.constant 0 : index
    %c0_12 = arith.constant 0 : index
    %23 = vector.load %arg2[%c0_11, %c0_12] : memref<784x128xf32, #tpu.memory_space<vmem>>, vector<784x128xf32>
    %24 = arith.addf %22, %23 : vector<784x128xf32>
    %25 = arith.truncf %24 : vector<784x128xf32> to vector<784x128xbf16>
    %c0_13 = arith.constant 0 : index
    %c0_14 = arith.constant 0 : index
    %26 = vector.load %arg4[%c0_13, %c0_14] : memref<128x480xbf16, #tpu.memory_space<vmem>>, vector<128x480xbf16>
    %cst_15 = arith.constant dense<0.000000e+00> : vector<784x480xf32>
    %27 = tpu.matmul %25, %26, %cst_15 {dimension_numbers = #tpu.dot_dimension_numbers<[1], [0], [0], [1], [0, 0, 1, 1], [], []>} : vector<784x128xbf16>, vector<128x480xbf16>, vector<784x480xf32> -> vector<784x480xf32>
    %cst_16 = arith.constant dense<0.000000e+00> : vector<480xf32>
    %28 = vector.multi_reduction <add>, %27, %cst_16 [0] : vector<784x480xf32> to vector<480xf32>
    %29 = vector.shape_cast %28 : vector<480xf32> to vector<1x480xf32>
    %cst_17 = arith.constant 0.00127551018 : f32
    %30 = vector.broadcast %cst_17 : f32 to vector<1x480xf32>
    %31 = arith.mulf %29, %30 : vector<1x480xf32>
    %32 = arith.mulf %27, %27 : vector<784x480xf32>
    %cst_18 = arith.constant dense<0.000000e+00> : vector<480xf32>
    %33 = vector.multi_reduction <add>, %32, %cst_18 [0] : vector<784x480xf32> to vector<480xf32>
    %34 = vector.shape_cast %33 : vector<480xf32> to vector<1x480xf32>
    %cst_19 = arith.constant 0.00127551018 : f32
    %35 = vector.broadcast %cst_19 : f32 to vector<1x480xf32>
    %36 = arith.mulf %34, %35 : vector<1x480xf32>
    %37 = arith.mulf %31, %31 : vector<1x480xf32>
    %38 = arith.subf %36, %37 : vector<1x480xf32>
    %cst_20 = arith.constant 0.000000e+00 : f32
    %39 = vector.broadcast %cst_20 : f32 to vector<1x480xf32>
    %40 = arith.maximumf %38, %39 : vector<1x480xf32>
    %c0_21 = arith.constant 0 : index
    %c0_22 = arith.constant 0 : index
    %41 = vector.load %arg6[%c0_21, %c0_22] : memref<1x480xf32, #tpu.memory_space<vmem>>, vector<1x480xf32>
    %cst_23 = arith.constant 9.99999974E-6 : f32
    %42 = vector.broadcast %cst_23 : f32 to vector<1x480xf32>
    %43 = arith.addf %40, %42 : vector<1x480xf32>
    %44 = math.rsqrt %43 : vector<1x480xf32>
    %45 = arith.mulf %41, %44 : vector<1x480xf32>
    %c0_24 = arith.constant 0 : index
    %c0_25 = arith.constant 0 : index
    %46 = vector.load %arg7[%c0_24, %c0_25] : memref<1x480xf32, #tpu.memory_space<vmem>>, vector<1x480xf32>
    %47 = arith.mulf %31, %45 : vector<1x480xf32>
    %48 = arith.subf %46, %47 : vector<1x480xf32>
    %49 = vector.broadcast %45 : vector<1x480xf32> to vector<784x480xf32>
    %50 = arith.mulf %27, %49 : vector<784x480xf32>
    %51 = vector.broadcast %48 : vector<1x480xf32> to vector<784x480xf32>
    %52 = arith.addf %50, %51 : vector<784x480xf32>
    %c0_26 = arith.constant 0 : index
    %c0_27 = arith.constant 0 : index
    %53 = vector.load %arg8[%c0_26, %c0_27] : memref<784x480xf32, #tpu.memory_space<vmem>>, vector<784x480xf32>
    tpu.vector_store %arg8[%c0_26, %c0_27], %52 {strides = array<i32>} : memref<784x480xf32, #tpu.memory_space<vmem>>, vector<784x480xf32>,
    return
  }
  func.func @transform_0(%arg0: i32) -> (i32, i32) {
    %c0_i32 = arith.constant 0 : i32
    %c0_i32_0 = arith.constant 0 : i32
    %c0_i32_1 = arith.constant 0 : i32
    return %c0_i32, %c0_i32_0 : i32, i32
  }
  func.func @transform_1(%arg0: i32) -> (i32, i32) {
    %c0_i32 = arith.constant 0 : i32
    %c0_i32_0 = arith.constant 0 : i32
    %c0_i32_1 = arith.constant 0 : i32
    return %c0_i32, %c0_i32_0 : i32, i32
  }
  func.func @transform_2(%arg0: i32) -> (i32, i32) {
    %c0_i32 = arith.constant 0 : i32
    %c0_i32_0 = arith.constant 0 : i32
    %c0_i32_1 = arith.constant 0 : i32
    return %c0_i32, %c0_i32_0 : i32, i32
  }
  func.func @transform_3(%arg0: i32) -> (i32, i32) {
    %c0_i32 = arith.constant 0 : i32
    %c0_i32_0 = arith.constant 0 : i32
    %c0_i32_1 = arith.constant 0 : i32
    return %c0_i32, %c0_i32_0 : i32, i32
  }
  func.func @transform_4(%arg0: i32) -> (i32, i32) {
    %c0_i32 = arith.constant 0 : i32
    %c0_i32_0 = arith.constant 0 : i32
    %c0_i32_1 = arith.constant 0 : i32
    return %c0_i32, %c0_i32_0 : i32, i32
  }
  func.func @transform_5(%arg0: i32) -> (i32, i32) {
    %c0_i32 = arith.constant 0 : i32
    %c0_i32_0 = arith.constant 0 : i32
    %c0_i32_1 = arith.constant 0 : i32
    return %c0_i32, %c0_i32_0 : i32, i32
  }
  func.func @transform_6(%arg0: i32) -> (i32, i32) {
    %c0_i32 = arith.constant 0 : i32
    %c0_i32_0 = arith.constant 0 : i32
    %c0_i32_1 = arith.constant 0 : i32
    return %c0_i32, %c0_i32_0 : i32, i32
  }
  func.func @transform_7(%arg0: i32) -> (i32, i32) {
    %c0_i32 = arith.constant 0 : i32
    %c0_i32_0 = arith.constant 0 : i32
    %c0_i32_1 = arith.constant 0 : i32
    return %c0_i32, %c0_i32_0 : i32, i32
  }
}

</mosaic_0001>

<llo_original>
// kernel: tpu_custom_call.1
$region0: #{tpu_custom_call.1}
  #allocation0 [shape = 'u32[]', space=smem, size = 0x4, offset = 0x4, fixed_abs, tag = 'smem constant byte address 0x4 - core index']
  #allocation1 [shape = 'u32[144,128]{1,0:T(1,128)}', space=vmem, size = 0x12000, scoped, tag = 'internal scratch']
  %s0 = inlined_call_operand.hbm [shape: bf16[784,480], index: 0, kind: input, shape index: {}]
  %s1 = inlined_call_operand.hbm [shape: f32[784,128], index: 1, kind: input, shape index: {}]
  %s2 = inlined_call_operand.hbm [shape: bf16[480,128], index: 2, kind: input, shape index: {}]
  %s3 = inlined_call_operand.vmem [shape: bf16[128,480], index: 3, kind: input, shape index: {}]
  %s4 = inlined_call_operand.hbm [shape: f32[1,128], index: 4, kind: input, shape index: {}]
  %s5 = inlined_call_operand.hbm [shape: f32[1,480], index: 5, kind: input, shape index: {}]
  %s6 = inlined_call_operand.hbm [shape: f32[1,480], index: 6, kind: input, shape index: {}]
  %s7 = inlined_call_operand.hbm [shape: f32[784,480], index: 7, kind: output, shape index: {}]
  %s8 = sld [smem:[#allocation0]]
  $region62: #{tpu_custom_call.1} parent=0
    _
  %s10 = ssub.s32 1, %s8
  %s11 = scalar_select 0, %s10, %s8
  $region1: #{tpu_custom_call.1} parent=0
    #allocation2 [shape = 'u8[802816]{0}', space=vmem, size = 0xc4000, scoped, tag = 'input window, operand 0, single buffered']
    #allocation3 [shape = 's32[1]{0}', space=sflag, size = 0x4, scoped, tag = 'scoped memory for tpu_custom_call.1']
    #allocation4 [shape = 's32[1]{0}', space=sflag, size = 0x4, scoped, tag = 'scoped memory for tpu_custom_call.1']
    #allocation5 [shape = 'u8[401408]{0}', space=vmem, size = 0x62000, scoped, tag = 'input window, operand 1, single buffered']
    #allocation6 [shape = 's32[1]{0}', space=sflag, size = 0x4, scoped, tag = 'scoped memory for tpu_custom_call.1']
    #allocation7 [shape = 'u8[122880]{0}', space=vmem, size = 0x1e000, scoped, tag = 'input window, operand 2, single buffered']
    #allocation8 [shape = 'u8[512]{0}', space=vmem, size = 0x400, scoped, tag = 'input window, operand 4, single buffered']
    #allocation9 [shape = 's32[1]{0}', space=sflag, size = 0x4, scoped, tag = 'scoped memory for tpu_custom_call.1']
    #allocation10 [shape = 'u8[2048]{0}', space=vmem, size = 0x800, scoped, tag = 'input window, operand 5, single buffered']
    #allocation11 [shape = 'u8[2048]{0}', space=vmem, size = 0x800, scoped, tag = 'input window, operand 6, single buffered']
    #allocation12 [shape = 's32[1]{0}', space=sflag, size = 0x4, scoped, tag = 'scoped memory for tpu_custom_call.1']
    #allocation13 [shape = 'u8[1605632]{0}', space=vmem, size = 0x188000, scoped, tag = 'output window, operand 0, single buffered']
    %12 = vsyncpa [#allocation3], 0
    %13 = vsyncpa [#allocation6], 0
    %14 = vsyncpa [#allocation9], 0
    %15 = vsyncpa [#allocation12], 0
    %16 = vsyncpa [#allocation4], 0
    // Predicated region
    $region2: #{tpu_custom_call.1} parent=1 // pred_check
      _
    $region3: #{tpu_custom_call.1} parent=1 // pred_check_branch
      %18 = sbr.rel (0) target = $region5
    $region4: #{tpu_custom_call.1} parent=1 // pred_region
      %s20 = ssub.s32 25088, 25088
      %21 = vsyncadd [#allocation3], %s20
      %s22 = sshll.u32 [#allocation2], 4
      %s23 = int_to_ptr.vmem [resolvable:$true] %s22
      %28 = dma.hbm_to_vmem [thread:$0]  %s0, 25088, %s23, [#allocation3], 256, 256, 16
    $region5: #{tpu_custom_call.1} parent=1 // pred_fallthru
      _
    // Predicated region
    $region6: #{tpu_custom_call.1} parent=1 // pred_check
      _
    $region7: #{tpu_custom_call.1} parent=1 // pred_check_branch
      %30 = sbr.rel (0) target = $region9
    $region8: #{tpu_custom_call.1} parent=1 // pred_region
      %s32 = ssub.s32 12544, 12544
      %33 = vsyncadd [#allocation6], %s32
      %s34 = sshll.u32 [#allocation5], 4
      %s35 = int_to_ptr.vmem [resolvable:$true] %s34
      %40 = dma.hbm_to_vmem [thread:$0]  %s1, 12544, %s35, [#allocation6], 128, 128, 8
    $region9: #{tpu_custom_call.1} parent=1 // pred_fallthru
      _
    // Predicated region
    $region10: #{tpu_custom_call.1} parent=1 // pred_check
      _
    $region11: #{tpu_custom_call.1} parent=1 // pred_check_branch
      %42 = sbr.rel (0) target = $region13
    $region12: #{tpu_custom_call.1} parent=1 // pred_region
      %s44 = ssub.s32 3840, 3840
      %45 = vsyncadd [#allocation6], %s44
      %s46 = sshll.u32 [#allocation7], 4
      %s47 = int_to_ptr.vmem [resolvable:$true] %s46
      %52 = dma.hbm_to_vmem [thread:$0]  %s2, 3840, %s47, [#allocation6], 64, 64, 4
    $region13: #{tpu_custom_call.1} parent=1 // pred_fallthru
      _
    // Predicated region
    $region14: #{tpu_custom_call.1} parent=1 // pred_check
      _
    $region15: #{tpu_custom_call.1} parent=1 // pred_check_branch
      %54 = sbr.rel (0) target = $region17
    $region16: #{tpu_custom_call.1} parent=1 // pred_region
      _
    $region17: #{tpu_custom_call.1} parent=1 // pred_fallthru
      _
    // Predicated region
    $region18: #{tpu_custom_call.1} parent=1 // pred_check
      _
    $region19: #{tpu_custom_call.1} parent=1 // pred_check_branch
      %56 = sbr.rel (0) target = $region21
    $region20: #{tpu_custom_call.1} parent=1 // pred_region
      %s58 = ssub.s32 16, 16
      %59 = vsyncadd [#allocation9], %s58
      %s61 = sshll.u32 [#allocation8], 4
      %s62 = int_to_ptr.vmem [resolvable:$true] %s61
      %64 = dma.hbm_to_vmem [thread:$0]  %s4, 16, %s62, [#allocation9]
    $region21: #{tpu_custom_call.1} parent=1 // pred_fallthru
      _
    // Predicated region
    $region22: #{tpu_custom_call.1} parent=1 // pred_check
      _
    $region23: #{tpu_custom_call.1} parent=1 // pred_check_branch
      %66 = sbr.rel (0) target = $region25
    $region24: #{tpu_custom_call.1} parent=1 // pred_region
      %s68 = ssub.s32 64, 64
      %69 = vsyncadd [#allocation9], %s68
      %s71 = sshll.u32 [#allocation10], 4
      %s72 = int_to_ptr.vmem [resolvable:$true] %s71
      %74 = dma.hbm_to_vmem [thread:$0]  %s5, 64, %s72, [#allocation9]
    $region25: #{tpu_custom_call.1} parent=1 // pred_fallthru
      _
    // Predicated region
    $region26: #{tpu_custom_call.1} parent=1 // pred_check
      _
    $region27: #{tpu_custom_call.1} parent=1 // pred_check_branch
      %76 = sbr.rel (0) target = $region29
    $region28: #{tpu_custom_call.1} parent=1 // pred_region
      %s78 = ssub.s32 64, 64
      %79 = vsyncadd [#allocation12], %s78
      %s81 = sshll.u32 [#allocation11], 4
      %s82 = int_to_ptr.vmem [resolvable:$true] %s81
      %84 = dma.hbm_to_vmem [thread:$0]  %s6, 64, %s82, [#allocation12]
    $region29: #{tpu_custom_call.1} parent=1 // pred_fallthru
      _
    // Predicated region
    $region30: #{tpu_custom_call.1} parent=1 // pred_check
      _
    $region31: #{tpu_custom_call.1} parent=1 // pred_check_branch
      %86 = sbr.rel (0) target = $region33
    $region32: #{tpu_custom_call.1} parent=1 // pred_region
      %87 = dma.done [#allocation3], 25088
    $region33: #{tpu_custom_call.1} parent=1 // pred_fallthru
      _
    // Predicated region
    $region34: #{tpu_custom_call.1} parent=1 // pred_check
      _
    $region35: #{tpu_custom_call.1} parent=1 // pred_check_branch
      %89 = sbr.rel (0) target = $region37
    $region36: #{tpu_custom_call.1} parent=1 // pred_region
      %90 = dma.done [#allocation6], 12544
    $region37: #{tpu_custom_call.1} parent=1 // pred_fallthru
      _
    // Predicated region
    $region38: #{tpu_custom_call.1} parent=1 // pred_check
      _
    $region39: #{tpu_custom_call.1} parent=1 // pred_check_branch
      %92 = sbr.rel (0) target = $region41
    $region40: #{tpu_custom_call.1} parent=1 // pred_region
      %93 = dma.done [#allocation6], 3840
    $region41: #{tpu_custom_call.1} parent=1 // pred_fallthru
      _
    // Predicated region
    $region42: #{tpu_custom_call.1} parent=1 // pred_check
      _
    $region43: #{tpu_custom_call.1} parent=1 // pred_check_branch
      %95 = sbr.rel (0) target = $region45
    $region44: #{tpu_custom_call.1} parent=1 // pred_region
      %96 = dma.done [#allocation9], 16
    $region45: #{tpu_custom_call.1} parent=1 // pred_fallthru
      _
    // Predicated region
    $region46: #{tpu_custom_call.1} parent=1 // pred_check
      _
    $region47: #{tpu_custom_call.1} parent=1 // pred_check_branch
      %98 = sbr.rel (0) target = $region49
    $region48: #{tpu_custom_call.1} parent=1 // pred_region
      %99 = dma.done [#allocation9], 64
    $region49: #{tpu_custom_call.1} parent=1 // pred_fallthru
      _
    // Predicated region
    $region50: #{tpu_custom_call.1} parent=1 // pred_check
      _
    $region51: #{tpu_custom_call.1} parent=1 // pred_check_branch
      %101 = sbr.rel (0) target = $region53
    $region52: #{tpu_custom_call.1} parent=1 // pred_region
      %102 = dma.done [#allocation12], 64
    $region53: #{tpu_custom_call.1} parent=1 // pred_fallthru
      _
    %v104 = vld [vmem:[#allocation2] sm:$0xff]
    %v105 = vld [vmem:[#allocation2 + $0x8] sm:$0xff]
    %v106 = vld [vmem:[#allocation2 + $0x10] sm:$0xff]
    %v107 = vld [vmem:[#allocation2 + $0x18] sm:$0xff]
    %v108 = vld [vmem:[#allocation2 + $0x20] sm:$0xff]
    %v109 = vld [vmem:[#allocation2 + $0x28] sm:$0xff]
    %v110 = vld [vmem:[#allocation2 + $0x30] sm:$0xff]
    %v111 = vld [vmem:[#allocation2 + $0x38] sm:$0xff]
    %v112 = vld [vmem:[#allocation2 + $0x40] sm:$0xff]
    %v113 = vld [vmem:[#allocation2 + $0x48] sm:$0xff]
    %v114 = vld [vmem:[#allocation2 + $0x50] sm:$0xff]
    %v115 = vld [vmem:[#allocation2 + $0x58] sm:$0xff]
    %v116 = vld [vmem:[#allocation2 + $0x60] sm:$0xff]
    %v117 = vld [vmem:[#allocation2 + $0x68] sm:$0xff]
    %v118 = vld [vmem:[#allocation2 + $0x70] sm:$0xff]
    %v119 = vld [vmem:[#allocation2 + $0x78] sm:$0xff]
    %v120 = vld [vmem:[#allocation2 + $0x80] sm:$0xff]
    %v121 = vld [vmem:[#allocation2 + $0x88] sm:$0xff]
    %v122 = vld [vmem:[#allocation2 + $0x90] sm:$0xff]
    %v123 = vld [vmem:[#allocation2 + $0x98] sm:$0xff]
    %v124 = vld [vmem:[#allocation2 + $0xa0] sm:$0xff]
    %v125 = vld [vmem:[#allocation2 + $0xa8] sm:$0xff]
    %v126 = vld [vmem:[#allocation2 + $0xb0] sm:$0xff]
    %v127 = vld [vmem:[#allocation2 + $0xb8] sm:$0xff]
    %v128 = vld [vmem:[#allocation2 + $0xc0] sm:$0xff]
    %v129 = vld [vmem:[#allocation2 + $0xc8] sm:$0xff]
    %v130 = vld [vmem:[#allocation2 + $0xd0] sm:$0xff]
    %v131 = vld [vmem:[#allocation2 + $0xd8] sm:$0xff]
    %v132 = vld [vmem:[#allocation2 + $0xe0] sm:$0xff]
    %v133 = vld [vmem:[#allocation2 + $0xe8] sm:$0xff]
    %v134 = vld [vmem:[#allocation2 + $0xf0] sm:$0xff]
    %v135 = vld [vmem:[#allocation2 + $0xf8] sm:$0xff]
    %v136 = vld [vmem:[#allocation2 + $0x100] sm:$0xff]
    %v137 = vld [vmem:[#allocation2 + $0x108] sm:$0xff]
    %v138 = vld [vmem:[#allocation2 + $0x110] sm:$0xff]
    %v139 = vld [vmem:[#allocation2 + $0x118] sm:$0xff]
    %v140 = vld [vmem:[#allocation2 + $0x120] sm:$0xff]
    %v141 = vld [vmem:[#allocation2 + $0x128] sm:$0xff]
    %v142 = vld [vmem:[#allocation2 + $0x130] sm:$0xff]
    %v143 = vld [vmem:[#allocation2 + $0x138] sm:$0xff]
    %v144 = vld [vmem:[#allocation2 + $0x140] sm:$0xff]
    %v145 = vld [vmem:[#allocation2 + $0x148] sm:$0xff]
    %v146 = vld [vmem:[#allocation2 + $0x150] sm:$0xff]
    %v147 = vld [vmem:[#allocation2 + $0x158] sm:$0xff]
    %v148 = vld [vmem:[#allocation2 + $0x160] sm:$0xff]
    %v149 = vld [vmem:[#allocation2 + $0x168] sm:$0xff]
    %v150 = vld [vmem:[#allocation2 + $0x170] sm:$0xff]
    %v151 = vld [vmem:[#allocation2 + $0x178] sm:$0xff]
    %v152 = vld [vmem:[#allocation2 + $0x180] sm:$0xff]
    %v153 = vld [vmem:[#allocation2 + $0x188] sm:$0xff]
    %v154 = vld [vmem:[#allocation2 + $0x190] sm:$0xff]
    %v155 = vld [vmem:[#allocation2 + $0x198] sm:$0xff]
    %v156 = vld [vmem:[#allocation2 + $0x1a0] sm:$0xff]
    %v157 = vld [vmem:[#allocation2 + $0x1a8] sm:$0xff]
    %v158 = vld [vmem:[#allocation2 + $0x1b0] sm:$0xff]
    %v159 = vld [vmem:[#allocation2 + $0x1b8] sm:$0xff]
    %v160 = vld [vmem:[#allocation2 + $0x1c0] sm:$0xff]
    %v161 = vld [vmem:[#allocation2 + $0x1c8] sm:$0xff]
    %v162 = vld [vmem:[#allocation2 + $0x1d0] sm:$0xff]
    %v163 = vld [vmem:[#allocation2 + $0x1d8] sm:$0xff]
    %v164 = vld [vmem:[#allocation2 + $0x1e0] sm:$0xff]
    %v165 = vld [vmem:[#allocation2 + $0x1e8] sm:$0xff]
    %v166 = vld [vmem:[#allocation2 + $0x1f0] sm:$0xff]
    %v167 = vld [vmem:[#allocation2 + $0x1f8] sm:$0xff]
    %v168 = vld [vmem:[#allocation2 + $0x200] sm:$0xff]
    %v169 = vld [vmem:[#allocation2 + $0x208] sm:$0xff]
    %v170 = vld [vmem:[#allocation2 + $0x210] sm:$0xff]
    %v171 = vld [vmem:[#allocation2 + $0x218] sm:$0xff]
    %v172 = vld [vmem:[#allocation2 + $0x220] sm:$0xff]
    %v173 = vld [vmem:[#allocation2 + $0x228] sm:$0xff]
    %v174 = vld [vmem:[#allocation2 + $0x230] sm:$0xff]
    %v175 = vld [vmem:[#allocation2 + $0x238] sm:$0xff]
    %v176 = vld [vmem:[#allocation2 + $0x240] sm:$0xff]
    %v177 = vld [vmem:[#allocation2 + $0x248] sm:$0xff]
    %v178 = vld [vmem:[#allocation2 + $0x250] sm:$0xff]
    %v179 = vld [vmem:[#allocation2 + $0x258] sm:$0xff]
    %v180 = vld [vmem:[#allocation2 + $0x260] sm:$0xff]
    %v181 = vld [vmem:[#allocation2 + $0x268] sm:$0xff]
    %v182 = vld [vmem:[#allocation2 + $0x270] sm:$0xff]
    %v183 = vld [vmem:[#allocation2 + $0x278] sm:$0xff]
    %v184 = vld [vmem:[#allocation2 + $0x280] sm:$0xff]
    %v185 = vld [vmem:[#allocation2 + $0x288] sm:$0xff]
    %v186 = vld [vmem:[#allocation2 + $0x290] sm:$0xff]
    %v187 = vld [vmem:[#allocation2 + $0x298] sm:$0xff]
    %v188 = vld [vmem:[#allocation2 + $0x2a0] sm:$0xff]
    %v189 = vld [vmem:[#allocation2 + $0x2a8] sm:$0xff]
    %v190 = vld [vmem:[#allocation2 + $0x2b0] sm:$0xff]
    %v191 = vld [vmem:[#allocation2 + $0x2b8] sm:$0xff]
    %v192 = vld [vmem:[#allocation2 + $0x2c0] sm:$0xff]
    %v193 = vld [vmem:[#allocation2 + $0x2c8] sm:$0xff]
    %v194 = vld [vmem:[#allocation2 + $0x2d0] sm:$0xff]
    %v195 = vld [vmem:[#allocation2 + $0x2d8] sm:$0xff]
    %v196 = vld [vmem:[#allocation2 + $0x2e0] sm:$0xff]
    %v197 = vld [vmem:[#allocation2 + $0x2e8] sm:$0xff]
    %v198 = vld [vmem:[#allocation2 + $0x2f0] sm:$0xff]
    %v199 = vld [vmem:[#allocation2 + $0x2f8] sm:$0xff]
    %v200 = vld [vmem:[#allocation2 + $0x300] sm:$0xff]
    %v201 = vld [vmem:[#allocation2 + $0x308] sm:$0xff]
    %v202 = vld [vmem:[#allocation2 + $0x310] sm:$0xff]
    %v203 = vld [vmem:[#allocation2 + $0x318] sm:$0xff]
    %v204 = vld [vmem:[#allocation2 + $0x320] sm:$0xff]
    %v205 = vld [vmem:[#allocation2 + $0x328] sm:$0xff]
    %v206 = vld [vmem:[#allocation2 + $0x330] sm:$0xff]
    %v207 = vld [vmem:[#allocation2 + $0x338] sm:$0xff]
    %v208 = vld [vmem:[#allocation2 + $0x340] sm:$0xff]
    %v209 = vld [vmem:[#allocation2 + $0x348] sm:$0xff]
    %v210 = vld [vmem:[#allocation2 + $0x350] sm:$0xff]
    %v211 = vld [vmem:[#allocation2 + $0x358] sm:$0xff]
    %v212 = vld [vmem:[#allocation2 + $0x360] sm:$0xff]
    %v213 = vld [vmem:[#allocation2 + $0x368] sm:$0xff]
    %v214 = vld [vmem:[#allocation2 + $0x370] sm:$0xff]
    %v215 = vld [vmem:[#allocation2 + $0x378] sm:$0xff]
    %v216 = vld [vmem:[#allocation2 + $0x380] sm:$0xff]
    %v217 = vld [vmem:[#allocation2 + $0x388] sm:$0xff]
    %v218 = vld [vmem:[#allocation2 + $0x390] sm:$0xff]
    %v219 = vld [vmem:[#allocation2 + $0x398] sm:$0xff]
    %v220 = vld [vmem:[#allocation2 + $0x3a0] sm:$0xff]
    %v221 = vld [vmem:[#allocation2 + $0x3a8] sm:$0xff]
    %v222 = vld [vmem:[#allocation2 + $0x3b0] sm:$0xff]
    %v223 = vld [vmem:[#allocation2 + $0x3b8] sm:$0xff]
    %v224 = vld [vmem:[#allocation2 + $0x3c0] sm:$0xff]
    %v225 = vld [vmem:[#allocation2 + $0x3c8] sm:$0xff]
    %v226 = vld [vmem:[#allocation2 + $0x3d0] sm:$0xff]
    %v227 = vld [vmem:[#allocation2 + $0x3d8] sm:$0xff]
    %v228 = vld [vmem:[#allocation2 + $0x3e0] sm:$0xff]
    %v229 = vld [vmem:[#allocation2 + $0x3e8] sm:$0xff]
    %v230 = vld [vmem:[#allocation2 + $0x3f0] sm:$0xff]
    %v231 = vld [vmem:[#allocation2 + $0x3f8] sm:$0xff]
    %v232 = vld [vmem:[#allocation2 + $0x400] sm:$0xff]
    %v233 = vld [vmem:[#allocation2 + $0x408] sm:$0xff]
    %v234 = vld [vmem:[#allocation2 + $0x410] sm:$0xff]
    %v235 = vld [vmem:[#allocation2 + $0x418] sm:$0xff]
    %v236 = vld [vmem:[#allocation2 + $0x420] sm:$0xff]
    %v237 = vld [vmem:[#allocation2 + $0x428] sm:$0xff]
    %v238 = vld [vmem:[#allocation2 + $0x430] sm:$0xff]
    %v239 = vld [vmem:[#allocation2 + $0x438] sm:$0xff]
    %v240 = vld [vmem:[#allocation2 + $0x440] sm:$0xff]
    %v241 = vld [vmem:[#allocation2 + $0x448] sm:$0xff]
    %v242 = vld [vmem:[#allocation2 + $0x450] sm:$0xff]
    %v243 = vld [vmem:[#allocation2 + $0x458] sm:$0xff]
    %v244 = vld [vmem:[#allocation2 + $0x460] sm:$0xff]
    %v245 = vld [vmem:[#allocation2 + $0x468] sm:$0xff]
    %v246 = vld [vmem:[#allocation2 + $0x470] sm:$0xff]
    %v247 = vld [vmem:[#allocation2 + $0x478] sm:$0xff]
    %v248 = vld [vmem:[#allocation2 + $0x480] sm:$0xff]
    %v249 = vld [vmem:[#allocation2 + $0x488] sm:$0xff]
    %v250 = vld [vmem:[#allocation2 + $0x490] sm:$0xff]
    %v251 = vld [vmem:[#allocation2 + $0x498] sm:$0xff]
    %v252 = vld [vmem:[#allocation2 + $0x4a0] sm:$0xff]
    %v253 = vld [vmem:[#allocation2 + $0x4a8] sm:$0xff]
    %v254 = vld [vmem:[#allocation2 + $0x4b0] sm:$0xff]
    %v255 = vld [vmem:[#allocation2 + $0x4b8] sm:$0xff]
    %v256 = vld [vmem:[#allocation2 + $0x4c0] sm:$0xff]
    %v257 = vld [vmem:[#allocation2 + $0x4c8] sm:$0xff]
    %v258 = vld [vmem:[#allocation2 + $0x4d0] sm:$0xff]
    %v259 = vld [vmem:[#allocation2 + $0x4d8] sm:$0xff]
    %v260 = vld [vmem:[#allocation2 + $0x4e0] sm:$0xff]
    %v261 = vld [vmem:[#allocation2 + $0x4e8] sm:$0xff]
    %v262 = vld [vmem:[#allocation2 + $0x4f0] sm:$0xff]
    %v263 = vld [vmem:[#allocation2 + $0x4f8] sm:$0xff]
    %v264 = vld [vmem:[#allocation2 + $0x500] sm:$0xff]
    %v265 = vld [vmem:[#allocation2 + $0x508] sm:$0xff]
    %v266 = vld [vmem:[#allocation2 + $0x510] sm:$0xff]
    %v267 = vld [vmem:[#allocation2 + $0x518] sm:$0xff]
    %v268 = vld [vmem:[#allocation2 + $0x520] sm:$0xff]
    %v269 = vld [vmem:[#allocation2 + $0x528] sm:$0xff]
    %v270 = vld [vmem:[#allocation2 + $0x530] sm:$0xff]
    %v271 = vld [vmem:[#allocation2 + $0x538] sm:$0xff]
    %v272 = vld [vmem:[#allocation2 + $0x540] sm:$0xff]
    %v273 = vld [vmem:[#allocation2 + $0x548] sm:$0xff]
    %v274 = vld [vmem:[#allocation2 + $0x550] sm:$0xff]
    %v275 = vld [vmem:[#allocation2 + $0x558] sm:$0xff]
    %v276 = vld [vmem:[#allocation2 + $0x560] sm:$0xff]
    %v277 = vld [vmem:[#allocation2 + $0x568] sm:$0xff]
    %v278 = vld [vmem:[#allocation2 + $0x570] sm:$0xff]
    %v279 = vld [vmem:[#allocation2 + $0x578] sm:$0xff]
    %v280 = vld [vmem:[#allocation2 + $0x580] sm:$0xff]
    %v281 = vld [vmem:[#allocation2 + $0x588] sm:$0xff]
    %v282 = vld [vmem:[#allocation2 + $0x590] sm:$0xff]
    %v283 = vld [vmem:[#allocation2 + $0x598] sm:$0xff]
    %v284 = vld [vmem:[#allocation2 + $0x5a0] sm:$0xff]
    %v285 = vld [vmem:[#allocation2 + $0x5a8] sm:$0xff]
    %v286 = vld [vmem:[#allocation2 + $0x5b0] sm:$0xff]
    %v287 = vld [vmem:[#allocation2 + $0x5b8] sm:$0xff]
    %v288 = vld [vmem:[#allocation2 + $0x5c0] sm:$0xff]
    %v289 = vld [vmem:[#allocation2 + $0x5c8] sm:$0xff]
    %v290 = vld [vmem:[#allocation2 + $0x5d0] sm:$0xff]
    %v291 = vld [vmem:[#allocation2 + $0x5d8] sm:$0xff]
    %v292 = vld [vmem:[#allocation2 + $0x5e0] sm:$0xff]
    %v293 = vld [vmem:[#allocation2 + $0x5e8] sm:$0xff]
    %v294 = vld [vmem:[#allocation2 + $0x5f0] sm:$0xff]
    %v295 = vld [vmem:[#allocation2 + $0x5f8] sm:$0xff]
    %v296 = vld [vmem:[#allocation2 + $0x600] sm:$0xff]
    %v297 = vld [vmem:[#allocation2 + $0x608] sm:$0xff]
    %v298 = vld [vmem:[#allocation2 + $0x610] sm:$0xff]
    %v299 = vld [vmem:[#allocation2 + $0x618] sm:$0xff]
    %v300 = vld [vmem:[#allocation7] sm:$0xf]
    %v301 = vld [vmem:[#allocation7 + $0x4] sm:$0xf]
    %v302 = vld [vmem:[#allocation7 + $0x8] sm:$0xf]
    %v303 = vld [vmem:[#allocation7 + $0xc] sm:$0xf]
    %v304 = vld [vmem:[#allocation7 + $0x10] sm:$0xf]
    %v305 = vld [vmem:[#allocation7 + $0x14] sm:$0xf]
    %v306 = vld [vmem:[#allocation7 + $0x18] sm:$0xf]
    %v307 = vld [vmem:[#allocation7 + $0x1c] sm:$0xf]
    %v308 = vld [vmem:[#allocation7 + $0x20] sm:$0xf]
    %v309 = vld [vmem:[#allocation7 + $0x24] sm:$0xf]
    %v310 = vld [vmem:[#allocation7 + $0x28] sm:$0xf]
    %v311 = vld [vmem:[#allocation7 + $0x2c] sm:$0xf]
    %v312 = vld [vmem:[#allocation7 + $0x30] sm:$0xf]
    %v313 = vld [vmem:[#allocation7 + $0x34] sm:$0xf]
    %v314 = vld [vmem:[#allocation7 + $0x38] sm:$0xf]
    %v315 = vld [vmem:[#allocation7 + $0x3c] sm:$0xf]
    %v316 = vld [vmem:[#allocation7 + $0x40] sm:$0xf]
    %v317 = vld [vmem:[#allocation7 + $0x44] sm:$0xf]
    %v318 = vld [vmem:[#allocation7 + $0x48] sm:$0xf]
    %v319 = vld [vmem:[#allocation7 + $0x4c] sm:$0xf]
    %v320 = vld [vmem:[#allocation7 + $0x50] sm:$0xf]
    %v321 = vld [vmem:[#allocation7 + $0x54] sm:$0xf]
    %v322 = vld [vmem:[#allocation7 + $0x58] sm:$0xf]
    %v323 = vld [vmem:[#allocation7 + $0x5c] sm:$0xf]
    %v324 = vld [vmem:[#allocation7 + $0x60] sm:$0xf]
    %v325 = vld [vmem:[#allocation7 + $0x64] sm:$0xf]
    %v326 = vld [vmem:[#allocation7 + $0x68] sm:$0xf]
    %v327 = vld [vmem:[#allocation7 + $0x6c] sm:$0xf]
    %v328 = vld [vmem:[#allocation7 + $0x70] sm:$0xf]
    %v329 = vld [vmem:[#allocation7 + $0x74] sm:$0xf]
    %v330 = vld [vmem:[#allocation7 + $0x78] sm:$0xf]
    %v331 = vld [vmem:[#allocation7 + $0x7c] sm:$0xf]
    %v332 = vld [vmem:[#allocation7 + $0x80] sm:$0xf]
    %v333 = vld [vmem:[#allocation7 + $0x84] sm:$0xf]
    %v334 = vld [vmem:[#allocation7 + $0x88] sm:$0xf]
    %v335 = vld [vmem:[#allocation7 + $0x8c] sm:$0xf]
    %v336 = vld [vmem:[#allocation7 + $0x90] sm:$0xf]
    %v337 = vld [vmem:[#allocation7 + $0x94] sm:$0xf]
    %v338 = vld [vmem:[#allocation7 + $0x98] sm:$0xf]
    %v339 = vld [vmem:[#allocation7 + $0x9c] sm:$0xf]
    %v340 = vld [vmem:[#allocation7 + $0xa0] sm:$0xf]
    %v341 = vld [vmem:[#allocation7 + $0xa4] sm:$0xf]
    %v342 = vld [vmem:[#allocation7 + $0xa8] sm:$0xf]
    %v343 = vld [vmem:[#allocation7 + $0xac] sm:$0xf]
    %v344 = vld [vmem:[#allocation7 + $0xb0] sm:$0xf]
    %v345 = vld [vmem:[#allocation7 + $0xb4] sm:$0xf]
    %v346 = vld [vmem:[#allocation7 + $0xb8] sm:$0xf]
    %v347 = vld [vmem:[#allocation7 + $0xbc] sm:$0xf]
    %v348 = vld [vmem:[#allocation7 + $0xc0] sm:$0xf]
    %v349 = vld [vmem:[#allocation7 + $0xc4] sm:$0xf]
    %v350 = vld [vmem:[#allocation7 + $0xc8] sm:$0xf]
    %v351 = vld [vmem:[#allocation7 + $0xcc] sm:$0xf]
    %v352 = vld [vmem:[#allocation7 + $0xd0] sm:$0xf]
    %v353 = vld [vmem:[#allocation7 + $0xd4] sm:$0xf]
    %v354 = vld [vmem:[#allocation7 + $0xd8] sm:$0xf]
    %v355 = vld [vmem:[#allocation7 + $0xdc] sm:$0xf]
    %v356 = vld [vmem:[#allocation7 + $0xe0] sm:$0xf]
    %v357 = vld [vmem:[#allocation7 + $0xe4] sm:$0xf]
    %v358 = vld [vmem:[#allocation7 + $0xe8] sm:$0xf]
    %v359 = vld [vmem:[#allocation7 + $0xec] sm:$0xf]
    %v556 = vunpack.c.l.b16 %v104
    %v557 = vunpack.c.h.b16 %v104
    %v558 = vunpack.c.l.b16 %v105
    %v559 = vunpack.c.h.b16 %v105
    %v560 = vunpack.c.l.b16 %v106
    %v561 = vunpack.c.h.b16 %v106
    %v562 = vunpack.c.l.b16 %v107
    %v563 = vunpack.c.h.b16 %v107
    %v564 = vunpack.c.l.b16 %v108
    %v565 = vunpack.c.h.b16 %v108
    %v566 = vunpack.c.l.b16 %v109
    %v567 = vunpack.c.h.b16 %v109
    %v568 = vunpack.c.l.b16 %v110
    %v569 = vunpack.c.h.b16 %v110
    %v570 = vunpack.c.l.b16 %v111
    %v571 = vunpack.c.h.b16 %v111
    %v572 = vunpack.c.l.b16 %v112
    %v573 = vunpack.c.h.b16 %v112
    %v574 = vunpack.c.l.b16 %v113
    %v575 = vunpack.c.h.b16 %v113
    %v576 = vunpack.c.l.b16 %v114
    %v577 = vunpack.c.h.b16 %v114
    %v578 = vunpack.c.l.b16 %v115
    %v579 = vunpack.c.h.b16 %v115
    %v580 = vunpack.c.l.b16 %v116
    %v581 = vunpack.c.h.b16 %v116
    %v582 = vunpack.c.l.b16 %v117
    %v583 = vunpack.c.h.b16 %v117
    %v584 = vunpack.c.l.b16 %v118
    %v585 = vunpack.c.h.b16 %v118
    %v586 = vunpack.c.l.b16 %v119
    %v587 = vunpack.c.h.b16 %v119
    %v588 = vunpack.c.l.b16 %v120
    %v589 = vunpack.c.h.b16 %v120
    %v590 = vunpack.c.l.b16 %v121
    %v591 = vunpack.c.h.b16 %v121
    %v592 = vunpack.c.l.b16 %v122
    %v593 = vunpack.c.h.b16 %v122
    %v594 = vunpack.c.l.b16 %v123
    %v595 = vunpack.c.h.b16 %v123
    %v596 = vunpack.c.l.b16 %v124
    %v597 = vunpack.c.h.b16 %v124
    %v598 = vunpack.c.l.b16 %v125
    %v599 = vunpack.c.h.b16 %v125
    %v600 = vunpack.c.l.b16 %v126
    %v601 = vunpack.c.h.b16 %v126
    %v602 = vunpack.c.l.b16 %v127
    %v603 = vunpack.c.h.b16 %v127
    %v604 = vunpack.c.l.b16 %v128
    %v605 = vunpack.c.h.b16 %v128
    %v606 = vunpack.c.l.b16 %v129
    %v607 = vunpack.c.h.b16 %v129
    %v608 = vunpack.c.l.b16 %v130
    %v609 = vunpack.c.h.b16 %v130
    %v610 = vunpack.c.l.b16 %v131
    %v611 = vunpack.c.h.b16 %v131
    %v612 = vunpack.c.l.b16 %v132
    %v613 = vunpack.c.h.b16 %v132
    %v614 = vunpack.c.l.b16 %v133
    %v615 = vunpack.c.h.b16 %v133
    %v616 = vunpack.c.l.b16 %v134
    %v617 = vunpack.c.h.b16 %v134
    %v618 = vunpack.c.l.b16 %v135
    %v619 = vunpack.c.h.b16 %v135
    %v620 = vunpack.c.l.b16 %v136
    %v621 = vunpack.c.h.b16 %v136
    %v622 = vunpack.c.l.b16 %v137
    %v623 = vunpack.c.h.b16 %v137
    %v624 = vunpack.c.l.b16 %v138
    %v625 = vunpack.c.h.b16 %v138
    %v626 = vunpack.c.l.b16 %v139
    %v627 = vunpack.c.h.b16 %v139
    %v628 = vunpack.c.l.b16 %v140
    %v629 = vunpack.c.h.b16 %v140
    %v630 = vunpack.c.l.b16 %v141
    %v631 = vunpack.c.h.b16 %v141
    %v632 = vunpack.c.l.b16 %v142
    %v633 = vunpack.c.h.b16 %v142
    %v634 = vunpack.c.l.b16 %v143
    %v635 = vunpack.c.h.b16 %v143
    %v636 = vunpack.c.l.b16 %v144
    %v637 = vunpack.c.h.b16 %v144
    %v638 = vunpack.c.l.b16 %v145
    %v639 = vunpack.c.h.b16 %v145
    %v640 = vunpack.c.l.b16 %v146
    %v641 = vunpack.c.h.b16 %v146
    %v642 = vunpack.c.l.b16 %v147
    %v643 = vunpack.c.h.b16 %v147
    %v644 = vunpack.c.l.b16 %v148
    %v645 = vunpack.c.h.b16 %v148
    %v646 = vunpack.c.l.b16 %v149
    %v647 = vunpack.c.h.b16 %v149
    %v648 = vunpack.c.l.b16 %v150
    %v649 = vunpack.c.h.b16 %v150
    %v650 = vunpack.c.l.b16 %v151
    %v651 = vunpack.c.h.b16 %v151
    %v652 = vunpack.c.l.b16 %v152
    %v653 = vunpack.c.h.b16 %v152
    %v654 = vunpack.c.l.b16 %v153
    %v655 = vunpack.c.h.b16 %v153
    %v656 = vunpack.c.l.b16 %v154
    %v657 = vunpack.c.h.b16 %v154
    %v658 = vunpack.c.l.b16 %v155
    %v659 = vunpack.c.h.b16 %v155
    %v660 = vunpack.c.l.b16 %v156
    %v661 = vunpack.c.h.b16 %v156
    %v662 = vunpack.c.l.b16 %v157
    %v663 = vunpack.c.h.b16 %v157
    %v664 = vunpack.c.l.b16 %v158
    %v665 = vunpack.c.h.b16 %v158
    %v666 = vunpack.c.l.b16 %v159
    %v667 = vunpack.c.h.b16 %v159
    %v668 = vunpack.c.l.b16 %v160
    %v669 = vunpack.c.h.b16 %v160
    %v670 = vunpack.c.l.b16 %v161
    %v671 = vunpack.c.h.b16 %v161
    %v672 = vunpack.c.l.b16 %v162
    %v673 = vunpack.c.h.b16 %v162
    %v674 = vunpack.c.l.b16 %v163
    %v675 = vunpack.c.h.b16 %v163
    %v676 = vunpack.c.l.b16 %v164
    %v677 = vunpack.c.h.b16 %v164
    %v678 = vunpack.c.l.b16 %v165
    %v679 = vunpack.c.h.b16 %v165
    %v680 = vunpack.c.l.b16 %v166
    %v681 = vunpack.c.h.b16 %v166
    %v682 = vunpack.c.l.b16 %v167
    %v683 = vunpack.c.h.b16 %v167
    %v684 = vunpack.c.l.b16 %v168
    %v685 = vunpack.c.h.b16 %v168
    %v686 = vunpack.c.l.b16 %v169
    %v687 = vunpack.c.h.b16 %v169
    %v688 = vunpack.c.l.b16 %v170
    %v689 = vunpack.c.h.b16 %v170
    %v690 = vunpack.c.l.b16 %v171
    %v691 = vunpack.c.h.b16 %v171
    %v692 = vunpack.c.l.b16 %v172
    %v693 = vunpack.c.h.b16 %v172
    %v694 = vunpack.c.l.b16 %v173
    %v695 = vunpack.c.h.b16 %v173
    %v696 = vunpack.c.l.b16 %v174
    %v697 = vunpack.c.h.b16 %v174
    %v698 = vunpack.c.l.b16 %v175
    %v699 = vunpack.c.h.b16 %v175
    %v700 = vunpack.c.l.b16 %v176
    %v701 = vunpack.c.h.b16 %v176
    %v702 = vunpack.c.l.b16 %v177
    %v703 = vunpack.c.h.b16 %v177
    %v704 = vunpack.c.l.b16 %v178
    %v705 = vunpack.c.h.b16 %v178
    %v706 = vunpack.c.l.b16 %v179
    %v707 = vunpack.c.h.b16 %v179
    %v708 = vunpack.c.l.b16 %v180
    %v709 = vunpack.c.h.b16 %v180
    %v710 = vunpack.c.l.b16 %v181
    %v711 = vunpack.c.h.b16 %v181
    %v712 = vunpack.c.l.b16 %v182
    %v713 = vunpack.c.h.b16 %v182
    %v714 = vunpack.c.l.b16 %v183
    %v715 = vunpack.c.h.b16 %v183
    %v716 = vunpack.c.l.b16 %v184
    %v717 = vunpack.c.h.b16 %v184
    %v718 = vunpack.c.l.b16 %v185
    %v719 = vunpack.c.h.b16 %v185
    %v720 = vunpack.c.l.b16 %v186
    %v721 = vunpack.c.h.b16 %v186
    %v722 = vunpack.c.l.b16 %v187
    %v723 = vunpack.c.h.b16 %v187
    %v724 = vunpack.c.l.b16 %v188
    %v725 = vunpack.c.h.b16 %v188
    %v726 = vunpack.c.l.b16 %v189
    %v727 = vunpack.c.h.b16 %v189
    %v728 = vunpack.c.l.b16 %v190
    %v729 = vunpack.c.h.b16 %v190
    %v730 = vunpack.c.l.b16 %v191
    %v731 = vunpack.c.h.b16 %v191
    %v732 = vunpack.c.l.b16 %v192
    %v733 = vunpack.c.h.b16 %v192
    %v734 = vunpack.c.l.b16 %v193
    %v735 = vunpack.c.h.b16 %v193
    %v736 = vunpack.c.l.b16 %v194
    %v737 = vunpack.c.h.b16 %v194
    %v738 = vunpack.c.l.b16 %v195
    %v739 = vunpack.c.h.b16 %v195
    %v740 = vunpack.c.l.b16 %v196
    %v741 = vunpack.c.h.b16 %v196
    %v742 = vunpack.c.l.b16 %v197
    %v743 = vunpack.c.h.b16 %v197
    %v744 = vunpack.c.l.b16 %v198
    %v745 = vunpack.c.h.b16 %v198
    %v746 = vunpack.c.l.b16 %v199
    %v747 = vunpack.c.h.b16 %v199
    %v748 = vunpack.c.l.b16 %v200
    %v749 = vunpack.c.h.b16 %v200
    %v750 = vunpack.c.l.b16 %v201
    %v751 = vunpack.c.h.b16 %v201
    %v752 = vunpack.c.l.b16 %v202
    %v753 = vunpack.c.h.b16 %v202
    %v754 = vunpack.c.l.b16 %v203
    %v755 = vunpack.c.h.b16 %v203
    %v756 = vunpack.c.l.b16 %v204
    %v757 = vunpack.c.h.b16 %v204
    %v758 = vunpack.c.l.b16 %v205
    %v759 = vunpack.c.h.b16 %v205
    %v760 = vunpack.c.l.b16 %v206
    %v761 = vunpack.c.h.b16 %v206
    %v762 = vunpack.c.l.b16 %v207
    %v763 = vunpack.c.h.b16 %v207
    %v764 = vunpack.c.l.b16 %v208
    %v765 = vunpack.c.h.b16 %v208
    %v766 = vunpack.c.l.b16 %v209
    %v767 = vunpack.c.h.b16 %v209
    %v768 = vunpack.c.l.b16 %v210
    %v769 = vunpack.c.h.b16 %v210
    %v770 = vunpack.c.l.b16 %v211
    %v771 = vunpack.c.h.b16 %v211
    %v772 = vunpack.c.l.b16 %v212
    %v773 = vunpack.c.h.b16 %v212
    %v774 = vunpack.c.l.b16 %v213
    %v775 = vunpack.c.h.b16 %v213
    %v776 = vunpack.c.l.b16 %v214
    %v777 = vunpack.c.h.b16 %v214
    %v778 = vunpack.c.l.b16 %v215
    %v779 = vunpack.c.h.b16 %v215
    %v780 = vunpack.c.l.b16 %v216
    %v781 = vunpack.c.h.b16 %v216
    %v782 = vunpack.c.l.b16 %v217
    %v783 = vunpack.c.h.b16 %v217
    %v784 = vunpack.c.l.b16 %v218
    %v785 = vunpack.c.h.b16 %v218
    %v786 = vunpack.c.l.b16 %v219
    %v787 = vunpack.c.h.b16 %v219
    %v788 = vunpack.c.l.b16 %v220
    %v789 = vunpack.c.h.b16 %v220
    %v790 = vunpack.c.l.b16 %v221
    %v791 = vunpack.c.h.b16 %v221
    %v792 = vunpack.c.l.b16 %v222
    %v793 = vunpack.c.h.b16 %v222
    %v794 = vunpack.c.l.b16 %v223
    %v795 = vunpack.c.h.b16 %v223
    %v796 = vunpack.c.l.b16 %v224
    %v797 = vunpack.c.h.b16 %v224
    %v798 = vunpack.c.l.b16 %v225
    %v799 = vunpack.c.h.b16 %v225
    %v800 = vunpack.c.l.b16 %v226
    %v801 = vunpack.c.h.b16 %v226
    %v802 = vunpack.c.l.b16 %v227
    %v803 = vunpack.c.h.b16 %v227
    %v804 = vunpack.c.l.b16 %v228
    %v805 = vunpack.c.h.b16 %v228
    %v806 = vunpack.c.l.b16 %v229
    %v807 = vunpack.c.h.b16 %v229
    %v808 = vunpack.c.l.b16 %v230
    %v809 = vunpack.c.h.b16 %v230
    %v810 = vunpack.c.l.b16 %v231
    %v811 = vunpack.c.h.b16 %v231
    %v812 = vunpack.c.l.b16 %v232
    %v813 = vunpack.c.h.b16 %v232
    %v814 = vunpack.c.l.b16 %v233
    %v815 = vunpack.c.h.b16 %v233
    %v816 = vunpack.c.l.b16 %v234
    %v817 = vunpack.c.h.b16 %v234
    %v818 = vunpack.c.l.b16 %v235
    %v819 = vunpack.c.h.b16 %v235
    %v820 = vunpack.c.l.b16 %v236
    %v821 = vunpack.c.h.b16 %v236
    %v822 = vunpack.c.l.b16 %v237
    %v823 = vunpack.c.h.b16 %v237
    %v824 = vunpack.c.l.b16 %v238
    %v825 = vunpack.c.h.b16 %v238
    %v826 = vunpack.c.l.b16 %v239
    %v827 = vunpack.c.h.b16 %v239
    %v828 = vunpack.c.l.b16 %v240
    %v829 = vunpack.c.h.b16 %v240
    %v830 = vunpack.c.l.b16 %v241
    %v831 = vunpack.c.h.b16 %v241
    %v832 = vunpack.c.l.b16 %v242
    %v833 = vunpack.c.h.b16 %v242
    %v834 = vunpack.c.l.b16 %v243
    %v835 = vunpack.c.h.b16 %v243
    %v836 = vunpack.c.l.b16 %v244
    %v837 = vunpack.c.h.b16 %v244
    %v838 = vunpack.c.l.b16 %v245
    %v839 = vunpack.c.h.b16 %v245
    %v840 = vunpack.c.l.b16 %v246
    %v841 = vunpack.c.h.b16 %v246
    %v842 = vunpack.c.l.b16 %v247
    %v843 = vunpack.c.h.b16 %v247
    %v844 = vunpack.c.l.b16 %v248
    %v845 = vunpack.c.h.b16 %v248
    %v846 = vunpack.c.l.b16 %v249
    %v847 = vunpack.c.h.b16 %v249
    %v848 = vunpack.c.l.b16 %v250
    %v849 = vunpack.c.h.b16 %v250
    %v850 = vunpack.c.l.b16 %v251
    %v851 = vunpack.c.h.b16 %v251
    %v852 = vunpack.c.l.b16 %v252
    %v853 = vunpack.c.h.b16 %v252
    %v854 = vunpack.c.l.b16 %v253
    %v855 = vunpack.c.h.b16 %v253
    %v856 = vunpack.c.l.b16 %v254
    %v857 = vunpack.c.h.b16 %v254
    %v858 = vunpack.c.l.b16 %v255
    %v859 = vunpack.c.h.b16 %v255
    %v860 = vunpack.c.l.b16 %v256
    %v861 = vunpack.c.h.b16 %v256
    %v862 = vunpack.c.l.b16 %v257
    %v863 = vunpack.c.h.b16 %v257
    %v864 = vunpack.c.l.b16 %v258
    %v865 = vunpack.c.h.b16 %v258
    %v866 = vunpack.c.l.b16 %v259
    %v867 = vunpack.c.h.b16 %v259
    %v868 = vunpack.c.l.b16 %v260
    %v869 = vunpack.c.h.b16 %v260
    %v870 = vunpack.c.l.b16 %v261
    %v871 = vunpack.c.h.b16 %v261
    %v872 = vunpack.c.l.b16 %v262
    %v873 = vunpack.c.h.b16 %v262
    %v874 = vunpack.c.l.b16 %v263
    %v875 = vunpack.c.h.b16 %v263
    %v876 = vunpack.c.l.b16 %v264
    %v877 = vunpack.c.h.b16 %v264
    %v878 = vunpack.c.l.b16 %v265
    %v879 = vunpack.c.h.b16 %v265
    %v880 = vunpack.c.l.b16 %v266
    %v881 = vunpack.c.h.b16 %v266
    %v882 = vunpack.c.l.b16 %v267
    %v883 = vunpack.c.h.b16 %v267
    %v884 = vunpack.c.l.b16 %v268
    %v885 = vunpack.c.h.b16 %v268
    %v886 = vunpack.c.l.b16 %v269
    %v887 = vunpack.c.h.b16 %v269
    %v888 = vunpack.c.l.b16 %v270
    %v889 = vunpack.c.h.b16 %v270
    %v890 = vunpack.c.l.b16 %v271
    %v891 = vunpack.c.h.b16 %v271
    %v892 = vunpack.c.l.b16 %v272
    %v893 = vunpack.c.h.b16 %v272
    %v894 = vunpack.c.l.b16 %v273
    %v895 = vunpack.c.h.b16 %v273
    %v896 = vunpack.c.l.b16 %v274
    %v897 = vunpack.c.h.b16 %v274
    %v898 = vunpack.c.l.b16 %v275
    %v899 = vunpack.c.h.b16 %v275
    %v900 = vunpack.c.l.b16 %v276
    %v901 = vunpack.c.h.b16 %v276
    %v902 = vunpack.c.l.b16 %v277
    %v903 = vunpack.c.h.b16 %v277
    %v904 = vunpack.c.l.b16 %v278
    %v905 = vunpack.c.h.b16 %v278
    %v906 = vunpack.c.l.b16 %v279
    %v907 = vunpack.c.h.b16 %v279
    %v908 = vunpack.c.l.b16 %v280
    %v909 = vunpack.c.h.b16 %v280
    %v910 = vunpack.c.l.b16 %v281
    %v911 = vunpack.c.h.b16 %v281
    %v912 = vunpack.c.l.b16 %v282
    %v913 = vunpack.c.h.b16 %v282
    %v914 = vunpack.c.l.b16 %v283
    %v915 = vunpack.c.h.b16 %v283
    %v916 = vunpack.c.l.b16 %v284
    %v917 = vunpack.c.h.b16 %v284
    %v918 = vunpack.c.l.b16 %v285
    %v919 = vunpack.c.h.b16 %v285
    %v920 = vunpack.c.l.b16 %v286
    %v921 = vunpack.c.h.b16 %v286
    %v922 = vunpack.c.l.b16 %v287
    %v923 = vunpack.c.h.b16 %v287
    %v924 = vunpack.c.l.b16 %v288
    %v925 = vunpack.c.h.b16 %v288
    %v926 = vunpack.c.l.b16 %v289
    %v927 = vunpack.c.h.b16 %v289
    %v928 = vunpack.c.l.b16 %v290
    %v929 = vunpack.c.h.b16 %v290
    %v930 = vunpack.c.l.b16 %v291
    %v931 = vunpack.c.h.b16 %v291
    %v932 = vunpack.c.l.b16 %v292
    %v933 = vunpack.c.h.b16 %v292
    %v934 = vunpack.c.l.b16 %v293
    %v935 = vunpack.c.h.b16 %v293
    %v936 = vunpack.c.l.b16 %v294
    %v937 = vunpack.c.h.b16 %v294
    %v938 = vunpack.c.l.b16 %v295
    %v939 = vunpack.c.h.b16 %v295
    %v940 = vunpack.c.l.b16 %v296
    %v941 = vunpack.c.h.b16 %v296
    %v942 = vunpack.c.l.b16 %v297
    %v943 = vunpack.c.h.b16 %v297
    %v944 = vunpack.c.l.b16 %v298
    %v945 = vunpack.c.h.b16 %v298
    %v946 = vunpack.c.l.b16 %v299
    %v947 = vunpack.c.h.b16 %v299
    %v948 = vpack.c.b16 %v560, %v556
    %v949 = vpack.c.b16 %v561, %v557
    %v950 = vpack.c.b16 %v562, %v558
    %v951 = vpack.c.b16 %v563, %v559
    %v952 = vpack.c.b16 %v568, %v564
    %v953 = vpack.c.b16 %v569, %v565
    %v954 = vpack.c.b16 %v570, %v566
    %v955 = vpack.c.b16 %v571, %v567
    %v956 = vpack.c.b16 %v576, %v572
    %v957 = vpack.c.b16 %v577, %v573
    %v958 = vpack.c.b16 %v578, %v574
    %v959 = vpack.c.b16 %v579, %v575
    %v960 = vpack.c.b16 %v584, %v580
    %v961 = vpack.c.b16 %v585, %v581
    %v962 = vpack.c.b16 %v586, %v582
    %v963 = vpack.c.b16 %v587, %v583
    %v964 = vpack.c.b16 %v592, %v588
    %v965 = vpack.c.b16 %v593, %v589
    %v966 = vpack.c.b16 %v594, %v590
    %v967 = vpack.c.b16 %v595, %v591
    %v968 = vpack.c.b16 %v600, %v596
    %v969 = vpack.c.b16 %v601, %v597
    %v970 = vpack.c.b16 %v602, %v598
    %v971 = vpack.c.b16 %v603, %v599
    %v972 = vpack.c.b16 %v608, %v604
    %v973 = vpack.c.b16 %v609, %v605
    %v974 = vpack.c.b16 %v610, %v606
    %v975 = vpack.c.b16 %v611, %v607
    %v976 = vpack.c.b16 %v616, %v612
    %v977 = vpack.c.b16 %v617, %v613
    %v978 = vpack.c.b16 %v618, %v614
    %v979 = vpack.c.b16 %v619, %v615
    %v980 = vpack.c.b16 %v624, %v620
    %v981 = vpack.c.b16 %v625, %v621
    %v982 = vpack.c.b16 %v626, %v622
    %v983 = vpack.c.b16 %v627, %v623
    %v984 = vpack.c.b16 %v632, %v628
    %v985 = vpack.c.b16 %v633, %v629
    %v986 = vpack.c.b16 %v634, %v630
    %v987 = vpack.c.b16 %v635, %v631
    %v988 = vpack.c.b16 %v640, %v636
    %v989 = vpack.c.b16 %v641, %v637
    %v990 = vpack.c.b16 %v642, %v638
    %v991 = vpack.c.b16 %v643, %v639
    %v992 = vpack.c.b16 %v648, %v644
    %v993 = vpack.c.b16 %v649, %v645
    %v994 = vpack.c.b16 %v650, %v646
    %v995 = vpack.c.b16 %v651, %v647
    %v996 = vpack.c.b16 %v656, %v652
    %v997 = vpack.c.b16 %v657, %v653
    %v998 = vpack.c.b16 %v658, %v654
    %v999 = vpack.c.b16 %v659, %v655
    %v1000 = vpack.c.b16 %v664, %v660
    %v1001 = vpack.c.b16 %v665, %v661
    %v1002 = vpack.c.b16 %v666, %v662
    %v1003 = vpack.c.b16 %v667, %v663
    %v1004 = vpack.c.b16 %v672, %v668
    %v1005 = vpack.c.b16 %v673, %v669
    %v1006 = vpack.c.b16 %v674, %v670
    %v1007 = vpack.c.b16 %v675, %v671
    %v1008 = vpack.c.b16 %v680, %v676
    %v1009 = vpack.c.b16 %v681, %v677
    %v1010 = vpack.c.b16 %v682, %v678
    %v1011 = vpack.c.b16 %v683, %v679
    %v1012 = vpack.c.b16 %v688, %v684
    %v1013 = vpack.c.b16 %v689, %v685
    %v1014 = vpack.c.b16 %v690, %v686
    %v1015 = vpack.c.b16 %v691, %v687
    %v1016 = vpack.c.b16 %v696, %v692
    %v1017 = vpack.c.b16 %v697, %v693
    %v1018 = vpack.c.b16 %v698, %v694
    %v1019 = vpack.c.b16 %v699, %v695
    %v1020 = vpack.c.b16 %v704, %v700
    %v1021 = vpack.c.b16 %v705, %v701
    %v1022 = vpack.c.b16 %v706, %v702
    %v1023 = vpack.c.b16 %v707, %v703
    %v1024 = vpack.c.b16 %v712, %v708
    %v1025 = vpack.c.b16 %v713, %v709
    %v1026 = vpack.c.b16 %v714, %v710
    %v1027 = vpack.c.b16 %v715, %v711
    %v1028 = vpack.c.b16 %v720, %v716
    %v1029 = vpack.c.b16 %v721, %v717
    %v1030 = vpack.c.b16 %v722, %v718
    %v1031 = vpack.c.b16 %v723, %v719
    %v1032 = vpack.c.b16 %v728, %v724
    %v1033 = vpack.c.b16 %v729, %v725
    %v1034 = vpack.c.b16 %v730, %v726
    %v1035 = vpack.c.b16 %v731, %v727
    %v1036 = vpack.c.b16 %v736, %v732
    %v1037 = vpack.c.b16 %v737, %v733
    %v1038 = vpack.c.b16 %v738, %v734
    %v1039 = vpack.c.b16 %v739, %v735
    %v1040 = vpack.c.b16 %v744, %v740
    %v1041 = vpack.c.b16 %v745, %v741
    %v1042 = vpack.c.b16 %v746, %v742
    %v1043 = vpack.c.b16 %v747, %v743
    %v1044 = vpack.c.b16 %v752, %v748
    %v1045 = vpack.c.b16 %v753, %v749
    %v1046 = vpack.c.b16 %v754, %v750
    %v1047 = vpack.c.b16 %v755, %v751
    %v1048 = vpack.c.b16 %v760, %v756
    %v1049 = vpack.c.b16 %v761, %v757
    %v1050 = vpack.c.b16 %v762, %v758
    %v1051 = vpack.c.b16 %v763, %v759
    %v1052 = vpack.c.b16 %v768, %v764
    %v1053 = vpack.c.b16 %v769, %v765
    %v1054 = vpack.c.b16 %v770, %v766
    %v1055 = vpack.c.b16 %v771, %v767
    %v1056 = vpack.c.b16 %v776, %v772
    %v1057 = vpack.c.b16 %v777, %v773
    %v1058 = vpack.c.b16 %v778, %v774
    %v1059 = vpack.c.b16 %v779, %v775
    %v1060 = vpack.c.b16 %v784, %v780
    %v1061 = vpack.c.b16 %v785, %v781
    %v1062 = vpack.c.b16 %v786, %v782
    %v1063 = vpack.c.b16 %v787, %v783
    %v1064 = vpack.c.b16 %v792, %v788
    %v1065 = vpack.c.b16 %v793, %v789
    %v1066 = vpack.c.b16 %v794, %v790
    %v1067 = vpack.c.b16 %v795, %v791
    %v1068 = vpack.c.b16 %v800, %v796
    %v1069 = vpack.c.b16 %v801, %v797
    %v1070 = vpack.c.b16 %v802, %v798
    %v1071 = vpack.c.b16 %v803, %v799
    %v1072 = vpack.c.b16 %v808, %v804
    %v1073 = vpack.c.b16 %v809, %v805
    %v1074 = vpack.c.b16 %v810, %v806
    %v1075 = vpack.c.b16 %v811, %v807
    %v1076 = vpack.c.b16 %v816, %v812
    %v1077 = vpack.c.b16 %v817, %v813
    %v1078 = vpack.c.b16 %v818, %v814
    %v1079 = vpack.c.b16 %v819, %v815
    %v1080 = vpack.c.b16 %v824, %v820
    %v1081 = vpack.c.b16 %v825, %v821
    %v1082 = vpack.c.b16 %v826, %v822
    %v1083 = vpack.c.b16 %v827, %v823
    %v1084 = vpack.c.b16 %v832, %v828
    %v1085 = vpack.c.b16 %v833, %v829
    %v1086 = vpack.c.b16 %v834, %v830
    %v1087 = vpack.c.b16 %v835, %v831
    %v1088 = vpack.c.b16 %v840, %v836
    %v1089 = vpack.c.b16 %v841, %v837
    %v1090 = vpack.c.b16 %v842, %v838
    %v1091 = vpack.c.b16 %v843, %v839
    %v1092 = vpack.c.b16 %v848, %v844
    %v1093 = vpack.c.b16 %v849, %v845
    %v1094 = vpack.c.b16 %v850, %v846
    %v1095 = vpack.c.b16 %v851, %v847
    %v1096 = vpack.c.b16 %v856, %v852
    %v1097 = vpack.c.b16 %v857, %v853
    %v1098 = vpack.c.b16 %v858, %v854
    %v1099 = vpack.c.b16 %v859, %v855
    %v1100 = vpack.c.b16 %v864, %v860
    %v1101 = vpack.c.b16 %v865, %v861
    %v1102 = vpack.c.b16 %v866, %v862
    %v1103 = vpack.c.b16 %v867, %v863
    %v1104 = vpack.c.b16 %v872, %v868
    %v1105 = vpack.c.b16 %v873, %v869
    %v1106 = vpack.c.b16 %v874, %v870
    %v1107 = vpack.c.b16 %v875, %v871
    %v1108 = vpack.c.b16 %v880, %v876
    %v1109 = vpack.c.b16 %v881, %v877
    %v1110 = vpack.c.b16 %v882, %v878
    %v1111 = vpack.c.b16 %v883, %v879
    %v1112 = vpack.c.b16 %v888, %v884
    %v1113 = vpack.c.b16 %v889, %v885
    %v1114 = vpack.c.b16 %v890, %v886
    %v1115 = vpack.c.b16 %v891, %v887
    %v1116 = vpack.c.b16 %v896, %v892
    %v1117 = vpack.c.b16 %v897, %v893
    %v1118 = vpack.c.b16 %v898, %v894
    %v1119 = vpack.c.b16 %v899, %v895
    %v1120 = vpack.c.b16 %v904, %v900
    %v1121 = vpack.c.b16 %v905, %v901
    %v1122 = vpack.c.b16 %v906, %v902
    %v1123 = vpack.c.b16 %v907, %v903
    %v1124 = vpack.c.b16 %v912, %v908
    %v1125 = vpack.c.b16 %v913, %v909
    %v1126 = vpack.c.b16 %v914, %v910
    %v1127 = vpack.c.b16 %v915, %v911
    %v1128 = vpack.c.b16 %v920, %v916
    %v1129 = vpack.c.b16 %v921, %v917
    %v1130 = vpack.c.b16 %v922, %v918
    %v1131 = vpack.c.b16 %v923, %v919
    %v1132 = vpack.c.b16 %v928, %v924
    %v1133 = vpack.c.b16 %v929, %v925
    %v1134 = vpack.c.b16 %v930, %v926
    %v1135 = vpack.c.b16 %v931, %v927
    %v1136 = vpack.c.b16 %v936, %v932
    %v1137 = vpack.c.b16 %v937, %v933
    %v1138 = vpack.c.b16 %v938, %v934
    %v1139 = vpack.c.b16 %v939, %v935
    %v1140 = vpack.c.b16 %v944, %v940
    %v1141 = vpack.c.b16 %v945, %v941
    %v1142 = vpack.c.b16 %v946, %v942
    %v1143 = vpack.c.b16 %v947, %v943
    %v1351 = vunpack.c.l.b16 %v300
    %v1352 = vunpack.c.l.b16 %v301
    %v1353 = vunpack.c.l.b16 %v302
    %v1354 = vunpack.c.l.b16 %v303
    %v1355 = vunpack.c.l.b16 %v304
    %v1356 = vunpack.c.l.b16 %v305
    %v1357 = vunpack.c.l.b16 %v306
    %v1358 = vunpack.c.l.b16 %v307
    %v1359 = vunpack.c.l.b16 %v308
    %v1360 = vunpack.c.l.b16 %v309
    %v1361 = vunpack.c.l.b16 %v310
    %v1362 = vunpack.c.l.b16 %v311
    %v1363 = vunpack.c.l.b16 %v312
    %v1364 = vunpack.c.l.b16 %v313
    %v1365 = vunpack.c.l.b16 %v314
    %v1366 = vunpack.c.l.b16 %v315
    %v1367 = vunpack.c.l.b16 %v316
    %v1368 = vunpack.c.l.b16 %v317
    %v1369 = vunpack.c.l.b16 %v318
    %v1370 = vunpack.c.l.b16 %v319
    %v1371 = vunpack.c.l.b16 %v320
    %v1372 = vunpack.c.l.b16 %v321
    %v1373 = vunpack.c.l.b16 %v322
    %v1374 = vunpack.c.l.b16 %v323
    %v1375 = vunpack.c.l.b16 %v324
    %v1376 = vunpack.c.l.b16 %v325
    %v1377 = vunpack.c.l.b16 %v326
    %v1378 = vunpack.c.l.b16 %v327
    %v1379 = vunpack.c.l.b16 %v328
    %v1380 = vunpack.c.l.b16 %v329
    %v1381 = vunpack.c.l.b16 %v330
    %v1382 = vunpack.c.l.b16 %v331
    %v1383 = vunpack.c.l.b16 %v332
    %v1384 = vunpack.c.l.b16 %v333
    %v1385 = vunpack.c.l.b16 %v334
    %v1386 = vunpack.c.l.b16 %v335
    %v1387 = vunpack.c.l.b16 %v336
    %v1388 = vunpack.c.l.b16 %v337
    %v1389 = vunpack.c.l.b16 %v338
    %v1390 = vunpack.c.l.b16 %v339
    %v1391 = vunpack.c.l.b16 %v340
    %v1392 = vunpack.c.l.b16 %v341
    %v1393 = vunpack.c.l.b16 %v342
    %v1394 = vunpack.c.l.b16 %v343
    %v1395 = vunpack.c.l.b16 %v344
    %v1396 = vunpack.c.l.b16 %v345
    %v1397 = vunpack.c.l.b16 %v346
    %v1398 = vunpack.c.l.b16 %v347
    %v1399 = vunpack.c.l.b16 %v348
    %v1400 = vunpack.c.l.b16 %v349
    %v1401 = vunpack.c.l.b16 %v350
    %v1402 = vunpack.c.l.b16 %v351
    %v1403 = vunpack.c.l.b16 %v352
    %v1404 = vunpack.c.l.b16 %v353
    %v1405 = vunpack.c.l.b16 %v354
    %v1406 = vunpack.c.l.b16 %v355
    %v1407 = vunpack.c.l.b16 %v356
    %v1408 = vunpack.c.l.b16 %v357
    %v1409 = vunpack.c.l.b16 %v358
    %v1410 = vunpack.c.l.b16 %v359
    %v1411 = vpack.c.b16 %v1352, %v1351
    %v1412 = vpack.c.b16 %v1354, %v1353
    %v1413 = vpack.c.b16 %v1356, %v1355
    %v1414 = vpack.c.b16 %v1358, %v1357
    %v1415 = vpack.c.b16 %v1360, %v1359
    %v1416 = vpack.c.b16 %v1362, %v1361
    %v1417 = vpack.c.b16 %v1364, %v1363
    %v1418 = vpack.c.b16 %v1366, %v1365
    %v1419 = vpack.c.b16 %v1368, %v1367
    %v1420 = vpack.c.b16 %v1370, %v1369
    %v1421 = vpack.c.b16 %v1372, %v1371
    %v1422 = vpack.c.b16 %v1374, %v1373
    %v1423 = vpack.c.b16 %v1376, %v1375
    %v1424 = vpack.c.b16 %v1378, %v1377
    %v1425 = vpack.c.b16 %v1380, %v1379
    %v1426 = vpack.c.b16 %v1382, %v1381
    %v1427 = vpack.c.b16 %v1384, %v1383
    %v1428 = vpack.c.b16 %v1386, %v1385
    %v1429 = vpack.c.b16 %v1388, %v1387
    %v1430 = vpack.c.b16 %v1390, %v1389
    %v1431 = vpack.c.b16 %v1392, %v1391
    %v1432 = vpack.c.b16 %v1394, %v1393
    %v1433 = vpack.c.b16 %v1396, %v1395
    %v1434 = vpack.c.b16 %v1398, %v1397
    %v1435 = vpack.c.b16 %v1400, %v1399
    %v1436 = vpack.c.b16 %v1402, %v1401
    %v1437 = vpack.c.b16 %v1404, %v1403
    %v1438 = vpack.c.b16 %v1406, %v1405
    %v1439 = vpack.c.b16 %v1408, %v1407
    %v1440 = vpack.c.b16 %v1410, %v1409
    %vm1471 = vcmask 785408
    %v1473 = vsel %vm1471, %v951, 0
    %v1476 = vsel %vm1471, %v955, 0
    %v1479 = vsel %vm1471, %v959, 0
    %v1482 = vsel %vm1471, %v963, 0
    %v1485 = vsel %vm1471, %v967, 0
    %v1488 = vsel %vm1471, %v971, 0
    %v1491 = vsel %vm1471, %v975, 0
    %v1494 = vsel %vm1471, %v979, 0
    %v1497 = vsel %vm1471, %v983, 0
    %v1500 = vsel %vm1471, %v987, 0
    %v1503 = vsel %vm1471, %v991, 0
    %v1506 = vsel %vm1471, %v995, 0
    %v1509 = vsel %vm1471, %v999, 0
    %v1512 = vsel %vm1471, %v1003, 0
    %v1515 = vsel %vm1471, %v1007, 0
    %v1518 = vsel %vm1471, %v1011, 0
    %v1521 = vsel %vm1471, %v1015, 0
    %v1524 = vsel %vm1471, %v1019, 0
    %v1527 = vsel %vm1471, %v1023, 0
    %v1530 = vsel %vm1471, %v1027, 0
    %v1533 = vsel %vm1471, %v1031, 0
    %v1536 = vsel %vm1471, %v1035, 0
    %v1539 = vsel %vm1471, %v1039, 0
    %v1542 = vsel %vm1471, %v1043, 0
    %v1545 = vsel %vm1471, %v1047, 0
    %v1548 = vsel %vm1471, %v1051, 0
    %v1551 = vsel %vm1471, %v1055, 0
    %v1554 = vsel %vm1471, %v1059, 0
    %v1557 = vsel %vm1471, %v1063, 0
    %v1560 = vsel %vm1471, %v1067, 0
    %v1563 = vsel %vm1471, %v1071, 0
    %v1566 = vsel %vm1471, %v1075, 0
    %v1569 = vsel %vm1471, %v1079, 0
    %v1572 = vsel %vm1471, %v1083, 0
    %v1575 = vsel %vm1471, %v1087, 0
    %v1578 = vsel %vm1471, %v1091, 0
    %v1581 = vsel %vm1471, %v1095, 0
    %v1584 = vsel %vm1471, %v1099, 0
    %v1587 = vsel %vm1471, %v1103, 0
    %v1590 = vsel %vm1471, %v1107, 0
    %v1593 = vsel %vm1471, %v1111, 0
    %v1596 = vsel %vm1471, %v1115, 0
    %v1599 = vsel %vm1471, %v1119, 0
    %v1602 = vsel %vm1471, %v1123, 0
    %v1605 = vsel %vm1471, %v1127, 0
    %v1608 = vsel %vm1471, %v1131, 0
    %v1611 = vsel %vm1471, %v1135, 0
    %v1614 = vsel %vm1471, %v1139, 0
    %v1617 = vsel %vm1471, %v1143, 0
    %1619 = vmatprep.subr.bf16.mxu0 0
    %1620 = vmatpush1.bf16.msra.mxu0 %v1418
    %1621 = vmatprep.subr.bf16.mxu0 0
    %1622 = vmatpush1.bf16.msra.mxu0 %v1417
    %1623 = vmatprep.subr.bf16.mxu0 0
    %1624 = vmatpush1.bf16.msra.mxu0 %v1416
    %1625 = vmatprep.subr.bf16.mxu0 0
    %1626 = vmatpush1.bf16.msra.mxu0 %v1415
    %1627 = vmatprep.subr.bf16.mxu0 0
    %1628 = vmatpush1.bf16.msra.mxu0 %v1414
    %1629 = vmatprep.subr.bf16.mxu0 0
    %1630 = vmatpush1.bf16.msra.mxu0 %v1413
    %1631 = vmatprep.subr.bf16.mxu0 0
    %1632 = vmatpush1.bf16.msra.mxu0 %v1412
    %1633 = vmatprep.subr.bf16.mxu0 0
    %1634 = vmatpush1.bf16.msra.mxu0 %v1411
    %1635 = vmatprep.subr.bf16.mxu0 0
    %1636 = vmatpush2.bf16.msra.mxu0 %v1426
    %1637 = vmatprep.subr.bf16.mxu0 0
    %1638 = vmatpush2.bf16.msra.mxu0 %v1425
    %1639 = vmatprep.subr.bf16.mxu0 0
    %1640 = vmatpush2.bf16.msra.mxu0 %v1424
    %1641 = vmatprep.subr.bf16.mxu0 0
    %1642 = vmatpush2.bf16.msra.mxu0 %v1423
    %1643 = vmatprep.subr.bf16.mxu0 0
    %1644 = vmatpush2.bf16.msra.mxu0 %v1422
    %1645 = vmatprep.subr.bf16.mxu0 0
    %1646 = vmatpush2.bf16.msra.mxu0 %v1421
    %1647 = vmatprep.subr.bf16.mxu0 0
    %1648 = vmatpush2.bf16.msra.mxu0 %v1420
    %1649 = vmatprep.subr.bf16.mxu0 0
    %1650 = vmatpush2.bf16.msra.mxu0 %v1419
    %1651 = vmatprep.mubr.bf16.mxu0 %v949
    %1652 = vmatmul.mubr.bf16.gmra.mxu0 %v948
    %v1653 = vpop.f32.mrf.mxu0
    %v1654 = vadd.f32 0.0, %v1653
    %v1655 = vpop.f32.mrf.mxu0
    %v1656 = vpop.f32.mrf.mxu0
    %v1657 = vadd.f32 0.0, %v1656
    %v1658 = vpop.f32.mrf.mxu0
    %1659 = vmatprep.mubr.bf16.mxu0 %v953
    %1660 = vmatmul.mubr.bf16.gmra.mxu0 %v952
    %v1661 = vpop.f32.mrf.mxu0
    %v1662 = vadd.f32 0.0, %v1661
    %v1663 = vpop.f32.mrf.mxu0
    %v1664 = vpop.f32.mrf.mxu0
    %v1665 = vadd.f32 0.0, %v1664
    %v1666 = vpop.f32.mrf.mxu0
    %1667 = vmatprep.mubr.bf16.mxu0 %v957
    %1668 = vmatmul.mubr.bf16.gmra.mxu0 %v956
    %v1669 = vpop.f32.mrf.mxu0
    %v1670 = vadd.f32 0.0, %v1669
    %v1671 = vpop.f32.mrf.mxu0
    %v1672 = vpop.f32.mrf.mxu0
    %v1673 = vadd.f32 0.0, %v1672
    %v1674 = vpop.f32.mrf.mxu0
    %1675 = vmatprep.mubr.bf16.mxu0 %v961
    %1676 = vmatmul.mubr.bf16.gmra.mxu0 %v960
    %v1677 = vpop.f32.mrf.mxu0
    %v1678 = vadd.f32 0.0, %v1677
    %v1679 = vpop.f32.mrf.mxu0
    %v1680 = vpop.f32.mrf.mxu0
    %v1681 = vadd.f32 0.0, %v1680
    %v1682 = vpop.f32.mrf.mxu0
    %1683 = vmatprep.mubr.bf16.mxu0 %v965
    %1684 = vmatmul.mubr.bf16.gmra.mxu0 %v964
    %v1685 = vpop.f32.mrf.mxu0
    %v1686 = vadd.f32 0.0, %v1685
    %v1687 = vpop.f32.mrf.mxu0
    %v1688 = vpop.f32.mrf.mxu0
    %v1689 = vadd.f32 0.0, %v1688
    %v1690 = vpop.f32.mrf.mxu0
    %1691 = vmatprep.mubr.bf16.mxu0 %v969
    %1692 = vmatmul.mubr.bf16.gmra.mxu0 %v968
    %v1693 = vpop.f32.mrf.mxu0
    %v1694 = vadd.f32 0.0, %v1693
    %v1695 = vpop.f32.mrf.mxu0
    %v1696 = vpop.f32.mrf.mxu0
    %v1697 = vadd.f32 0.0, %v1696
    %v1698 = vpop.f32.mrf.mxu0
    %1699 = vmatprep.mubr.bf16.mxu0 %v973
    %1700 = vmatmul.mubr.bf16.gmra.mxu0 %v972
    %v1701 = vpop.f32.mrf.mxu0
    %v1702 = vadd.f32 0.0, %v1701
    %v1703 = vpop.f32.mrf.mxu0
    %v1704 = vpop.f32.mrf.mxu0
    %v1705 = vadd.f32 0.0, %v1704
    %v1706 = vpop.f32.mrf.mxu0
    %1707 = vmatprep.mubr.bf16.mxu0 %v977
    %1708 = vmatmul.mubr.bf16.gmra.mxu0 %v976
    %v1709 = vpop.f32.mrf.mxu0
    %v1710 = vadd.f32 0.0, %v1709
    %v1711 = vpop.f32.mrf.mxu0
    %v1712 = vpop.f32.mrf.mxu0
    %v1713 = vadd.f32 0.0, %v1712
    %v1714 = vpop.f32.mrf.mxu0
    %1715 = vmatprep.mubr.bf16.mxu0 %v981
    %1716 = vmatmul.mubr.bf16.gmra.mxu0 %v980
    %v1717 = vpop.f32.mrf.mxu0
    %v1718 = vadd.f32 0.0, %v1717
    %v1719 = vpop.f32.mrf.mxu0
    %v1720 = vpop.f32.mrf.mxu0
    %v1721 = vadd.f32 0.0, %v1720
    %v1722 = vpop.f32.mrf.mxu0
    %1723 = vmatprep.mubr.bf16.mxu0 %v985
    %1724 = vmatmul.mubr.bf16.gmra.mxu0 %v984
    %v1725 = vpop.f32.mrf.mxu0
    %v1726 = vadd.f32 0.0, %v1725
    %v1727 = vpop.f32.mrf.mxu0
    %v1728 = vpop.f32.mrf.mxu0
    %v1729 = vadd.f32 0.0, %v1728
    %v1730 = vpop.f32.mrf.mxu0
    %1731 = vmatprep.mubr.bf16.mxu0 %v989
    %1732 = vmatmul.mubr.bf16.gmra.mxu0 %v988
    %v1733 = vpop.f32.mrf.mxu0
    %v1734 = vadd.f32 0.0, %v1733
    %v1735 = vpop.f32.mrf.mxu0
    %v1736 = vpop.f32.mrf.mxu0
    %v1737 = vadd.f32 0.0, %v1736
    %v1738 = vpop.f32.mrf.mxu0
    %1739 = vmatprep.mubr.bf16.mxu0 %v993
    %1740 = vmatmul.mubr.bf16.gmra.mxu0 %v992
    %v1741 = vpop.f32.mrf.mxu0
    %v1742 = vadd.f32 0.0, %v1741
    %v1743 = vpop.f32.mrf.mxu0
    %v1744 = vpop.f32.mrf.mxu0
    %v1745 = vadd.f32 0.0, %v1744
    %v1746 = vpop.f32.mrf.mxu0
    %1747 = vmatprep.mubr.bf16.mxu0 %v997
    %1748 = vmatmul.mubr.bf16.gmra.mxu0 %v996
    %v1749 = vpop.f32.mrf.mxu0
    %v1750 = vadd.f32 0.0, %v1749
    %v1751 = vpop.f32.mrf.mxu0
    %v1752 = vpop.f32.mrf.mxu0
    %v1753 = vadd.f32 0.0, %v1752
    %v1754 = vpop.f32.mrf.mxu0
    %1755 = vmatprep.mubr.bf16.mxu0 %v1001
    %1756 = vmatmul.mubr.bf16.gmra.mxu0 %v1000
    %v1757 = vpop.f32.mrf.mxu0
    %v1758 = vadd.f32 0.0, %v1757
    %v1759 = vpop.f32.mrf.mxu0
    %v1760 = vpop.f32.mrf.mxu0
    %v1761 = vadd.f32 0.0, %v1760
    %v1762 = vpop.f32.mrf.mxu0
    %1763 = vmatprep.mubr.bf16.mxu0 %v1005
    %1764 = vmatmul.mubr.bf16.gmra.mxu0 %v1004
    %v1765 = vpop.f32.mrf.mxu0
    %v1766 = vadd.f32 0.0, %v1765
    %v1767 = vpop.f32.mrf.mxu0
    %v1768 = vpop.f32.mrf.mxu0
    %v1769 = vadd.f32 0.0, %v1768
    %v1770 = vpop.f32.mrf.mxu0
    %1771 = vmatprep.mubr.bf16.mxu0 %v1009
    %1772 = vmatmul.mubr.bf16.gmra.mxu0 %v1008
    %v1773 = vpop.f32.mrf.mxu0
    %v1774 = vadd.f32 0.0, %v1773
    %v1775 = vpop.f32.mrf.mxu0
    %v1776 = vpop.f32.mrf.mxu0
    %v1777 = vadd.f32 0.0, %v1776
    %v1778 = vpop.f32.mrf.mxu0
    %1779 = vmatprep.mubr.bf16.mxu0 %v1013
    %1780 = vmatmul.mubr.bf16.gmra.mxu0 %v1012
    %v1781 = vpop.f32.mrf.mxu0
    %v1782 = vadd.f32 0.0, %v1781
    %v1783 = vpop.f32.mrf.mxu0
    %v1784 = vpop.f32.mrf.mxu0
    %v1785 = vadd.f32 0.0, %v1784
    %v1786 = vpop.f32.mrf.mxu0
    %1787 = vmatprep.mubr.bf16.mxu0 %v1017
    %1788 = vmatmul.mubr.bf16.gmra.mxu0 %v1016
    %v1789 = vpop.f32.mrf.mxu0
    %v1790 = vadd.f32 0.0, %v1789
    %v1791 = vpop.f32.mrf.mxu0
    %v1792 = vpop.f32.mrf.mxu0
    %v1793 = vadd.f32 0.0, %v1792
    %v1794 = vpop.f32.mrf.mxu0
    %1795 = vmatprep.mubr.bf16.mxu0 %v1021
    %1796 = vmatmul.mubr.bf16.gmra.mxu0 %v1020
    %v1797 = vpop.f32.mrf.mxu0
    %v1798 = vadd.f32 0.0, %v1797
    %v1799 = vpop.f32.mrf.mxu0
    %v1800 = vpop.f32.mrf.mxu0
    %v1801 = vadd.f32 0.0, %v1800
    %v1802 = vpop.f32.mrf.mxu0
    %1803 = vmatprep.mubr.bf16.mxu0 %v1025
    %1804 = vmatmul.mubr.bf16.gmra.mxu0 %v1024
    %v1805 = vpop.f32.mrf.mxu0
    %v1806 = vadd.f32 0.0, %v1805
    %v1807 = vpop.f32.mrf.mxu0
    %v1808 = vpop.f32.mrf.mxu0
    %v1809 = vadd.f32 0.0, %v1808
    %v1810 = vpop.f32.mrf.mxu0
    %1811 = vmatprep.mubr.bf16.mxu0 %v1029
    %1812 = vmatmul.mubr.bf16.gmra.mxu0 %v1028
    %v1813 = vpop.f32.mrf.mxu0
    %v1814 = vadd.f32 0.0, %v1813
    %v1815 = vpop.f32.mrf.mxu0
    %v1816 = vpop.f32.mrf.mxu0
    %v1817 = vadd.f32 0.0, %v1816
    %v1818 = vpop.f32.mrf.mxu0
    %1819 = vmatprep.mubr.bf16.mxu0 %v1033
    %1820 = vmatmul.mubr.bf16.gmra.mxu0 %v1032
    %v1821 = vpop.f32.mrf.mxu0
    %v1822 = vadd.f32 0.0, %v1821
    %v1823 = vpop.f32.mrf.mxu0
    %v1824 = vpop.f32.mrf.mxu0
    %v1825 = vadd.f32 0.0, %v1824
    %v1826 = vpop.f32.mrf.mxu0
    %1827 = vmatprep.mubr.bf16.mxu0 %v1037
    %1828 = vmatmul.mubr.bf16.gmra.mxu0 %v1036
    %v1829 = vpop.f32.mrf.mxu0
    %v1830 = vadd.f32 0.0, %v1829
    %v1831 = vpop.f32.mrf.mxu0
    %v1832 = vpop.f32.mrf.mxu0
    %v1833 = vadd.f32 0.0, %v1832
    %v1834 = vpop.f32.mrf.mxu0
    %1835 = vmatprep.mubr.bf16.mxu0 %v1041
    %1836 = vmatmul.mubr.bf16.gmra.mxu0 %v1040
    %v1837 = vpop.f32.mrf.mxu0
    %v1838 = vadd.f32 0.0, %v1837
    %v1839 = vpop.f32.mrf.mxu0
    %v1840 = vpop.f32.mrf.mxu0
    %v1841 = vadd.f32 0.0, %v1840
    %v1842 = vpop.f32.mrf.mxu0
    %1843 = vmatprep.mubr.bf16.mxu0 %v1045
    %1844 = vmatmul.mubr.bf16.gmra.mxu0 %v1044
    %v1845 = vpop.f32.mrf.mxu0
    %v1846 = vadd.f32 0.0, %v1845
    %v1847 = vpop.f32.mrf.mxu0
    %v1848 = vpop.f32.mrf.mxu0
    %v1849 = vadd.f32 0.0, %v1848
    %v1850 = vpop.f32.mrf.mxu0
    %1851 = vmatprep.mubr.bf16.mxu0 %v1049
    %1852 = vmatmul.mubr.bf16.gmra.mxu0 %v1048
    %v1853 = vpop.f32.mrf.mxu0
    %v1854 = vadd.f32 0.0, %v1853
    %v1855 = vpop.f32.mrf.mxu0
    %v1856 = vpop.f32.mrf.mxu0
    %v1857 = vadd.f32 0.0, %v1856
    %v1858 = vpop.f32.mrf.mxu0
    %1859 = vmatprep.mubr.bf16.mxu0 %v1053
    %1860 = vmatmul.mubr.bf16.gmra.mxu0 %v1052
    %v1861 = vpop.f32.mrf.mxu0
    %v1862 = vadd.f32 0.0, %v1861
    %v1863 = vpop.f32.mrf.mxu0
    %v1864 = vpop.f32.mrf.mxu0
    %v1865 = vadd.f32 0.0, %v1864
    %v1866 = vpop.f32.mrf.mxu0
    %1867 = vmatprep.mubr.bf16.mxu0 %v1057
    %1868 = vmatmul.mubr.bf16.gmra.mxu0 %v1056
    %v1869 = vpop.f32.mrf.mxu0
    %v1870 = vadd.f32 0.0, %v1869
    %v1871 = vpop.f32.mrf.mxu0
    %v1872 = vpop.f32.mrf.mxu0
    %v1873 = vadd.f32 0.0, %v1872
    %v1874 = vpop.f32.mrf.mxu0
    %1875 = vmatprep.mubr.bf16.mxu0 %v1061
    %1876 = vmatmul.mubr.bf16.gmra.mxu0 %v1060
    %v1877 = vpop.f32.mrf.mxu0
    %v1878 = vadd.f32 0.0, %v1877
    %v1879 = vpop.f32.mrf.mxu0
    %v1880 = vpop.f32.mrf.mxu0
    %v1881 = vadd.f32 0.0, %v1880
    %v1882 = vpop.f32.mrf.mxu0
    %1883 = vmatprep.mubr.bf16.mxu0 %v1065
    %1884 = vmatmul.mubr.bf16.gmra.mxu0 %v1064
    %v1885 = vpop.f32.mrf.mxu0
    %v1886 = vadd.f32 0.0, %v1885
    %v1887 = vpop.f32.mrf.mxu0
    %v1888 = vpop.f32.mrf.mxu0
    %v1889 = vadd.f32 0.0, %v1888
    %v1890 = vpop.f32.mrf.mxu0
    %1891 = vmatprep.mubr.bf16.mxu0 %v1069
    %1892 = vmatmul.mubr.bf16.gmra.mxu0 %v1068
    %v1893 = vpop.f32.mrf.mxu0
    %v1894 = vadd.f32 0.0, %v1893
    %v1895 = vpop.f32.mrf.mxu0
    %v1896 = vpop.f32.mrf.mxu0
    %v1897 = vadd.f32 0.0, %v1896
    %v1898 = vpop.f32.mrf.mxu0
    %1899 = vmatprep.mubr.bf16.mxu0 %v1073
    %1900 = vmatmul.mubr.bf16.gmra.mxu0 %v1072
    %v1901 = vpop.f32.mrf.mxu0
    %v1902 = vadd.f32 0.0, %v1901
    %v1903 = vpop.f32.mrf.mxu0
    %v1904 = vpop.f32.mrf.mxu0
    %v1905 = vadd.f32 0.0, %v1904
    %v1906 = vpop.f32.mrf.mxu0
    %1907 = vmatprep.mubr.bf16.mxu0 %v1077
    %1908 = vmatmul.mubr.bf16.gmra.mxu0 %v1076
    %v1909 = vpop.f32.mrf.mxu0
    %v1910 = vadd.f32 0.0, %v1909
    %v1911 = vpop.f32.mrf.mxu0
    %v1912 = vpop.f32.mrf.mxu0
    %v1913 = vadd.f32 0.0, %v1912
    %v1914 = vpop.f32.mrf.mxu0
    %1915 = vmatprep.mubr.bf16.mxu0 %v1081
    %1916 = vmatmul.mubr.bf16.gmra.mxu0 %v1080
    %v1917 = vpop.f32.mrf.mxu0
    %v1918 = vadd.f32 0.0, %v1917
    %v1919 = vpop.f32.mrf.mxu0
    %v1920 = vpop.f32.mrf.mxu0
    %v1921 = vadd.f32 0.0, %v1920
    %v1922 = vpop.f32.mrf.mxu0
    %1923 = vmatprep.mubr.bf16.mxu0 %v1085
    %1924 = vmatmul.mubr.bf16.gmra.mxu0 %v1084
    %v1925 = vpop.f32.mrf.mxu0
    %v1926 = vadd.f32 0.0, %v1925
    %v1927 = vpop.f32.mrf.mxu0
    %v1928 = vpop.f32.mrf.mxu0
    %v1929 = vadd.f32 0.0, %v1928
    %v1930 = vpop.f32.mrf.mxu0
    %1931 = vmatprep.mubr.bf16.mxu0 %v1089
    %1932 = vmatmul.mubr.bf16.gmra.mxu0 %v1088
    %v1933 = vpop.f32.mrf.mxu0
    %v1934 = vadd.f32 0.0, %v1933
    %v1935 = vpop.f32.mrf.mxu0
    %v1936 = vpop.f32.mrf.mxu0
    %v1937 = vadd.f32 0.0, %v1936
    %v1938 = vpop.f32.mrf.mxu0
    %1939 = vmatprep.mubr.bf16.mxu0 %v1093
    %1940 = vmatmul.mubr.bf16.gmra.mxu0 %v1092
    %v1941 = vpop.f32.mrf.mxu0
    %v1942 = vadd.f32 0.0, %v1941
    %v1943 = vpop.f32.mrf.mxu0
    %v1944 = vpop.f32.mrf.mxu0
    %v1945 = vadd.f32 0.0, %v1944
    %v1946 = vpop.f32.mrf.mxu0
    %1947 = vmatprep.mubr.bf16.mxu0 %v1097
    %1948 = vmatmul.mubr.bf16.gmra.mxu0 %v1096
    %v1949 = vpop.f32.mrf.mxu0
    %v1950 = vadd.f32 0.0, %v1949
    %v1951 = vpop.f32.mrf.mxu0
    %v1952 = vpop.f32.mrf.mxu0
    %v1953 = vadd.f32 0.0, %v1952
    %v1954 = vpop.f32.mrf.mxu0
    %1955 = vmatprep.mubr.bf16.mxu0 %v1101
    %1956 = vmatmul.mubr.bf16.gmra.mxu0 %v1100
    %v1957 = vpop.f32.mrf.mxu0
    %v1958 = vadd.f32 0.0, %v1957
    %v1959 = vpop.f32.mrf.mxu0
    %v1960 = vpop.f32.mrf.mxu0
    %v1961 = vadd.f32 0.0, %v1960
    %v1962 = vpop.f32.mrf.mxu0
    %1963 = vmatprep.mubr.bf16.mxu0 %v1105
    %1964 = vmatmul.mubr.bf16.gmra.mxu0 %v1104
    %v1965 = vpop.f32.mrf.mxu0
    %v1966 = vadd.f32 0.0, %v1965
    %v1967 = vpop.f32.mrf.mxu0
    %v1968 = vpop.f32.mrf.mxu0
    %v1969 = vadd.f32 0.0, %v1968
    %v1970 = vpop.f32.mrf.mxu0
    %1971 = vmatprep.mubr.bf16.mxu0 %v1109
    %1972 = vmatmul.mubr.bf16.gmra.mxu0 %v1108
    %v1973 = vpop.f32.mrf.mxu0
    %v1974 = vadd.f32 0.0, %v1973
    %v1975 = vpop.f32.mrf.mxu0
    %v1976 = vpop.f32.mrf.mxu0
    %v1977 = vadd.f32 0.0, %v1976
    %v1978 = vpop.f32.mrf.mxu0
    %1979 = vmatprep.mubr.bf16.mxu0 %v1113
    %1980 = vmatmul.mubr.bf16.gmra.mxu0 %v1112
    %v1981 = vpop.f32.mrf.mxu0
    %v1982 = vadd.f32 0.0, %v1981
    %v1983 = vpop.f32.mrf.mxu0
    %v1984 = vpop.f32.mrf.mxu0
    %v1985 = vadd.f32 0.0, %v1984
    %v1986 = vpop.f32.mrf.mxu0
    %1987 = vmatprep.mubr.bf16.mxu0 %v1117
    %1988 = vmatmul.mubr.bf16.gmra.mxu0 %v1116
    %v1989 = vpop.f32.mrf.mxu0
    %v1990 = vadd.f32 0.0, %v1989
    %v1991 = vpop.f32.mrf.mxu0
    %v1992 = vpop.f32.mrf.mxu0
    %v1993 = vadd.f32 0.0, %v1992
    %v1994 = vpop.f32.mrf.mxu0
    %1995 = vmatprep.mubr.bf16.mxu0 %v1121
    %1996 = vmatmul.mubr.bf16.gmra.mxu0 %v1120
    %v1997 = vpop.f32.mrf.mxu0
    %v1998 = vadd.f32 0.0, %v1997
    %v1999 = vpop.f32.mrf.mxu0
    %v2000 = vpop.f32.mrf.mxu0
    %v2001 = vadd.f32 0.0, %v2000
    %v2002 = vpop.f32.mrf.mxu0
    %2003 = vmatprep.mubr.bf16.mxu0 %v1125
    %2004 = vmatmul.mubr.bf16.gmra.mxu0 %v1124
    %v2005 = vpop.f32.mrf.mxu0
    %v2006 = vadd.f32 0.0, %v2005
    %v2007 = vpop.f32.mrf.mxu0
    %v2008 = vpop.f32.mrf.mxu0
    %v2009 = vadd.f32 0.0, %v2008
    %v2010 = vpop.f32.mrf.mxu0
    %2011 = vmatprep.mubr.bf16.mxu0 %v1129
    %2012 = vmatmul.mubr.bf16.gmra.mxu0 %v1128
    %v2013 = vpop.f32.mrf.mxu0
    %v2014 = vadd.f32 0.0, %v2013
    %v2015 = vpop.f32.mrf.mxu0
    %v2016 = vpop.f32.mrf.mxu0
    %v2017 = vadd.f32 0.0, %v2016
    %v2018 = vpop.f32.mrf.mxu0
    %2019 = vmatprep.mubr.bf16.mxu0 %v1133
    %2020 = vmatmul.mubr.bf16.gmra.mxu0 %v1132
    %v2021 = vpop.f32.mrf.mxu0
    %v2022 = vadd.f32 0.0, %v2021
    %v2023 = vpop.f32.mrf.mxu0
    %v2024 = vpop.f32.mrf.mxu0
    %v2025 = vadd.f32 0.0, %v2024
    %v2026 = vpop.f32.mrf.mxu0
    %2027 = vmatprep.mubr.bf16.mxu0 %v1137
    %2028 = vmatmul.mubr.bf16.gmra.mxu0 %v1136
    %v2029 = vpop.f32.mrf.mxu0
    %v2030 = vadd.f32 0.0, %v2029
    %v2031 = vpop.f32.mrf.mxu0
    %v2032 = vpop.f32.mrf.mxu0
    %v2033 = vadd.f32 0.0, %v2032
    %v2034 = vpop.f32.mrf.mxu0
    %2035 = vmatprep.mubr.bf16.mxu0 %v1141
    %2036 = vmatmul.mubr.bf16.gmra.mxu0 %v1140
    %v2037 = vpop.f32.mrf.mxu0
    %v2038 = vadd.f32 0.0, %v2037
    %v2039 = vpop.f32.mrf.mxu0
    %v2040 = vpop.f32.mrf.mxu0
    %v2041 = vadd.f32 0.0, %v2040
    %v2042 = vpop.f32.mrf.mxu0
    %2043 = vdwg.mxu0
    %2044 = vmatprep.subr.bf16.mxu0 0
    %2045 = vmatpush1.bf16.msra.mxu0 %v1434
    %2046 = vmatprep.subr.bf16.mxu0 0
    %2047 = vmatpush1.bf16.msra.mxu0 %v1433
    %2048 = vmatprep.subr.bf16.mxu0 0
    %2049 = vmatpush1.bf16.msra.mxu0 %v1432
    %2050 = vmatprep.subr.bf16.mxu0 0
    %2051 = vmatpush1.bf16.msra.mxu0 %v1431
    %2052 = vmatprep.subr.bf16.mxu0 0
    %2053 = vmatpush1.bf16.msra.mxu0 %v1430
    %2054 = vmatprep.subr.bf16.mxu0 0
    %2055 = vmatpush1.bf16.msra.mxu0 %v1429
    %2056 = vmatprep.subr.bf16.mxu0 0
    %2057 = vmatpush1.bf16.msra.mxu0 %v1428
    %2058 = vmatprep.subr.bf16.mxu0 0
    %2059 = vmatpush1.bf16.msra.mxu0 %v1427
    %2060 = vmatprep.subr.bf16.mxu0 0
    %2061 = vmatpush2.bf16.msra.mxu0 0
    %2062 = vmatprep.subr.bf16.mxu0 0
    %2063 = vmatpush2.bf16.msra.mxu0 0
    %2064 = vmatprep.subr.bf16.mxu0 0
    %2065 = vmatpush2.bf16.msra.mxu0 %v1440
    %2066 = vmatprep.subr.bf16.mxu0 0
    %2067 = vmatpush2.bf16.msra.mxu0 %v1439
    %2068 = vmatprep.subr.bf16.mxu0 0
    %2069 = vmatpush2.bf16.msra.mxu0 %v1438
    %2070 = vmatprep.subr.bf16.mxu0 0
    %2071 = vmatpush2.bf16.msra.mxu0 %v1437
    %2072 = vmatprep.subr.bf16.mxu0 0
    %2073 = vmatpush2.bf16.msra.mxu0 %v1436
    %2074 = vmatprep.subr.bf16.mxu0 0
    %2075 = vmatpush2.bf16.msra.mxu0 %v1435
    %2076 = vmatprep.mubr.bf16.mxu0 %v1473
    %2077 = vmatmul.mubr.bf16.gmra.mxu0 %v950
    %v2078 = vpop.f32.mrf.mxu0
    %v2079 = vadd.f32 %v1654, %v2078
    %v2080 = vpop.f32.mrf.mxu0
    %v2081 = vpop.f32.mrf.mxu0
    %v2082 = vadd.f32 %v1657, %v2081
    %v2083 = vpop.f32.mrf.mxu0
    %2084 = vmatprep.mubr.bf16.mxu0 %v1476
    %2085 = vmatmul.mubr.bf16.gmra.mxu0 %v954
    %v2086 = vpop.f32.mrf.mxu0
    %v2087 = vadd.f32 %v1662, %v2086
    %v2088 = vpop.f32.mrf.mxu0
    %v2089 = vpop.f32.mrf.mxu0
    %v2090 = vadd.f32 %v1665, %v2089
    %v2091 = vpop.f32.mrf.mxu0
    %2092 = vmatprep.mubr.bf16.mxu0 %v1479
    %2093 = vmatmul.mubr.bf16.gmra.mxu0 %v958
    %v2094 = vpop.f32.mrf.mxu0
    %v2095 = vadd.f32 %v1670, %v2094
    %v2096 = vpop.f32.mrf.mxu0
    %v2097 = vpop.f32.mrf.mxu0
    %v2098 = vadd.f32 %v1673, %v2097
    %v2099 = vpop.f32.mrf.mxu0
    %2100 = vmatprep.mubr.bf16.mxu0 %v1482
    %2101 = vmatmul.mubr.bf16.gmra.mxu0 %v962
    %v2102 = vpop.f32.mrf.mxu0
    %v2103 = vadd.f32 %v1678, %v2102
    %v2104 = vpop.f32.mrf.mxu0
    %v2105 = vpop.f32.mrf.mxu0
    %v2106 = vadd.f32 %v1681, %v2105
    %v2107 = vpop.f32.mrf.mxu0
    %2108 = vmatprep.mubr.bf16.mxu0 %v1485
    %2109 = vmatmul.mubr.bf16.gmra.mxu0 %v966
    %v2110 = vpop.f32.mrf.mxu0
    %v2111 = vadd.f32 %v1686, %v2110
    %v2112 = vpop.f32.mrf.mxu0
    %v2113 = vpop.f32.mrf.mxu0
    %v2114 = vadd.f32 %v1689, %v2113
    %v2115 = vpop.f32.mrf.mxu0
    %2116 = vmatprep.mubr.bf16.mxu0 %v1488
    %2117 = vmatmul.mubr.bf16.gmra.mxu0 %v970
    %v2118 = vpop.f32.mrf.mxu0
    %v2119 = vadd.f32 %v1694, %v2118
    %v2120 = vpop.f32.mrf.mxu0
    %v2121 = vpop.f32.mrf.mxu0
    %v2122 = vadd.f32 %v1697, %v2121
    %v2123 = vpop.f32.mrf.mxu0
    %2124 = vmatprep.mubr.bf16.mxu0 %v1491
    %2125 = vmatmul.mubr.bf16.gmra.mxu0 %v974
    %v2126 = vpop.f32.mrf.mxu0
    %v2127 = vadd.f32 %v1702, %v2126
    %v2128 = vpop.f32.mrf.mxu0
    %v2129 = vpop.f32.mrf.mxu0
    %v2130 = vadd.f32 %v1705, %v2129
    %v2131 = vpop.f32.mrf.mxu0
    %2132 = vmatprep.mubr.bf16.mxu0 %v1494
    %2133 = vmatmul.mubr.bf16.gmra.mxu0 %v978
    %v2134 = vpop.f32.mrf.mxu0
    %v2135 = vadd.f32 %v1710, %v2134
    %v2136 = vpop.f32.mrf.mxu0
    %v2137 = vpop.f32.mrf.mxu0
    %v2138 = vadd.f32 %v1713, %v2137
    %v2139 = vpop.f32.mrf.mxu0
    %2140 = vmatprep.mubr.bf16.mxu0 %v1497
    %2141 = vmatmul.mubr.bf16.gmra.mxu0 %v982
    %v2142 = vpop.f32.mrf.mxu0
    %v2143 = vadd.f32 %v1718, %v2142
    %v2144 = vpop.f32.mrf.mxu0
    %v2145 = vpop.f32.mrf.mxu0
    %v2146 = vadd.f32 %v1721, %v2145
    %v2147 = vpop.f32.mrf.mxu0
    %2148 = vmatprep.mubr.bf16.mxu0 %v1500
    %2149 = vmatmul.mubr.bf16.gmra.mxu0 %v986
    %v2150 = vpop.f32.mrf.mxu0
    %v2151 = vadd.f32 %v1726, %v2150
    %v2152 = vpop.f32.mrf.mxu0
    %v2153 = vpop.f32.mrf.mxu0
    %v2154 = vadd.f32 %v1729, %v2153
    %v2155 = vpop.f32.mrf.mxu0
    %2156 = vmatprep.mubr.bf16.mxu0 %v1503
    %2157 = vmatmul.mubr.bf16.gmra.mxu0 %v990
    %v2158 = vpop.f32.mrf.mxu0
    %v2159 = vadd.f32 %v1734, %v2158
    %v2160 = vpop.f32.mrf.mxu0
    %v2161 = vpop.f32.mrf.mxu0
    %v2162 = vadd.f32 %v1737, %v2161
    %v2163 = vpop.f32.mrf.mxu0
    %2164 = vmatprep.mubr.bf16.mxu0 %v1506
    %2165 = vmatmul.mubr.bf16.gmra.mxu0 %v994
    %v2166 = vpop.f32.mrf.mxu0
    %v2167 = vadd.f32 %v1742, %v2166
    %v2168 = vpop.f32.mrf.mxu0
    %v2169 = vpop.f32.mrf.mxu0
    %v2170 = vadd.f32 %v1745, %v2169
    %v2171 = vpop.f32.mrf.mxu0
    %2172 = vmatprep.mubr.bf16.mxu0 %v1509
    %2173 = vmatmul.mubr.bf16.gmra.mxu0 %v998
    %v2174 = vpop.f32.mrf.mxu0
    %v2175 = vadd.f32 %v1750, %v2174
    %v2176 = vpop.f32.mrf.mxu0
    %v2177 = vpop.f32.mrf.mxu0
    %v2178 = vadd.f32 %v1753, %v2177
    %v2179 = vpop.f32.mrf.mxu0
    %2180 = vmatprep.mubr.bf16.mxu0 %v1512
    %2181 = vmatmul.mubr.bf16.gmra.mxu0 %v1002
    %v2182 = vpop.f32.mrf.mxu0
    %v2183 = vadd.f32 %v1758, %v2182
    %v2184 = vpop.f32.mrf.mxu0
    %v2185 = vpop.f32.mrf.mxu0
    %v2186 = vadd.f32 %v1761, %v2185
    %v2187 = vpop.f32.mrf.mxu0
    %2188 = vmatprep.mubr.bf16.mxu0 %v1515
    %2189 = vmatmul.mubr.bf16.gmra.mxu0 %v1006
    %v2190 = vpop.f32.mrf.mxu0
    %v2191 = vadd.f32 %v1766, %v2190
    %v2192 = vpop.f32.mrf.mxu0
    %v2193 = vpop.f32.mrf.mxu0
    %v2194 = vadd.f32 %v1769, %v2193
    %v2195 = vpop.f32.mrf.mxu0
    %2196 = vmatprep.mubr.bf16.mxu0 %v1518
    %2197 = vmatmul.mubr.bf16.gmra.mxu0 %v1010
    %v2198 = vpop.f32.mrf.mxu0
    %v2199 = vadd.f32 %v1774, %v2198
    %v2200 = vpop.f32.mrf.mxu0
    %v2201 = vpop.f32.mrf.mxu0
    %v2202 = vadd.f32 %v1777, %v2201
    %v2203 = vpop.f32.mrf.mxu0
    %2204 = vmatprep.mubr.bf16.mxu0 %v1521
    %2205 = vmatmul.mubr.bf16.gmra.mxu0 %v1014
    %v2206 = vpop.f32.mrf.mxu0
    %v2207 = vadd.f32 %v1782, %v2206
    %v2208 = vpop.f32.mrf.mxu0
    %v2209 = vpop.f32.mrf.mxu0
    %v2210 = vadd.f32 %v1785, %v2209
    %v2211 = vpop.f32.mrf.mxu0
    %2212 = vmatprep.mubr.bf16.mxu0 %v1524
    %2213 = vmatmul.mubr.bf16.gmra.mxu0 %v1018
    %v2214 = vpop.f32.mrf.mxu0
    %v2215 = vadd.f32 %v1790, %v2214
    %v2216 = vpop.f32.mrf.mxu0
    %v2217 = vpop.f32.mrf.mxu0
    %v2218 = vadd.f32 %v1793, %v2217
    %v2219 = vpop.f32.mrf.mxu0
    %2220 = vmatprep.mubr.bf16.mxu0 %v1527
    %2221 = vmatmul.mubr.bf16.gmra.mxu0 %v1022
    %v2222 = vpop.f32.mrf.mxu0
    %v2223 = vadd.f32 %v1798, %v2222
    %v2224 = vpop.f32.mrf.mxu0
    %v2225 = vpop.f32.mrf.mxu0
    %v2226 = vadd.f32 %v1801, %v2225
    %v2227 = vpop.f32.mrf.mxu0
    %2228 = vmatprep.mubr.bf16.mxu0 %v1530
    %2229 = vmatmul.mubr.bf16.gmra.mxu0 %v1026
    %v2230 = vpop.f32.mrf.mxu0
    %v2231 = vadd.f32 %v1806, %v2230
    %v2232 = vpop.f32.mrf.mxu0
    %v2233 = vpop.f32.mrf.mxu0
    %v2234 = vadd.f32 %v1809, %v2233
    %v2235 = vpop.f32.mrf.mxu0
    %2236 = vmatprep.mubr.bf16.mxu0 %v1533
    %2237 = vmatmul.mubr.bf16.gmra.mxu0 %v1030
    %v2238 = vpop.f32.mrf.mxu0
    %v2239 = vadd.f32 %v1814, %v2238
    %v2240 = vpop.f32.mrf.mxu0
    %v2241 = vpop.f32.mrf.mxu0
    %v2242 = vadd.f32 %v1817, %v2241
    %v2243 = vpop.f32.mrf.mxu0
    %2244 = vmatprep.mubr.bf16.mxu0 %v1536
    %2245 = vmatmul.mubr.bf16.gmra.mxu0 %v1034
    %v2246 = vpop.f32.mrf.mxu0
    %v2247 = vadd.f32 %v1822, %v2246
    %v2248 = vpop.f32.mrf.mxu0
    %v2249 = vpop.f32.mrf.mxu0
    %v2250 = vadd.f32 %v1825, %v2249
    %v2251 = vpop.f32.mrf.mxu0
    %2252 = vmatprep.mubr.bf16.mxu0 %v1539
    %2253 = vmatmul.mubr.bf16.gmra.mxu0 %v1038
    %v2254 = vpop.f32.mrf.mxu0
    %v2255 = vadd.f32 %v1830, %v2254
    %v2256 = vpop.f32.mrf.mxu0
    %v2257 = vpop.f32.mrf.mxu0
    %v2258 = vadd.f32 %v1833, %v2257
    %v2259 = vpop.f32.mrf.mxu0
    %2260 = vmatprep.mubr.bf16.mxu0 %v1542
    %2261 = vmatmul.mubr.bf16.gmra.mxu0 %v1042
    %v2262 = vpop.f32.mrf.mxu0
    %v2263 = vadd.f32 %v1838, %v2262
    %v2264 = vpop.f32.mrf.mxu0
    %v2265 = vpop.f32.mrf.mxu0
    %v2266 = vadd.f32 %v1841, %v2265
    %v2267 = vpop.f32.mrf.mxu0
    %2268 = vmatprep.mubr.bf16.mxu0 %v1545
    %2269 = vmatmul.mubr.bf16.gmra.mxu0 %v1046
    %v2270 = vpop.f32.mrf.mxu0
    %v2271 = vadd.f32 %v1846, %v2270
    %v2272 = vpop.f32.mrf.mxu0
    %v2273 = vpop.f32.mrf.mxu0
    %v2274 = vadd.f32 %v1849, %v2273
    %v2275 = vpop.f32.mrf.mxu0
    %2276 = vmatprep.mubr.bf16.mxu0 %v1548
    %2277 = vmatmul.mubr.bf16.gmra.mxu0 %v1050
    %v2278 = vpop.f32.mrf.mxu0
    %v2279 = vadd.f32 %v1854, %v2278
    %v2280 = vpop.f32.mrf.mxu0
    %v2281 = vpop.f32.mrf.mxu0
    %v2282 = vadd.f32 %v1857, %v2281
    %v2283 = vpop.f32.mrf.mxu0
    %2284 = vmatprep.mubr.bf16.mxu0 %v1551
    %2285 = vmatmul.mubr.bf16.gmra.mxu0 %v1054
    %v2286 = vpop.f32.mrf.mxu0
    %v2287 = vadd.f32 %v1862, %v2286
    %v2288 = vpop.f32.mrf.mxu0
    %v2289 = vpop.f32.mrf.mxu0
    %v2290 = vadd.f32 %v1865, %v2289
    %v2291 = vpop.f32.mrf.mxu0
    %2292 = vmatprep.mubr.bf16.mxu0 %v1554
    %2293 = vmatmul.mubr.bf16.gmra.mxu0 %v1058
    %v2294 = vpop.f32.mrf.mxu0
    %v2295 = vadd.f32 %v1870, %v2294
    %v2296 = vpop.f32.mrf.mxu0
    %v2297 = vpop.f32.mrf.mxu0
    %v2298 = vadd.f32 %v1873, %v2297
    %v2299 = vpop.f32.mrf.mxu0
    %2300 = vmatprep.mubr.bf16.mxu0 %v1557
    %2301 = vmatmul.mubr.bf16.gmra.mxu0 %v1062
    %v2302 = vpop.f32.mrf.mxu0
    %v2303 = vadd.f32 %v1878, %v2302
    %v2304 = vpop.f32.mrf.mxu0
    %v2305 = vpop.f32.mrf.mxu0
    %v2306 = vadd.f32 %v1881, %v2305
    %v2307 = vpop.f32.mrf.mxu0
    %2308 = vmatprep.mubr.bf16.mxu0 %v1560
    %2309 = vmatmul.mubr.bf16.gmra.mxu0 %v1066
    %v2310 = vpop.f32.mrf.mxu0
    %v2311 = vadd.f32 %v1886, %v2310
    %v2312 = vpop.f32.mrf.mxu0
    %v2313 = vpop.f32.mrf.mxu0
    %v2314 = vadd.f32 %v1889, %v2313
    %v2315 = vpop.f32.mrf.mxu0
    %2316 = vmatprep.mubr.bf16.mxu0 %v1563
    %2317 = vmatmul.mubr.bf16.gmra.mxu0 %v1070
    %v2318 = vpop.f32.mrf.mxu0
    %v2319 = vadd.f32 %v1894, %v2318
    %v2320 = vpop.f32.mrf.mxu0
    %v2321 = vpop.f32.mrf.mxu0
    %v2322 = vadd.f32 %v1897, %v2321
    %v2323 = vpop.f32.mrf.mxu0
    %2324 = vmatprep.mubr.bf16.mxu0 %v1566
    %2325 = vmatmul.mubr.bf16.gmra.mxu0 %v1074
    %v2326 = vpop.f32.mrf.mxu0
    %v2327 = vadd.f32 %v1902, %v2326
    %v2328 = vpop.f32.mrf.mxu0
    %v2329 = vpop.f32.mrf.mxu0
    %v2330 = vadd.f32 %v1905, %v2329
    %v2331 = vpop.f32.mrf.mxu0
    %2332 = vmatprep.mubr.bf16.mxu0 %v1569
    %2333 = vmatmul.mubr.bf16.gmra.mxu0 %v1078
    %v2334 = vpop.f32.mrf.mxu0
    %v2335 = vadd.f32 %v1910, %v2334
    %v2336 = vpop.f32.mrf.mxu0
    %v2337 = vpop.f32.mrf.mxu0
    %v2338 = vadd.f32 %v1913, %v2337
    %v2339 = vpop.f32.mrf.mxu0
    %2340 = vmatprep.mubr.bf16.mxu0 %v1572
    %2341 = vmatmul.mubr.bf16.gmra.mxu0 %v1082
    %v2342 = vpop.f32.mrf.mxu0
    %v2343 = vadd.f32 %v1918, %v2342
    %v2344 = vpop.f32.mrf.mxu0
    %v2345 = vpop.f32.mrf.mxu0
    %v2346 = vadd.f32 %v1921, %v2345
    %v2347 = vpop.f32.mrf.mxu0
    %2348 = vmatprep.mubr.bf16.mxu0 %v1575
    %2349 = vmatmul.mubr.bf16.gmra.mxu0 %v1086
    %v2350 = vpop.f32.mrf.mxu0
    %v2351 = vadd.f32 %v1926, %v2350
    %v2352 = vpop.f32.mrf.mxu0
    %v2353 = vpop.f32.mrf.mxu0
    %v2354 = vadd.f32 %v1929, %v2353
    %v2355 = vpop.f32.mrf.mxu0
    %2356 = vmatprep.mubr.bf16.mxu0 %v1578
    %2357 = vmatmul.mubr.bf16.gmra.mxu0 %v1090
    %v2358 = vpop.f32.mrf.mxu0
    %v2359 = vadd.f32 %v1934, %v2358
    %v2360 = vpop.f32.mrf.mxu0
    %v2361 = vpop.f32.mrf.mxu0
    %v2362 = vadd.f32 %v1937, %v2361
    %v2363 = vpop.f32.mrf.mxu0
    %2364 = vmatprep.mubr.bf16.mxu0 %v1581
    %2365 = vmatmul.mubr.bf16.gmra.mxu0 %v1094
    %v2366 = vpop.f32.mrf.mxu0
    %v2367 = vadd.f32 %v1942, %v2366
    %v2368 = vpop.f32.mrf.mxu0
    %v2369 = vpop.f32.mrf.mxu0
    %v2370 = vadd.f32 %v1945, %v2369
    %v2371 = vpop.f32.mrf.mxu0
    %2372 = vmatprep.mubr.bf16.mxu0 %v1584
    %2373 = vmatmul.mubr.bf16.gmra.mxu0 %v1098
    %v2374 = vpop.f32.mrf.mxu0
    %v2375 = vadd.f32 %v1950, %v2374
    %v2376 = vpop.f32.mrf.mxu0
    %v2377 = vpop.f32.mrf.mxu0
    %v2378 = vadd.f32 %v1953, %v2377
    %v2379 = vpop.f32.mrf.mxu0
    %2380 = vmatprep.mubr.bf16.mxu0 %v1587
    %2381 = vmatmul.mubr.bf16.gmra.mxu0 %v1102
    %v2382 = vpop.f32.mrf.mxu0
    %v2383 = vadd.f32 %v1958, %v2382
    %v2384 = vpop.f32.mrf.mxu0
    %v2385 = vpop.f32.mrf.mxu0
    %v2386 = vadd.f32 %v1961, %v2385
    %v2387 = vpop.f32.mrf.mxu0
    %2388 = vmatprep.mubr.bf16.mxu0 %v1590
    %2389 = vmatmul.mubr.bf16.gmra.mxu0 %v1106
    %v2390 = vpop.f32.mrf.mxu0
    %v2391 = vadd.f32 %v1966, %v2390
    %v2392 = vpop.f32.mrf.mxu0
    %v2393 = vpop.f32.mrf.mxu0
    %v2394 = vadd.f32 %v1969, %v2393
    %v2395 = vpop.f32.mrf.mxu0
    %2396 = vmatprep.mubr.bf16.mxu0 %v1593
    %2397 = vmatmul.mubr.bf16.gmra.mxu0 %v1110
    %v2398 = vpop.f32.mrf.mxu0
    %v2399 = vadd.f32 %v1974, %v2398
    %v2400 = vpop.f32.mrf.mxu0
    %v2401 = vpop.f32.mrf.mxu0
    %v2402 = vadd.f32 %v1977, %v2401
    %v2403 = vpop.f32.mrf.mxu0
    %2404 = vmatprep.mubr.bf16.mxu0 %v1596
    %2405 = vmatmul.mubr.bf16.gmra.mxu0 %v1114
    %v2406 = vpop.f32.mrf.mxu0
    %v2407 = vadd.f32 %v1982, %v2406
    %v2408 = vpop.f32.mrf.mxu0
    %v2409 = vpop.f32.mrf.mxu0
    %v2410 = vadd.f32 %v1985, %v2409
    %v2411 = vpop.f32.mrf.mxu0
    %2412 = vmatprep.mubr.bf16.mxu0 %v1599
    %2413 = vmatmul.mubr.bf16.gmra.mxu0 %v1118
    %v2414 = vpop.f32.mrf.mxu0
    %v2415 = vadd.f32 %v1990, %v2414
    %v2416 = vpop.f32.mrf.mxu0
    %v2417 = vpop.f32.mrf.mxu0
    %v2418 = vadd.f32 %v1993, %v2417
    %v2419 = vpop.f32.mrf.mxu0
    %2420 = vmatprep.mubr.bf16.mxu0 %v1602
    %2421 = vmatmul.mubr.bf16.gmra.mxu0 %v1122
    %v2422 = vpop.f32.mrf.mxu0
    %v2423 = vadd.f32 %v1998, %v2422
    %v2424 = vpop.f32.mrf.mxu0
    %v2425 = vpop.f32.mrf.mxu0
    %v2426 = vadd.f32 %v2001, %v2425
    %v2427 = vpop.f32.mrf.mxu0
    %2428 = vmatprep.mubr.bf16.mxu0 %v1605
    %2429 = vmatmul.mubr.bf16.gmra.mxu0 %v1126
    %v2430 = vpop.f32.mrf.mxu0
    %v2431 = vadd.f32 %v2006, %v2430
    %v2432 = vpop.f32.mrf.mxu0
    %v2433 = vpop.f32.mrf.mxu0
    %v2434 = vadd.f32 %v2009, %v2433
    %v2435 = vpop.f32.mrf.mxu0
    %2436 = vmatprep.mubr.bf16.mxu0 %v1608
    %2437 = vmatmul.mubr.bf16.gmra.mxu0 %v1130
    %v2438 = vpop.f32.mrf.mxu0
    %v2439 = vadd.f32 %v2014, %v2438
    %v2440 = vpop.f32.mrf.mxu0
    %v2441 = vpop.f32.mrf.mxu0
    %v2442 = vadd.f32 %v2017, %v2441
    %v2443 = vpop.f32.mrf.mxu0
    %2444 = vmatprep.mubr.bf16.mxu0 %v1611
    %2445 = vmatmul.mubr.bf16.gmra.mxu0 %v1134
    %v2446 = vpop.f32.mrf.mxu0
    %v2447 = vadd.f32 %v2022, %v2446
    %v2448 = vpop.f32.mrf.mxu0
    %v2449 = vpop.f32.mrf.mxu0
    %v2450 = vadd.f32 %v2025, %v2449
    %v2451 = vpop.f32.mrf.mxu0
    %2452 = vmatprep.mubr.bf16.mxu0 %v1614
    %2453 = vmatmul.mubr.bf16.gmra.mxu0 %v1138
    %v2454 = vpop.f32.mrf.mxu0
    %v2455 = vadd.f32 %v2030, %v2454
    %v2456 = vpop.f32.mrf.mxu0
    %v2457 = vpop.f32.mrf.mxu0
    %v2458 = vadd.f32 %v2033, %v2457
    %v2459 = vpop.f32.mrf.mxu0
    %2460 = vmatprep.mubr.bf16.mxu0 %v1617
    %2461 = vmatmul.mubr.bf16.gmra.mxu0 %v1142
    %v2462 = vpop.f32.mrf.mxu0
    %v2463 = vadd.f32 %v2038, %v2462
    %v2464 = vpop.f32.mrf.mxu0
    %v2465 = vpop.f32.mrf.mxu0
    %v2466 = vadd.f32 %v2041, %v2465
    %v2467 = vpop.f32.mrf.mxu0
    %2468 = vdwg.mxu0
    %v2469 = vadd.f32 %v2079, %v2082
    %v2470 = vadd.f32 %v2469, %v2087
    %v2471 = vadd.f32 %v2470, %v2090
    %v2472 = vadd.f32 %v2471, %v2095
    %v2473 = vadd.f32 %v2472, %v2098
    %v2474 = vadd.f32 %v2473, %v2103
    %v2475 = vadd.f32 %v2474, %v2106
    %v2476 = vadd.f32 %v2475, %v2111
    %v2477 = vadd.f32 %v2476, %v2114
    %v2478 = vadd.f32 %v2477, %v2119
    %v2479 = vadd.f32 %v2478, %v2122
    %v2480 = vadd.f32 %v2479, %v2127
    %v2481 = vadd.f32 %v2480, %v2130
    %v2482 = vadd.f32 %v2481, %v2135
    %v2483 = vadd.f32 %v2482, %v2138
    %v2484 = vadd.f32 %v2483, %v2143
    %v2485 = vadd.f32 %v2484, %v2146
    %v2486 = vadd.f32 %v2485, %v2151
    %v2487 = vadd.f32 %v2486, %v2154
    %v2488 = vadd.f32 %v2487, %v2159
    %v2489 = vadd.f32 %v2488, %v2162
    %v2490 = vadd.f32 %v2489, %v2167
    %v2491 = vadd.f32 %v2490, %v2170
    %v2492 = vadd.f32 %v2491, %v2175
    %v2493 = vadd.f32 %v2492, %v2178
    %v2494 = vadd.f32 %v2493, %v2183
    %v2495 = vadd.f32 %v2494, %v2186
    %v2496 = vadd.f32 %v2495, %v2191
    %v2497 = vadd.f32 %v2496, %v2194
    %v2498 = vadd.f32 %v2497, %v2199
    %v2499 = vadd.f32 %v2498, %v2202
    %v2500 = vadd.f32 %v2499, %v2207
    %v2501 = vadd.f32 %v2500, %v2210
    %v2502 = vadd.f32 %v2501, %v2215
    %v2503 = vadd.f32 %v2502, %v2218
    %v2504 = vadd.f32 %v2503, %v2223
    %v2505 = vadd.f32 %v2504, %v2226
    %v2506 = vadd.f32 %v2505, %v2231
    %v2507 = vadd.f32 %v2506, %v2234
    %v2508 = vadd.f32 %v2507, %v2239
    %v2509 = vadd.f32 %v2508, %v2242
    %v2510 = vadd.f32 %v2509, %v2247
    %v2511 = vadd.f32 %v2510, %v2250
    %v2512 = vadd.f32 %v2511, %v2255
    %v2513 = vadd.f32 %v2512, %v2258
    %v2514 = vadd.f32 %v2513, %v2263
    %v2515 = vadd.f32 %v2514, %v2266
    %v2516 = vadd.f32 %v2515, %v2271
    %v2517 = vadd.f32 %v2516, %v2274
    %v2518 = vadd.f32 %v2517, %v2279
    %v2519 = vadd.f32 %v2518, %v2282
    %v2520 = vadd.f32 %v2519, %v2287
    %v2521 = vadd.f32 %v2520, %v2290
    %v2522 = vadd.f32 %v2521, %v2295
    %v2523 = vadd.f32 %v2522, %v2298
    %v2524 = vadd.f32 %v2523, %v2303
    %v2525 = vadd.f32 %v2524, %v2306
    %v2526 = vadd.f32 %v2525, %v2311
    %v2527 = vadd.f32 %v2526, %v2314
    %v2528 = vadd.f32 %v2527, %v2319
    %v2529 = vadd.f32 %v2528, %v2322
    %v2530 = vadd.f32 %v2529, %v2327
    %v2531 = vadd.f32 %v2530, %v2330
    %v2532 = vadd.f32 %v2531, %v2335
    %v2533 = vadd.f32 %v2532, %v2338
    %v2534 = vadd.f32 %v2533, %v2343
    %v2535 = vadd.f32 %v2534, %v2346
    %v2536 = vadd.f32 %v2535, %v2351
    %v2537 = vadd.f32 %v2536, %v2354
    %v2538 = vadd.f32 %v2537, %v2359
    %v2539 = vadd.f32 %v2538, %v2362
    %v2540 = vadd.f32 %v2539, %v2367
    %v2541 = vadd.f32 %v2540, %v2370
    %v2542 = vadd.f32 %v2541, %v2375
    %v2543 = vadd.f32 %v2542, %v2378
    %v2544 = vadd.f32 %v2543, %v2383
    %v2545 = vadd.f32 %v2544, %v2386
    %v2546 = vadd.f32 %v2545, %v2391
    %v2547 = vadd.f32 %v2546, %v2394
    %v2548 = vadd.f32 %v2547, %v2399
    %v2549 = vadd.f32 %v2548, %v2402
    %v2550 = vadd.f32 %v2549, %v2407
    %v2551 = vadd.f32 %v2550, %v2410
    %v2552 = vadd.f32 %v2551, %v2415
    %v2553 = vadd.f32 %v2552, %v2418
    %v2554 = vadd.f32 %v2553, %v2423
    %v2555 = vadd.f32 %v2554, %v2426
    %v2556 = vadd.f32 %v2555, %v2431
    %v2557 = vadd.f32 %v2556, %v2434
    %v2558 = vadd.f32 %v2557, %v2439
    %v2559 = vadd.f32 %v2558, %v2442
    %v2560 = vadd.f32 %v2559, %v2447
    %v2561 = vadd.f32 %v2560, %v2450
    %v2562 = vadd.f32 %v2561, %v2455
    %v2563 = vadd.f32 %v2562, %v2458
    %v2564 = vadd.f32 %v2563, %v2463
    %v2565 = vadd.f32 %v2564, %v2466
    %v2566 = vrot.slane %v2565, 4
    %v2567 = vadd.f32 %v2565, %v2566
    %v2568 = vrot.slane %v2567, 2
    %v2569 = vadd.f32 %v2567, %v2568
    %v2570 = vrot.slane %v2569, 1
    %v2571 = vadd.f32 %v2569, %v2570
    %v2572 = vmul.f32 %v2571, 0.0012755102
    %v2573 = vmul.f32 %v2079, %v2079
    %v2574 = vmul.f32 %v2082, %v2082
    %v2575 = vmul.f32 %v2087, %v2087
    %v2576 = vmul.f32 %v2090, %v2090
    %v2577 = vmul.f32 %v2095, %v2095
    %v2578 = vmul.f32 %v2098, %v2098
    %v2579 = vmul.f32 %v2103, %v2103
    %v2580 = vmul.f32 %v2106, %v2106
    %v2581 = vmul.f32 %v2111, %v2111
    %v2582 = vmul.f32 %v2114, %v2114
    %v2583 = vmul.f32 %v2119, %v2119
    %v2584 = vmul.f32 %v2122, %v2122
    %v2585 = vmul.f32 %v2127, %v2127
    %v2586 = vmul.f32 %v2130, %v2130
    %v2587 = vmul.f32 %v2135, %v2135
    %v2588 = vmul.f32 %v2138, %v2138
    %v2589 = vmul.f32 %v2143, %v2143
    %v2590 = vmul.f32 %v2146, %v2146
    %v2591 = vmul.f32 %v2151, %v2151
    %v2592 = vmul.f32 %v2154, %v2154
    %v2593 = vmul.f32 %v2159, %v2159
    %v2594 = vmul.f32 %v2162, %v2162
    %v2595 = vmul.f32 %v2167, %v2167
    %v2596 = vmul.f32 %v2170, %v2170
    %v2597 = vmul.f32 %v2175, %v2175
    %v2598 = vmul.f32 %v2178, %v2178
    %v2599 = vmul.f32 %v2183, %v2183
    %v2600 = vmul.f32 %v2186, %v2186
    %v2601 = vmul.f32 %v2191, %v2191
    %v2602 = vmul.f32 %v2194, %v2194
    %v2603 = vmul.f32 %v2199, %v2199
    %v2604 = vmul.f32 %v2202, %v2202
    %v2605 = vmul.f32 %v2207, %v2207
    %v2606 = vmul.f32 %v2210, %v2210
    %v2607 = vmul.f32 %v2215, %v2215
    %v2608 = vmul.f32 %v2218, %v2218
    %v2609 = vmul.f32 %v2223, %v2223
    %v2610 = vmul.f32 %v2226, %v2226
    %v2611 = vmul.f32 %v2231, %v2231
    %v2612 = vmul.f32 %v2234, %v2234
    %v2613 = vmul.f32 %v2239, %v2239
    %v2614 = vmul.f32 %v2242, %v2242
    %v2615 = vmul.f32 %v2247, %v2247
    %v2616 = vmul.f32 %v2250, %v2250
    %v2617 = vmul.f32 %v2255, %v2255
    %v2618 = vmul.f32 %v2258, %v2258
    %v2619 = vmul.f32 %v2263, %v2263
    %v2620 = vmul.f32 %v2266, %v2266
    %v2621 = vmul.f32 %v2271, %v2271
    %v2622 = vmul.f32 %v2274, %v2274
    %v2623 = vmul.f32 %v2279, %v2279
    %v2624 = vmul.f32 %v2282, %v2282
    %v2625 = vmul.f32 %v2287, %v2287
    %v2626 = vmul.f32 %v2290, %v2290
    %v2627 = vmul.f32 %v2295, %v2295
    %v2628 = vmul.f32 %v2298, %v2298
    %v2629 = vmul.f32 %v2303, %v2303
    %v2630 = vmul.f32 %v2306, %v2306
    %v2631 = vmul.f32 %v2311, %v2311
    %v2632 = vmul.f32 %v2314, %v2314
    %v2633 = vmul.f32 %v2319, %v2319
    %v2634 = vmul.f32 %v2322, %v2322
    %v2635 = vmul.f32 %v2327, %v2327
    %v2636 = vmul.f32 %v2330, %v2330
    %v2637 = vmul.f32 %v2335, %v2335
    %v2638 = vmul.f32 %v2338, %v2338
    %v2639 = vmul.f32 %v2343, %v2343
    %v2640 = vmul.f32 %v2346, %v2346
    %v2641 = vmul.f32 %v2351, %v2351
    %v2642 = vmul.f32 %v2354, %v2354
    %v2643 = vmul.f32 %v2359, %v2359
    %v2644 = vmul.f32 %v2362, %v2362
    %v2645 = vmul.f32 %v2367, %v2367
    %v2646 = vmul.f32 %v2370, %v2370
    %v2647 = vmul.f32 %v2375, %v2375
    %v2648 = vmul.f32 %v2378, %v2378
    %v2649 = vmul.f32 %v2383, %v2383
    %v2650 = vmul.f32 %v2386, %v2386
    %v2651 = vmul.f32 %v2391, %v2391
    %v2652 = vmul.f32 %v2394, %v2394
    %v2653 = vmul.f32 %v2399, %v2399
    %v2654 = vmul.f32 %v2402, %v2402
    %v2655 = vmul.f32 %v2407, %v2407
    %v2656 = vmul.f32 %v2410, %v2410
    %v2657 = vmul.f32 %v2415, %v2415
    %v2658 = vmul.f32 %v2418, %v2418
    %v2659 = vmul.f32 %v2423, %v2423
    %v2660 = vmul.f32 %v2426, %v2426
    %v2661 = vmul.f32 %v2431, %v2431
    %v2662 = vmul.f32 %v2434, %v2434
    %v2663 = vmul.f32 %v2439, %v2439
    %v2664 = vmul.f32 %v2442, %v2442
    %v2665 = vmul.f32 %v2447, %v2447
    %v2666 = vmul.f32 %v2450, %v2450
    %v2667 = vmul.f32 %v2455, %v2455
    %v2668 = vmul.f32 %v2458, %v2458
    %v2669 = vmul.f32 %v2463, %v2463
    %v2670 = vmul.f32 %v2466, %v2466
    %v2671 = vadd.f32 %v2573, %v2574
    %v2672 = vadd.f32 %v2671, %v2575
    %v2673 = vadd.f32 %v2672, %v2576
    %v2674 = vadd.f32 %v2673, %v2577
    %v2675 = vadd.f32 %v2674, %v2578
    %v2676 = vadd.f32 %v2675, %v2579
    %v2677 = vadd.f32 %v2676, %v2580
    %v2678 = vadd.f32 %v2677, %v2581
    %v2679 = vadd.f32 %v2678, %v2582
    %v2680 = vadd.f32 %v2679, %v2583
    %v2681 = vadd.f32 %v2680, %v2584
    %v2682 = vadd.f32 %v2681, %v2585
    %v2683 = vadd.f32 %v2682, %v2586
    %v2684 = vadd.f32 %v2683, %v2587
    %v2685 = vadd.f32 %v2684, %v2588
    %v2686 = vadd.f32 %v2685, %v2589
    %v2687 = vadd.f32 %v2686, %v2590
    %v2688 = vadd.f32 %v2687, %v2591
    %v2689 = vadd.f32 %v2688, %v2592
    %v2690 = vadd.f32 %v2689, %v2593
    %v2691 = vadd.f32 %v2690, %v2594
    %v2692 = vadd.f32 %v2691, %v2595
    %v2693 = vadd.f32 %v2692, %v2596
    %v2694 = vadd.f32 %v2693, %v2597
    %v2695 = vadd.f32 %v2694, %v2598
    %v2696 = vadd.f32 %v2695, %v2599
    %v2697 = vadd.f32 %v2696, %v2600
    %v2698 = vadd.f32 %v2697, %v2601
    %v2699 = vadd.f32 %v2698, %v2602
    %v2700 = vadd.f32 %v2699, %v2603
    %v2701 = vadd.f32 %v2700, %v2604
    %v2702 = vadd.f32 %v2701, %v2605
    %v2703 = vadd.f32 %v2702, %v2606
    %v2704 = vadd.f32 %v2703, %v2607
    %v2705 = vadd.f32 %v2704, %v2608
    %v2706 = vadd.f32 %v2705, %v2609
    %v2707 = vadd.f32 %v2706, %v2610
    %v2708 = vadd.f32 %v2707, %v2611
    %v2709 = vadd.f32 %v2708, %v2612
    %v2710 = vadd.f32 %v2709, %v2613
    %v2711 = vadd.f32 %v2710, %v2614
    %v2712 = vadd.f32 %v2711, %v2615
    %v2713 = vadd.f32 %v2712, %v2616
    %v2714 = vadd.f32 %v2713, %v2617
    %v2715 = vadd.f32 %v2714, %v2618
    %v2716 = vadd.f32 %v2715, %v2619
    %v2717 = vadd.f32 %v2716, %v2620
    %v2718 = vadd.f32 %v2717, %v2621
    %v2719 = vadd.f32 %v2718, %v2622
    %v2720 = vadd.f32 %v2719, %v2623
    %v2721 = vadd.f32 %v2720, %v2624
    %v2722 = vadd.f32 %v2721, %v2625
    %v2723 = vadd.f32 %v2722, %v2626
    %v2724 = vadd.f32 %v2723, %v2627
    %v2725 = vadd.f32 %v2724, %v2628
    %v2726 = vadd.f32 %v2725, %v2629
    %v2727 = vadd.f32 %v2726, %v2630
    %v2728 = vadd.f32 %v2727, %v2631
    %v2729 = vadd.f32 %v2728, %v2632
    %v2730 = vadd.f32 %v2729, %v2633
    %v2731 = vadd.f32 %v2730, %v2634
    %v2732 = vadd.f32 %v2731, %v2635
    %v2733 = vadd.f32 %v2732, %v2636
    %v2734 = vadd.f32 %v2733, %v2637
    %v2735 = vadd.f32 %v2734, %v2638
    %v2736 = vadd.f32 %v2735, %v2639
    %v2737 = vadd.f32 %v2736, %v2640
    %v2738 = vadd.f32 %v2737, %v2641
    %v2739 = vadd.f32 %v2738, %v2642
    %v2740 = vadd.f32 %v2739, %v2643
    %v2741 = vadd.f32 %v2740, %v2644
    %v2742 = vadd.f32 %v2741, %v2645
    %v2743 = vadd.f32 %v2742, %v2646
    %v2744 = vadd.f32 %v2743, %v2647
    %v2745 = vadd.f32 %v2744, %v2648
    %v2746 = vadd.f32 %v2745, %v2649
    %v2747 = vadd.f32 %v2746, %v2650
    %v2748 = vadd.f32 %v2747, %v2651
    %v2749 = vadd.f32 %v2748, %v2652
    %v2750 = vadd.f32 %v2749, %v2653
    %v2751 = vadd.f32 %v2750, %v2654
    %v2752 = vadd.f32 %v2751, %v2655
    %v2753 = vadd.f32 %v2752, %v2656
    %v2754 = vadd.f32 %v2753, %v2657
    %v2755 = vadd.f32 %v2754, %v2658
    %v2756 = vadd.f32 %v2755, %v2659
    %v2757 = vadd.f32 %v2756, %v2660
    %v2758 = vadd.f32 %v2757, %v2661
    %v2759 = vadd.f32 %v2758, %v2662
    %v2760 = vadd.f32 %v2759, %v2663
    %v2761 = vadd.f32 %v2760, %v2664
    %v2762 = vadd.f32 %v2761, %v2665
    %v2763 = vadd.f32 %v2762, %v2666
    %v2764 = vadd.f32 %v2763, %v2667
    %v2765 = vadd.f32 %v2764, %v2668
    %v2766 = vadd.f32 %v2765, %v2669
    %v2767 = vadd.f32 %v2766, %v2670
    %v2768 = vrot.slane %v2767, 4
    %v2769 = vadd.f32 %v2767, %v2768
    %v2770 = vrot.slane %v2769, 2
    %v2771 = vadd.f32 %v2769, %v2770
    %v2772 = vrot.slane %v2771, 1
    %v2773 = vadd.f32 %v2771, %v2772
    %v2774 = vmul.f32 %v2773, 0.0012755102
    %v2775 = vmul.f32 %v2572, %v2572
    %v2776 = vsub.f32 %v2774, %v2775
    %v2777 = vmax.f32 %v2776, 0.0
    %v2778 = vld [vmem:[#allocation8] sm:$0x1]
    %v2779 = vadd.f32 %v2777, 1e-05
    %v2780 = vrsqrt.pop %v2779
    %v2781 = vmul.f32 %v2778, %v2780
    %v2783 = vlaneseq
    %v2784 = vshrl.u32 %v2783, 7
    %v2785 = vsub.s32 0, %v2784
    %v2786 = vrot.slane %v2781, %v2785
    %v2788 = vmul.f32 %v2079, %v2786
    %v2789 = vmul.f32 %v2082, %v2786
    %v2790 = vmul.f32 %v2087, %v2786
    %v2791 = vmul.f32 %v2090, %v2786
    %v2792 = vmul.f32 %v2095, %v2786
    %v2793 = vmul.f32 %v2098, %v2786
    %v2794 = vmul.f32 %v2103, %v2786
    %v2795 = vmul.f32 %v2106, %v2786
    %v2796 = vmul.f32 %v2111, %v2786
    %v2797 = vmul.f32 %v2114, %v2786
    %v2798 = vmul.f32 %v2119, %v2786
    %v2799 = vmul.f32 %v2122, %v2786
    %v2800 = vmul.f32 %v2127, %v2786
    %v2801 = vmul.f32 %v2130, %v2786
    %v2802 = vmul.f32 %v2135, %v2786
    %v2803 = vmul.f32 %v2138, %v2786
    %v2804 = vmul.f32 %v2143, %v2786
    %v2805 = vmul.f32 %v2146, %v2786
    %v2806 = vmul.f32 %v2151, %v2786
    %v2807 = vmul.f32 %v2154, %v2786
    %v2808 = vmul.f32 %v2159, %v2786
    %v2809 = vmul.f32 %v2162, %v2786
    %v2810 = vmul.f32 %v2167, %v2786
    %v2811 = vmul.f32 %v2170, %v2786
    %v2812 = vmul.f32 %v2175, %v2786
    %v2813 = vmul.f32 %v2178, %v2786
    %v2814 = vmul.f32 %v2183, %v2786
    %v2815 = vmul.f32 %v2186, %v2786
    %v2816 = vmul.f32 %v2191, %v2786
    %v2817 = vmul.f32 %v2194, %v2786
    %v2818 = vmul.f32 %v2199, %v2786
    %v2819 = vmul.f32 %v2202, %v2786
    %v2820 = vmul.f32 %v2207, %v2786
    %v2821 = vmul.f32 %v2210, %v2786
    %v2822 = vmul.f32 %v2215, %v2786
    %v2823 = vmul.f32 %v2218, %v2786
    %v2824 = vmul.f32 %v2223, %v2786
    %v2825 = vmul.f32 %v2226, %v2786
    %v2826 = vmul.f32 %v2231, %v2786
    %v2827 = vmul.f32 %v2234, %v2786
    %v2828 = vmul.f32 %v2239, %v2786
    %v2829 = vmul.f32 %v2242, %v2786
    %v2830 = vmul.f32 %v2247, %v2786
    %v2831 = vmul.f32 %v2250, %v2786
    %v2832 = vmul.f32 %v2255, %v2786
    %v2833 = vmul.f32 %v2258, %v2786
    %v2834 = vmul.f32 %v2263, %v2786
    %v2835 = vmul.f32 %v2266, %v2786
    %v2836 = vmul.f32 %v2271, %v2786
    %v2837 = vmul.f32 %v2274, %v2786
    %v2838 = vmul.f32 %v2279, %v2786
    %v2839 = vmul.f32 %v2282, %v2786
    %v2840 = vmul.f32 %v2287, %v2786
    %v2841 = vmul.f32 %v2290, %v2786
    %v2842 = vmul.f32 %v2295, %v2786
    %v2843 = vmul.f32 %v2298, %v2786
    %v2844 = vmul.f32 %v2303, %v2786
    %v2845 = vmul.f32 %v2306, %v2786
    %v2846 = vmul.f32 %v2311, %v2786
    %v2847 = vmul.f32 %v2314, %v2786
    %v2848 = vmul.f32 %v2319, %v2786
    %v2849 = vmul.f32 %v2322, %v2786
    %v2850 = vmul.f32 %v2327, %v2786
    %v2851 = vmul.f32 %v2330, %v2786
    %v2852 = vmul.f32 %v2335, %v2786
    %v2853 = vmul.f32 %v2338, %v2786
    %v2854 = vmul.f32 %v2343, %v2786
    %v2855 = vmul.f32 %v2346, %v2786
    %v2856 = vmul.f32 %v2351, %v2786
    %v2857 = vmul.f32 %v2354, %v2786
    %v2858 = vmul.f32 %v2359, %v2786
    %v2859 = vmul.f32 %v2362, %v2786
    %v2860 = vmul.f32 %v2367, %v2786
    %v2861 = vmul.f32 %v2370, %v2786
    %v2862 = vmul.f32 %v2375, %v2786
    %v2863 = vmul.f32 %v2378, %v2786
    %v2864 = vmul.f32 %v2383, %v2786
    %v2865 = vmul.f32 %v2386, %v2786
    %v2866 = vmul.f32 %v2391, %v2786
    %v2867 = vmul.f32 %v2394, %v2786
    %v2868 = vmul.f32 %v2399, %v2786
    %v2869 = vmul.f32 %v2402, %v2786
    %v2870 = vmul.f32 %v2407, %v2786
    %v2871 = vmul.f32 %v2410, %v2786
    %v2872 = vmul.f32 %v2415, %v2786
    %v2873 = vmul.f32 %v2418, %v2786
    %v2874 = vmul.f32 %v2423, %v2786
    %v2875 = vmul.f32 %v2426, %v2786
    %v2876 = vmul.f32 %v2431, %v2786
    %v2877 = vmul.f32 %v2434, %v2786
    %v2878 = vmul.f32 %v2439, %v2786
    %v2879 = vmul.f32 %v2442, %v2786
    %v2880 = vmul.f32 %v2447, %v2786
    %v2881 = vmul.f32 %v2450, %v2786
    %v2882 = vmul.f32 %v2455, %v2786
    %v2883 = vmul.f32 %v2458, %v2786
    %v2884 = vmul.f32 %v2463, %v2786
    %v2885 = vmul.f32 %v2466, %v2786
    %v2886 = vld [vmem:[#allocation5] sm:$0xff]
    %v2887 = vld [vmem:[#allocation5 + $0x8] sm:$0xff]
    %v2888 = vld [vmem:[#allocation5 + $0x10] sm:$0xff]
    %v2889 = vld [vmem:[#allocation5 + $0x18] sm:$0xff]
    %v2890 = vld [vmem:[#allocation5 + $0x20] sm:$0xff]
    %v2891 = vld [vmem:[#allocation5 + $0x28] sm:$0xff]
    %v2892 = vld [vmem:[#allocation5 + $0x30] sm:$0xff]
    %v2893 = vld [vmem:[#allocation5 + $0x38] sm:$0xff]
    %v2894 = vld [vmem:[#allocation5 + $0x40] sm:$0xff]
    %v2895 = vld [vmem:[#allocation5 + $0x48] sm:$0xff]
    %v2896 = vld [vmem:[#allocation5 + $0x50] sm:$0xff]
    %v2897 = vld [vmem:[#allocation5 + $0x58] sm:$0xff]
    %v2898 = vld [vmem:[#allocation5 + $0x60] sm:$0xff]
    %v2899 = vld [vmem:[#allocation5 + $0x68] sm:$0xff]
    %v2900 = vld [vmem:[#allocation5 + $0x70] sm:$0xff]
    %v2901 = vld [vmem:[#allocation5 + $0x78] sm:$0xff]
    %v2902 = vld [vmem:[#allocation5 + $0x80] sm:$0xff]
    %v2903 = vld [vmem:[#allocation5 + $0x88] sm:$0xff]
    %v2904 = vld [vmem:[#allocation5 + $0x90] sm:$0xff]
    %v2905 = vld [vmem:[#allocation5 + $0x98] sm:$0xff]
    %v2906 = vld [vmem:[#allocation5 + $0xa0] sm:$0xff]
    %v2907 = vld [vmem:[#allocation5 + $0xa8] sm:$0xff]
    %v2908 = vld [vmem:[#allocation5 + $0xb0] sm:$0xff]
    %v2909 = vld [vmem:[#allocation5 + $0xb8] sm:$0xff]
    %v2910 = vld [vmem:[#allocation5 + $0xc0] sm:$0xff]
    %v2911 = vld [vmem:[#allocation5 + $0xc8] sm:$0xff]
    %v2912 = vld [vmem:[#allocation5 + $0xd0] sm:$0xff]
    %v2913 = vld [vmem:[#allocation5 + $0xd8] sm:$0xff]
    %v2914 = vld [vmem:[#allocation5 + $0xe0] sm:$0xff]
    %v2915 = vld [vmem:[#allocation5 + $0xe8] sm:$0xff]
    %v2916 = vld [vmem:[#allocation5 + $0xf0] sm:$0xff]
    %v2917 = vld [vmem:[#allocation5 + $0xf8] sm:$0xff]
    %v2918 = vld [vmem:[#allocation5 + $0x100] sm:$0xff]
    %v2919 = vld [vmem:[#allocation5 + $0x108] sm:$0xff]
    %v2920 = vld [vmem:[#allocation5 + $0x110] sm:$0xff]
    %v2921 = vld [vmem:[#allocation5 + $0x118] sm:$0xff]
    %v2922 = vld [vmem:[#allocation5 + $0x120] sm:$0xff]
    %v2923 = vld [vmem:[#allocation5 + $0x128] sm:$0xff]
    %v2924 = vld [vmem:[#allocation5 + $0x130] sm:$0xff]
    %v2925 = vld [vmem:[#allocation5 + $0x138] sm:$0xff]
    %v2926 = vld [vmem:[#allocation5 + $0x140] sm:$0xff]
    %v2927 = vld [vmem:[#allocation5 + $0x148] sm:$0xff]
    %v2928 = vld [vmem:[#allocation5 + $0x150] sm:$0xff]
    %v2929 = vld [vmem:[#allocation5 + $0x158] sm:$0xff]
    %v2930 = vld [vmem:[#allocation5 + $0x160] sm:$0xff]
    %v2931 = vld [vmem:[#allocation5 + $0x168] sm:$0xff]
    %v2932 = vld [vmem:[#allocation5 + $0x170] sm:$0xff]
    %v2933 = vld [vmem:[#allocation5 + $0x178] sm:$0xff]
    %v2934 = vld [vmem:[#allocation5 + $0x180] sm:$0xff]
    %v2935 = vld [vmem:[#allocation5 + $0x188] sm:$0xff]
    %v2936 = vld [vmem:[#allocation5 + $0x190] sm:$0xff]
    %v2937 = vld [vmem:[#allocation5 + $0x198] sm:$0xff]
    %v2938 = vld [vmem:[#allocation5 + $0x1a0] sm:$0xff]
    %v2939 = vld [vmem:[#allocation5 + $0x1a8] sm:$0xff]
    %v2940 = vld [vmem:[#allocation5 + $0x1b0] sm:$0xff]
    %v2941 = vld [vmem:[#allocation5 + $0x1b8] sm:$0xff]
    %v2942 = vld [vmem:[#allocation5 + $0x1c0] sm:$0xff]
    %v2943 = vld [vmem:[#allocation5 + $0x1c8] sm:$0xff]
    %v2944 = vld [vmem:[#allocation5 + $0x1d0] sm:$0xff]
    %v2945 = vld [vmem:[#allocation5 + $0x1d8] sm:$0xff]
    %v2946 = vld [vmem:[#allocation5 + $0x1e0] sm:$0xff]
    %v2947 = vld [vmem:[#allocation5 + $0x1e8] sm:$0xff]
    %v2948 = vld [vmem:[#allocation5 + $0x1f0] sm:$0xff]
    %v2949 = vld [vmem:[#allocation5 + $0x1f8] sm:$0xff]
    %v2950 = vld [vmem:[#allocation5 + $0x200] sm:$0xff]
    %v2951 = vld [vmem:[#allocation5 + $0x208] sm:$0xff]
    %v2952 = vld [vmem:[#allocation5 + $0x210] sm:$0xff]
    %v2953 = vld [vmem:[#allocation5 + $0x218] sm:$0xff]
    %v2954 = vld [vmem:[#allocation5 + $0x220] sm:$0xff]
    %v2955 = vld [vmem:[#allocation5 + $0x228] sm:$0xff]
    %v2956 = vld [vmem:[#allocation5 + $0x230] sm:$0xff]
    %v2957 = vld [vmem:[#allocation5 + $0x238] sm:$0xff]
    %v2958 = vld [vmem:[#allocation5 + $0x240] sm:$0xff]
    %v2959 = vld [vmem:[#allocation5 + $0x248] sm:$0xff]
    %v2960 = vld [vmem:[#allocation5 + $0x250] sm:$0xff]
    %v2961 = vld [vmem:[#allocation5 + $0x258] sm:$0xff]
    %v2962 = vld [vmem:[#allocation5 + $0x260] sm:$0xff]
    %v2963 = vld [vmem:[#allocation5 + $0x268] sm:$0xff]
    %v2964 = vld [vmem:[#allocation5 + $0x270] sm:$0xff]
    %v2965 = vld [vmem:[#allocation5 + $0x278] sm:$0xff]
    %v2966 = vld [vmem:[#allocation5 + $0x280] sm:$0xff]
    %v2967 = vld [vmem:[#allocation5 + $0x288] sm:$0xff]
    %v2968 = vld [vmem:[#allocation5 + $0x290] sm:$0xff]
    %v2969 = vld [vmem:[#allocation5 + $0x298] sm:$0xff]
    %v2970 = vld [vmem:[#allocation5 + $0x2a0] sm:$0xff]
    %v2971 = vld [vmem:[#allocation5 + $0x2a8] sm:$0xff]
    %v2972 = vld [vmem:[#allocation5 + $0x2b0] sm:$0xff]
    %v2973 = vld [vmem:[#allocation5 + $0x2b8] sm:$0xff]
    %v2974 = vld [vmem:[#allocation5 + $0x2c0] sm:$0xff]
    %v2975 = vld [vmem:[#allocation5 + $0x2c8] sm:$0xff]
    %v2976 = vld [vmem:[#allocation5 + $0x2d0] sm:$0xff]
    %v2977 = vld [vmem:[#allocation5 + $0x2d8] sm:$0xff]
    %v2978 = vld [vmem:[#allocation5 + $0x2e0] sm:$0xff]
    %v2979 = vld [vmem:[#allocation5 + $0x2e8] sm:$0xff]
    %v2980 = vld [vmem:[#allocation5 + $0x2f0] sm:$0xff]
    %v2981 = vld [vmem:[#allocation5 + $0x2f8] sm:$0xff]
    %v2982 = vld [vmem:[#allocation5 + $0x300] sm:$0xff]
    %v2983 = vld [vmem:[#allocation5 + $0x308] sm:$0xff]
    %v2984 = vadd.f32 %v2788, %v2886
    %v2985 = vadd.f32 %v2789, %v2887
    %v2986 = vadd.f32 %v2790, %v2888
    %v2987 = vadd.f32 %v2791, %v2889
    %v2988 = vadd.f32 %v2792, %v2890
    %v2989 = vadd.f32 %v2793, %v2891
    %v2990 = vadd.f32 %v2794, %v2892
    %v2991 = vadd.f32 %v2795, %v2893
    %v2992 = vadd.f32 %v2796, %v2894
    %v2993 = vadd.f32 %v2797, %v2895
    %v2994 = vadd.f32 %v2798, %v2896
    %v2995 = vadd.f32 %v2799, %v2897
    %v2996 = vadd.f32 %v2800, %v2898
    %v2997 = vadd.f32 %v2801, %v2899
    %v2998 = vadd.f32 %v2802, %v2900
    %v2999 = vadd.f32 %v2803, %v2901
    %v3000 = vadd.f32 %v2804, %v2902
    %v3001 = vadd.f32 %v2805, %v2903
    %v3002 = vadd.f32 %v2806, %v2904
    %v3003 = vadd.f32 %v2807, %v2905
    %v3004 = vadd.f32 %v2808, %v2906
    %v3005 = vadd.f32 %v2809, %v2907
    %v3006 = vadd.f32 %v2810, %v2908
    %v3007 = vadd.f32 %v2811, %v2909
    %v3008 = vadd.f32 %v2812, %v2910
    %v3009 = vadd.f32 %v2813, %v2911
    %v3010 = vadd.f32 %v2814, %v2912
    %v3011 = vadd.f32 %v2815, %v2913
    %v3012 = vadd.f32 %v2816, %v2914
    %v3013 = vadd.f32 %v2817, %v2915
    %v3014 = vadd.f32 %v2818, %v2916
    %v3015 = vadd.f32 %v2819, %v2917
    %v3016 = vadd.f32 %v2820, %v2918
    %v3017 = vadd.f32 %v2821, %v2919
    %v3018 = vadd.f32 %v2822, %v2920
    %v3019 = vadd.f32 %v2823, %v2921
    %v3020 = vadd.f32 %v2824, %v2922
    %v3021 = vadd.f32 %v2825, %v2923
    %v3022 = vadd.f32 %v2826, %v2924
    %v3023 = vadd.f32 %v2827, %v2925
    %v3024 = vadd.f32 %v2828, %v2926
    %v3025 = vadd.f32 %v2829, %v2927
    %v3026 = vadd.f32 %v2830, %v2928
    %v3027 = vadd.f32 %v2831, %v2929
    %v3028 = vadd.f32 %v2832, %v2930
    %v3029 = vadd.f32 %v2833, %v2931
    %v3030 = vadd.f32 %v2834, %v2932
    %v3031 = vadd.f32 %v2835, %v2933
    %v3032 = vadd.f32 %v2836, %v2934
    %v3033 = vadd.f32 %v2837, %v2935
    %v3034 = vadd.f32 %v2838, %v2936
    %v3035 = vadd.f32 %v2839, %v2937
    %v3036 = vadd.f32 %v2840, %v2938
    %v3037 = vadd.f32 %v2841, %v2939
    %v3038 = vadd.f32 %v2842, %v2940
    %v3039 = vadd.f32 %v2843, %v2941
    %v3040 = vadd.f32 %v2844, %v2942
    %v3041 = vadd.f32 %v2845, %v2943
    %v3042 = vadd.f32 %v2846, %v2944
    %v3043 = vadd.f32 %v2847, %v2945
    %v3044 = vadd.f32 %v2848, %v2946
    %v3045 = vadd.f32 %v2849, %v2947
    %v3046 = vadd.f32 %v2850, %v2948
    %v3047 = vadd.f32 %v2851, %v2949
    %v3048 = vadd.f32 %v2852, %v2950
    %v3049 = vadd.f32 %v2853, %v2951
    %v3050 = vadd.f32 %v2854, %v2952
    %v3051 = vadd.f32 %v2855, %v2953
    %v3052 = vadd.f32 %v2856, %v2954
    %v3053 = vadd.f32 %v2857, %v2955
    %v3054 = vadd.f32 %v2858, %v2956
    %v3055 = vadd.f32 %v2859, %v2957
    %v3056 = vadd.f32 %v2860, %v2958
    %v3057 = vadd.f32 %v2861, %v2959
    %v3058 = vadd.f32 %v2862, %v2960
    %v3059 = vadd.f32 %v2863, %v2961
    %v3060 = vadd.f32 %v2864, %v2962
    %v3061 = vadd.f32 %v2865, %v2963
    %v3062 = vadd.f32 %v2866, %v2964
    %v3063 = vadd.f32 %v2867, %v2965
    %v3064 = vadd.f32 %v2868, %v2966
    %v3065 = vadd.f32 %v2869, %v2967
    %v3066 = vadd.f32 %v2870, %v2968
    %v3067 = vadd.f32 %v2871, %v2969
    %v3068 = vadd.f32 %v2872, %v2970
    %v3069 = vadd.f32 %v2873, %v2971
    %v3070 = vadd.f32 %v2874, %v2972
    %v3071 = vadd.f32 %v2875, %v2973
    %v3072 = vadd.f32 %v2876, %v2974
    %v3073 = vadd.f32 %v2877, %v2975
    %v3074 = vadd.f32 %v2878, %v2976
    %v3075 = vadd.f32 %v2879, %v2977
    %v3076 = vadd.f32 %v2880, %v2978
    %v3077 = vadd.f32 %v2881, %v2979
    %v3078 = vadd.f32 %v2882, %v2980
    %v3079 = vadd.f32 %v2883, %v2981
    %v3080 = vadd.f32 %v2884, %v2982
    %v3081 = vadd.f32 %v2885, %v2983
    %v3082 = vpack.c.bf16 %v2985, %v2984
    %v3083 = vpack.c.bf16 %v2987, %v2986
    %v3084 = vpack.c.bf16 %v2989, %v2988
    %v3085 = vpack.c.bf16 %v2991, %v2990
    %v3086 = vpack.c.bf16 %v2993, %v2992
    %v3087 = vpack.c.bf16 %v2995, %v2994
    %v3088 = vpack.c.bf16 %v2997, %v2996
    %v3089 = vpack.c.bf16 %v2999, %v2998
    %v3090 = vpack.c.bf16 %v3001, %v3000
    %v3091 = vpack.c.bf16 %v3003, %v3002
    %v3092 = vpack.c.bf16 %v3005, %v3004
    %v3093 = vpack.c.bf16 %v3007, %v3006
    %v3094 = vpack.c.bf16 %v3009, %v3008
    %v3095 = vpack.c.bf16 %v3011, %v3010
    %v3096 = vpack.c.bf16 %v3013, %v3012
    %v3097 = vpack.c.bf16 %v3015, %v3014
    %v3098 = vpack.c.bf16 %v3017, %v3016
    %v3099 = vpack.c.bf16 %v3019, %v3018
    %v3100 = vpack.c.bf16 %v3021, %v3020
    %v3101 = vpack.c.bf16 %v3023, %v3022
    %v3102 = vpack.c.bf16 %v3025, %v3024
    %v3103 = vpack.c.bf16 %v3027, %v3026
    %v3104 = vpack.c.bf16 %v3029, %v3028
    %v3105 = vpack.c.bf16 %v3031, %v3030
    %v3106 = vpack.c.bf16 %v3033, %v3032
    %v3107 = vpack.c.bf16 %v3035, %v3034
    %v3108 = vpack.c.bf16 %v3037, %v3036
    %v3109 = vpack.c.bf16 %v3039, %v3038
    %v3110 = vpack.c.bf16 %v3041, %v3040
    %v3111 = vpack.c.bf16 %v3043, %v3042
    %v3112 = vpack.c.bf16 %v3045, %v3044
    %v3113 = vpack.c.bf16 %v3047, %v3046
    %v3114 = vpack.c.bf16 %v3049, %v3048
    %v3115 = vpack.c.bf16 %v3051, %v3050
    %v3116 = vpack.c.bf16 %v3053, %v3052
    %v3117 = vpack.c.bf16 %v3055, %v3054
    %v3118 = vpack.c.bf16 %v3057, %v3056
    %v3119 = vpack.c.bf16 %v3059, %v3058
    %v3120 = vpack.c.bf16 %v3061, %v3060
    %v3121 = vpack.c.bf16 %v3063, %v3062
    %v3122 = vpack.c.bf16 %v3065, %v3064
    %v3123 = vpack.c.bf16 %v3067, %v3066
    %v3124 = vpack.c.bf16 %v3069, %v3068
    %v3125 = vpack.c.bf16 %v3071, %v3070
    %v3126 = vpack.c.bf16 %v3073, %v3072
    %v3127 = vpack.c.bf16 %v3075, %v3074
    %v3128 = vpack.c.bf16 %v3077, %v3076
    %v3129 = vpack.c.bf16 %v3079, %v3078
    %v3130 = vpack.c.bf16 %v3081, %v3080
    %v3131 = vld [vmem:[%s3] sm:$0xff]
    %v3132 = vld [vmem:[%s3 + $0x8] sm:$0xff]
    %v3133 = vld [vmem:[%s3 + $0x10] sm:$0xff]
    %v3134 = vld [vmem:[%s3 + $0x18] sm:$0xff]
    %v3135 = vld [vmem:[%s3 + $0x20] sm:$0xff]
    %v3136 = vld [vmem:[%s3 + $0x28] sm:$0xff]
    %v3137 = vld [vmem:[%s3 + $0x30] sm:$0xff]
    %v3138 = vld [vmem:[%s3 + $0x38] sm:$0xff]
    %v3139 = vld [vmem:[%s3 + $0x40] sm:$0xff]
    %v3140 = vld [vmem:[%s3 + $0x48] sm:$0xff]
    %v3141 = vld [vmem:[%s3 + $0x50] sm:$0xff]
    %v3142 = vld [vmem:[%s3 + $0x58] sm:$0xff]
    %v3143 = vld [vmem:[%s3 + $0x60] sm:$0xff]
    %v3144 = vld [vmem:[%s3 + $0x68] sm:$0xff]
    %v3145 = vld [vmem:[%s3 + $0x70] sm:$0xff]
    %v3146 = vld [vmem:[%s3 + $0x78] sm:$0xff]
    %v3147 = vld [vmem:[%s3 + $0x80] sm:$0xff]
    %v3148 = vld [vmem:[%s3 + $0x88] sm:$0xff]
    %v3149 = vld [vmem:[%s3 + $0x90] sm:$0xff]
    %v3150 = vld [vmem:[%s3 + $0x98] sm:$0xff]
    %v3151 = vld [vmem:[%s3 + $0xa0] sm:$0xff]
    %v3152 = vld [vmem:[%s3 + $0xa8] sm:$0xff]
    %v3153 = vld [vmem:[%s3 + $0xb0] sm:$0xff]
    %v3154 = vld [vmem:[%s3 + $0xb8] sm:$0xff]
    %v3155 = vld [vmem:[%s3 + $0xc0] sm:$0xff]
    %v3156 = vld [vmem:[%s3 + $0xc8] sm:$0xff]
    %v3157 = vld [vmem:[%s3 + $0xd0] sm:$0xff]
    %v3158 = vld [vmem:[%s3 + $0xd8] sm:$0xff]
    %v3159 = vld [vmem:[%s3 + $0xe0] sm:$0xff]
    %v3160 = vld [vmem:[%s3 + $0xe8] sm:$0xff]
    %v3161 = vld [vmem:[%s3 + $0xf0] sm:$0xff]
    %v3162 = vld [vmem:[%s3 + $0xf8] sm:$0xff]
    %v3195 = vunpack.c.l.b16 %v3131
    %v3196 = vunpack.c.h.b16 %v3131
    %v3197 = vunpack.c.l.b16 %v3132
    %v3198 = vunpack.c.h.b16 %v3132
    %v3199 = vunpack.c.l.b16 %v3133
    %v3200 = vunpack.c.h.b16 %v3133
    %v3201 = vunpack.c.l.b16 %v3134
    %v3202 = vunpack.c.h.b16 %v3134
    %v3203 = vunpack.c.l.b16 %v3135
    %v3204 = vunpack.c.h.b16 %v3135
    %v3205 = vunpack.c.l.b16 %v3136
    %v3206 = vunpack.c.h.b16 %v3136
    %v3207 = vunpack.c.l.b16 %v3137
    %v3208 = vunpack.c.h.b16 %v3137
    %v3209 = vunpack.c.l.b16 %v3138
    %v3210 = vunpack.c.h.b16 %v3138
    %v3211 = vunpack.c.l.b16 %v3139
    %v3212 = vunpack.c.h.b16 %v3139
    %v3213 = vunpack.c.l.b16 %v3140
    %v3214 = vunpack.c.h.b16 %v3140
    %v3215 = vunpack.c.l.b16 %v3141
    %v3216 = vunpack.c.h.b16 %v3141
    %v3217 = vunpack.c.l.b16 %v3142
    %v3218 = vunpack.c.h.b16 %v3142
    %v3219 = vunpack.c.l.b16 %v3143
    %v3220 = vunpack.c.h.b16 %v3143
    %v3221 = vunpack.c.l.b16 %v3144
    %v3222 = vunpack.c.h.b16 %v3144
    %v3223 = vunpack.c.l.b16 %v3145
    %v3224 = vunpack.c.h.b16 %v3145
    %v3225 = vunpack.c.l.b16 %v3146
    %v3226 = vunpack.c.h.b16 %v3146
    %v3227 = vunpack.c.l.b16 %v3147
    %v3228 = vunpack.c.h.b16 %v3147
    %v3229 = vunpack.c.l.b16 %v3148
    %v3230 = vunpack.c.h.b16 %v3148
    %v3231 = vunpack.c.l.b16 %v3149
    %v3232 = vunpack.c.h.b16 %v3149
    %v3233 = vunpack.c.l.b16 %v3150
    %v3234 = vunpack.c.h.b16 %v3150
    %v3235 = vunpack.c.l.b16 %v3151
    %v3236 = vunpack.c.h.b16 %v3151
    %v3237 = vunpack.c.l.b16 %v3152
    %v3238 = vunpack.c.h.b16 %v3152
    %v3239 = vunpack.c.l.b16 %v3153
    %v3240 = vunpack.c.h.b16 %v3153
    %v3241 = vunpack.c.l.b16 %v3154
    %v3242 = vunpack.c.h.b16 %v3154
    %v3243 = vunpack.c.l.b16 %v3155
    %v3244 = vunpack.c.h.b16 %v3155
    %v3245 = vunpack.c.l.b16 %v3156
    %v3246 = vunpack.c.h.b16 %v3156
    %v3247 = vunpack.c.l.b16 %v3157
    %v3248 = vunpack.c.h.b16 %v3157
    %v3249 = vunpack.c.l.b16 %v3158
    %v3250 = vunpack.c.h.b16 %v3158
    %v3251 = vunpack.c.l.b16 %v3159
    %v3252 = vunpack.c.h.b16 %v3159
    %v3253 = vunpack.c.l.b16 %v3160
    %v3254 = vunpack.c.h.b16 %v3160
    %v3255 = vunpack.c.l.b16 %v3161
    %v3256 = vunpack.c.h.b16 %v3161
    %v3257 = vunpack.c.l.b16 %v3162
    %v3258 = vunpack.c.h.b16 %v3162
    %v3259 = vpack.c.b16 %v3199, %v3195
    %v3260 = vpack.c.b16 %v3200, %v3196
    %v3261 = vpack.c.b16 %v3201, %v3197
    %v3262 = vpack.c.b16 %v3202, %v3198
    %v3263 = vpack.c.b16 %v3207, %v3203
    %v3264 = vpack.c.b16 %v3208, %v3204
    %v3265 = vpack.c.b16 %v3209, %v3205
    %v3266 = vpack.c.b16 %v3210, %v3206
    %v3267 = vpack.c.b16 %v3215, %v3211
    %v3268 = vpack.c.b16 %v3216, %v3212
    %v3269 = vpack.c.b16 %v3217, %v3213
    %v3270 = vpack.c.b16 %v3218, %v3214
    %v3271 = vpack.c.b16 %v3223, %v3219
    %v3272 = vpack.c.b16 %v3224, %v3220
    %v3273 = vpack.c.b16 %v3225, %v3221
    %v3274 = vpack.c.b16 %v3226, %v3222
    %v3275 = vpack.c.b16 %v3231, %v3227
    %v3276 = vpack.c.b16 %v3232, %v3228
    %v3277 = vpack.c.b16 %v3233, %v3229
    %v3278 = vpack.c.b16 %v3234, %v3230
    %v3279 = vpack.c.b16 %v3239, %v3235
    %v3280 = vpack.c.b16 %v3240, %v3236
    %v3281 = vpack.c.b16 %v3241, %v3237
    %v3282 = vpack.c.b16 %v3242, %v3238
    %v3283 = vpack.c.b16 %v3247, %v3243
    %v3284 = vpack.c.b16 %v3248, %v3244
    %v3285 = vpack.c.b16 %v3249, %v3245
    %v3286 = vpack.c.b16 %v3250, %v3246
    %v3287 = vpack.c.b16 %v3255, %v3251
    %v3288 = vpack.c.b16 %v3256, %v3252
    %v3289 = vpack.c.b16 %v3257, %v3253
    %v3290 = vpack.c.b16 %v3258, %v3254
    %3323 = vmatprep.subr.bf16.mxu0 %v3288
    %3324 = vmatpush1.bf16.msra.mxu0 %v3287
    %3325 = vmatprep.subr.bf16.mxu0 %v3284
    %3326 = vmatpush1.bf16.msra.mxu0 %v3283
    %3327 = vmatprep.subr.bf16.mxu0 %v3280
    %3328 = vmatpush1.bf16.msra.mxu0 %v3279
    %3329 = vmatprep.subr.bf16.mxu0 %v3276
    %3330 = vmatpush1.bf16.msra.mxu0 %v3275
    %3331 = vmatprep.subr.bf16.mxu0 %v3272
    %3332 = vmatpush1.bf16.msra.mxu0 %v3271
    %3333 = vmatprep.subr.bf16.mxu0 %v3268
    %3334 = vmatpush1.bf16.msra.mxu0 %v3267
    %3335 = vmatprep.subr.bf16.mxu0 %v3264
    %3336 = vmatpush1.bf16.msra.mxu0 %v3263
    %3337 = vmatprep.subr.bf16.mxu0 %v3260
    %3338 = vmatpush1.bf16.msra.mxu0 %v3259
    %3339 = vmatprep.subr.bf16.mxu0 0
    %3340 = vmatpush2.bf16.msra.mxu0 0
    %3341 = vmatprep.subr.bf16.mxu0 0
    %3342 = vmatpush2.bf16.msra.mxu0 0
    %3343 = vmatprep.subr.bf16.mxu0 0
    %3344 = vmatpush2.bf16.msra.mxu0 0
    %3345 = vmatprep.subr.bf16.mxu0 0
    %3346 = vmatpush2.bf16.msra.mxu0 0
    %3347 = vmatprep.subr.bf16.mxu0 0
    %3348 = vmatpush2.bf16.msra.mxu0 0
    %3349 = vmatprep.subr.bf16.mxu0 0
    %3350 = vmatpush2.bf16.msra.mxu0 0
    %3351 = vmatprep.subr.bf16.mxu0 0
    %3352 = vmatpush2.bf16.msra.mxu0 0
    %3353 = vmatprep.subr.bf16.mxu0 0
    %3354 = vmatpush2.bf16.msra.mxu0 0
    %3355 = vmatprep.mubr.bf16.mxu0 0
    %3356 = vmatmul.mubr.bf16.gmra.mxu0 %v3082
    %v3357 = vpop.f32.mrf.mxu0
    %v3358 = vadd.f32 0.0, %v3357
    %v3359 = vpop.f32.mrf.mxu0
    %v3360 = vadd.f32 0.0, %v3359
    %v3361 = vpop.f32.mrf.mxu0
    %v3362 = vadd.f32 0.0, %v3361
    %v3363 = vpop.f32.mrf.mxu0
    %v3364 = vadd.f32 0.0, %v3363
    %3365 = vmatprep.mubr.bf16.mxu0 0
    %3366 = vmatmul.mubr.bf16.gmra.mxu0 %v3083
    %v3367 = vpop.f32.mrf.mxu0
    %v3368 = vadd.f32 0.0, %v3367
    %v3369 = vpop.f32.mrf.mxu0
    %v3370 = vadd.f32 0.0, %v3369
    %v3371 = vpop.f32.mrf.mxu0
    %v3372 = vadd.f32 0.0, %v3371
    %v3373 = vpop.f32.mrf.mxu0
    %v3374 = vadd.f32 0.0, %v3373
    %3375 = vmatprep.mubr.bf16.mxu0 0
    %3376 = vmatmul.mubr.bf16.gmra.mxu0 %v3084
    %v3377 = vpop.f32.mrf.mxu0
    %v3378 = vadd.f32 0.0, %v3377
    %v3379 = vpop.f32.mrf.mxu0
    %v3380 = vadd.f32 0.0, %v3379
    %v3381 = vpop.f32.mrf.mxu0
    %v3382 = vadd.f32 0.0, %v3381
    %v3383 = vpop.f32.mrf.mxu0
    %v3384 = vadd.f32 0.0, %v3383
    %3385 = vmatprep.mubr.bf16.mxu0 0
    %3386 = vmatmul.mubr.bf16.gmra.mxu0 %v3085
    %v3387 = vpop.f32.mrf.mxu0
    %v3388 = vadd.f32 0.0, %v3387
    %v3389 = vpop.f32.mrf.mxu0
    %v3390 = vadd.f32 0.0, %v3389
    %v3391 = vpop.f32.mrf.mxu0
    %v3392 = vadd.f32 0.0, %v3391
    %v3393 = vpop.f32.mrf.mxu0
    %v3394 = vadd.f32 0.0, %v3393
    %3395 = vmatprep.mubr.bf16.mxu0 0
    %3396 = vmatmul.mubr.bf16.gmra.mxu0 %v3086
    %v3397 = vpop.f32.mrf.mxu0
    %v3398 = vadd.f32 0.0, %v3397
    %v3399 = vpop.f32.mrf.mxu0
    %v3400 = vadd.f32 0.0, %v3399
    %v3401 = vpop.f32.mrf.mxu0
    %v3402 = vadd.f32 0.0, %v3401
    %v3403 = vpop.f32.mrf.mxu0
    %v3404 = vadd.f32 0.0, %v3403
    %3405 = vmatprep.mubr.bf16.mxu0 0
    %3406 = vmatmul.mubr.bf16.gmra.mxu0 %v3087
    %v3407 = vpop.f32.mrf.mxu0
    %v3408 = vadd.f32 0.0, %v3407
    %v3409 = vpop.f32.mrf.mxu0
    %v3410 = vadd.f32 0.0, %v3409
    %v3411 = vpop.f32.mrf.mxu0
    %v3412 = vadd.f32 0.0, %v3411
    %v3413 = vpop.f32.mrf.mxu0
    %v3414 = vadd.f32 0.0, %v3413
    %3415 = vmatprep.mubr.bf16.mxu0 0
    %3416 = vmatmul.mubr.bf16.gmra.mxu0 %v3088
    %v3417 = vpop.f32.mrf.mxu0
    %v3418 = vadd.f32 0.0, %v3417
    %v3419 = vpop.f32.mrf.mxu0
    %v3420 = vadd.f32 0.0, %v3419
    %v3421 = vpop.f32.mrf.mxu0
    %v3422 = vadd.f32 0.0, %v3421
    %v3423 = vpop.f32.mrf.mxu0
    %v3424 = vadd.f32 0.0, %v3423
    %3425 = vmatprep.mubr.bf16.mxu0 0
    %3426 = vmatmul.mubr.bf16.gmra.mxu0 %v3089
    %v3427 = vpop.f32.mrf.mxu0
    %v3428 = vadd.f32 0.0, %v3427
    %v3429 = vpop.f32.mrf.mxu0
    %v3430 = vadd.f32 0.0, %v3429
    %v3431 = vpop.f32.mrf.mxu0
    %v3432 = vadd.f32 0.0, %v3431
    %v3433 = vpop.f32.mrf.mxu0
    %v3434 = vadd.f32 0.0, %v3433
    %3435 = vmatprep.mubr.bf16.mxu0 0
    %3436 = vmatmul.mubr.bf16.gmra.mxu0 %v3090
    %v3437 = vpop.f32.mrf.mxu0
    %v3438 = vadd.f32 0.0, %v3437
    %v3439 = vpop.f32.mrf.mxu0
    %v3440 = vadd.f32 0.0, %v3439
    %v3441 = vpop.f32.mrf.mxu0
    %v3442 = vadd.f32 0.0, %v3441
    %v3443 = vpop.f32.mrf.mxu0
    %v3444 = vadd.f32 0.0, %v3443
    %3445 = vmatprep.mubr.bf16.mxu0 0
    %3446 = vmatmul.mubr.bf16.gmra.mxu0 %v3091
    %v3447 = vpop.f32.mrf.mxu0
    %v3448 = vadd.f32 0.0, %v3447
    %v3449 = vpop.f32.mrf.mxu0
    %v3450 = vadd.f32 0.0, %v3449
    %v3451 = vpop.f32.mrf.mxu0
    %v3452 = vadd.f32 0.0, %v3451
    %v3453 = vpop.f32.mrf.mxu0
    %v3454 = vadd.f32 0.0, %v3453
    %3455 = vmatprep.mubr.bf16.mxu0 0
    %3456 = vmatmul.mubr.bf16.gmra.mxu0 %v3092
    %v3457 = vpop.f32.mrf.mxu0
    %v3458 = vadd.f32 0.0, %v3457
    %v3459 = vpop.f32.mrf.mxu0
    %v3460 = vadd.f32 0.0, %v3459
    %v3461 = vpop.f32.mrf.mxu0
    %v3462 = vadd.f32 0.0, %v3461
    %v3463 = vpop.f32.mrf.mxu0
    %v3464 = vadd.f32 0.0, %v3463
    %3465 = vmatprep.mubr.bf16.mxu0 0
    %3466 = vmatmul.mubr.bf16.gmra.mxu0 %v3093
    %v3467 = vpop.f32.mrf.mxu0
    %v3468 = vadd.f32 0.0, %v3467
    %v3469 = vpop.f32.mrf.mxu0
    %v3470 = vadd.f32 0.0, %v3469
    %v3471 = vpop.f32.mrf.mxu0
    %v3472 = vadd.f32 0.0, %v3471
    %v3473 = vpop.f32.mrf.mxu0
    %v3474 = vadd.f32 0.0, %v3473
    %3475 = vmatprep.mubr.bf16.mxu0 0
    %3476 = vmatmul.mubr.bf16.gmra.mxu0 %v3094
    %v3477 = vpop.f32.mrf.mxu0
    %v3478 = vadd.f32 0.0, %v3477
    %v3479 = vpop.f32.mrf.mxu0
    %v3480 = vadd.f32 0.0, %v3479
    %v3481 = vpop.f32.mrf.mxu0
    %v3482 = vadd.f32 0.0, %v3481
    %v3483 = vpop.f32.mrf.mxu0
    %v3484 = vadd.f32 0.0, %v3483
    %3485 = vmatprep.mubr.bf16.mxu0 0
    %3486 = vmatmul.mubr.bf16.gmra.mxu0 %v3095
    %v3487 = vpop.f32.mrf.mxu0
    %v3488 = vadd.f32 0.0, %v3487
    %v3489 = vpop.f32.mrf.mxu0
    %v3490 = vadd.f32 0.0, %v3489
    %v3491 = vpop.f32.mrf.mxu0
    %v3492 = vadd.f32 0.0, %v3491
    %v3493 = vpop.f32.mrf.mxu0
    %v3494 = vadd.f32 0.0, %v3493
    %3495 = vmatprep.mubr.bf16.mxu0 0
    %3496 = vmatmul.mubr.bf16.gmra.mxu0 %v3096
    %v3497 = vpop.f32.mrf.mxu0
    %v3498 = vadd.f32 0.0, %v3497
    %v3499 = vpop.f32.mrf.mxu0
    %v3500 = vadd.f32 0.0, %v3499
    %v3501 = vpop.f32.mrf.mxu0
    %v3502 = vadd.f32 0.0, %v3501
    %v3503 = vpop.f32.mrf.mxu0
    %v3504 = vadd.f32 0.0, %v3503
    %3505 = vmatprep.mubr.bf16.mxu0 0
    %3506 = vmatmul.mubr.bf16.gmra.mxu0 %v3097
    %v3507 = vpop.f32.mrf.mxu0
    %v3508 = vadd.f32 0.0, %v3507
    %v3509 = vpop.f32.mrf.mxu0
    %v3510 = vadd.f32 0.0, %v3509
    %v3511 = vpop.f32.mrf.mxu0
    %v3512 = vadd.f32 0.0, %v3511
    %v3513 = vpop.f32.mrf.mxu0
    %v3514 = vadd.f32 0.0, %v3513
    %3515 = vmatprep.mubr.bf16.mxu0 0
    %3516 = vmatmul.mubr.bf16.gmra.mxu0 %v3098
    %v3517 = vpop.f32.mrf.mxu0
    %v3518 = vadd.f32 0.0, %v3517
    %v3519 = vpop.f32.mrf.mxu0
    %v3520 = vadd.f32 0.0, %v3519
    %v3521 = vpop.f32.mrf.mxu0
    %v3522 = vadd.f32 0.0, %v3521
    %v3523 = vpop.f32.mrf.mxu0
    %v3524 = vadd.f32 0.0, %v3523
    %3525 = vmatprep.mubr.bf16.mxu0 0
    %3526 = vmatmul.mubr.bf16.gmra.mxu0 %v3099
    %v3527 = vpop.f32.mrf.mxu0
    %v3528 = vadd.f32 0.0, %v3527
    %v3529 = vpop.f32.mrf.mxu0
    %v3530 = vadd.f32 0.0, %v3529
    %v3531 = vpop.f32.mrf.mxu0
    %v3532 = vadd.f32 0.0, %v3531
    %v3533 = vpop.f32.mrf.mxu0
    %v3534 = vadd.f32 0.0, %v3533
    %3535 = vmatprep.mubr.bf16.mxu0 0
    %3536 = vmatmul.mubr.bf16.gmra.mxu0 %v3100
    %v3537 = vpop.f32.mrf.mxu0
    %v3538 = vadd.f32 0.0, %v3537
    %v3539 = vpop.f32.mrf.mxu0
    %v3540 = vadd.f32 0.0, %v3539
    %v3541 = vpop.f32.mrf.mxu0
    %v3542 = vadd.f32 0.0, %v3541
    %v3543 = vpop.f32.mrf.mxu0
    %v3544 = vadd.f32 0.0, %v3543
    %3545 = vmatprep.mubr.bf16.mxu0 0
    %3546 = vmatmul.mubr.bf16.gmra.mxu0 %v3101
    %v3547 = vpop.f32.mrf.mxu0
    %v3548 = vadd.f32 0.0, %v3547
    %v3549 = vpop.f32.mrf.mxu0
    %v3550 = vadd.f32 0.0, %v3549
    %v3551 = vpop.f32.mrf.mxu0
    %v3552 = vadd.f32 0.0, %v3551
    %v3553 = vpop.f32.mrf.mxu0
    %v3554 = vadd.f32 0.0, %v3553
    %3555 = vmatprep.mubr.bf16.mxu0 0
    %3556 = vmatmul.mubr.bf16.gmra.mxu0 %v3102
    %v3557 = vpop.f32.mrf.mxu0
    %v3558 = vadd.f32 0.0, %v3557
    %v3559 = vpop.f32.mrf.mxu0
    %v3560 = vadd.f32 0.0, %v3559
    %v3561 = vpop.f32.mrf.mxu0
    %v3562 = vadd.f32 0.0, %v3561
    %v3563 = vpop.f32.mrf.mxu0
    %v3564 = vadd.f32 0.0, %v3563
    %3565 = vmatprep.mubr.bf16.mxu0 0
    %3566 = vmatmul.mubr.bf16.gmra.mxu0 %v3103
    %v3567 = vpop.f32.mrf.mxu0
    %v3568 = vadd.f32 0.0, %v3567
    %v3569 = vpop.f32.mrf.mxu0
    %v3570 = vadd.f32 0.0, %v3569
    %v3571 = vpop.f32.mrf.mxu0
    %v3572 = vadd.f32 0.0, %v3571
    %v3573 = vpop.f32.mrf.mxu0
    %v3574 = vadd.f32 0.0, %v3573
    %3575 = vmatprep.mubr.bf16.mxu0 0
    %3576 = vmatmul.mubr.bf16.gmra.mxu0 %v3104
    %v3577 = vpop.f32.mrf.mxu0
    %v3578 = vadd.f32 0.0, %v3577
    %v3579 = vpop.f32.mrf.mxu0
    %v3580 = vadd.f32 0.0, %v3579
    %v3581 = vpop.f32.mrf.mxu0
    %v3582 = vadd.f32 0.0, %v3581
    %v3583 = vpop.f32.mrf.mxu0
    %v3584 = vadd.f32 0.0, %v3583
    %3585 = vmatprep.mubr.bf16.mxu0 0
    %3586 = vmatmul.mubr.bf16.gmra.mxu0 %v3105
    %v3587 = vpop.f32.mrf.mxu0
    %v3588 = vadd.f32 0.0, %v3587
    %v3589 = vpop.f32.mrf.mxu0
    %v3590 = vadd.f32 0.0, %v3589
    %v3591 = vpop.f32.mrf.mxu0
    %v3592 = vadd.f32 0.0, %v3591
    %v3593 = vpop.f32.mrf.mxu0
    %v3594 = vadd.f32 0.0, %v3593
    %3595 = vmatprep.mubr.bf16.mxu0 0
    %3596 = vmatmul.mubr.bf16.gmra.mxu0 %v3106
    %v3597 = vpop.f32.mrf.mxu0
    %v3598 = vadd.f32 0.0, %v3597
    %v3599 = vpop.f32.mrf.mxu0
    %v3600 = vadd.f32 0.0, %v3599
    %v3601 = vpop.f32.mrf.mxu0
    %v3602 = vadd.f32 0.0, %v3601
    %v3603 = vpop.f32.mrf.mxu0
    %v3604 = vadd.f32 0.0, %v3603
    %3605 = vmatprep.mubr.bf16.mxu0 0
    %3606 = vmatmul.mubr.bf16.gmra.mxu0 %v3107
    %v3607 = vpop.f32.mrf.mxu0
    %v3608 = vadd.f32 0.0, %v3607
    %v3609 = vpop.f32.mrf.mxu0
    %v3610 = vadd.f32 0.0, %v3609
    %v3611 = vpop.f32.mrf.mxu0
    %v3612 = vadd.f32 0.0, %v3611
    %v3613 = vpop.f32.mrf.mxu0
    %v3614 = vadd.f32 0.0, %v3613
    %3615 = vmatprep.mubr.bf16.mxu0 0
    %3616 = vmatmul.mubr.bf16.gmra.mxu0 %v3108
    %v3617 = vpop.f32.mrf.mxu0
    %v3618 = vadd.f32 0.0, %v3617
    %v3619 = vpop.f32.mrf.mxu0
    %v3620 = vadd.f32 0.0, %v3619
    %v3621 = vpop.f32.mrf.mxu0
    %v3622 = vadd.f32 0.0, %v3621
    %v3623 = vpop.f32.mrf.mxu0
    %v3624 = vadd.f32 0.0, %v3623
    %3625 = vmatprep.mubr.bf16.mxu0 0
    %3626 = vmatmul.mubr.bf16.gmra.mxu0 %v3109
    %v3627 = vpop.f32.mrf.mxu0
    %v3628 = vadd.f32 0.0, %v3627
    %v3629 = vpop.f32.mrf.mxu0
    %v3630 = vadd.f32 0.0, %v3629
    %v3631 = vpop.f32.mrf.mxu0
    %v3632 = vadd.f32 0.0, %v3631
    %v3633 = vpop.f32.mrf.mxu0
    %v3634 = vadd.f32 0.0, %v3633
    %3635 = vmatprep.mubr.bf16.mxu0 0
    %3636 = vmatmul.mubr.bf16.gmra.mxu0 %v3110
    %v3637 = vpop.f32.mrf.mxu0
    %v3638 = vadd.f32 0.0, %v3637
    %v3639 = vpop.f32.mrf.mxu0
    %v3640 = vadd.f32 0.0, %v3639
    %v3641 = vpop.f32.mrf.mxu0
    %v3642 = vadd.f32 0.0, %v3641
    %v3643 = vpop.f32.mrf.mxu0
    %v3644 = vadd.f32 0.0, %v3643
    %3645 = vmatprep.mubr.bf16.mxu0 0
    %3646 = vmatmul.mubr.bf16.gmra.mxu0 %v3111
    %v3647 = vpop.f32.mrf.mxu0
    %v3648 = vadd.f32 0.0, %v3647
    %v3649 = vpop.f32.mrf.mxu0
    %v3650 = vadd.f32 0.0, %v3649
    %v3651 = vpop.f32.mrf.mxu0
    %v3652 = vadd.f32 0.0, %v3651
    %v3653 = vpop.f32.mrf.mxu0
    %v3654 = vadd.f32 0.0, %v3653
    %3655 = vmatprep.mubr.bf16.mxu0 0
    %3656 = vmatmul.mubr.bf16.gmra.mxu0 %v3112
    %v3657 = vpop.f32.mrf.mxu0
    %v3658 = vadd.f32 0.0, %v3657
    %v3659 = vpop.f32.mrf.mxu0
    %v3660 = vadd.f32 0.0, %v3659
    %v3661 = vpop.f32.mrf.mxu0
    %v3662 = vadd.f32 0.0, %v3661
    %v3663 = vpop.f32.mrf.mxu0
    %v3664 = vadd.f32 0.0, %v3663
    %3665 = vmatprep.mubr.bf16.mxu0 0
    %3666 = vmatmul.mubr.bf16.gmra.mxu0 %v3113
    %v3667 = vpop.f32.mrf.mxu0
    %v3668 = vadd.f32 0.0, %v3667
    %v3669 = vpop.f32.mrf.mxu0
    %v3670 = vadd.f32 0.0, %v3669
    %v3671 = vpop.f32.mrf.mxu0
    %v3672 = vadd.f32 0.0, %v3671
    %v3673 = vpop.f32.mrf.mxu0
    %v3674 = vadd.f32 0.0, %v3673
    %3675 = vmatprep.mubr.bf16.mxu0 0
    %3676 = vmatmul.mubr.bf16.gmra.mxu0 %v3114
    %v3677 = vpop.f32.mrf.mxu0
    %v3678 = vadd.f32 0.0, %v3677
    %v3679 = vpop.f32.mrf.mxu0
    %v3680 = vadd.f32 0.0, %v3679
    %v3681 = vpop.f32.mrf.mxu0
    %v3682 = vadd.f32 0.0, %v3681
    %v3683 = vpop.f32.mrf.mxu0
    %v3684 = vadd.f32 0.0, %v3683
    %3685 = vmatprep.mubr.bf16.mxu0 0
    %3686 = vmatmul.mubr.bf16.gmra.mxu0 %v3115
    %v3687 = vpop.f32.mrf.mxu0
    %v3688 = vadd.f32 0.0, %v3687
    %v3689 = vpop.f32.mrf.mxu0
    %v3690 = vadd.f32 0.0, %v3689
    %v3691 = vpop.f32.mrf.mxu0
    %v3692 = vadd.f32 0.0, %v3691
    %v3693 = vpop.f32.mrf.mxu0
    %v3694 = vadd.f32 0.0, %v3693
    %3695 = vmatprep.mubr.bf16.mxu0 0
    %3696 = vmatmul.mubr.bf16.gmra.mxu0 %v3116
    %v3697 = vpop.f32.mrf.mxu0
    %v3698 = vadd.f32 0.0, %v3697
    %v3699 = vpop.f32.mrf.mxu0
    %v3700 = vadd.f32 0.0, %v3699
    %v3701 = vpop.f32.mrf.mxu0
    %v3702 = vadd.f32 0.0, %v3701
    %v3703 = vpop.f32.mrf.mxu0
    %v3704 = vadd.f32 0.0, %v3703
    %3705 = vmatprep.mubr.bf16.mxu0 0
    %3706 = vmatmul.mubr.bf16.gmra.mxu0 %v3117
    %v3707 = vpop.f32.mrf.mxu0
    %v3708 = vadd.f32 0.0, %v3707
    %v3709 = vpop.f32.mrf.mxu0
    %v3710 = vadd.f32 0.0, %v3709
    %v3711 = vpop.f32.mrf.mxu0
    %v3712 = vadd.f32 0.0, %v3711
    %v3713 = vpop.f32.mrf.mxu0
    %v3714 = vadd.f32 0.0, %v3713
    %3715 = vmatprep.mubr.bf16.mxu0 0
    %3716 = vmatmul.mubr.bf16.gmra.mxu0 %v3118
    %v3717 = vpop.f32.mrf.mxu0
    %v3718 = vadd.f32 0.0, %v3717
    %v3719 = vpop.f32.mrf.mxu0
    %v3720 = vadd.f32 0.0, %v3719
    %v3721 = vpop.f32.mrf.mxu0
    %v3722 = vadd.f32 0.0, %v3721
    %v3723 = vpop.f32.mrf.mxu0
    %v3724 = vadd.f32 0.0, %v3723
    %3725 = vmatprep.mubr.bf16.mxu0 0
    %3726 = vmatmul.mubr.bf16.gmra.mxu0 %v3119
    %v3727 = vpop.f32.mrf.mxu0
    %v3728 = vadd.f32 0.0, %v3727
    %v3729 = vpop.f32.mrf.mxu0
    %v3730 = vadd.f32 0.0, %v3729
    %v3731 = vpop.f32.mrf.mxu0
    %v3732 = vadd.f32 0.0, %v3731
    %v3733 = vpop.f32.mrf.mxu0
    %v3734 = vadd.f32 0.0, %v3733
    %3735 = vmatprep.mubr.bf16.mxu0 0
    %3736 = vmatmul.mubr.bf16.gmra.mxu0 %v3120
    %v3737 = vpop.f32.mrf.mxu0
    %v3738 = vadd.f32 0.0, %v3737
    %v3739 = vpop.f32.mrf.mxu0
    %v3740 = vadd.f32 0.0, %v3739
    %v3741 = vpop.f32.mrf.mxu0
    %v3742 = vadd.f32 0.0, %v3741
    %v3743 = vpop.f32.mrf.mxu0
    %v3744 = vadd.f32 0.0, %v3743
    %3745 = vmatprep.mubr.bf16.mxu0 0
    %3746 = vmatmul.mubr.bf16.gmra.mxu0 %v3121
    %v3747 = vpop.f32.mrf.mxu0
    %v3748 = vadd.f32 0.0, %v3747
    %v3749 = vpop.f32.mrf.mxu0
    %v3750 = vadd.f32 0.0, %v3749
    %v3751 = vpop.f32.mrf.mxu0
    %v3752 = vadd.f32 0.0, %v3751
    %v3753 = vpop.f32.mrf.mxu0
    %v3754 = vadd.f32 0.0, %v3753
    %3755 = vmatprep.mubr.bf16.mxu0 0
    %3756 = vmatmul.mubr.bf16.gmra.mxu0 %v3122
    %v3757 = vpop.f32.mrf.mxu0
    %v3758 = vadd.f32 0.0, %v3757
    %v3759 = vpop.f32.mrf.mxu0
    %v3760 = vadd.f32 0.0, %v3759
    %v3761 = vpop.f32.mrf.mxu0
    %v3762 = vadd.f32 0.0, %v3761
    %v3763 = vpop.f32.mrf.mxu0
    %v3764 = vadd.f32 0.0, %v3763
    %3765 = vmatprep.mubr.bf16.mxu0 0
    %3766 = vmatmul.mubr.bf16.gmra.mxu0 %v3123
    %v3767 = vpop.f32.mrf.mxu0
    %v3768 = vadd.f32 0.0, %v3767
    %v3769 = vpop.f32.mrf.mxu0
    %v3770 = vadd.f32 0.0, %v3769
    %v3771 = vpop.f32.mrf.mxu0
    %v3772 = vadd.f32 0.0, %v3771
    %v3773 = vpop.f32.mrf.mxu0
    %v3774 = vadd.f32 0.0, %v3773
    %3775 = vmatprep.mubr.bf16.mxu0 0
    %3776 = vmatmul.mubr.bf16.gmra.mxu0 %v3124
    %v3777 = vpop.f32.mrf.mxu0
    %v3778 = vadd.f32 0.0, %v3777
    %v3779 = vpop.f32.mrf.mxu0
    %v3780 = vadd.f32 0.0, %v3779
    %v3781 = vpop.f32.mrf.mxu0
    %v3782 = vadd.f32 0.0, %v3781
    %v3783 = vpop.f32.mrf.mxu0
    %v3784 = vadd.f32 0.0, %v3783
    %3785 = vmatprep.mubr.bf16.mxu0 0
    %3786 = vmatmul.mubr.bf16.gmra.mxu0 %v3125
    %v3787 = vpop.f32.mrf.mxu0
    %v3788 = vadd.f32 0.0, %v3787
    %v3789 = vpop.f32.mrf.mxu0
    %v3790 = vadd.f32 0.0, %v3789
    %v3791 = vpop.f32.mrf.mxu0
    %v3792 = vadd.f32 0.0, %v3791
    %v3793 = vpop.f32.mrf.mxu0
    %v3794 = vadd.f32 0.0, %v3793
    %3795 = vmatprep.mubr.bf16.mxu0 0
    %3796 = vmatmul.mubr.bf16.gmra.mxu0 %v3126
    %v3797 = vpop.f32.mrf.mxu0
    %v3798 = vadd.f32 0.0, %v3797
    %v3799 = vpop.f32.mrf.mxu0
    %v3800 = vadd.f32 0.0, %v3799
    %v3801 = vpop.f32.mrf.mxu0
    %v3802 = vadd.f32 0.0, %v3801
    %v3803 = vpop.f32.mrf.mxu0
    %v3804 = vadd.f32 0.0, %v3803
    %3805 = vmatprep.mubr.bf16.mxu0 0
    %3806 = vmatmul.mubr.bf16.gmra.mxu0 %v3127
    %v3807 = vpop.f32.mrf.mxu0
    %v3808 = vadd.f32 0.0, %v3807
    %v3809 = vpop.f32.mrf.mxu0
    %v3810 = vadd.f32 0.0, %v3809
    %v3811 = vpop.f32.mrf.mxu0
    %v3812 = vadd.f32 0.0, %v3811
    %v3813 = vpop.f32.mrf.mxu0
    %v3814 = vadd.f32 0.0, %v3813
    %3815 = vmatprep.mubr.bf16.mxu0 0
    %3816 = vmatmul.mubr.bf16.gmra.mxu0 %v3128
    %v3817 = vpop.f32.mrf.mxu0
    %v3818 = vadd.f32 0.0, %v3817
    %v3819 = vpop.f32.mrf.mxu0
    %v3820 = vadd.f32 0.0, %v3819
    %v3821 = vpop.f32.mrf.mxu0
    %v3822 = vadd.f32 0.0, %v3821
    %v3823 = vpop.f32.mrf.mxu0
    %v3824 = vadd.f32 0.0, %v3823
    %3825 = vmatprep.mubr.bf16.mxu0 0
    %3826 = vmatmul.mubr.bf16.gmra.mxu0 %v3129
    %v3827 = vpop.f32.mrf.mxu0
    %v3828 = vadd.f32 0.0, %v3827
    %v3829 = vpop.f32.mrf.mxu0
    %v3830 = vadd.f32 0.0, %v3829
    %v3831 = vpop.f32.mrf.mxu0
    %v3832 = vadd.f32 0.0, %v3831
    %v3833 = vpop.f32.mrf.mxu0
    %v3834 = vadd.f32 0.0, %v3833
    %3835 = vmatprep.mubr.bf16.mxu0 0
    %3836 = vmatmul.mubr.bf16.gmra.mxu0 %v3130
    %v3837 = vpop.f32.mrf.mxu0
    %v3838 = vadd.f32 0.0, %v3837
    %v3839 = vpop.f32.mrf.mxu0
    %v3840 = vadd.f32 0.0, %v3839
    %v3841 = vpop.f32.mrf.mxu0
    %v3842 = vadd.f32 0.0, %v3841
    %v3843 = vpop.f32.mrf.mxu0
    %v3844 = vadd.f32 0.0, %v3843
    %3845 = vdwg.mxu0
    %3846 = vmatprep.subr.bf16.mxu0 %v3290
    %3847 = vmatpush1.bf16.msra.mxu0 %v3289
    %3848 = vmatprep.subr.bf16.mxu0 %v3286
    %3849 = vmatpush1.bf16.msra.mxu0 %v3285
    %3850 = vmatprep.subr.bf16.mxu0 %v3282
    %3851 = vmatpush1.bf16.msra.mxu0 %v3281
    %3852 = vmatprep.subr.bf16.mxu0 %v3278
    %3853 = vmatpush1.bf16.msra.mxu0 %v3277
    %3854 = vmatprep.subr.bf16.mxu0 %v3274
    %3855 = vmatpush1.bf16.msra.mxu0 %v3273
    %3856 = vmatprep.subr.bf16.mxu0 %v3270
    %3857 = vmatpush1.bf16.msra.mxu0 %v3269
    %3858 = vmatprep.subr.bf16.mxu0 %v3266
    %3859 = vmatpush1.bf16.msra.mxu0 %v3265
    %3860 = vmatprep.subr.bf16.mxu0 %v3262
    %3861 = vmatpush1.bf16.msra.mxu0 %v3261
    %3862 = vmatprep.subr.bf16.mxu0 0
    %3863 = vmatpush2.bf16.msra.mxu0 0
    %3864 = vmatprep.subr.bf16.mxu0 0
    %3865 = vmatpush2.bf16.msra.mxu0 0
    %3866 = vmatprep.subr.bf16.mxu0 0
    %3867 = vmatpush2.bf16.msra.mxu0 0
    %3868 = vmatprep.subr.bf16.mxu0 0
    %3869 = vmatpush2.bf16.msra.mxu0 0
    %3870 = vmatprep.subr.bf16.mxu0 0
    %3871 = vmatpush2.bf16.msra.mxu0 0
    %3872 = vmatprep.subr.bf16.mxu0 0
    %3873 = vmatpush2.bf16.msra.mxu0 0
    %3874 = vmatprep.subr.bf16.mxu0 0
    %3875 = vmatpush2.bf16.msra.mxu0 0
    %3876 = vmatprep.subr.bf16.mxu0 0
    %3877 = vmatpush2.bf16.msra.mxu0 0
    %3878 = vmatprep.mubr.bf16.mxu0 0
    %3879 = vmatmul.mubr.bf16.gmra.mxu0 %v3082
    %v3880 = vpop.f32.mrf.mxu0
    %v3881 = vadd.f32 0.0, %v3880
    %v3882 = vpop.f32.mrf.mxu0
    %v3883 = vadd.f32 0.0, %v3882
    %v3884 = vpop.f32.mrf.mxu0
    %v3885 = vadd.f32 0.0, %v3884
    %v3886 = vpop.f32.mrf.mxu0
    %v3887 = vadd.f32 0.0, %v3886
    %3888 = vmatprep.mubr.bf16.mxu0 0
    %3889 = vmatmul.mubr.bf16.gmra.mxu0 %v3083
    %v3890 = vpop.f32.mrf.mxu0
    %v3891 = vadd.f32 0.0, %v3890
    %v3892 = vpop.f32.mrf.mxu0
    %v3893 = vadd.f32 0.0, %v3892
    %v3894 = vpop.f32.mrf.mxu0
    %v3895 = vadd.f32 0.0, %v3894
    %v3896 = vpop.f32.mrf.mxu0
    %v3897 = vadd.f32 0.0, %v3896
    %3898 = vmatprep.mubr.bf16.mxu0 0
    %3899 = vmatmul.mubr.bf16.gmra.mxu0 %v3084
    %v3900 = vpop.f32.mrf.mxu0
    %v3901 = vadd.f32 0.0, %v3900
    %v3902 = vpop.f32.mrf.mxu0
    %v3903 = vadd.f32 0.0, %v3902
    %v3904 = vpop.f32.mrf.mxu0
    %v3905 = vadd.f32 0.0, %v3904
    %v3906 = vpop.f32.mrf.mxu0
    %v3907 = vadd.f32 0.0, %v3906
    %3908 = vmatprep.mubr.bf16.mxu0 0
    %3909 = vmatmul.mubr.bf16.gmra.mxu0 %v3085
    %v3910 = vpop.f32.mrf.mxu0
    %v3911 = vadd.f32 0.0, %v3910
    %v3912 = vpop.f32.mrf.mxu0
    %v3913 = vadd.f32 0.0, %v3912
    %v3914 = vpop.f32.mrf.mxu0
    %v3915 = vadd.f32 0.0, %v3914
    %v3916 = vpop.f32.mrf.mxu0
    %v3917 = vadd.f32 0.0, %v3916
    %3918 = vmatprep.mubr.bf16.mxu0 0
    %3919 = vmatmul.mubr.bf16.gmra.mxu0 %v3086
    %v3920 = vpop.f32.mrf.mxu0
    %v3921 = vadd.f32 0.0, %v3920
    %v3922 = vpop.f32.mrf.mxu0
    %v3923 = vadd.f32 0.0, %v3922
    %v3924 = vpop.f32.mrf.mxu0
    %v3925 = vadd.f32 0.0, %v3924
    %v3926 = vpop.f32.mrf.mxu0
    %v3927 = vadd.f32 0.0, %v3926
    %3928 = vmatprep.mubr.bf16.mxu0 0
    %3929 = vmatmul.mubr.bf16.gmra.mxu0 %v3087
    %v3930 = vpop.f32.mrf.mxu0
    %v3931 = vadd.f32 0.0, %v3930
    %v3932 = vpop.f32.mrf.mxu0
    %v3933 = vadd.f32 0.0, %v3932
    %v3934 = vpop.f32.mrf.mxu0
    %v3935 = vadd.f32 0.0, %v3934
    %v3936 = vpop.f32.mrf.mxu0
    %v3937 = vadd.f32 0.0, %v3936
    %3938 = vmatprep.mubr.bf16.mxu0 0
    %3939 = vmatmul.mubr.bf16.gmra.mxu0 %v3088
    %v3940 = vpop.f32.mrf.mxu0
    %v3941 = vadd.f32 0.0, %v3940
    %v3942 = vpop.f32.mrf.mxu0
    %v3943 = vadd.f32 0.0, %v3942
    %v3944 = vpop.f32.mrf.mxu0
    %v3945 = vadd.f32 0.0, %v3944
    %v3946 = vpop.f32.mrf.mxu0
    %v3947 = vadd.f32 0.0, %v3946
    %3948 = vmatprep.mubr.bf16.mxu0 0
    %3949 = vmatmul.mubr.bf16.gmra.mxu0 %v3089
    %v3950 = vpop.f32.mrf.mxu0
    %v3951 = vadd.f32 0.0, %v3950
    %v3952 = vpop.f32.mrf.mxu0
    %v3953 = vadd.f32 0.0, %v3952
    %v3954 = vpop.f32.mrf.mxu0
    %v3955 = vadd.f32 0.0, %v3954
    %v3956 = vpop.f32.mrf.mxu0
    %v3957 = vadd.f32 0.0, %v3956
    %3958 = vmatprep.mubr.bf16.mxu0 0
    %3959 = vmatmul.mubr.bf16.gmra.mxu0 %v3090
    %v3960 = vpop.f32.mrf.mxu0
    %v3961 = vadd.f32 0.0, %v3960
    %v3962 = vpop.f32.mrf.mxu0
    %v3963 = vadd.f32 0.0, %v3962
    %v3964 = vpop.f32.mrf.mxu0
    %v3965 = vadd.f32 0.0, %v3964
    %v3966 = vpop.f32.mrf.mxu0
    %v3967 = vadd.f32 0.0, %v3966
    %3968 = vmatprep.mubr.bf16.mxu0 0
    %3969 = vmatmul.mubr.bf16.gmra.mxu0 %v3091
    %v3970 = vpop.f32.mrf.mxu0
    %v3971 = vadd.f32 0.0, %v3970
    %v3972 = vpop.f32.mrf.mxu0
    %v3973 = vadd.f32 0.0, %v3972
    %v3974 = vpop.f32.mrf.mxu0
    %v3975 = vadd.f32 0.0, %v3974
    %v3976 = vpop.f32.mrf.mxu0
    %v3977 = vadd.f32 0.0, %v3976
    %3978 = vmatprep.mubr.bf16.mxu0 0
    %3979 = vmatmul.mubr.bf16.gmra.mxu0 %v3092
    %v3980 = vpop.f32.mrf.mxu0
    %v3981 = vadd.f32 0.0, %v3980
    %v3982 = vpop.f32.mrf.mxu0
    %v3983 = vadd.f32 0.0, %v3982
    %v3984 = vpop.f32.mrf.mxu0
    %v3985 = vadd.f32 0.0, %v3984
    %v3986 = vpop.f32.mrf.mxu0
    %v3987 = vadd.f32 0.0, %v3986
    %3988 = vmatprep.mubr.bf16.mxu0 0
    %3989 = vmatmul.mubr.bf16.gmra.mxu0 %v3093
    %v3990 = vpop.f32.mrf.mxu0
    %v3991 = vadd.f32 0.0, %v3990
    %v3992 = vpop.f32.mrf.mxu0
    %v3993 = vadd.f32 0.0, %v3992
    %v3994 = vpop.f32.mrf.mxu0
    %v3995 = vadd.f32 0.0, %v3994
    %v3996 = vpop.f32.mrf.mxu0
    %v3997 = vadd.f32 0.0, %v3996
    %3998 = vmatprep.mubr.bf16.mxu0 0
    %3999 = vmatmul.mubr.bf16.gmra.mxu0 %v3094
    %v4000 = vpop.f32.mrf.mxu0
    %v4001 = vadd.f32 0.0, %v4000
    %v4002 = vpop.f32.mrf.mxu0
    %v4003 = vadd.f32 0.0, %v4002
    %v4004 = vpop.f32.mrf.mxu0
    %v4005 = vadd.f32 0.0, %v4004
    %v4006 = vpop.f32.mrf.mxu0
    %v4007 = vadd.f32 0.0, %v4006
    %4008 = vmatprep.mubr.bf16.mxu0 0
    %4009 = vmatmul.mubr.bf16.gmra.mxu0 %v3095
    %v4010 = vpop.f32.mrf.mxu0
    %v4011 = vadd.f32 0.0, %v4010
    %v4012 = vpop.f32.mrf.mxu0
    %v4013 = vadd.f32 0.0, %v4012
    %v4014 = vpop.f32.mrf.mxu0
    %v4015 = vadd.f32 0.0, %v4014
    %v4016 = vpop.f32.mrf.mxu0
    %v4017 = vadd.f32 0.0, %v4016
    %4018 = vmatprep.mubr.bf16.mxu0 0
    %4019 = vmatmul.mubr.bf16.gmra.mxu0 %v3096
    %v4020 = vpop.f32.mrf.mxu0
    %v4021 = vadd.f32 0.0, %v4020
    %v4022 = vpop.f32.mrf.mxu0
    %v4023 = vadd.f32 0.0, %v4022
    %v4024 = vpop.f32.mrf.mxu0
    %v4025 = vadd.f32 0.0, %v4024
    %v4026 = vpop.f32.mrf.mxu0
    %v4027 = vadd.f32 0.0, %v4026
    %4028 = vmatprep.mubr.bf16.mxu0 0
    %4029 = vmatmul.mubr.bf16.gmra.mxu0 %v3097
    %v4030 = vpop.f32.mrf.mxu0
    %v4031 = vadd.f32 0.0, %v4030
    %v4032 = vpop.f32.mrf.mxu0
    %v4033 = vadd.f32 0.0, %v4032
    %v4034 = vpop.f32.mrf.mxu0
    %v4035 = vadd.f32 0.0, %v4034
    %v4036 = vpop.f32.mrf.mxu0
    %v4037 = vadd.f32 0.0, %v4036
    %4038 = vmatprep.mubr.bf16.mxu0 0
    %4039 = vmatmul.mubr.bf16.gmra.mxu0 %v3098
    %v4040 = vpop.f32.mrf.mxu0
    %v4041 = vadd.f32 0.0, %v4040
    %v4042 = vpop.f32.mrf.mxu0
    %v4043 = vadd.f32 0.0, %v4042
    %v4044 = vpop.f32.mrf.mxu0
    %v4045 = vadd.f32 0.0, %v4044
    %v4046 = vpop.f32.mrf.mxu0
    %v4047 = vadd.f32 0.0, %v4046
    %4048 = vmatprep.mubr.bf16.mxu0 0
    %4049 = vmatmul.mubr.bf16.gmra.mxu0 %v3099
    %v4050 = vpop.f32.mrf.mxu0
    %v4051 = vadd.f32 0.0, %v4050
    %v4052 = vpop.f32.mrf.mxu0
    %v4053 = vadd.f32 0.0, %v4052
    %v4054 = vpop.f32.mrf.mxu0
    %v4055 = vadd.f32 0.0, %v4054
    %v4056 = vpop.f32.mrf.mxu0
    %v4057 = vadd.f32 0.0, %v4056
    %4058 = vmatprep.mubr.bf16.mxu0 0
    %4059 = vmatmul.mubr.bf16.gmra.mxu0 %v3100
    %v4060 = vpop.f32.mrf.mxu0
    %v4061 = vadd.f32 0.0, %v4060
    %v4062 = vpop.f32.mrf.mxu0
    %v4063 = vadd.f32 0.0, %v4062
    %v4064 = vpop.f32.mrf.mxu0
    %v4065 = vadd.f32 0.0, %v4064
    %v4066 = vpop.f32.mrf.mxu0
    %v4067 = vadd.f32 0.0, %v4066
    %4068 = vmatprep.mubr.bf16.mxu0 0
    %4069 = vmatmul.mubr.bf16.gmra.mxu0 %v3101
    %v4070 = vpop.f32.mrf.mxu0
    %v4071 = vadd.f32 0.0, %v4070
    %v4072 = vpop.f32.mrf.mxu0
    %v4073 = vadd.f32 0.0, %v4072
    %v4074 = vpop.f32.mrf.mxu0
    %v4075 = vadd.f32 0.0, %v4074
    %v4076 = vpop.f32.mrf.mxu0
    %v4077 = vadd.f32 0.0, %v4076
    %4078 = vmatprep.mubr.bf16.mxu0 0
    %4079 = vmatmul.mubr.bf16.gmra.mxu0 %v3102
    %v4080 = vpop.f32.mrf.mxu0
    %v4081 = vadd.f32 0.0, %v4080
    %v4082 = vpop.f32.mrf.mxu0
    %v4083 = vadd.f32 0.0, %v4082
    %v4084 = vpop.f32.mrf.mxu0
    %v4085 = vadd.f32 0.0, %v4084
    %v4086 = vpop.f32.mrf.mxu0
    %v4087 = vadd.f32 0.0, %v4086
    %4088 = vmatprep.mubr.bf16.mxu0 0
    %4089 = vmatmul.mubr.bf16.gmra.mxu0 %v3103
    %v4090 = vpop.f32.mrf.mxu0
    %v4091 = vadd.f32 0.0, %v4090
    %v4092 = vpop.f32.mrf.mxu0
    %v4093 = vadd.f32 0.0, %v4092
    %v4094 = vpop.f32.mrf.mxu0
    %v4095 = vadd.f32 0.0, %v4094
    %v4096 = vpop.f32.mrf.mxu0
    %v4097 = vadd.f32 0.0, %v4096
    %4098 = vmatprep.mubr.bf16.mxu0 0
    %4099 = vmatmul.mubr.bf16.gmra.mxu0 %v3104
    %v4100 = vpop.f32.mrf.mxu0
    %v4101 = vadd.f32 0.0, %v4100
    %v4102 = vpop.f32.mrf.mxu0
    %v4103 = vadd.f32 0.0, %v4102
    %v4104 = vpop.f32.mrf.mxu0
    %v4105 = vadd.f32 0.0, %v4104
    %v4106 = vpop.f32.mrf.mxu0
    %v4107 = vadd.f32 0.0, %v4106
    %4108 = vmatprep.mubr.bf16.mxu0 0
    %4109 = vmatmul.mubr.bf16.gmra.mxu0 %v3105
    %v4110 = vpop.f32.mrf.mxu0
    %v4111 = vadd.f32 0.0, %v4110
    %v4112 = vpop.f32.mrf.mxu0
    %v4113 = vadd.f32 0.0, %v4112
    %v4114 = vpop.f32.mrf.mxu0
    %v4115 = vadd.f32 0.0, %v4114
    %v4116 = vpop.f32.mrf.mxu0
    %v4117 = vadd.f32 0.0, %v4116
    %4118 = vmatprep.mubr.bf16.mxu0 0
    %4119 = vmatmul.mubr.bf16.gmra.mxu0 %v3106
    %v4120 = vpop.f32.mrf.mxu0
    %v4121 = vadd.f32 0.0, %v4120
    %v4122 = vpop.f32.mrf.mxu0
    %v4123 = vadd.f32 0.0, %v4122
    %v4124 = vpop.f32.mrf.mxu0
    %v4125 = vadd.f32 0.0, %v4124
    %v4126 = vpop.f32.mrf.mxu0
    %v4127 = vadd.f32 0.0, %v4126
    %4128 = vmatprep.mubr.bf16.mxu0 0
    %4129 = vmatmul.mubr.bf16.gmra.mxu0 %v3107
    %v4130 = vpop.f32.mrf.mxu0
    %v4131 = vadd.f32 0.0, %v4130
    %v4132 = vpop.f32.mrf.mxu0
    %v4133 = vadd.f32 0.0, %v4132
    %v4134 = vpop.f32.mrf.mxu0
    %v4135 = vadd.f32 0.0, %v4134
    %v4136 = vpop.f32.mrf.mxu0
    %v4137 = vadd.f32 0.0, %v4136
    %4138 = vmatprep.mubr.bf16.mxu0 0
    %4139 = vmatmul.mubr.bf16.gmra.mxu0 %v3108
    %v4140 = vpop.f32.mrf.mxu0
    %v4141 = vadd.f32 0.0, %v4140
    %v4142 = vpop.f32.mrf.mxu0
    %v4143 = vadd.f32 0.0, %v4142
    %v4144 = vpop.f32.mrf.mxu0
    %v4145 = vadd.f32 0.0, %v4144
    %v4146 = vpop.f32.mrf.mxu0
    %v4147 = vadd.f32 0.0, %v4146
    %4148 = vmatprep.mubr.bf16.mxu0 0
    %4149 = vmatmul.mubr.bf16.gmra.mxu0 %v3109
    %v4150 = vpop.f32.mrf.mxu0
    %v4151 = vadd.f32 0.0, %v4150
    %v4152 = vpop.f32.mrf.mxu0
    %v4153 = vadd.f32 0.0, %v4152
    %v4154 = vpop.f32.mrf.mxu0
    %v4155 = vadd.f32 0.0, %v4154
    %v4156 = vpop.f32.mrf.mxu0
    %v4157 = vadd.f32 0.0, %v4156
    %4158 = vmatprep.mubr.bf16.mxu0 0
    %4159 = vmatmul.mubr.bf16.gmra.mxu0 %v3110
    %v4160 = vpop.f32.mrf.mxu0
    %v4161 = vadd.f32 0.0, %v4160
    %v4162 = vpop.f32.mrf.mxu0
    %v4163 = vadd.f32 0.0, %v4162
    %v4164 = vpop.f32.mrf.mxu0
    %v4165 = vadd.f32 0.0, %v4164
    %v4166 = vpop.f32.mrf.mxu0
    %v4167 = vadd.f32 0.0, %v4166
    %4168 = vmatprep.mubr.bf16.mxu0 0
    %4169 = vmatmul.mubr.bf16.gmra.mxu0 %v3111
    %v4170 = vpop.f32.mrf.mxu0
    %v4171 = vadd.f32 0.0, %v4170
    %v4172 = vpop.f32.mrf.mxu0
    %v4173 = vadd.f32 0.0, %v4172
    %v4174 = vpop.f32.mrf.mxu0
    %v4175 = vadd.f32 0.0, %v4174
    %v4176 = vpop.f32.mrf.mxu0
    %v4177 = vadd.f32 0.0, %v4176
    %4178 = vmatprep.mubr.bf16.mxu0 0
    %4179 = vmatmul.mubr.bf16.gmra.mxu0 %v3112
    %v4180 = vpop.f32.mrf.mxu0
    %v4181 = vadd.f32 0.0, %v4180
    %v4182 = vpop.f32.mrf.mxu0
    %v4183 = vadd.f32 0.0, %v4182
    %v4184 = vpop.f32.mrf.mxu0
    %v4185 = vadd.f32 0.0, %v4184
    %v4186 = vpop.f32.mrf.mxu0
    %v4187 = vadd.f32 0.0, %v4186
    %4188 = vmatprep.mubr.bf16.mxu0 0
    %4189 = vmatmul.mubr.bf16.gmra.mxu0 %v3113
    %v4190 = vpop.f32.mrf.mxu0
    %v4191 = vadd.f32 0.0, %v4190
    %v4192 = vpop.f32.mrf.mxu0
    %v4193 = vadd.f32 0.0, %v4192
    %v4194 = vpop.f32.mrf.mxu0
    %v4195 = vadd.f32 0.0, %v4194
    %v4196 = vpop.f32.mrf.mxu0
    %v4197 = vadd.f32 0.0, %v4196
    %4198 = vmatprep.mubr.bf16.mxu0 0
    %4199 = vmatmul.mubr.bf16.gmra.mxu0 %v3114
    %v4200 = vpop.f32.mrf.mxu0
    %v4201 = vadd.f32 0.0, %v4200
    %v4202 = vpop.f32.mrf.mxu0
    %v4203 = vadd.f32 0.0, %v4202
    %v4204 = vpop.f32.mrf.mxu0
    %v4205 = vadd.f32 0.0, %v4204
    %v4206 = vpop.f32.mrf.mxu0
    %v4207 = vadd.f32 0.0, %v4206
    %4208 = vmatprep.mubr.bf16.mxu0 0
    %4209 = vmatmul.mubr.bf16.gmra.mxu0 %v3115
    %v4210 = vpop.f32.mrf.mxu0
    %v4211 = vadd.f32 0.0, %v4210
    %v4212 = vpop.f32.mrf.mxu0
    %v4213 = vadd.f32 0.0, %v4212
    %v4214 = vpop.f32.mrf.mxu0
    %v4215 = vadd.f32 0.0, %v4214
    %v4216 = vpop.f32.mrf.mxu0
    %v4217 = vadd.f32 0.0, %v4216
    %4218 = vmatprep.mubr.bf16.mxu0 0
    %4219 = vmatmul.mubr.bf16.gmra.mxu0 %v3116
    %v4220 = vpop.f32.mrf.mxu0
    %v4221 = vadd.f32 0.0, %v4220
    %v4222 = vpop.f32.mrf.mxu0
    %v4223 = vadd.f32 0.0, %v4222
    %v4224 = vpop.f32.mrf.mxu0
    %v4225 = vadd.f32 0.0, %v4224
    %v4226 = vpop.f32.mrf.mxu0
    %v4227 = vadd.f32 0.0, %v4226
    %4228 = vmatprep.mubr.bf16.mxu0 0
    %4229 = vmatmul.mubr.bf16.gmra.mxu0 %v3117
    %v4230 = vpop.f32.mrf.mxu0
    %v4231 = vadd.f32 0.0, %v4230
    %v4232 = vpop.f32.mrf.mxu0
    %v4233 = vadd.f32 0.0, %v4232
    %v4234 = vpop.f32.mrf.mxu0
    %v4235 = vadd.f32 0.0, %v4234
    %v4236 = vpop.f32.mrf.mxu0
    %v4237 = vadd.f32 0.0, %v4236
    %4238 = vmatprep.mubr.bf16.mxu0 0
    %4239 = vmatmul.mubr.bf16.gmra.mxu0 %v3118
    %v4240 = vpop.f32.mrf.mxu0
    %v4241 = vadd.f32 0.0, %v4240
    %v4242 = vpop.f32.mrf.mxu0
    %v4243 = vadd.f32 0.0, %v4242
    %v4244 = vpop.f32.mrf.mxu0
    %v4245 = vadd.f32 0.0, %v4244
    %v4246 = vpop.f32.mrf.mxu0
    %v4247 = vadd.f32 0.0, %v4246
    %4248 = vmatprep.mubr.bf16.mxu0 0
    %4249 = vmatmul.mubr.bf16.gmra.mxu0 %v3119
    %v4250 = vpop.f32.mrf.mxu0
    %v4251 = vadd.f32 0.0, %v4250
    %v4252 = vpop.f32.mrf.mxu0
    %v4253 = vadd.f32 0.0, %v4252
    %v4254 = vpop.f32.mrf.mxu0
    %v4255 = vadd.f32 0.0, %v4254
    %v4256 = vpop.f32.mrf.mxu0
    %v4257 = vadd.f32 0.0, %v4256
    %4258 = vmatprep.mubr.bf16.mxu0 0
    %4259 = vmatmul.mubr.bf16.gmra.mxu0 %v3120
    %v4260 = vpop.f32.mrf.mxu0
    %v4261 = vadd.f32 0.0, %v4260
    %v4262 = vpop.f32.mrf.mxu0
    %v4263 = vadd.f32 0.0, %v4262
    %v4264 = vpop.f32.mrf.mxu0
    %v4265 = vadd.f32 0.0, %v4264
    %v4266 = vpop.f32.mrf.mxu0
    %v4267 = vadd.f32 0.0, %v4266
    %4268 = vmatprep.mubr.bf16.mxu0 0
    %4269 = vmatmul.mubr.bf16.gmra.mxu0 %v3121
    %v4270 = vpop.f32.mrf.mxu0
    %v4271 = vadd.f32 0.0, %v4270
    %v4272 = vpop.f32.mrf.mxu0
    %v4273 = vadd.f32 0.0, %v4272
    %v4274 = vpop.f32.mrf.mxu0
    %v4275 = vadd.f32 0.0, %v4274
    %v4276 = vpop.f32.mrf.mxu0
    %v4277 = vadd.f32 0.0, %v4276
    %4278 = vmatprep.mubr.bf16.mxu0 0
    %4279 = vmatmul.mubr.bf16.gmra.mxu0 %v3122
    %v4280 = vpop.f32.mrf.mxu0
    %v4281 = vadd.f32 0.0, %v4280
    %v4282 = vpop.f32.mrf.mxu0
    %v4283 = vadd.f32 0.0, %v4282
    %v4284 = vpop.f32.mrf.mxu0
    %v4285 = vadd.f32 0.0, %v4284
    %v4286 = vpop.f32.mrf.mxu0
    %v4287 = vadd.f32 0.0, %v4286
    %4288 = vmatprep.mubr.bf16.mxu0 0
    %4289 = vmatmul.mubr.bf16.gmra.mxu0 %v3123
    %v4290 = vpop.f32.mrf.mxu0
    %v4291 = vadd.f32 0.0, %v4290
    %v4292 = vpop.f32.mrf.mxu0
    %v4293 = vadd.f32 0.0, %v4292
    %v4294 = vpop.f32.mrf.mxu0
    %v4295 = vadd.f32 0.0, %v4294
    %v4296 = vpop.f32.mrf.mxu0
    %v4297 = vadd.f32 0.0, %v4296
    %4298 = vmatprep.mubr.bf16.mxu0 0
    %4299 = vmatmul.mubr.bf16.gmra.mxu0 %v3124
    %v4300 = vpop.f32.mrf.mxu0
    %v4301 = vadd.f32 0.0, %v4300
    %v4302 = vpop.f32.mrf.mxu0
    %v4303 = vadd.f32 0.0, %v4302
    %v4304 = vpop.f32.mrf.mxu0
    %v4305 = vadd.f32 0.0, %v4304
    %v4306 = vpop.f32.mrf.mxu0
    %v4307 = vadd.f32 0.0, %v4306
    %4308 = vmatprep.mubr.bf16.mxu0 0
    %4309 = vmatmul.mubr.bf16.gmra.mxu0 %v3125
    %v4310 = vpop.f32.mrf.mxu0
    %v4311 = vadd.f32 0.0, %v4310
    %v4312 = vpop.f32.mrf.mxu0
    %v4313 = vadd.f32 0.0, %v4312
    %v4314 = vpop.f32.mrf.mxu0
    %v4315 = vadd.f32 0.0, %v4314
    %v4316 = vpop.f32.mrf.mxu0
    %v4317 = vadd.f32 0.0, %v4316
    %4318 = vmatprep.mubr.bf16.mxu0 0
    %4319 = vmatmul.mubr.bf16.gmra.mxu0 %v3126
    %v4320 = vpop.f32.mrf.mxu0
    %v4321 = vadd.f32 0.0, %v4320
    %v4322 = vpop.f32.mrf.mxu0
    %v4323 = vadd.f32 0.0, %v4322
    %v4324 = vpop.f32.mrf.mxu0
    %v4325 = vadd.f32 0.0, %v4324
    %v4326 = vpop.f32.mrf.mxu0
    %v4327 = vadd.f32 0.0, %v4326
    %4328 = vmatprep.mubr.bf16.mxu0 0
    %4329 = vmatmul.mubr.bf16.gmra.mxu0 %v3127
    %v4330 = vpop.f32.mrf.mxu0
    %v4331 = vadd.f32 0.0, %v4330
    %v4332 = vpop.f32.mrf.mxu0
    %v4333 = vadd.f32 0.0, %v4332
    %v4334 = vpop.f32.mrf.mxu0
    %v4335 = vadd.f32 0.0, %v4334
    %v4336 = vpop.f32.mrf.mxu0
    %v4337 = vadd.f32 0.0, %v4336
    %4338 = vmatprep.mubr.bf16.mxu0 0
    %4339 = vmatmul.mubr.bf16.gmra.mxu0 %v3128
    %v4340 = vpop.f32.mrf.mxu0
    %v4341 = vadd.f32 0.0, %v4340
    %v4342 = vpop.f32.mrf.mxu0
    %v4343 = vadd.f32 0.0, %v4342
    %v4344 = vpop.f32.mrf.mxu0
    %v4345 = vadd.f32 0.0, %v4344
    %v4346 = vpop.f32.mrf.mxu0
    %v4347 = vadd.f32 0.0, %v4346
    %4348 = vmatprep.mubr.bf16.mxu0 0
    %4349 = vmatmul.mubr.bf16.gmra.mxu0 %v3129
    %v4350 = vpop.f32.mrf.mxu0
    %v4351 = vadd.f32 0.0, %v4350
    %v4352 = vpop.f32.mrf.mxu0
    %v4353 = vadd.f32 0.0, %v4352
    %v4354 = vpop.f32.mrf.mxu0
    %v4355 = vadd.f32 0.0, %v4354
    %v4356 = vpop.f32.mrf.mxu0
    %v4357 = vadd.f32 0.0, %v4356
    %4358 = vmatprep.mubr.bf16.mxu0 0
    %4359 = vmatmul.mubr.bf16.gmra.mxu0 %v3130
    %v4360 = vpop.f32.mrf.mxu0
    %v4361 = vadd.f32 0.0, %v4360
    %v4362 = vpop.f32.mrf.mxu0
    %v4363 = vadd.f32 0.0, %v4362
    %v4364 = vpop.f32.mrf.mxu0
    %v4365 = vadd.f32 0.0, %v4364
    %v4366 = vpop.f32.mrf.mxu0
    %v4367 = vadd.f32 0.0, %v4366
    %4368 = vdwg.mxu0
    %v4369 = vadd.f32 %v3358, %v3362
    %v4370 = vadd.f32 %v4369, %v3368
    %v4371 = vadd.f32 %v4370, %v3372
    %v4372 = vadd.f32 %v4371, %v3378
    %v4373 = vadd.f32 %v4372, %v3382
    %v4374 = vadd.f32 %v4373, %v3388
    %v4375 = vadd.f32 %v4374, %v3392
    %v4376 = vadd.f32 %v4375, %v3398
    %v4377 = vadd.f32 %v4376, %v3402
    %v4378 = vadd.f32 %v4377, %v3408
    %v4379 = vadd.f32 %v4378, %v3412
    %v4380 = vadd.f32 %v4379, %v3418
    %v4381 = vadd.f32 %v4380, %v3422
    %v4382 = vadd.f32 %v4381, %v3428
    %v4383 = vadd.f32 %v4382, %v3432
    %v4384 = vadd.f32 %v4383, %v3438
    %v4385 = vadd.f32 %v4384, %v3442
    %v4386 = vadd.f32 %v4385, %v3448
    %v4387 = vadd.f32 %v4386, %v3452
    %v4388 = vadd.f32 %v4387, %v3458
    %v4389 = vadd.f32 %v4388, %v3462
    %v4390 = vadd.f32 %v4389, %v3468
    %v4391 = vadd.f32 %v4390, %v3472
    %v4392 = vadd.f32 %v4391, %v3478
    %v4393 = vadd.f32 %v4392, %v3482
    %v4394 = vadd.f32 %v4393, %v3488
    %v4395 = vadd.f32 %v4394, %v3492
    %v4396 = vadd.f32 %v4395, %v3498
    %v4397 = vadd.f32 %v4396, %v3502
    %v4398 = vadd.f32 %v4397, %v3508
    %v4399 = vadd.f32 %v4398, %v3512
    %v4400 = vadd.f32 %v4399, %v3518
    %v4401 = vadd.f32 %v4400, %v3522
    %v4402 = vadd.f32 %v4401, %v3528
    %v4403 = vadd.f32 %v4402, %v3532
    %v4404 = vadd.f32 %v4403, %v3538
    %v4405 = vadd.f32 %v4404, %v3542
    %v4406 = vadd.f32 %v4405, %v3548
    %v4407 = vadd.f32 %v4406, %v3552
    %v4408 = vadd.f32 %v4407, %v3558
    %v4409 = vadd.f32 %v4408, %v3562
    %v4410 = vadd.f32 %v4409, %v3568
    %v4411 = vadd.f32 %v4410, %v3572
    %v4412 = vadd.f32 %v4411, %v3578
    %v4413 = vadd.f32 %v4412, %v3582
    %v4414 = vadd.f32 %v4413, %v3588
    %v4415 = vadd.f32 %v4414, %v3592
    %v4416 = vadd.f32 %v4415, %v3598
    %v4417 = vadd.f32 %v4416, %v3602
    %v4418 = vadd.f32 %v4417, %v3608
    %v4419 = vadd.f32 %v4418, %v3612
    %v4420 = vadd.f32 %v4419, %v3618
    %v4421 = vadd.f32 %v4420, %v3622
    %v4422 = vadd.f32 %v4421, %v3628
    %v4423 = vadd.f32 %v4422, %v3632
    %v4424 = vadd.f32 %v4423, %v3638
    %v4425 = vadd.f32 %v4424, %v3642
    %v4426 = vadd.f32 %v4425, %v3648
    %v4427 = vadd.f32 %v4426, %v3652
    %v4428 = vadd.f32 %v4427, %v3658
    %v4429 = vadd.f32 %v4428, %v3662
    %v4430 = vadd.f32 %v4429, %v3668
    %v4431 = vadd.f32 %v4430, %v3672
    %v4432 = vadd.f32 %v4431, %v3678
    %v4433 = vadd.f32 %v4432, %v3682
    %v4434 = vadd.f32 %v4433, %v3688
    %v4435 = vadd.f32 %v4434, %v3692
    %v4436 = vadd.f32 %v4435, %v3698
    %v4437 = vadd.f32 %v4436, %v3702
    %v4438 = vadd.f32 %v4437, %v3708
    %v4439 = vadd.f32 %v4438, %v3712
    %v4440 = vadd.f32 %v4439, %v3718
    %v4441 = vadd.f32 %v4440, %v3722
    %v4442 = vadd.f32 %v4441, %v3728
    %v4443 = vadd.f32 %v4442, %v3732
    %v4444 = vadd.f32 %v4443, %v3738
    %v4445 = vadd.f32 %v4444, %v3742
    %v4446 = vadd.f32 %v4445, %v3748
    %v4447 = vadd.f32 %v4446, %v3752
    %v4448 = vadd.f32 %v4447, %v3758
    %v4449 = vadd.f32 %v4448, %v3762
    %v4450 = vadd.f32 %v4449, %v3768
    %v4451 = vadd.f32 %v4450, %v3772
    %v4452 = vadd.f32 %v4451, %v3778
    %v4453 = vadd.f32 %v4452, %v3782
    %v4454 = vadd.f32 %v4453, %v3788
    %v4455 = vadd.f32 %v4454, %v3792
    %v4456 = vadd.f32 %v4455, %v3798
    %v4457 = vadd.f32 %v4456, %v3802
    %v4458 = vadd.f32 %v4457, %v3808
    %v4459 = vadd.f32 %v4458, %v3812
    %v4460 = vadd.f32 %v4459, %v3818
    %v4461 = vadd.f32 %v4460, %v3822
    %v4462 = vadd.f32 %v4461, %v3828
    %v4463 = vadd.f32 %v4462, %v3832
    %v4464 = vadd.f32 %v4463, %v3838
    %v4465 = vadd.f32 %v4464, %v3842
    %v4466 = vrot.slane %v4465, 4
    %v4467 = vadd.f32 %v4465, %v4466
    %v4468 = vrot.slane %v4467, 2
    %v4469 = vadd.f32 %v4467, %v4468
    %v4470 = vrot.slane %v4469, 1
    %v4471 = vadd.f32 %v4469, %v4470
    %v4472 = vadd.f32 %v3360, %v3364
    %v4473 = vadd.f32 %v4472, %v3370
    %v4474 = vadd.f32 %v4473, %v3374
    %v4475 = vadd.f32 %v4474, %v3380
    %v4476 = vadd.f32 %v4475, %v3384
    %v4477 = vadd.f32 %v4476, %v3390
    %v4478 = vadd.f32 %v4477, %v3394
    %v4479 = vadd.f32 %v4478, %v3400
    %v4480 = vadd.f32 %v4479, %v3404
    %v4481 = vadd.f32 %v4480, %v3410
    %v4482 = vadd.f32 %v4481, %v3414
    %v4483 = vadd.f32 %v4482, %v3420
    %v4484 = vadd.f32 %v4483, %v3424
    %v4485 = vadd.f32 %v4484, %v3430
    %v4486 = vadd.f32 %v4485, %v3434
    %v4487 = vadd.f32 %v4486, %v3440
    %v4488 = vadd.f32 %v4487, %v3444
    %v4489 = vadd.f32 %v4488, %v3450
    %v4490 = vadd.f32 %v4489, %v3454
    %v4491 = vadd.f32 %v4490, %v3460
    %v4492 = vadd.f32 %v4491, %v3464
    %v4493 = vadd.f32 %v4492, %v3470
    %v4494 = vadd.f32 %v4493, %v3474
    %v4495 = vadd.f32 %v4494, %v3480
    %v4496 = vadd.f32 %v4495, %v3484
    %v4497 = vadd.f32 %v4496, %v3490
    %v4498 = vadd.f32 %v4497, %v3494
    %v4499 = vadd.f32 %v4498, %v3500
    %v4500 = vadd.f32 %v4499, %v3504
    %v4501 = vadd.f32 %v4500, %v3510
    %v4502 = vadd.f32 %v4501, %v3514
    %v4503 = vadd.f32 %v4502, %v3520
    %v4504 = vadd.f32 %v4503, %v3524
    %v4505 = vadd.f32 %v4504, %v3530
    %v4506 = vadd.f32 %v4505, %v3534
    %v4507 = vadd.f32 %v4506, %v3540
    %v4508 = vadd.f32 %v4507, %v3544
    %v4509 = vadd.f32 %v4508, %v3550
    %v4510 = vadd.f32 %v4509, %v3554
    %v4511 = vadd.f32 %v4510, %v3560
    %v4512 = vadd.f32 %v4511, %v3564
    %v4513 = vadd.f32 %v4512, %v3570
    %v4514 = vadd.f32 %v4513, %v3574
    %v4515 = vadd.f32 %v4514, %v3580
    %v4516 = vadd.f32 %v4515, %v3584
    %v4517 = vadd.f32 %v4516, %v3590
    %v4518 = vadd.f32 %v4517, %v3594
    %v4519 = vadd.f32 %v4518, %v3600
    %v4520 = vadd.f32 %v4519, %v3604
    %v4521 = vadd.f32 %v4520, %v3610
    %v4522 = vadd.f32 %v4521, %v3614
    %v4523 = vadd.f32 %v4522, %v3620
    %v4524 = vadd.f32 %v4523, %v3624
    %v4525 = vadd.f32 %v4524, %v3630
    %v4526 = vadd.f32 %v4525, %v3634
    %v4527 = vadd.f32 %v4526, %v3640
    %v4528 = vadd.f32 %v4527, %v3644
    %v4529 = vadd.f32 %v4528, %v3650
    %v4530 = vadd.f32 %v4529, %v3654
    %v4531 = vadd.f32 %v4530, %v3660
    %v4532 = vadd.f32 %v4531, %v3664
    %v4533 = vadd.f32 %v4532, %v3670
    %v4534 = vadd.f32 %v4533, %v3674
    %v4535 = vadd.f32 %v4534, %v3680
    %v4536 = vadd.f32 %v4535, %v3684
    %v4537 = vadd.f32 %v4536, %v3690
    %v4538 = vadd.f32 %v4537, %v3694
    %v4539 = vadd.f32 %v4538, %v3700
    %v4540 = vadd.f32 %v4539, %v3704
    %v4541 = vadd.f32 %v4540, %v3710
    %v4542 = vadd.f32 %v4541, %v3714
    %v4543 = vadd.f32 %v4542, %v3720
    %v4544 = vadd.f32 %v4543, %v3724
    %v4545 = vadd.f32 %v4544, %v3730
    %v4546 = vadd.f32 %v4545, %v3734
    %v4547 = vadd.f32 %v4546, %v3740
    %v4548 = vadd.f32 %v4547, %v3744
    %v4549 = vadd.f32 %v4548, %v3750
    %v4550 = vadd.f32 %v4549, %v3754
    %v4551 = vadd.f32 %v4550, %v3760
    %v4552 = vadd.f32 %v4551, %v3764
    %v4553 = vadd.f32 %v4552, %v3770
    %v4554 = vadd.f32 %v4553, %v3774
    %v4555 = vadd.f32 %v4554, %v3780
    %v4556 = vadd.f32 %v4555, %v3784
    %v4557 = vadd.f32 %v4556, %v3790
    %v4558 = vadd.f32 %v4557, %v3794
    %v4559 = vadd.f32 %v4558, %v3800
    %v4560 = vadd.f32 %v4559, %v3804
    %v4561 = vadd.f32 %v4560, %v3810
    %v4562 = vadd.f32 %v4561, %v3814
    %v4563 = vadd.f32 %v4562, %v3820
    %v4564 = vadd.f32 %v4563, %v3824
    %v4565 = vadd.f32 %v4564, %v3830
    %v4566 = vadd.f32 %v4565, %v3834
    %v4567 = vadd.f32 %v4566, %v3840
    %v4568 = vadd.f32 %v4567, %v3844
    %v4569 = vrot.slane %v4568, 4
    %v4570 = vadd.f32 %v4568, %v4569
    %v4571 = vrot.slane %v4570, 2
    %v4572 = vadd.f32 %v4570, %v4571
    %v4573 = vrot.slane %v4572, 1
    %v4574 = vadd.f32 %v4572, %v4573
    %v4575 = vadd.f32 %v3881, %v3885
    %v4576 = vadd.f32 %v4575, %v3891
    %v4577 = vadd.f32 %v4576, %v3895
    %v4578 = vadd.f32 %v4577, %v3901
    %v4579 = vadd.f32 %v4578, %v3905
    %v4580 = vadd.f32 %v4579, %v3911
    %v4581 = vadd.f32 %v4580, %v3915
    %v4582 = vadd.f32 %v4581, %v3921
    %v4583 = vadd.f32 %v4582, %v3925
    %v4584 = vadd.f32 %v4583, %v3931
    %v4585 = vadd.f32 %v4584, %v3935
    %v4586 = vadd.f32 %v4585, %v3941
    %v4587 = vadd.f32 %v4586, %v3945
    %v4588 = vadd.f32 %v4587, %v3951
    %v4589 = vadd.f32 %v4588, %v3955
    %v4590 = vadd.f32 %v4589, %v3961
    %v4591 = vadd.f32 %v4590, %v3965
    %v4592 = vadd.f32 %v4591, %v3971
    %v4593 = vadd.f32 %v4592, %v3975
    %v4594 = vadd.f32 %v4593, %v3981
    %v4595 = vadd.f32 %v4594, %v3985
    %v4596 = vadd.f32 %v4595, %v3991
    %v4597 = vadd.f32 %v4596, %v3995
    %v4598 = vadd.f32 %v4597, %v4001
    %v4599 = vadd.f32 %v4598, %v4005
    %v4600 = vadd.f32 %v4599, %v4011
    %v4601 = vadd.f32 %v4600, %v4015
    %v4602 = vadd.f32 %v4601, %v4021
    %v4603 = vadd.f32 %v4602, %v4025
    %v4604 = vadd.f32 %v4603, %v4031
    %v4605 = vadd.f32 %v4604, %v4035
    %v4606 = vadd.f32 %v4605, %v4041
    %v4607 = vadd.f32 %v4606, %v4045
    %v4608 = vadd.f32 %v4607, %v4051
    %v4609 = vadd.f32 %v4608, %v4055
    %v4610 = vadd.f32 %v4609, %v4061
    %v4611 = vadd.f32 %v4610, %v4065
    %v4612 = vadd.f32 %v4611, %v4071
    %v4613 = vadd.f32 %v4612, %v4075
    %v4614 = vadd.f32 %v4613, %v4081
    %v4615 = vadd.f32 %v4614, %v4085
    %v4616 = vadd.f32 %v4615, %v4091
    %v4617 = vadd.f32 %v4616, %v4095
    %v4618 = vadd.f32 %v4617, %v4101
    %v4619 = vadd.f32 %v4618, %v4105
    %v4620 = vadd.f32 %v4619, %v4111
    %v4621 = vadd.f32 %v4620, %v4115
    %v4622 = vadd.f32 %v4621, %v4121
    %v4623 = vadd.f32 %v4622, %v4125
    %v4624 = vadd.f32 %v4623, %v4131
    %v4625 = vadd.f32 %v4624, %v4135
    %v4626 = vadd.f32 %v4625, %v4141
    %v4627 = vadd.f32 %v4626, %v4145
    %v4628 = vadd.f32 %v4627, %v4151
    %v4629 = vadd.f32 %v4628, %v4155
    %v4630 = vadd.f32 %v4629, %v4161
    %v4631 = vadd.f32 %v4630, %v4165
    %v4632 = vadd.f32 %v4631, %v4171
    %v4633 = vadd.f32 %v4632, %v4175
    %v4634 = vadd.f32 %v4633, %v4181
    %v4635 = vadd.f32 %v4634, %v4185
    %v4636 = vadd.f32 %v4635, %v4191
    %v4637 = vadd.f32 %v4636, %v4195
    %v4638 = vadd.f32 %v4637, %v4201
    %v4639 = vadd.f32 %v4638, %v4205
    %v4640 = vadd.f32 %v4639, %v4211
    %v4641 = vadd.f32 %v4640, %v4215
    %v4642 = vadd.f32 %v4641, %v4221
    %v4643 = vadd.f32 %v4642, %v4225
    %v4644 = vadd.f32 %v4643, %v4231
    %v4645 = vadd.f32 %v4644, %v4235
    %v4646 = vadd.f32 %v4645, %v4241
    %v4647 = vadd.f32 %v4646, %v4245
    %v4648 = vadd.f32 %v4647, %v4251
    %v4649 = vadd.f32 %v4648, %v4255
    %v4650 = vadd.f32 %v4649, %v4261
    %v4651 = vadd.f32 %v4650, %v4265
    %v4652 = vadd.f32 %v4651, %v4271
    %v4653 = vadd.f32 %v4652, %v4275
    %v4654 = vadd.f32 %v4653, %v4281
    %v4655 = vadd.f32 %v4654, %v4285
    %v4656 = vadd.f32 %v4655, %v4291
    %v4657 = vadd.f32 %v4656, %v4295
    %v4658 = vadd.f32 %v4657, %v4301
    %v4659 = vadd.f32 %v4658, %v4305
    %v4660 = vadd.f32 %v4659, %v4311
    %v4661 = vadd.f32 %v4660, %v4315
    %v4662 = vadd.f32 %v4661, %v4321
    %v4663 = vadd.f32 %v4662, %v4325
    %v4664 = vadd.f32 %v4663, %v4331
    %v4665 = vadd.f32 %v4664, %v4335
    %v4666 = vadd.f32 %v4665, %v4341
    %v4667 = vadd.f32 %v4666, %v4345
    %v4668 = vadd.f32 %v4667, %v4351
    %v4669 = vadd.f32 %v4668, %v4355
    %v4670 = vadd.f32 %v4669, %v4361
    %v4671 = vadd.f32 %v4670, %v4365
    %v4672 = vrot.slane %v4671, 4
    %v4673 = vadd.f32 %v4671, %v4672
    %v4674 = vrot.slane %v4673, 2
    %v4675 = vadd.f32 %v4673, %v4674
    %v4676 = vrot.slane %v4675, 1
    %v4677 = vadd.f32 %v4675, %v4676
    %v4678 = vsel %vm1471, %v3883, 0.0
    %v4679 = vsel %vm1471, %v3887, 0.0
    %v4680 = vadd.f32 %v4678, %v4679
    %v4681 = vsel %vm1471, %v3893, 0.0
    %v4682 = vadd.f32 %v4680, %v4681
    %v4683 = vsel %vm1471, %v3897, 0.0
    %v4684 = vadd.f32 %v4682, %v4683
    %v4685 = vsel %vm1471, %v3903, 0.0
    %v4686 = vadd.f32 %v4684, %v4685
    %v4687 = vsel %vm1471, %v3907, 0.0
    %v4688 = vadd.f32 %v4686, %v4687
    %v4689 = vsel %vm1471, %v3913, 0.0
    %v4690 = vadd.f32 %v4688, %v4689
    %v4691 = vsel %vm1471, %v3917, 0.0
    %v4692 = vadd.f32 %v4690, %v4691
    %v4693 = vsel %vm1471, %v3923, 0.0
    %v4694 = vadd.f32 %v4692, %v4693
    %v4695 = vsel %vm1471, %v3927, 0.0
    %v4696 = vadd.f32 %v4694, %v4695
    %v4697 = vsel %vm1471, %v3933, 0.0
    %v4698 = vadd.f32 %v4696, %v4697
    %v4699 = vsel %vm1471, %v3937, 0.0
    %v4700 = vadd.f32 %v4698, %v4699
    %v4701 = vsel %vm1471, %v3943, 0.0
    %v4702 = vadd.f32 %v4700, %v4701
    %v4703 = vsel %vm1471, %v3947, 0.0
    %v4704 = vadd.f32 %v4702, %v4703
    %v4705 = vsel %vm1471, %v3953, 0.0
    %v4706 = vadd.f32 %v4704, %v4705
    %v4707 = vsel %vm1471, %v3957, 0.0
    %v4708 = vadd.f32 %v4706, %v4707
    %v4709 = vsel %vm1471, %v3963, 0.0
    %v4710 = vadd.f32 %v4708, %v4709
    %v4711 = vsel %vm1471, %v3967, 0.0
    %v4712 = vadd.f32 %v4710, %v4711
    %v4713 = vsel %vm1471, %v3973, 0.0
    %v4714 = vadd.f32 %v4712, %v4713
    %v4715 = vsel %vm1471, %v3977, 0.0
    %v4716 = vadd.f32 %v4714, %v4715
    %v4717 = vsel %vm1471, %v3983, 0.0
    %v4718 = vadd.f32 %v4716, %v4717
    %v4719 = vsel %vm1471, %v3987, 0.0
    %v4720 = vadd.f32 %v4718, %v4719
    %v4721 = vsel %vm1471, %v3993, 0.0
    %v4722 = vadd.f32 %v4720, %v4721
    %v4723 = vsel %vm1471, %v3997, 0.0
    %v4724 = vadd.f32 %v4722, %v4723
    %v4725 = vsel %vm1471, %v4003, 0.0
    %v4726 = vadd.f32 %v4724, %v4725
    %v4727 = vsel %vm1471, %v4007, 0.0
    %v4728 = vadd.f32 %v4726, %v4727
    %v4729 = vsel %vm1471, %v4013, 0.0
    %v4730 = vadd.f32 %v4728, %v4729
    %v4731 = vsel %vm1471, %v4017, 0.0
    %v4732 = vadd.f32 %v4730, %v4731
    %v4733 = vsel %vm1471, %v4023, 0.0
    %v4734 = vadd.f32 %v4732, %v4733
    %v4735 = vsel %vm1471, %v4027, 0.0
    %v4736 = vadd.f32 %v4734, %v4735
    %v4737 = vsel %vm1471, %v4033, 0.0
    %v4738 = vadd.f32 %v4736, %v4737
    %v4739 = vsel %vm1471, %v4037, 0.0
    %v4740 = vadd.f32 %v4738, %v4739
    %v4741 = vsel %vm1471, %v4043, 0.0
    %v4742 = vadd.f32 %v4740, %v4741
    %v4743 = vsel %vm1471, %v4047, 0.0
    %v4744 = vadd.f32 %v4742, %v4743
    %v4745 = vsel %vm1471, %v4053, 0.0
    %v4746 = vadd.f32 %v4744, %v4745
    %v4747 = vsel %vm1471, %v4057, 0.0
    %v4748 = vadd.f32 %v4746, %v4747
    %v4749 = vsel %vm1471, %v4063, 0.0
    %v4750 = vadd.f32 %v4748, %v4749
    %v4751 = vsel %vm1471, %v4067, 0.0
    %v4752 = vadd.f32 %v4750, %v4751
    %v4753 = vsel %vm1471, %v4073, 0.0
    %v4754 = vadd.f32 %v4752, %v4753
    %v4755 = vsel %vm1471, %v4077, 0.0
    %v4756 = vadd.f32 %v4754, %v4755
    %v4757 = vsel %vm1471, %v4083, 0.0
    %v4758 = vadd.f32 %v4756, %v4757
    %v4759 = vsel %vm1471, %v4087, 0.0
    %v4760 = vadd.f32 %v4758, %v4759
    %v4761 = vsel %vm1471, %v4093, 0.0
    %v4762 = vadd.f32 %v4760, %v4761
    %v4763 = vsel %vm1471, %v4097, 0.0
    %v4764 = vadd.f32 %v4762, %v4763
    %v4765 = vsel %vm1471, %v4103, 0.0
    %v4766 = vadd.f32 %v4764, %v4765
    %v4767 = vsel %vm1471, %v4107, 0.0
    %v4768 = vadd.f32 %v4766, %v4767
    %v4769 = vsel %vm1471, %v4113, 0.0
    %v4770 = vadd.f32 %v4768, %v4769
    %v4771 = vsel %vm1471, %v4117, 0.0
    %v4772 = vadd.f32 %v4770, %v4771
    %v4773 = vsel %vm1471, %v4123, 0.0
    %v4774 = vadd.f32 %v4772, %v4773
    %v4775 = vsel %vm1471, %v4127, 0.0
    %v4776 = vadd.f32 %v4774, %v4775
    %v4777 = vsel %vm1471, %v4133, 0.0
    %v4778 = vadd.f32 %v4776, %v4777
    %v4779 = vsel %vm1471, %v4137, 0.0
    %v4780 = vadd.f32 %v4778, %v4779
    %v4781 = vsel %vm1471, %v4143, 0.0
    %v4782 = vadd.f32 %v4780, %v4781
    %v4783 = vsel %vm1471, %v4147, 0.0
    %v4784 = vadd.f32 %v4782, %v4783
    %v4785 = vsel %vm1471, %v4153, 0.0
    %v4786 = vadd.f32 %v4784, %v4785
    %v4787 = vsel %vm1471, %v4157, 0.0
    %v4788 = vadd.f32 %v4786, %v4787
    %v4789 = vsel %vm1471, %v4163, 0.0
    %v4790 = vadd.f32 %v4788, %v4789
    %v4791 = vsel %vm1471, %v4167, 0.0
    %v4792 = vadd.f32 %v4790, %v4791
    %v4793 = vsel %vm1471, %v4173, 0.0
    %v4794 = vadd.f32 %v4792, %v4793
    %v4795 = vsel %vm1471, %v4177, 0.0
    %v4796 = vadd.f32 %v4794, %v4795
    %v4797 = vsel %vm1471, %v4183, 0.0
    %v4798 = vadd.f32 %v4796, %v4797
    %v4799 = vsel %vm1471, %v4187, 0.0
    %v4800 = vadd.f32 %v4798, %v4799
    %v4801 = vsel %vm1471, %v4193, 0.0
    %v4802 = vadd.f32 %v4800, %v4801
    %v4803 = vsel %vm1471, %v4197, 0.0
    %v4804 = vadd.f32 %v4802, %v4803
    %v4805 = vsel %vm1471, %v4203, 0.0
    %v4806 = vadd.f32 %v4804, %v4805
    %v4807 = vsel %vm1471, %v4207, 0.0
    %v4808 = vadd.f32 %v4806, %v4807
    %v4809 = vsel %vm1471, %v4213, 0.0
    %v4810 = vadd.f32 %v4808, %v4809
    %v4811 = vsel %vm1471, %v4217, 0.0
    %v4812 = vadd.f32 %v4810, %v4811
    %v4813 = vsel %vm1471, %v4223, 0.0
    %v4814 = vadd.f32 %v4812, %v4813
    %v4815 = vsel %vm1471, %v4227, 0.0
    %v4816 = vadd.f32 %v4814, %v4815
    %v4817 = vsel %vm1471, %v4233, 0.0
    %v4818 = vadd.f32 %v4816, %v4817
    %v4819 = vsel %vm1471, %v4237, 0.0
    %v4820 = vadd.f32 %v4818, %v4819
    %v4821 = vsel %vm1471, %v4243, 0.0
    %v4822 = vadd.f32 %v4820, %v4821
    %v4823 = vsel %vm1471, %v4247, 0.0
    %v4824 = vadd.f32 %v4822, %v4823
    %v4825 = vsel %vm1471, %v4253, 0.0
    %v4826 = vadd.f32 %v4824, %v4825
    %v4827 = vsel %vm1471, %v4257, 0.0
    %v4828 = vadd.f32 %v4826, %v4827
    %v4829 = vsel %vm1471, %v4263, 0.0
    %v4830 = vadd.f32 %v4828, %v4829
    %v4831 = vsel %vm1471, %v4267, 0.0
    %v4832 = vadd.f32 %v4830, %v4831
    %v4833 = vsel %vm1471, %v4273, 0.0
    %v4834 = vadd.f32 %v4832, %v4833
    %v4835 = vsel %vm1471, %v4277, 0.0
    %v4836 = vadd.f32 %v4834, %v4835
    %v4837 = vsel %vm1471, %v4283, 0.0
    %v4838 = vadd.f32 %v4836, %v4837
    %v4839 = vsel %vm1471, %v4287, 0.0
    %v4840 = vadd.f32 %v4838, %v4839
    %v4841 = vsel %vm1471, %v4293, 0.0
    %v4842 = vadd.f32 %v4840, %v4841
    %v4843 = vsel %vm1471, %v4297, 0.0
    %v4844 = vadd.f32 %v4842, %v4843
    %v4845 = vsel %vm1471, %v4303, 0.0
    %v4846 = vadd.f32 %v4844, %v4845
    %v4847 = vsel %vm1471, %v4307, 0.0
    %v4848 = vadd.f32 %v4846, %v4847
    %v4849 = vsel %vm1471, %v4313, 0.0
    %v4850 = vadd.f32 %v4848, %v4849
    %v4851 = vsel %vm1471, %v4317, 0.0
    %v4852 = vadd.f32 %v4850, %v4851
    %v4853 = vsel %vm1471, %v4323, 0.0
    %v4854 = vadd.f32 %v4852, %v4853
    %v4855 = vsel %vm1471, %v4327, 0.0
    %v4856 = vadd.f32 %v4854, %v4855
    %v4857 = vsel %vm1471, %v4333, 0.0
    %v4858 = vadd.f32 %v4856, %v4857
    %v4859 = vsel %vm1471, %v4337, 0.0
    %v4860 = vadd.f32 %v4858, %v4859
    %v4861 = vsel %vm1471, %v4343, 0.0
    %v4862 = vadd.f32 %v4860, %v4861
    %v4863 = vsel %vm1471, %v4347, 0.0
    %v4864 = vadd.f32 %v4862, %v4863
    %v4865 = vsel %vm1471, %v4353, 0.0
    %v4866 = vadd.f32 %v4864, %v4865
    %v4867 = vsel %vm1471, %v4357, 0.0
    %v4868 = vadd.f32 %v4866, %v4867
    %v4869 = vsel %vm1471, %v4363, 0.0
    %v4870 = vadd.f32 %v4868, %v4869
    %v4871 = vsel %vm1471, %v4367, 0.0
    %v4872 = vadd.f32 %v4870, %v4871
    %v4873 = vrot.slane %v4872, 4
    %v4874 = vadd.f32 %v4872, %v4873
    %v4875 = vrot.slane %v4874, 2
    %v4876 = vadd.f32 %v4874, %v4875
    %v4877 = vrot.slane %v4876, 1
    %v4878 = vadd.f32 %v4876, %v4877
    %v4879 = vmul.f32 %v4471, 0.0012755102
    %v4880 = vmul.f32 %v4574, 0.0012755102
    %v4881 = vmul.f32 %v4677, 0.0012755102
    %v4882 = vmul.f32 %v4878, 0.0012755102
    %v4883 = vmul.f32 %v3358, %v3358
    %v4884 = vmul.f32 %v3360, %v3360
    %v4885 = vmul.f32 %v3881, %v3881
    %v4886 = vmul.f32 %v3883, %v3883
    %v4887 = vmul.f32 %v3362, %v3362
    %v4888 = vmul.f32 %v3364, %v3364
    %v4889 = vmul.f32 %v3885, %v3885
    %v4890 = vmul.f32 %v3887, %v3887
    %v4891 = vmul.f32 %v3368, %v3368
    %v4892 = vmul.f32 %v3370, %v3370
    %v4893 = vmul.f32 %v3891, %v3891
    %v4894 = vmul.f32 %v3893, %v3893
    %v4895 = vmul.f32 %v3372, %v3372
    %v4896 = vmul.f32 %v3374, %v3374
    %v4897 = vmul.f32 %v3895, %v3895
    %v4898 = vmul.f32 %v3897, %v3897
    %v4899 = vmul.f32 %v3378, %v3378
    %v4900 = vmul.f32 %v3380, %v3380
    %v4901 = vmul.f32 %v3901, %v3901
    %v4902 = vmul.f32 %v3903, %v3903
    %v4903 = vmul.f32 %v3382, %v3382
    %v4904 = vmul.f32 %v3384, %v3384
    %v4905 = vmul.f32 %v3905, %v3905
    %v4906 = vmul.f32 %v3907, %v3907
    %v4907 = vmul.f32 %v3388, %v3388
    %v4908 = vmul.f32 %v3390, %v3390
    %v4909 = vmul.f32 %v3911, %v3911
    %v4910 = vmul.f32 %v3913, %v3913
    %v4911 = vmul.f32 %v3392, %v3392
    %v4912 = vmul.f32 %v3394, %v3394
    %v4913 = vmul.f32 %v3915, %v3915
    %v4914 = vmul.f32 %v3917, %v3917
    %v4915 = vmul.f32 %v3398, %v3398
    %v4916 = vmul.f32 %v3400, %v3400
    %v4917 = vmul.f32 %v3921, %v3921
    %v4918 = vmul.f32 %v3923, %v3923
    %v4919 = vmul.f32 %v3402, %v3402
    %v4920 = vmul.f32 %v3404, %v3404
    %v4921 = vmul.f32 %v3925, %v3925
    %v4922 = vmul.f32 %v3927, %v3927
    %v4923 = vmul.f32 %v3408, %v3408
    %v4924 = vmul.f32 %v3410, %v3410
    %v4925 = vmul.f32 %v3931, %v3931
    %v4926 = vmul.f32 %v3933, %v3933
    %v4927 = vmul.f32 %v3412, %v3412
    %v4928 = vmul.f32 %v3414, %v3414
    %v4929 = vmul.f32 %v3935, %v3935
    %v4930 = vmul.f32 %v3937, %v3937
    %v4931 = vmul.f32 %v3418, %v3418
    %v4932 = vmul.f32 %v3420, %v3420
    %v4933 = vmul.f32 %v3941, %v3941
    %v4934 = vmul.f32 %v3943, %v3943
    %v4935 = vmul.f32 %v3422, %v3422
    %v4936 = vmul.f32 %v3424, %v3424
    %v4937 = vmul.f32 %v3945, %v3945
    %v4938 = vmul.f32 %v3947, %v3947
    %v4939 = vmul.f32 %v3428, %v3428
    %v4940 = vmul.f32 %v3430, %v3430
    %v4941 = vmul.f32 %v3951, %v3951
    %v4942 = vmul.f32 %v3953, %v3953
    %v4943 = vmul.f32 %v3432, %v3432
    %v4944 = vmul.f32 %v3434, %v3434
    %v4945 = vmul.f32 %v3955, %v3955
    %v4946 = vmul.f32 %v3957, %v3957
    %v4947 = vmul.f32 %v3438, %v3438
    %v4948 = vmul.f32 %v3440, %v3440
    %v4949 = vmul.f32 %v3961, %v3961
    %v4950 = vmul.f32 %v3963, %v3963
    %v4951 = vmul.f32 %v3442, %v3442
    %v4952 = vmul.f32 %v3444, %v3444
    %v4953 = vmul.f32 %v3965, %v3965
    %v4954 = vmul.f32 %v3967, %v3967
    %v4955 = vmul.f32 %v3448, %v3448
    %v4956 = vmul.f32 %v3450, %v3450
    %v4957 = vmul.f32 %v3971, %v3971
    %v4958 = vmul.f32 %v3973, %v3973
    %v4959 = vmul.f32 %v3452, %v3452
    %v4960 = vmul.f32 %v3454, %v3454
    %v4961 = vmul.f32 %v3975, %v3975
    %v4962 = vmul.f32 %v3977, %v3977
    %v4963 = vmul.f32 %v3458, %v3458
    %v4964 = vmul.f32 %v3460, %v3460
    %v4965 = vmul.f32 %v3981, %v3981
    %v4966 = vmul.f32 %v3983, %v3983
    %v4967 = vmul.f32 %v3462, %v3462
    %v4968 = vmul.f32 %v3464, %v3464
    %v4969 = vmul.f32 %v3985, %v3985
    %v4970 = vmul.f32 %v3987, %v3987
    %v4971 = vmul.f32 %v3468, %v3468
    %v4972 = vmul.f32 %v3470, %v3470
    %v4973 = vmul.f32 %v3991, %v3991
    %v4974 = vmul.f32 %v3993, %v3993
    %v4975 = vmul.f32 %v3472, %v3472
    %v4976 = vmul.f32 %v3474, %v3474
    %v4977 = vmul.f32 %v3995, %v3995
    %v4978 = vmul.f32 %v3997, %v3997
    %v4979 = vmul.f32 %v3478, %v3478
    %v4980 = vmul.f32 %v3480, %v3480
    %v4981 = vmul.f32 %v4001, %v4001
    %v4982 = vmul.f32 %v4003, %v4003
    %v4983 = vmul.f32 %v3482, %v3482
    %v4984 = vmul.f32 %v3484, %v3484
    %v4985 = vmul.f32 %v4005, %v4005
    %v4986 = vmul.f32 %v4007, %v4007
    %v4987 = vmul.f32 %v3488, %v3488
    %v4988 = vmul.f32 %v3490, %v3490
    %v4989 = vmul.f32 %v4011, %v4011
    %v4990 = vmul.f32 %v4013, %v4013
    %v4991 = vmul.f32 %v3492, %v3492
    %v4992 = vmul.f32 %v3494, %v3494
    %v4993 = vmul.f32 %v4015, %v4015
    %v4994 = vmul.f32 %v4017, %v4017
    %v4995 = vmul.f32 %v3498, %v3498
    %v4996 = vmul.f32 %v3500, %v3500
    %v4997 = vmul.f32 %v4021, %v4021
    %v4998 = vmul.f32 %v4023, %v4023
    %v4999 = vmul.f32 %v3502, %v3502
    %v5000 = vmul.f32 %v3504, %v3504
    %v5001 = vmul.f32 %v4025, %v4025
    %v5002 = vmul.f32 %v4027, %v4027
    %v5003 = vmul.f32 %v3508, %v3508
    %v5004 = vmul.f32 %v3510, %v3510
    %v5005 = vmul.f32 %v4031, %v4031
    %v5006 = vmul.f32 %v4033, %v4033
    %v5007 = vmul.f32 %v3512, %v3512
    %v5008 = vmul.f32 %v3514, %v3514
    %v5009 = vmul.f32 %v4035, %v4035
    %v5010 = vmul.f32 %v4037, %v4037
    %v5011 = vmul.f32 %v3518, %v3518
    %v5012 = vmul.f32 %v3520, %v3520
    %v5013 = vmul.f32 %v4041, %v4041
    %v5014 = vmul.f32 %v4043, %v4043
    %v5015 = vmul.f32 %v3522, %v3522
    %v5016 = vmul.f32 %v3524, %v3524
    %v5017 = vmul.f32 %v4045, %v4045
    %v5018 = vmul.f32 %v4047, %v4047
    %v5019 = vmul.f32 %v3528, %v3528
    %v5020 = vmul.f32 %v3530, %v3530
    %v5021 = vmul.f32 %v4051, %v4051
    %v5022 = vmul.f32 %v4053, %v4053
    %v5023 = vmul.f32 %v3532, %v3532
    %v5024 = vmul.f32 %v3534, %v3534
    %v5025 = vmul.f32 %v4055, %v4055
    %v5026 = vmul.f32 %v4057, %v4057
    %v5027 = vmul.f32 %v3538, %v3538
    %v5028 = vmul.f32 %v3540, %v3540
    %v5029 = vmul.f32 %v4061, %v4061
    %v5030 = vmul.f32 %v4063, %v4063
    %v5031 = vmul.f32 %v3542, %v3542
    %v5032 = vmul.f32 %v3544, %v3544
    %v5033 = vmul.f32 %v4065, %v4065
    %v5034 = vmul.f32 %v4067, %v4067
    %v5035 = vmul.f32 %v3548, %v3548
    %v5036 = vmul.f32 %v3550, %v3550
    %v5037 = vmul.f32 %v4071, %v4071
    %v5038 = vmul.f32 %v4073, %v4073
    %v5039 = vmul.f32 %v3552, %v3552
    %v5040 = vmul.f32 %v3554, %v3554
    %v5041 = vmul.f32 %v4075, %v4075
    %v5042 = vmul.f32 %v4077, %v4077
    %v5043 = vmul.f32 %v3558, %v3558
    %v5044 = vmul.f32 %v3560, %v3560
    %v5045 = vmul.f32 %v4081, %v4081
    %v5046 = vmul.f32 %v4083, %v4083
    %v5047 = vmul.f32 %v3562, %v3562
    %v5048 = vmul.f32 %v3564, %v3564
    %v5049 = vmul.f32 %v4085, %v4085
    %v5050 = vmul.f32 %v4087, %v4087
    %v5051 = vmul.f32 %v3568, %v3568
    %v5052 = vmul.f32 %v3570, %v3570
    %v5053 = vmul.f32 %v4091, %v4091
    %v5054 = vmul.f32 %v4093, %v4093
    %v5055 = vmul.f32 %v3572, %v3572
    %v5056 = vmul.f32 %v3574, %v3574
    %v5057 = vmul.f32 %v4095, %v4095
    %v5058 = vmul.f32 %v4097, %v4097
    %v5059 = vmul.f32 %v3578, %v3578
    %v5060 = vmul.f32 %v3580, %v3580
    %v5061 = vmul.f32 %v4101, %v4101
    %v5062 = vmul.f32 %v4103, %v4103
    %v5063 = vmul.f32 %v3582, %v3582
    %v5064 = vmul.f32 %v3584, %v3584
    %v5065 = vmul.f32 %v4105, %v4105
    %v5066 = vmul.f32 %v4107, %v4107
    %v5067 = vmul.f32 %v3588, %v3588
    %v5068 = vmul.f32 %v3590, %v3590
    %v5069 = vmul.f32 %v4111, %v4111
    %v5070 = vmul.f32 %v4113, %v4113
    %v5071 = vmul.f32 %v3592, %v3592
    %v5072 = vmul.f32 %v3594, %v3594
    %v5073 = vmul.f32 %v4115, %v4115
    %v5074 = vmul.f32 %v4117, %v4117
    %v5075 = vmul.f32 %v3598, %v3598
    %v5076 = vmul.f32 %v3600, %v3600
    %v5077 = vmul.f32 %v4121, %v4121
    %v5078 = vmul.f32 %v4123, %v4123
    %v5079 = vmul.f32 %v3602, %v3602
    %v5080 = vmul.f32 %v3604, %v3604
    %v5081 = vmul.f32 %v4125, %v4125
    %v5082 = vmul.f32 %v4127, %v4127
    %v5083 = vmul.f32 %v3608, %v3608
    %v5084 = vmul.f32 %v3610, %v3610
    %v5085 = vmul.f32 %v4131, %v4131
    %v5086 = vmul.f32 %v4133, %v4133
    %v5087 = vmul.f32 %v3612, %v3612
    %v5088 = vmul.f32 %v3614, %v3614
    %v5089 = vmul.f32 %v4135, %v4135
    %v5090 = vmul.f32 %v4137, %v4137
    %v5091 = vmul.f32 %v3618, %v3618
    %v5092 = vmul.f32 %v3620, %v3620
    %v5093 = vmul.f32 %v4141, %v4141
    %v5094 = vmul.f32 %v4143, %v4143
    %v5095 = vmul.f32 %v3622, %v3622
    %v5096 = vmul.f32 %v3624, %v3624
    %v5097 = vmul.f32 %v4145, %v4145
    %v5098 = vmul.f32 %v4147, %v4147
    %v5099 = vmul.f32 %v3628, %v3628
    %v5100 = vmul.f32 %v3630, %v3630
    %v5101 = vmul.f32 %v4151, %v4151
    %v5102 = vmul.f32 %v4153, %v4153
    %v5103 = vmul.f32 %v3632, %v3632
    %v5104 = vmul.f32 %v3634, %v3634
    %v5105 = vmul.f32 %v4155, %v4155
    %v5106 = vmul.f32 %v4157, %v4157
    %v5107 = vmul.f32 %v3638, %v3638
    %v5108 = vmul.f32 %v3640, %v3640
    %v5109 = vmul.f32 %v4161, %v4161
    %v5110 = vmul.f32 %v4163, %v4163
    %v5111 = vmul.f32 %v3642, %v3642
    %v5112 = vmul.f32 %v3644, %v3644
    %v5113 = vmul.f32 %v4165, %v4165
    %v5114 = vmul.f32 %v4167, %v4167
    %v5115 = vmul.f32 %v3648, %v3648
    %v5116 = vmul.f32 %v3650, %v3650
    %v5117 = vmul.f32 %v4171, %v4171
    %v5118 = vmul.f32 %v4173, %v4173
    %v5119 = vmul.f32 %v3652, %v3652
    %v5120 = vmul.f32 %v3654, %v3654
    %v5121 = vmul.f32 %v4175, %v4175
    %v5122 = vmul.f32 %v4177, %v4177
    %v5123 = vmul.f32 %v3658, %v3658
    %v5124 = vmul.f32 %v3660, %v3660
    %v5125 = vmul.f32 %v4181, %v4181
    %v5126 = vmul.f32 %v4183, %v4183
    %v5127 = vmul.f32 %v3662, %v3662
    %v5128 = vmul.f32 %v3664, %v3664
    %v5129 = vmul.f32 %v4185, %v4185
    %v5130 = vmul.f32 %v4187, %v4187
    %v5131 = vmul.f32 %v3668, %v3668
    %v5132 = vmul.f32 %v3670, %v3670
    %v5133 = vmul.f32 %v4191, %v4191
    %v5134 = vmul.f32 %v4193, %v4193
    %v5135 = vmul.f32 %v3672, %v3672
    %v5136 = vmul.f32 %v3674, %v3674
    %v5137 = vmul.f32 %v4195, %v4195
    %v5138 = vmul.f32 %v4197, %v4197
    %v5139 = vmul.f32 %v3678, %v3678
    %v5140 = vmul.f32 %v3680, %v3680
    %v5141 = vmul.f32 %v4201, %v4201
    %v5142 = vmul.f32 %v4203, %v4203
    %v5143 = vmul.f32 %v3682, %v3682
    %v5144 = vmul.f32 %v3684, %v3684
    %v5145 = vmul.f32 %v4205, %v4205
    %v5146 = vmul.f32 %v4207, %v4207
    %v5147 = vmul.f32 %v3688, %v3688
    %v5148 = vmul.f32 %v3690, %v3690
    %v5149 = vmul.f32 %v4211, %v4211
    %v5150 = vmul.f32 %v4213, %v4213
    %v5151 = vmul.f32 %v3692, %v3692
    %v5152 = vmul.f32 %v3694, %v3694
    %v5153 = vmul.f32 %v4215, %v4215
    %v5154 = vmul.f32 %v4217, %v4217
    %v5155 = vmul.f32 %v3698, %v3698
    %v5156 = vmul.f32 %v3700, %v3700
    %v5157 = vmul.f32 %v4221, %v4221
    %v5158 = vmul.f32 %v4223, %v4223
    %v5159 = vmul.f32 %v3702, %v3702
    %v5160 = vmul.f32 %v3704, %v3704
    %v5161 = vmul.f32 %v4225, %v4225
    %v5162 = vmul.f32 %v4227, %v4227
    %v5163 = vmul.f32 %v3708, %v3708
    %v5164 = vmul.f32 %v3710, %v3710
    %v5165 = vmul.f32 %v4231, %v4231
    %v5166 = vmul.f32 %v4233, %v4233
    %v5167 = vmul.f32 %v3712, %v3712
    %v5168 = vmul.f32 %v3714, %v3714
    %v5169 = vmul.f32 %v4235, %v4235
    %v5170 = vmul.f32 %v4237, %v4237
    %v5171 = vmul.f32 %v3718, %v3718
    %v5172 = vmul.f32 %v3720, %v3720
    %v5173 = vmul.f32 %v4241, %v4241
    %v5174 = vmul.f32 %v4243, %v4243
    %v5175 = vmul.f32 %v3722, %v3722
    %v5176 = vmul.f32 %v3724, %v3724
    %v5177 = vmul.f32 %v4245, %v4245
    %v5178 = vmul.f32 %v4247, %v4247
    %v5179 = vmul.f32 %v3728, %v3728
    %v5180 = vmul.f32 %v3730, %v3730
    %v5181 = vmul.f32 %v4251, %v4251
    %v5182 = vmul.f32 %v4253, %v4253
    %v5183 = vmul.f32 %v3732, %v3732
    %v5184 = vmul.f32 %v3734, %v3734
    %v5185 = vmul.f32 %v4255, %v4255
    %v5186 = vmul.f32 %v4257, %v4257
    %v5187 = vmul.f32 %v3738, %v3738
    %v5188 = vmul.f32 %v3740, %v3740
    %v5189 = vmul.f32 %v4261, %v4261
    %v5190 = vmul.f32 %v4263, %v4263
    %v5191 = vmul.f32 %v3742, %v3742
    %v5192 = vmul.f32 %v3744, %v3744
    %v5193 = vmul.f32 %v4265, %v4265
    %v5194 = vmul.f32 %v4267, %v4267
    %v5195 = vmul.f32 %v3748, %v3748
    %v5196 = vmul.f32 %v3750, %v3750
    %v5197 = vmul.f32 %v4271, %v4271
    %v5198 = vmul.f32 %v4273, %v4273
    %v5199 = vmul.f32 %v3752, %v3752
    %v5200 = vmul.f32 %v3754, %v3754
    %v5201 = vmul.f32 %v4275, %v4275
    %v5202 = vmul.f32 %v4277, %v4277
    %v5203 = vmul.f32 %v3758, %v3758
    %v5204 = vmul.f32 %v3760, %v3760
    %v5205 = vmul.f32 %v4281, %v4281
    %v5206 = vmul.f32 %v4283, %v4283
    %v5207 = vmul.f32 %v3762, %v3762
    %v5208 = vmul.f32 %v3764, %v3764
    %v5209 = vmul.f32 %v4285, %v4285
    %v5210 = vmul.f32 %v4287, %v4287
    %v5211 = vmul.f32 %v3768, %v3768
    %v5212 = vmul.f32 %v3770, %v3770
    %v5213 = vmul.f32 %v4291, %v4291
    %v5214 = vmul.f32 %v4293, %v4293
    %v5215 = vmul.f32 %v3772, %v3772
    %v5216 = vmul.f32 %v3774, %v3774
    %v5217 = vmul.f32 %v4295, %v4295
    %v5218 = vmul.f32 %v4297, %v4297
    %v5219 = vmul.f32 %v3778, %v3778
    %v5220 = vmul.f32 %v3780, %v3780
    %v5221 = vmul.f32 %v4301, %v4301
    %v5222 = vmul.f32 %v4303, %v4303
    %v5223 = vmul.f32 %v3782, %v3782
    %v5224 = vmul.f32 %v3784, %v3784
    %v5225 = vmul.f32 %v4305, %v4305
    %v5226 = vmul.f32 %v4307, %v4307
    %v5227 = vmul.f32 %v3788, %v3788
    %v5228 = vmul.f32 %v3790, %v3790
    %v5229 = vmul.f32 %v4311, %v4311
    %v5230 = vmul.f32 %v4313, %v4313
    %v5231 = vmul.f32 %v3792, %v3792
    %v5232 = vmul.f32 %v3794, %v3794
    %v5233 = vmul.f32 %v4315, %v4315
    %v5234 = vmul.f32 %v4317, %v4317
    %v5235 = vmul.f32 %v3798, %v3798
    %v5236 = vmul.f32 %v3800, %v3800
    %v5237 = vmul.f32 %v4321, %v4321
    %v5238 = vmul.f32 %v4323, %v4323
    %v5239 = vmul.f32 %v3802, %v3802
    %v5240 = vmul.f32 %v3804, %v3804
    %v5241 = vmul.f32 %v4325, %v4325
    %v5242 = vmul.f32 %v4327, %v4327
    %v5243 = vmul.f32 %v3808, %v3808
    %v5244 = vmul.f32 %v3810, %v3810
    %v5245 = vmul.f32 %v4331, %v4331
    %v5246 = vmul.f32 %v4333, %v4333
    %v5247 = vmul.f32 %v3812, %v3812
    %v5248 = vmul.f32 %v3814, %v3814
    %v5249 = vmul.f32 %v4335, %v4335
    %v5250 = vmul.f32 %v4337, %v4337
    %v5251 = vmul.f32 %v3818, %v3818
    %v5252 = vmul.f32 %v3820, %v3820
    %v5253 = vmul.f32 %v4341, %v4341
    %v5254 = vmul.f32 %v4343, %v4343
    %v5255 = vmul.f32 %v3822, %v3822
    %v5256 = vmul.f32 %v3824, %v3824
    %v5257 = vmul.f32 %v4345, %v4345
    %v5258 = vmul.f32 %v4347, %v4347
    %v5259 = vmul.f32 %v3828, %v3828
    %v5260 = vmul.f32 %v3830, %v3830
    %v5261 = vmul.f32 %v4351, %v4351
    %v5262 = vmul.f32 %v4353, %v4353
    %v5263 = vmul.f32 %v3832, %v3832
    %v5264 = vmul.f32 %v3834, %v3834
    %v5265 = vmul.f32 %v4355, %v4355
    %v5266 = vmul.f32 %v4357, %v4357
    %v5267 = vmul.f32 %v3838, %v3838
    %v5268 = vmul.f32 %v3840, %v3840
    %v5269 = vmul.f32 %v4361, %v4361
    %v5270 = vmul.f32 %v4363, %v4363
    %v5271 = vmul.f32 %v3842, %v3842
    %v5272 = vmul.f32 %v3844, %v3844
    %v5273 = vmul.f32 %v4365, %v4365
    %v5274 = vmul.f32 %v4367, %v4367
    %v5275 = vadd.f32 %v4883, %v4887
    %v5276 = vadd.f32 %v5275, %v4891
    %v5277 = vadd.f32 %v5276, %v4895
    %v5278 = vadd.f32 %v5277, %v4899
    %v5279 = vadd.f32 %v5278, %v4903
    %v5280 = vadd.f32 %v5279, %v4907
    %v5281 = vadd.f32 %v5280, %v4911
    %v5282 = vadd.f32 %v5281, %v4915
    %v5283 = vadd.f32 %v5282, %v4919
    %v5284 = vadd.f32 %v5283, %v4923
    %v5285 = vadd.f32 %v5284, %v4927
    %v5286 = vadd.f32 %v5285, %v4931
    %v5287 = vadd.f32 %v5286, %v4935
    %v5288 = vadd.f32 %v5287, %v4939
    %v5289 = vadd.f32 %v5288, %v4943
    %v5290 = vadd.f32 %v5289, %v4947
    %v5291 = vadd.f32 %v5290, %v4951
    %v5292 = vadd.f32 %v5291, %v4955
    %v5293 = vadd.f32 %v5292, %v4959
    %v5294 = vadd.f32 %v5293, %v4963
    %v5295 = vadd.f32 %v5294, %v4967
    %v5296 = vadd.f32 %v5295, %v4971
    %v5297 = vadd.f32 %v5296, %v4975
    %v5298 = vadd.f32 %v5297, %v4979
    %v5299 = vadd.f32 %v5298, %v4983
    %v5300 = vadd.f32 %v5299, %v4987
    %v5301 = vadd.f32 %v5300, %v4991
    %v5302 = vadd.f32 %v5301, %v4995
    %v5303 = vadd.f32 %v5302, %v4999
    %v5304 = vadd.f32 %v5303, %v5003
    %v5305 = vadd.f32 %v5304, %v5007
    %v5306 = vadd.f32 %v5305, %v5011
    %v5307 = vadd.f32 %v5306, %v5015
    %v5308 = vadd.f32 %v5307, %v5019
    %v5309 = vadd.f32 %v5308, %v5023
    %v5310 = vadd.f32 %v5309, %v5027
    %v5311 = vadd.f32 %v5310, %v5031
    %v5312 = vadd.f32 %v5311, %v5035
    %v5313 = vadd.f32 %v5312, %v5039
    %v5314 = vadd.f32 %v5313, %v5043
    %v5315 = vadd.f32 %v5314, %v5047
    %v5316 = vadd.f32 %v5315, %v5051
    %v5317 = vadd.f32 %v5316, %v5055
    %v5318 = vadd.f32 %v5317, %v5059
    %v5319 = vadd.f32 %v5318, %v5063
    %v5320 = vadd.f32 %v5319, %v5067
    %v5321 = vadd.f32 %v5320, %v5071
    %v5322 = vadd.f32 %v5321, %v5075
    %v5323 = vadd.f32 %v5322, %v5079
    %v5324 = vadd.f32 %v5323, %v5083
    %v5325 = vadd.f32 %v5324, %v5087
    %v5326 = vadd.f32 %v5325, %v5091
    %v5327 = vadd.f32 %v5326, %v5095
    %v5328 = vadd.f32 %v5327, %v5099
    %v5329 = vadd.f32 %v5328, %v5103
    %v5330 = vadd.f32 %v5329, %v5107
    %v5331 = vadd.f32 %v5330, %v5111
    %v5332 = vadd.f32 %v5331, %v5115
    %v5333 = vadd.f32 %v5332, %v5119
    %v5334 = vadd.f32 %v5333, %v5123
    %v5335 = vadd.f32 %v5334, %v5127
    %v5336 = vadd.f32 %v5335, %v5131
    %v5337 = vadd.f32 %v5336, %v5135
    %v5338 = vadd.f32 %v5337, %v5139
    %v5339 = vadd.f32 %v5338, %v5143
    %v5340 = vadd.f32 %v5339, %v5147
    %v5341 = vadd.f32 %v5340, %v5151
    %v5342 = vadd.f32 %v5341, %v5155
    %v5343 = vadd.f32 %v5342, %v5159
    %v5344 = vadd.f32 %v5343, %v5163
    %v5345 = vadd.f32 %v5344, %v5167
    %v5346 = vadd.f32 %v5345, %v5171
    %v5347 = vadd.f32 %v5346, %v5175
    %v5348 = vadd.f32 %v5347, %v5179
    %v5349 = vadd.f32 %v5348, %v5183
    %v5350 = vadd.f32 %v5349, %v5187
    %v5351 = vadd.f32 %v5350, %v5191
    %v5352 = vadd.f32 %v5351, %v5195
    %v5353 = vadd.f32 %v5352, %v5199
    %v5354 = vadd.f32 %v5353, %v5203
    %v5355 = vadd.f32 %v5354, %v5207
    %v5356 = vadd.f32 %v5355, %v5211
    %v5357 = vadd.f32 %v5356, %v5215
    %v5358 = vadd.f32 %v5357, %v5219
    %v5359 = vadd.f32 %v5358, %v5223
    %v5360 = vadd.f32 %v5359, %v5227
    %v5361 = vadd.f32 %v5360, %v5231
    %v5362 = vadd.f32 %v5361, %v5235
    %v5363 = vadd.f32 %v5362, %v5239
    %v5364 = vadd.f32 %v5363, %v5243
    %v5365 = vadd.f32 %v5364, %v5247
    %v5366 = vadd.f32 %v5365, %v5251
    %v5367 = vadd.f32 %v5366, %v5255
    %v5368 = vadd.f32 %v5367, %v5259
    %v5369 = vadd.f32 %v5368, %v5263
    %v5370 = vadd.f32 %v5369, %v5267
    %v5371 = vadd.f32 %v5370, %v5271
    %v5372 = vrot.slane %v5371, 4
    %v5373 = vadd.f32 %v5371, %v5372
    %v5374 = vrot.slane %v5373, 2
    %v5375 = vadd.f32 %v5373, %v5374
    %v5376 = vrot.slane %v5375, 1
    %v5377 = vadd.f32 %v5375, %v5376
    %v5378 = vadd.f32 %v4884, %v4888
    %v5379 = vadd.f32 %v5378, %v4892
    %v5380 = vadd.f32 %v5379, %v4896
    %v5381 = vadd.f32 %v5380, %v4900
    %v5382 = vadd.f32 %v5381, %v4904
    %v5383 = vadd.f32 %v5382, %v4908
    %v5384 = vadd.f32 %v5383, %v4912
    %v5385 = vadd.f32 %v5384, %v4916
    %v5386 = vadd.f32 %v5385, %v4920
    %v5387 = vadd.f32 %v5386, %v4924
    %v5388 = vadd.f32 %v5387, %v4928
    %v5389 = vadd.f32 %v5388, %v4932
    %v5390 = vadd.f32 %v5389, %v4936
    %v5391 = vadd.f32 %v5390, %v4940
    %v5392 = vadd.f32 %v5391, %v4944
    %v5393 = vadd.f32 %v5392, %v4948
    %v5394 = vadd.f32 %v5393, %v4952
    %v5395 = vadd.f32 %v5394, %v4956
    %v5396 = vadd.f32 %v5395, %v4960
    %v5397 = vadd.f32 %v5396, %v4964
    %v5398 = vadd.f32 %v5397, %v4968
    %v5399 = vadd.f32 %v5398, %v4972
    %v5400 = vadd.f32 %v5399, %v4976
    %v5401 = vadd.f32 %v5400, %v4980
    %v5402 = vadd.f32 %v5401, %v4984
    %v5403 = vadd.f32 %v5402, %v4988
    %v5404 = vadd.f32 %v5403, %v4992
    %v5405 = vadd.f32 %v5404, %v4996
    %v5406 = vadd.f32 %v5405, %v5000
    %v5407 = vadd.f32 %v5406, %v5004
    %v5408 = vadd.f32 %v5407, %v5008
    %v5409 = vadd.f32 %v5408, %v5012
    %v5410 = vadd.f32 %v5409, %v5016
    %v5411 = vadd.f32 %v5410, %v5020
    %v5412 = vadd.f32 %v5411, %v5024
    %v5413 = vadd.f32 %v5412, %v5028
    %v5414 = vadd.f32 %v5413, %v5032
    %v5415 = vadd.f32 %v5414, %v5036
    %v5416 = vadd.f32 %v5415, %v5040
    %v5417 = vadd.f32 %v5416, %v5044
    %v5418 = vadd.f32 %v5417, %v5048
    %v5419 = vadd.f32 %v5418, %v5052
    %v5420 = vadd.f32 %v5419, %v5056
    %v5421 = vadd.f32 %v5420, %v5060
    %v5422 = vadd.f32 %v5421, %v5064
    %v5423 = vadd.f32 %v5422, %v5068
    %v5424 = vadd.f32 %v5423, %v5072
    %v5425 = vadd.f32 %v5424, %v5076
    %v5426 = vadd.f32 %v5425, %v5080
    %v5427 = vadd.f32 %v5426, %v5084
    %v5428 = vadd.f32 %v5427, %v5088
    %v5429 = vadd.f32 %v5428, %v5092
    %v5430 = vadd.f32 %v5429, %v5096
    %v5431 = vadd.f32 %v5430, %v5100
    %v5432 = vadd.f32 %v5431, %v5104
    %v5433 = vadd.f32 %v5432, %v5108
    %v5434 = vadd.f32 %v5433, %v5112
    %v5435 = vadd.f32 %v5434, %v5116
    %v5436 = vadd.f32 %v5435, %v5120
    %v5437 = vadd.f32 %v5436, %v5124
    %v5438 = vadd.f32 %v5437, %v5128
    %v5439 = vadd.f32 %v5438, %v5132
    %v5440 = vadd.f32 %v5439, %v5136
    %v5441 = vadd.f32 %v5440, %v5140
    %v5442 = vadd.f32 %v5441, %v5144
    %v5443 = vadd.f32 %v5442, %v5148
    %v5444 = vadd.f32 %v5443, %v5152
    %v5445 = vadd.f32 %v5444, %v5156
    %v5446 = vadd.f32 %v5445, %v5160
    %v5447 = vadd.f32 %v5446, %v5164
    %v5448 = vadd.f32 %v5447, %v5168
    %v5449 = vadd.f32 %v5448, %v5172
    %v5450 = vadd.f32 %v5449, %v5176
    %v5451 = vadd.f32 %v5450, %v5180
    %v5452 = vadd.f32 %v5451, %v5184
    %v5453 = vadd.f32 %v5452, %v5188
    %v5454 = vadd.f32 %v5453, %v5192
    %v5455 = vadd.f32 %v5454, %v5196
    %v5456 = vadd.f32 %v5455, %v5200
    %v5457 = vadd.f32 %v5456, %v5204
    %v5458 = vadd.f32 %v5457, %v5208
    %v5459 = vadd.f32 %v5458, %v5212
    %v5460 = vadd.f32 %v5459, %v5216
    %v5461 = vadd.f32 %v5460, %v5220
    %v5462 = vadd.f32 %v5461, %v5224
    %v5463 = vadd.f32 %v5462, %v5228
    %v5464 = vadd.f32 %v5463, %v5232
    %v5465 = vadd.f32 %v5464, %v5236
    %v5466 = vadd.f32 %v5465, %v5240
    %v5467 = vadd.f32 %v5466, %v5244
    %v5468 = vadd.f32 %v5467, %v5248
    %v5469 = vadd.f32 %v5468, %v5252
    %v5470 = vadd.f32 %v5469, %v5256
    %v5471 = vadd.f32 %v5470, %v5260
    %v5472 = vadd.f32 %v5471, %v5264
    %v5473 = vadd.f32 %v5472, %v5268
    %v5474 = vadd.f32 %v5473, %v5272
    %v5475 = vrot.slane %v5474, 4
    %v5476 = vadd.f32 %v5474, %v5475
    %v5477 = vrot.slane %v5476, 2
    %v5478 = vadd.f32 %v5476, %v5477
    %v5479 = vrot.slane %v5478, 1
    %v5480 = vadd.f32 %v5478, %v5479
    %v5481 = vadd.f32 %v4885, %v4889
    %v5482 = vadd.f32 %v5481, %v4893
    %v5483 = vadd.f32 %v5482, %v4897
    %v5484 = vadd.f32 %v5483, %v4901
    %v5485 = vadd.f32 %v5484, %v4905
    %v5486 = vadd.f32 %v5485, %v4909
    %v5487 = vadd.f32 %v5486, %v4913
    %v5488 = vadd.f32 %v5487, %v4917
    %v5489 = vadd.f32 %v5488, %v4921
    %v5490 = vadd.f32 %v5489, %v4925
    %v5491 = vadd.f32 %v5490, %v4929
    %v5492 = vadd.f32 %v5491, %v4933
    %v5493 = vadd.f32 %v5492, %v4937
    %v5494 = vadd.f32 %v5493, %v4941
    %v5495 = vadd.f32 %v5494, %v4945
    %v5496 = vadd.f32 %v5495, %v4949
    %v5497 = vadd.f32 %v5496, %v4953
    %v5498 = vadd.f32 %v5497, %v4957
    %v5499 = vadd.f32 %v5498, %v4961
    %v5500 = vadd.f32 %v5499, %v4965
    %v5501 = vadd.f32 %v5500, %v4969
    %v5502 = vadd.f32 %v5501, %v4973
    %v5503 = vadd.f32 %v5502, %v4977
    %v5504 = vadd.f32 %v5503, %v4981
    %v5505 = vadd.f32 %v5504, %v4985
    %v5506 = vadd.f32 %v5505, %v4989
    %v5507 = vadd.f32 %v5506, %v4993
    %v5508 = vadd.f32 %v5507, %v4997
    %v5509 = vadd.f32 %v5508, %v5001
    %v5510 = vadd.f32 %v5509, %v5005
    %v5511 = vadd.f32 %v5510, %v5009
    %v5512 = vadd.f32 %v5511, %v5013
    %v5513 = vadd.f32 %v5512, %v5017
    %v5514 = vadd.f32 %v5513, %v5021
    %v5515 = vadd.f32 %v5514, %v5025
    %v5516 = vadd.f32 %v5515, %v5029
    %v5517 = vadd.f32 %v5516, %v5033
    %v5518 = vadd.f32 %v5517, %v5037
    %v5519 = vadd.f32 %v5518, %v5041
    %v5520 = vadd.f32 %v5519, %v5045
    %v5521 = vadd.f32 %v5520, %v5049
    %v5522 = vadd.f32 %v5521, %v5053
    %v5523 = vadd.f32 %v5522, %v5057
    %v5524 = vadd.f32 %v5523, %v5061
    %v5525 = vadd.f32 %v5524, %v5065
    %v5526 = vadd.f32 %v5525, %v5069
    %v5527 = vadd.f32 %v5526, %v5073
    %v5528 = vadd.f32 %v5527, %v5077
    %v5529 = vadd.f32 %v5528, %v5081
    %v5530 = vadd.f32 %v5529, %v5085
    %v5531 = vadd.f32 %v5530, %v5089
    %v5532 = vadd.f32 %v5531, %v5093
    %v5533 = vadd.f32 %v5532, %v5097
    %v5534 = vadd.f32 %v5533, %v5101
    %v5535 = vadd.f32 %v5534, %v5105
    %v5536 = vadd.f32 %v5535, %v5109
    %v5537 = vadd.f32 %v5536, %v5113
    %v5538 = vadd.f32 %v5537, %v5117
    %v5539 = vadd.f32 %v5538, %v5121
    %v5540 = vadd.f32 %v5539, %v5125
    %v5541 = vadd.f32 %v5540, %v5129
    %v5542 = vadd.f32 %v5541, %v5133
    %v5543 = vadd.f32 %v5542, %v5137
    %v5544 = vadd.f32 %v5543, %v5141
    %v5545 = vadd.f32 %v5544, %v5145
    %v5546 = vadd.f32 %v5545, %v5149
    %v5547 = vadd.f32 %v5546, %v5153
    %v5548 = vadd.f32 %v5547, %v5157
    %v5549 = vadd.f32 %v5548, %v5161
    %v5550 = vadd.f32 %v5549, %v5165
    %v5551 = vadd.f32 %v5550, %v5169
    %v5552 = vadd.f32 %v5551, %v5173
    %v5553 = vadd.f32 %v5552, %v5177
    %v5554 = vadd.f32 %v5553, %v5181
    %v5555 = vadd.f32 %v5554, %v5185
    %v5556 = vadd.f32 %v5555, %v5189
    %v5557 = vadd.f32 %v5556, %v5193
    %v5558 = vadd.f32 %v5557, %v5197
    %v5559 = vadd.f32 %v5558, %v5201
    %v5560 = vadd.f32 %v5559, %v5205
    %v5561 = vadd.f32 %v5560, %v5209
    %v5562 = vadd.f32 %v5561, %v5213
    %v5563 = vadd.f32 %v5562, %v5217
    %v5564 = vadd.f32 %v5563, %v5221
    %v5565 = vadd.f32 %v5564, %v5225
    %v5566 = vadd.f32 %v5565, %v5229
    %v5567 = vadd.f32 %v5566, %v5233
    %v5568 = vadd.f32 %v5567, %v5237
    %v5569 = vadd.f32 %v5568, %v5241
    %v5570 = vadd.f32 %v5569, %v5245
    %v5571 = vadd.f32 %v5570, %v5249
    %v5572 = vadd.f32 %v5571, %v5253
    %v5573 = vadd.f32 %v5572, %v5257
    %v5574 = vadd.f32 %v5573, %v5261
    %v5575 = vadd.f32 %v5574, %v5265
    %v5576 = vadd.f32 %v5575, %v5269
    %v5577 = vadd.f32 %v5576, %v5273
    %v5578 = vrot.slane %v5577, 4
    %v5579 = vadd.f32 %v5577, %v5578
    %v5580 = vrot.slane %v5579, 2
    %v5581 = vadd.f32 %v5579, %v5580
    %v5582 = vrot.slane %v5581, 1
    %v5583 = vadd.f32 %v5581, %v5582
    %v5584 = vsel %vm1471, %v4886, 0.0
    %v5585 = vsel %vm1471, %v4890, 0.0
    %v5586 = vadd.f32 %v5584, %v5585
    %v5587 = vsel %vm1471, %v4894, 0.0
    %v5588 = vadd.f32 %v5586, %v5587
    %v5589 = vsel %vm1471, %v4898, 0.0
    %v5590 = vadd.f32 %v5588, %v5589
    %v5591 = vsel %vm1471, %v4902, 0.0
    %v5592 = vadd.f32 %v5590, %v5591
    %v5593 = vsel %vm1471, %v4906, 0.0
    %v5594 = vadd.f32 %v5592, %v5593
    %v5595 = vsel %vm1471, %v4910, 0.0
    %v5596 = vadd.f32 %v5594, %v5595
    %v5597 = vsel %vm1471, %v4914, 0.0
    %v5598 = vadd.f32 %v5596, %v5597
    %v5599 = vsel %vm1471, %v4918, 0.0
    %v5600 = vadd.f32 %v5598, %v5599
    %v5601 = vsel %vm1471, %v4922, 0.0
    %v5602 = vadd.f32 %v5600, %v5601
    %v5603 = vsel %vm1471, %v4926, 0.0
    %v5604 = vadd.f32 %v5602, %v5603
    %v5605 = vsel %vm1471, %v4930, 0.0
    %v5606 = vadd.f32 %v5604, %v5605
    %v5607 = vsel %vm1471, %v4934, 0.0
    %v5608 = vadd.f32 %v5606, %v5607
    %v5609 = vsel %vm1471, %v4938, 0.0
    %v5610 = vadd.f32 %v5608, %v5609
    %v5611 = vsel %vm1471, %v4942, 0.0
    %v5612 = vadd.f32 %v5610, %v5611
    %v5613 = vsel %vm1471, %v4946, 0.0
    %v5614 = vadd.f32 %v5612, %v5613
    %v5615 = vsel %vm1471, %v4950, 0.0
    %v5616 = vadd.f32 %v5614, %v5615
    %v5617 = vsel %vm1471, %v4954, 0.0
    %v5618 = vadd.f32 %v5616, %v5617
    %v5619 = vsel %vm1471, %v4958, 0.0
    %v5620 = vadd.f32 %v5618, %v5619
    %v5621 = vsel %vm1471, %v4962, 0.0
    %v5622 = vadd.f32 %v5620, %v5621
    %v5623 = vsel %vm1471, %v4966, 0.0
    %v5624 = vadd.f32 %v5622, %v5623
    %v5625 = vsel %vm1471, %v4970, 0.0
    %v5626 = vadd.f32 %v5624, %v5625
    %v5627 = vsel %vm1471, %v4974, 0.0
    %v5628 = vadd.f32 %v5626, %v5627
    %v5629 = vsel %vm1471, %v4978, 0.0
    %v5630 = vadd.f32 %v5628, %v5629
    %v5631 = vsel %vm1471, %v4982, 0.0
    %v5632 = vadd.f32 %v5630, %v5631
    %v5633 = vsel %vm1471, %v4986, 0.0
    %v5634 = vadd.f32 %v5632, %v5633
    %v5635 = vsel %vm1471, %v4990, 0.0
    %v5636 = vadd.f32 %v5634, %v5635
    %v5637 = vsel %vm1471, %v4994, 0.0
    %v5638 = vadd.f32 %v5636, %v5637
    %v5639 = vsel %vm1471, %v4998, 0.0
    %v5640 = vadd.f32 %v5638, %v5639
    %v5641 = vsel %vm1471, %v5002, 0.0
    %v5642 = vadd.f32 %v5640, %v5641
    %v5643 = vsel %vm1471, %v5006, 0.0
    %v5644 = vadd.f32 %v5642, %v5643
    %v5645 = vsel %vm1471, %v5010, 0.0
    %v5646 = vadd.f32 %v5644, %v5645
    %v5647 = vsel %vm1471, %v5014, 0.0
    %v5648 = vadd.f32 %v5646, %v5647
    %v5649 = vsel %vm1471, %v5018, 0.0
    %v5650 = vadd.f32 %v5648, %v5649
    %v5651 = vsel %vm1471, %v5022, 0.0
    %v5652 = vadd.f32 %v5650, %v5651
    %v5653 = vsel %vm1471, %v5026, 0.0
    %v5654 = vadd.f32 %v5652, %v5653
    %v5655 = vsel %vm1471, %v5030, 0.0
    %v5656 = vadd.f32 %v5654, %v5655
    %v5657 = vsel %vm1471, %v5034, 0.0
    %v5658 = vadd.f32 %v5656, %v5657
    %v5659 = vsel %vm1471, %v5038, 0.0
    %v5660 = vadd.f32 %v5658, %v5659
    %v5661 = vsel %vm1471, %v5042, 0.0
    %v5662 = vadd.f32 %v5660, %v5661
    %v5663 = vsel %vm1471, %v5046, 0.0
    %v5664 = vadd.f32 %v5662, %v5663
    %v5665 = vsel %vm1471, %v5050, 0.0
    %v5666 = vadd.f32 %v5664, %v5665
    %v5667 = vsel %vm1471, %v5054, 0.0
    %v5668 = vadd.f32 %v5666, %v5667
    %v5669 = vsel %vm1471, %v5058, 0.0
    %v5670 = vadd.f32 %v5668, %v5669
    %v5671 = vsel %vm1471, %v5062, 0.0
    %v5672 = vadd.f32 %v5670, %v5671
    %v5673 = vsel %vm1471, %v5066, 0.0
    %v5674 = vadd.f32 %v5672, %v5673
    %v5675 = vsel %vm1471, %v5070, 0.0
    %v5676 = vadd.f32 %v5674, %v5675
    %v5677 = vsel %vm1471, %v5074, 0.0
    %v5678 = vadd.f32 %v5676, %v5677
    %v5679 = vsel %vm1471, %v5078, 0.0
    %v5680 = vadd.f32 %v5678, %v5679
    %v5681 = vsel %vm1471, %v5082, 0.0
    %v5682 = vadd.f32 %v5680, %v5681
    %v5683 = vsel %vm1471, %v5086, 0.0
    %v5684 = vadd.f32 %v5682, %v5683
    %v5685 = vsel %vm1471, %v5090, 0.0
    %v5686 = vadd.f32 %v5684, %v5685
    %v5687 = vsel %vm1471, %v5094, 0.0
    %v5688 = vadd.f32 %v5686, %v5687
    %v5689 = vsel %vm1471, %v5098, 0.0
    %v5690 = vadd.f32 %v5688, %v5689
    %v5691 = vsel %vm1471, %v5102, 0.0
    %v5692 = vadd.f32 %v5690, %v5691
    %v5693 = vsel %vm1471, %v5106, 0.0
    %v5694 = vadd.f32 %v5692, %v5693
    %v5695 = vsel %vm1471, %v5110, 0.0
    %v5696 = vadd.f32 %v5694, %v5695
    %v5697 = vsel %vm1471, %v5114, 0.0
    %v5698 = vadd.f32 %v5696, %v5697
    %v5699 = vsel %vm1471, %v5118, 0.0
    %v5700 = vadd.f32 %v5698, %v5699
    %v5701 = vsel %vm1471, %v5122, 0.0
    %v5702 = vadd.f32 %v5700, %v5701
    %v5703 = vsel %vm1471, %v5126, 0.0
    %v5704 = vadd.f32 %v5702, %v5703
    %v5705 = vsel %vm1471, %v5130, 0.0
    %v5706 = vadd.f32 %v5704, %v5705
    %v5707 = vsel %vm1471, %v5134, 0.0
    %v5708 = vadd.f32 %v5706, %v5707
    %v5709 = vsel %vm1471, %v5138, 0.0
    %v5710 = vadd.f32 %v5708, %v5709
    %v5711 = vsel %vm1471, %v5142, 0.0
    %v5712 = vadd.f32 %v5710, %v5711
    %v5713 = vsel %vm1471, %v5146, 0.0
    %v5714 = vadd.f32 %v5712, %v5713
    %v5715 = vsel %vm1471, %v5150, 0.0
    %v5716 = vadd.f32 %v5714, %v5715
    %v5717 = vsel %vm1471, %v5154, 0.0
    %v5718 = vadd.f32 %v5716, %v5717
    %v5719 = vsel %vm1471, %v5158, 0.0
    %v5720 = vadd.f32 %v5718, %v5719
    %v5721 = vsel %vm1471, %v5162, 0.0
    %v5722 = vadd.f32 %v5720, %v5721
    %v5723 = vsel %vm1471, %v5166, 0.0
    %v5724 = vadd.f32 %v5722, %v5723
    %v5725 = vsel %vm1471, %v5170, 0.0
    %v5726 = vadd.f32 %v5724, %v5725
    %v5727 = vsel %vm1471, %v5174, 0.0
    %v5728 = vadd.f32 %v5726, %v5727
    %v5729 = vsel %vm1471, %v5178, 0.0
    %v5730 = vadd.f32 %v5728, %v5729
    %v5731 = vsel %vm1471, %v5182, 0.0
    %v5732 = vadd.f32 %v5730, %v5731
    %v5733 = vsel %vm1471, %v5186, 0.0
    %v5734 = vadd.f32 %v5732, %v5733
    %v5735 = vsel %vm1471, %v5190, 0.0
    %v5736 = vadd.f32 %v5734, %v5735
    %v5737 = vsel %vm1471, %v5194, 0.0
    %v5738 = vadd.f32 %v5736, %v5737
    %v5739 = vsel %vm1471, %v5198, 0.0
    %v5740 = vadd.f32 %v5738, %v5739
    %v5741 = vsel %vm1471, %v5202, 0.0
    %v5742 = vadd.f32 %v5740, %v5741
    %v5743 = vsel %vm1471, %v5206, 0.0
    %v5744 = vadd.f32 %v5742, %v5743
    %v5745 = vsel %vm1471, %v5210, 0.0
    %v5746 = vadd.f32 %v5744, %v5745
    %v5747 = vsel %vm1471, %v5214, 0.0
    %v5748 = vadd.f32 %v5746, %v5747
    %v5749 = vsel %vm1471, %v5218, 0.0
    %v5750 = vadd.f32 %v5748, %v5749
    %v5751 = vsel %vm1471, %v5222, 0.0
    %v5752 = vadd.f32 %v5750, %v5751
    %v5753 = vsel %vm1471, %v5226, 0.0
    %v5754 = vadd.f32 %v5752, %v5753
    %v5755 = vsel %vm1471, %v5230, 0.0
    %v5756 = vadd.f32 %v5754, %v5755
    %v5757 = vsel %vm1471, %v5234, 0.0
    %v5758 = vadd.f32 %v5756, %v5757
    %v5759 = vsel %vm1471, %v5238, 0.0
    %v5760 = vadd.f32 %v5758, %v5759
    %v5761 = vsel %vm1471, %v5242, 0.0
    %v5762 = vadd.f32 %v5760, %v5761
    %v5763 = vsel %vm1471, %v5246, 0.0
    %v5764 = vadd.f32 %v5762, %v5763
    %v5765 = vsel %vm1471, %v5250, 0.0
    %v5766 = vadd.f32 %v5764, %v5765
    %v5767 = vsel %vm1471, %v5254, 0.0
    %v5768 = vadd.f32 %v5766, %v5767
    %v5769 = vsel %vm1471, %v5258, 0.0
    %v5770 = vadd.f32 %v5768, %v5769
    %v5771 = vsel %vm1471, %v5262, 0.0
    %v5772 = vadd.f32 %v5770, %v5771
    %v5773 = vsel %vm1471, %v5266, 0.0
    %v5774 = vadd.f32 %v5772, %v5773
    %v5775 = vsel %vm1471, %v5270, 0.0
    %v5776 = vadd.f32 %v5774, %v5775
    %v5777 = vsel %vm1471, %v5274, 0.0
    %v5778 = vadd.f32 %v5776, %v5777
    %v5779 = vrot.slane %v5778, 4
    %v5780 = vadd.f32 %v5778, %v5779
    %v5781 = vrot.slane %v5780, 2
    %v5782 = vadd.f32 %v5780, %v5781
    %v5783 = vrot.slane %v5782, 1
    %v5784 = vadd.f32 %v5782, %v5783
    %v5785 = vmul.f32 %v5377, 0.0012755102
    %v5786 = vmul.f32 %v5480, 0.0012755102
    %v5787 = vmul.f32 %v5583, 0.0012755102
    %v5788 = vmul.f32 %v5784, 0.0012755102
    %v5789 = vmul.f32 %v4879, %v4879
    %v5790 = vmul.f32 %v4880, %v4880
    %v5791 = vmul.f32 %v4881, %v4881
    %v5792 = vmul.f32 %v4882, %v4882
    %v5793 = vsub.f32 %v5785, %v5789
    %v5794 = vsub.f32 %v5786, %v5790
    %v5795 = vsub.f32 %v5787, %v5791
    %v5796 = vsub.f32 %v5788, %v5792
    %v5797 = vmax.f32 %v5793, 0.0
    %v5798 = vmax.f32 %v5794, 0.0
    %v5799 = vmax.f32 %v5795, 0.0
    %v5800 = vmax.f32 %v5796, 0.0
    %v5801 = vld [vmem:[#allocation10] sm:$0xf]
    %v5802 = vadd.f32 %v5797, 1e-05
    %v5803 = vadd.f32 %v5798, 1e-05
    %v5804 = vadd.f32 %v5799, 1e-05
    %v5805 = vadd.f32 %v5800, 1e-05
    %v5806 = vrsqrt.pop %v5802
    %v5807 = vrsqrt.pop %v5803
    %v5808 = vrsqrt.pop %v5804
    %v5809 = vrsqrt.pop %v5805
    %v5814 = vcombine.low %v5806, %v5807
    %v5815 = vcombine.low %v5808, %v5809
    %v5817 = vunpack.c.l.s4 1966171168
    %v5818 = vunpack.c.0.s8 %v5817
    %v5819 = vlaneseq
    %v5820 = vshrl.u32 %v5819, 7
    %v5821 = vsub.s32 %v5818, %v5820
    %v5822 = vrot.slane %v5814, %v5821
    %v5824 = vunpack.c.l.s4 1966171168
    %v5825 = vunpack.c.0.s8 %v5824
    %v5826 = vlaneseq
    %v5827 = vshrl.u32 %v5826, 7
    %v5828 = vsub.s32 %v5825, %v5827
    %v5829 = vrot.slane %v5815, %v5828
    %v5830 = vcombine.low %v5822, %v5829
    %v5832 = vunpack.c.l.s4 1966171168
    %v5833 = vunpack.c.0.s8 %v5832
    %v5834 = vlaneseq
    %v5835 = vshrl.u32 %v5834, 7
    %v5836 = vsub.s32 %v5833, %v5835
    %v5837 = vrot.slane %v5830, %v5836
    %v5839 = vmul.f32 %v5801, %v5837
    %v5840 = vld [vmem:[#allocation11] sm:$0xf]
    %v5842 = vlaneseq
    %v5843 = vshrl.u32 %v5842, 7
    %v5844 = vsub.s32 0, %v5843
    %v5845 = vrot.slane %v5839, %v5844
    %v5846 = vlaneseq
    %v5847 = vshrl.u32 %v5846, 7
    %v5848 = vsub.s32 1, %v5847
    %v5849 = vrot.slane %v5839, %v5848
    %v5850 = vlaneseq
    %v5851 = vshrl.u32 %v5850, 7
    %v5852 = vsub.s32 2, %v5851
    %v5853 = vrot.slane %v5839, %v5852
    %v5854 = vlaneseq
    %v5855 = vshrl.u32 %v5854, 7
    %v5856 = vsub.s32 3, %v5855
    %v5857 = vrot.slane %v5839, %v5856
    %v5862 = vmul.f32 %v4879, %v5845
    %v5863 = vmul.f32 %v4880, %v5849
    %v5864 = vmul.f32 %v4881, %v5853
    %v5865 = vmul.f32 %v4882, %v5857
    %v5870 = vcombine.low %v5862, %v5863
    %v5871 = vcombine.low %v5864, %v5865
    %v5873 = vunpack.c.l.s4 1966171168
    %v5874 = vunpack.c.0.s8 %v5873
    %v5875 = vlaneseq
    %v5876 = vshrl.u32 %v5875, 7
    %v5877 = vsub.s32 %v5874, %v5876
    %v5878 = vrot.slane %v5870, %v5877
    %v5880 = vunpack.c.l.s4 1966171168
    %v5881 = vunpack.c.0.s8 %v5880
    %v5882 = vlaneseq
    %v5883 = vshrl.u32 %v5882, 7
    %v5884 = vsub.s32 %v5881, %v5883
    %v5885 = vrot.slane %v5871, %v5884
    %v5886 = vcombine.low %v5878, %v5885
    %v5888 = vunpack.c.l.s4 1966171168
    %v5889 = vunpack.c.0.s8 %v5888
    %v5890 = vlaneseq
    %v5891 = vshrl.u32 %v5890, 7
    %v5892 = vsub.s32 %v5889, %v5891
    %v5893 = vrot.slane %v5886, %v5892
    %v5895 = vsub.f32 %v5840, %v5893
    %v5896 = vmul.f32 %v3358, %v5845
    %v5897 = vmul.f32 %v3360, %v5849
    %v5898 = vmul.f32 %v3881, %v5853
    %v5899 = vmul.f32 %v3883, %v5857
    %v5900 = vmul.f32 %v3362, %v5845
    %v5901 = vmul.f32 %v3364, %v5849
    %v5902 = vmul.f32 %v3885, %v5853
    %v5903 = vmul.f32 %v3887, %v5857
    %v5904 = vmul.f32 %v3368, %v5845
    %v5905 = vmul.f32 %v3370, %v5849
    %v5906 = vmul.f32 %v3891, %v5853
    %v5907 = vmul.f32 %v3893, %v5857
    %v5908 = vmul.f32 %v3372, %v5845
    %v5909 = vmul.f32 %v3374, %v5849
    %v5910 = vmul.f32 %v3895, %v5853
    %v5911 = vmul.f32 %v3897, %v5857
    %v5912 = vmul.f32 %v3378, %v5845
    %v5913 = vmul.f32 %v3380, %v5849
    %v5914 = vmul.f32 %v3901, %v5853
    %v5915 = vmul.f32 %v3903, %v5857
    %v5916 = vmul.f32 %v3382, %v5845
    %v5917 = vmul.f32 %v3384, %v5849
    %v5918 = vmul.f32 %v3905, %v5853
    %v5919 = vmul.f32 %v3907, %v5857
    %v5920 = vmul.f32 %v3388, %v5845
    %v5921 = vmul.f32 %v3390, %v5849
    %v5922 = vmul.f32 %v3911, %v5853
    %v5923 = vmul.f32 %v3913, %v5857
    %v5924 = vmul.f32 %v3392, %v5845
    %v5925 = vmul.f32 %v3394, %v5849
    %v5926 = vmul.f32 %v3915, %v5853
    %v5927 = vmul.f32 %v3917, %v5857
    %v5928 = vmul.f32 %v3398, %v5845
    %v5929 = vmul.f32 %v3400, %v5849
    %v5930 = vmul.f32 %v3921, %v5853
    %v5931 = vmul.f32 %v3923, %v5857
    %v5932 = vmul.f32 %v3402, %v5845
    %v5933 = vmul.f32 %v3404, %v5849
    %v5934 = vmul.f32 %v3925, %v5853
    %v5935 = vmul.f32 %v3927, %v5857
    %v5936 = vmul.f32 %v3408, %v5845
    %v5937 = vmul.f32 %v3410, %v5849
    %v5938 = vmul.f32 %v3931, %v5853
    %v5939 = vmul.f32 %v3933, %v5857
    %v5940 = vmul.f32 %v3412, %v5845
    %v5941 = vmul.f32 %v3414, %v5849
    %v5942 = vmul.f32 %v3935, %v5853
    %v5943 = vmul.f32 %v3937, %v5857
    %v5944 = vmul.f32 %v3418, %v5845
    %v5945 = vmul.f32 %v3420, %v5849
    %v5946 = vmul.f32 %v3941, %v5853
    %v5947 = vmul.f32 %v3943, %v5857
    %v5948 = vmul.f32 %v3422, %v5845
    %v5949 = vmul.f32 %v3424, %v5849
    %v5950 = vmul.f32 %v3945, %v5853
    %v5951 = vmul.f32 %v3947, %v5857
    %v5952 = vmul.f32 %v3428, %v5845
    %v5953 = vmul.f32 %v3430, %v5849
    %v5954 = vmul.f32 %v3951, %v5853
    %v5955 = vmul.f32 %v3953, %v5857
    %v5956 = vmul.f32 %v3432, %v5845
    %v5957 = vmul.f32 %v3434, %v5849
    %v5958 = vmul.f32 %v3955, %v5853
    %v5959 = vmul.f32 %v3957, %v5857
    %v5960 = vmul.f32 %v3438, %v5845
    %v5961 = vmul.f32 %v3440, %v5849
    %v5962 = vmul.f32 %v3961, %v5853
    %v5963 = vmul.f32 %v3963, %v5857
    %v5964 = vmul.f32 %v3442, %v5845
    %v5965 = vmul.f32 %v3444, %v5849
    %v5966 = vmul.f32 %v3965, %v5853
    %v5967 = vmul.f32 %v3967, %v5857
    %v5968 = vmul.f32 %v3448, %v5845
    %v5969 = vmul.f32 %v3450, %v5849
    %v5970 = vmul.f32 %v3971, %v5853
    %v5971 = vmul.f32 %v3973, %v5857
    %v5972 = vmul.f32 %v3452, %v5845
    %v5973 = vmul.f32 %v3454, %v5849
    %v5974 = vmul.f32 %v3975, %v5853
    %v5975 = vmul.f32 %v3977, %v5857
    %v5976 = vmul.f32 %v3458, %v5845
    %v5977 = vmul.f32 %v3460, %v5849
    %v5978 = vmul.f32 %v3981, %v5853
    %v5979 = vmul.f32 %v3983, %v5857
    %v5980 = vmul.f32 %v3462, %v5845
    %v5981 = vmul.f32 %v3464, %v5849
    %v5982 = vmul.f32 %v3985, %v5853
    %v5983 = vmul.f32 %v3987, %v5857
    %v5984 = vmul.f32 %v3468, %v5845
    %v5985 = vmul.f32 %v3470, %v5849
    %v5986 = vmul.f32 %v3991, %v5853
    %v5987 = vmul.f32 %v3993, %v5857
    %v5988 = vmul.f32 %v3472, %v5845
    %v5989 = vmul.f32 %v3474, %v5849
    %v5990 = vmul.f32 %v3995, %v5853
    %v5991 = vmul.f32 %v3997, %v5857
    %v5992 = vmul.f32 %v3478, %v5845
    %v5993 = vmul.f32 %v3480, %v5849
    %v5994 = vmul.f32 %v4001, %v5853
    %v5995 = vmul.f32 %v4003, %v5857
    %v5996 = vmul.f32 %v3482, %v5845
    %v5997 = vmul.f32 %v3484, %v5849
    %v5998 = vmul.f32 %v4005, %v5853
    %v5999 = vmul.f32 %v4007, %v5857
    %v6000 = vmul.f32 %v3488, %v5845
    %v6001 = vmul.f32 %v3490, %v5849
    %v6002 = vmul.f32 %v4011, %v5853
    %v6003 = vmul.f32 %v4013, %v5857
    %v6004 = vmul.f32 %v3492, %v5845
    %v6005 = vmul.f32 %v3494, %v5849
    %v6006 = vmul.f32 %v4015, %v5853
    %v6007 = vmul.f32 %v4017, %v5857
    %v6008 = vmul.f32 %v3498, %v5845
    %v6009 = vmul.f32 %v3500, %v5849
    %v6010 = vmul.f32 %v4021, %v5853
    %v6011 = vmul.f32 %v4023, %v5857
    %v6012 = vmul.f32 %v3502, %v5845
    %v6013 = vmul.f32 %v3504, %v5849
    %v6014 = vmul.f32 %v4025, %v5853
    %v6015 = vmul.f32 %v4027, %v5857
    %v6016 = vmul.f32 %v3508, %v5845
    %v6017 = vmul.f32 %v3510, %v5849
    %v6018 = vmul.f32 %v4031, %v5853
    %v6019 = vmul.f32 %v4033, %v5857
    %v6020 = vmul.f32 %v3512, %v5845
    %v6021 = vmul.f32 %v3514, %v5849
    %v6022 = vmul.f32 %v4035, %v5853
    %v6023 = vmul.f32 %v4037, %v5857
    %v6024 = vmul.f32 %v3518, %v5845
    %v6025 = vmul.f32 %v3520, %v5849
    %v6026 = vmul.f32 %v4041, %v5853
    %v6027 = vmul.f32 %v4043, %v5857
    %v6028 = vmul.f32 %v3522, %v5845
    %v6029 = vmul.f32 %v3524, %v5849
    %v6030 = vmul.f32 %v4045, %v5853
    %v6031 = vmul.f32 %v4047, %v5857
    %v6032 = vmul.f32 %v3528, %v5845
    %v6033 = vmul.f32 %v3530, %v5849
    %v6034 = vmul.f32 %v4051, %v5853
    %v6035 = vmul.f32 %v4053, %v5857
    %v6036 = vmul.f32 %v3532, %v5845
    %v6037 = vmul.f32 %v3534, %v5849
    %v6038 = vmul.f32 %v4055, %v5853
    %v6039 = vmul.f32 %v4057, %v5857
    %v6040 = vmul.f32 %v3538, %v5845
    %v6041 = vmul.f32 %v3540, %v5849
    %v6042 = vmul.f32 %v4061, %v5853
    %v6043 = vmul.f32 %v4063, %v5857
    %v6044 = vmul.f32 %v3542, %v5845
    %v6045 = vmul.f32 %v3544, %v5849
    %v6046 = vmul.f32 %v4065, %v5853
    %v6047 = vmul.f32 %v4067, %v5857
    %v6048 = vmul.f32 %v3548, %v5845
    %v6049 = vmul.f32 %v3550, %v5849
    %v6050 = vmul.f32 %v4071, %v5853
    %v6051 = vmul.f32 %v4073, %v5857
    %v6052 = vmul.f32 %v3552, %v5845
    %v6053 = vmul.f32 %v3554, %v5849
    %v6054 = vmul.f32 %v4075, %v5853
    %v6055 = vmul.f32 %v4077, %v5857
    %v6056 = vmul.f32 %v3558, %v5845
    %v6057 = vmul.f32 %v3560, %v5849
    %v6058 = vmul.f32 %v4081, %v5853
    %v6059 = vmul.f32 %v4083, %v5857
    %v6060 = vmul.f32 %v3562, %v5845
    %v6061 = vmul.f32 %v3564, %v5849
    %v6062 = vmul.f32 %v4085, %v5853
    %v6063 = vmul.f32 %v4087, %v5857
    %v6064 = vmul.f32 %v3568, %v5845
    %v6065 = vmul.f32 %v3570, %v5849
    %v6066 = vmul.f32 %v4091, %v5853
    %v6067 = vmul.f32 %v4093, %v5857
    %v6068 = vmul.f32 %v3572, %v5845
    %v6069 = vmul.f32 %v3574, %v5849
    %v6070 = vmul.f32 %v4095, %v5853
    %v6071 = vmul.f32 %v4097, %v5857
    %v6072 = vmul.f32 %v3578, %v5845
    %v6073 = vmul.f32 %v3580, %v5849
    %v6074 = vmul.f32 %v4101, %v5853
    %v6075 = vmul.f32 %v4103, %v5857
    %v6076 = vmul.f32 %v3582, %v5845
    %v6077 = vmul.f32 %v3584, %v5849
    %v6078 = vmul.f32 %v4105, %v5853
    %v6079 = vmul.f32 %v4107, %v5857
    %v6080 = vmul.f32 %v3588, %v5845
    %v6081 = vmul.f32 %v3590, %v5849
    %v6082 = vmul.f32 %v4111, %v5853
    %v6083 = vmul.f32 %v4113, %v5857
    %v6084 = vmul.f32 %v3592, %v5845
    %v6085 = vmul.f32 %v3594, %v5849
    %v6086 = vmul.f32 %v4115, %v5853
    %v6087 = vmul.f32 %v4117, %v5857
    %v6088 = vmul.f32 %v3598, %v5845
    %v6089 = vmul.f32 %v3600, %v5849
    %v6090 = vmul.f32 %v4121, %v5853
    %v6091 = vmul.f32 %v4123, %v5857
    %v6092 = vmul.f32 %v3602, %v5845
    %v6093 = vmul.f32 %v3604, %v5849
    %v6094 = vmul.f32 %v4125, %v5853
    %v6095 = vmul.f32 %v4127, %v5857
    %v6096 = vmul.f32 %v3608, %v5845
    %v6097 = vmul.f32 %v3610, %v5849
    %v6098 = vmul.f32 %v4131, %v5853
    %v6099 = vmul.f32 %v4133, %v5857
    %v6100 = vmul.f32 %v3612, %v5845
    %v6101 = vmul.f32 %v3614, %v5849
    %v6102 = vmul.f32 %v4135, %v5853
    %v6103 = vmul.f32 %v4137, %v5857
    %v6104 = vmul.f32 %v3618, %v5845
    %v6105 = vmul.f32 %v3620, %v5849
    %v6106 = vmul.f32 %v4141, %v5853
    %v6107 = vmul.f32 %v4143, %v5857
    %v6108 = vmul.f32 %v3622, %v5845
    %v6109 = vmul.f32 %v3624, %v5849
    %v6110 = vmul.f32 %v4145, %v5853
    %v6111 = vmul.f32 %v4147, %v5857
    %v6112 = vmul.f32 %v3628, %v5845
    %v6113 = vmul.f32 %v3630, %v5849
    %v6114 = vmul.f32 %v4151, %v5853
    %v6115 = vmul.f32 %v4153, %v5857
    %v6116 = vmul.f32 %v3632, %v5845
    %v6117 = vmul.f32 %v3634, %v5849
    %v6118 = vmul.f32 %v4155, %v5853
    %v6119 = vmul.f32 %v4157, %v5857
    %v6120 = vmul.f32 %v3638, %v5845
    %v6121 = vmul.f32 %v3640, %v5849
    %v6122 = vmul.f32 %v4161, %v5853
    %v6123 = vmul.f32 %v4163, %v5857
    %v6124 = vmul.f32 %v3642, %v5845
    %v6125 = vmul.f32 %v3644, %v5849
    %v6126 = vmul.f32 %v4165, %v5853
    %v6127 = vmul.f32 %v4167, %v5857
    %v6128 = vmul.f32 %v3648, %v5845
    %v6129 = vmul.f32 %v3650, %v5849
    %v6130 = vmul.f32 %v4171, %v5853
    %v6131 = vmul.f32 %v4173, %v5857
    %v6132 = vmul.f32 %v3652, %v5845
    %v6133 = vmul.f32 %v3654, %v5849
    %v6134 = vmul.f32 %v4175, %v5853
    %v6135 = vmul.f32 %v4177, %v5857
    %v6136 = vmul.f32 %v3658, %v5845
    %v6137 = vmul.f32 %v3660, %v5849
    %v6138 = vmul.f32 %v4181, %v5853
    %v6139 = vmul.f32 %v4183, %v5857
    %v6140 = vmul.f32 %v3662, %v5845
    %v6141 = vmul.f32 %v3664, %v5849
    %v6142 = vmul.f32 %v4185, %v5853
    %v6143 = vmul.f32 %v4187, %v5857
    %v6144 = vmul.f32 %v3668, %v5845
    %v6145 = vmul.f32 %v3670, %v5849
    %v6146 = vmul.f32 %v4191, %v5853
    %v6147 = vmul.f32 %v4193, %v5857
    %v6148 = vmul.f32 %v3672, %v5845
    %v6149 = vmul.f32 %v3674, %v5849
    %v6150 = vmul.f32 %v4195, %v5853
    %v6151 = vmul.f32 %v4197, %v5857
    %v6152 = vmul.f32 %v3678, %v5845
    %v6153 = vmul.f32 %v3680, %v5849
    %v6154 = vmul.f32 %v4201, %v5853
    %v6155 = vmul.f32 %v4203, %v5857
    %v6156 = vmul.f32 %v3682, %v5845
    %v6157 = vmul.f32 %v3684, %v5849
    %v6158 = vmul.f32 %v4205, %v5853
    %v6159 = vmul.f32 %v4207, %v5857
    %v6160 = vmul.f32 %v3688, %v5845
    %v6161 = vmul.f32 %v3690, %v5849
    %v6162 = vmul.f32 %v4211, %v5853
    %v6163 = vmul.f32 %v4213, %v5857
    %v6164 = vmul.f32 %v3692, %v5845
    %v6165 = vmul.f32 %v3694, %v5849
    %v6166 = vmul.f32 %v4215, %v5853
    %v6167 = vmul.f32 %v4217, %v5857
    %v6168 = vmul.f32 %v3698, %v5845
    %v6169 = vmul.f32 %v3700, %v5849
    %v6170 = vmul.f32 %v4221, %v5853
    %v6171 = vmul.f32 %v4223, %v5857
    %v6172 = vmul.f32 %v3702, %v5845
    %v6173 = vmul.f32 %v3704, %v5849
    %v6174 = vmul.f32 %v4225, %v5853
    %v6175 = vmul.f32 %v4227, %v5857
    %v6176 = vmul.f32 %v3708, %v5845
    %v6177 = vmul.f32 %v3710, %v5849
    %v6178 = vmul.f32 %v4231, %v5853
    %v6179 = vmul.f32 %v4233, %v5857
    %v6180 = vmul.f32 %v3712, %v5845
    %v6181 = vmul.f32 %v3714, %v5849
    %v6182 = vmul.f32 %v4235, %v5853
    %v6183 = vmul.f32 %v4237, %v5857
    %v6184 = vmul.f32 %v3718, %v5845
    %v6185 = vmul.f32 %v3720, %v5849
    %v6186 = vmul.f32 %v4241, %v5853
    %v6187 = vmul.f32 %v4243, %v5857
    %v6188 = vmul.f32 %v3722, %v5845
    %v6189 = vmul.f32 %v3724, %v5849
    %v6190 = vmul.f32 %v4245, %v5853
    %v6191 = vmul.f32 %v4247, %v5857
    %v6192 = vmul.f32 %v3728, %v5845
    %v6193 = vmul.f32 %v3730, %v5849
    %v6194 = vmul.f32 %v4251, %v5853
    %v6195 = vmul.f32 %v4253, %v5857
    %v6196 = vmul.f32 %v3732, %v5845
    %v6197 = vmul.f32 %v3734, %v5849
    %v6198 = vmul.f32 %v4255, %v5853
    %v6199 = vmul.f32 %v4257, %v5857
    %v6200 = vmul.f32 %v3738, %v5845
    %v6201 = vmul.f32 %v3740, %v5849
    %v6202 = vmul.f32 %v4261, %v5853
    %v6203 = vmul.f32 %v4263, %v5857
    %v6204 = vmul.f32 %v3742, %v5845
    %v6205 = vmul.f32 %v3744, %v5849
    %v6206 = vmul.f32 %v4265, %v5853
    %v6207 = vmul.f32 %v4267, %v5857
    %v6208 = vmul.f32 %v3748, %v5845
    %v6209 = vmul.f32 %v3750, %v5849
    %v6210 = vmul.f32 %v4271, %v5853
    %v6211 = vmul.f32 %v4273, %v5857
    %v6212 = vmul.f32 %v3752, %v5845
    %v6213 = vmul.f32 %v3754, %v5849
    %v6214 = vmul.f32 %v4275, %v5853
    %v6215 = vmul.f32 %v4277, %v5857
    %v6216 = vmul.f32 %v3758, %v5845
    %v6217 = vmul.f32 %v3760, %v5849
    %v6218 = vmul.f32 %v4281, %v5853
    %v6219 = vmul.f32 %v4283, %v5857
    %v6220 = vmul.f32 %v3762, %v5845
    %v6221 = vmul.f32 %v3764, %v5849
    %v6222 = vmul.f32 %v4285, %v5853
    %v6223 = vmul.f32 %v4287, %v5857
    %v6224 = vmul.f32 %v3768, %v5845
    %v6225 = vmul.f32 %v3770, %v5849
    %v6226 = vmul.f32 %v4291, %v5853
    %v6227 = vmul.f32 %v4293, %v5857
    %v6228 = vmul.f32 %v3772, %v5845
    %v6229 = vmul.f32 %v3774, %v5849
    %v6230 = vmul.f32 %v4295, %v5853
    %v6231 = vmul.f32 %v4297, %v5857
    %v6232 = vmul.f32 %v3778, %v5845
    %v6233 = vmul.f32 %v3780, %v5849
    %v6234 = vmul.f32 %v4301, %v5853
    %v6235 = vmul.f32 %v4303, %v5857
    %v6236 = vmul.f32 %v3782, %v5845
    %v6237 = vmul.f32 %v3784, %v5849
    %v6238 = vmul.f32 %v4305, %v5853
    %v6239 = vmul.f32 %v4307, %v5857
    %v6240 = vmul.f32 %v3788, %v5845
    %v6241 = vmul.f32 %v3790, %v5849
    %v6242 = vmul.f32 %v4311, %v5853
    %v6243 = vmul.f32 %v4313, %v5857
    %v6244 = vmul.f32 %v3792, %v5845
    %v6245 = vmul.f32 %v3794, %v5849
    %v6246 = vmul.f32 %v4315, %v5853
    %v6247 = vmul.f32 %v4317, %v5857
    %v6248 = vmul.f32 %v3798, %v5845
    %v6249 = vmul.f32 %v3800, %v5849
    %v6250 = vmul.f32 %v4321, %v5853
    %v6251 = vmul.f32 %v4323, %v5857
    %v6252 = vmul.f32 %v3802, %v5845
    %v6253 = vmul.f32 %v3804, %v5849
    %v6254 = vmul.f32 %v4325, %v5853
    %v6255 = vmul.f32 %v4327, %v5857
    %v6256 = vmul.f32 %v3808, %v5845
    %v6257 = vmul.f32 %v3810, %v5849
    %v6258 = vmul.f32 %v4331, %v5853
    %v6259 = vmul.f32 %v4333, %v5857
    %v6260 = vmul.f32 %v3812, %v5845
    %v6261 = vmul.f32 %v3814, %v5849
    %v6262 = vmul.f32 %v4335, %v5853
    %v6263 = vmul.f32 %v4337, %v5857
    %v6264 = vmul.f32 %v3818, %v5845
    %v6265 = vmul.f32 %v3820, %v5849
    %v6266 = vmul.f32 %v4341, %v5853
    %v6267 = vmul.f32 %v4343, %v5857
    %v6268 = vmul.f32 %v3822, %v5845
    %v6269 = vmul.f32 %v3824, %v5849
    %v6270 = vmul.f32 %v4345, %v5853
    %v6271 = vmul.f32 %v4347, %v5857
    %v6272 = vmul.f32 %v3828, %v5845
    %v6273 = vmul.f32 %v3830, %v5849
    %v6274 = vmul.f32 %v4351, %v5853
    %v6275 = vmul.f32 %v4353, %v5857
    %v6276 = vmul.f32 %v3832, %v5845
    %v6277 = vmul.f32 %v3834, %v5849
    %v6278 = vmul.f32 %v4355, %v5853
    %v6279 = vmul.f32 %v4357, %v5857
    %v6280 = vmul.f32 %v3838, %v5845
    %v6281 = vmul.f32 %v3840, %v5849
    %v6282 = vmul.f32 %v4361, %v5853
    %v6283 = vmul.f32 %v4363, %v5857
    %v6284 = vmul.f32 %v3842, %v5845
    %v6285 = vmul.f32 %v3844, %v5849
    %v6286 = vmul.f32 %v4365, %v5853
    %v6287 = vmul.f32 %v4367, %v5857
    %v6289 = vlaneseq
    %v6290 = vshrl.u32 %v6289, 7
    %v6291 = vsub.s32 0, %v6290
    %v6292 = vrot.slane %v5895, %v6291
    %v6293 = vlaneseq
    %v6294 = vshrl.u32 %v6293, 7
    %v6295 = vsub.s32 1, %v6294
    %v6296 = vrot.slane %v5895, %v6295
    %v6297 = vlaneseq
    %v6298 = vshrl.u32 %v6297, 7
    %v6299 = vsub.s32 2, %v6298
    %v6300 = vrot.slane %v5895, %v6299
    %v6301 = vlaneseq
    %v6302 = vshrl.u32 %v6301, 7
    %v6303 = vsub.s32 3, %v6302
    %v6304 = vrot.slane %v5895, %v6303
    %v6309 = vadd.f32 %v5896, %v6292
    %v6310 = vadd.f32 %v5897, %v6296
    %v6311 = vadd.f32 %v5898, %v6300
    %v6312 = vadd.f32 %v5899, %v6304
    %v6313 = vadd.f32 %v5900, %v6292
    %v6314 = vadd.f32 %v5901, %v6296
    %v6315 = vadd.f32 %v5902, %v6300
    %v6316 = vadd.f32 %v5903, %v6304
    %v6317 = vadd.f32 %v5904, %v6292
    %v6318 = vadd.f32 %v5905, %v6296
    %v6319 = vadd.f32 %v5906, %v6300
    %v6320 = vadd.f32 %v5907, %v6304
    %v6321 = vadd.f32 %v5908, %v6292
    %v6322 = vadd.f32 %v5909, %v6296
    %v6323 = vadd.f32 %v5910, %v6300
    %v6324 = vadd.f32 %v5911, %v6304
    %v6325 = vadd.f32 %v5912, %v6292
    %v6326 = vadd.f32 %v5913, %v6296
    %v6327 = vadd.f32 %v5914, %v6300
    %v6328 = vadd.f32 %v5915, %v6304
    %v6329 = vadd.f32 %v5916, %v6292
    %v6330 = vadd.f32 %v5917, %v6296
    %v6331 = vadd.f32 %v5918, %v6300
    %v6332 = vadd.f32 %v5919, %v6304
    %v6333 = vadd.f32 %v5920, %v6292
    %v6334 = vadd.f32 %v5921, %v6296
    %v6335 = vadd.f32 %v5922, %v6300
    %v6336 = vadd.f32 %v5923, %v6304
    %v6337 = vadd.f32 %v5924, %v6292
    %v6338 = vadd.f32 %v5925, %v6296
    %v6339 = vadd.f32 %v5926, %v6300
    %v6340 = vadd.f32 %v5927, %v6304
    %v6341 = vadd.f32 %v5928, %v6292
    %v6342 = vadd.f32 %v5929, %v6296
    %v6343 = vadd.f32 %v5930, %v6300
    %v6344 = vadd.f32 %v5931, %v6304
    %v6345 = vadd.f32 %v5932, %v6292
    %v6346 = vadd.f32 %v5933, %v6296
    %v6347 = vadd.f32 %v5934, %v6300
    %v6348 = vadd.f32 %v5935, %v6304
    %v6349 = vadd.f32 %v5936, %v6292
    %v6350 = vadd.f32 %v5937, %v6296
    %v6351 = vadd.f32 %v5938, %v6300
    %v6352 = vadd.f32 %v5939, %v6304
    %v6353 = vadd.f32 %v5940, %v6292
    %v6354 = vadd.f32 %v5941, %v6296
    %v6355 = vadd.f32 %v5942, %v6300
    %v6356 = vadd.f32 %v5943, %v6304
    %v6357 = vadd.f32 %v5944, %v6292
    %v6358 = vadd.f32 %v5945, %v6296
    %v6359 = vadd.f32 %v5946, %v6300
    %v6360 = vadd.f32 %v5947, %v6304
    %v6361 = vadd.f32 %v5948, %v6292
    %v6362 = vadd.f32 %v5949, %v6296
    %v6363 = vadd.f32 %v5950, %v6300
    %v6364 = vadd.f32 %v5951, %v6304
    %v6365 = vadd.f32 %v5952, %v6292
    %v6366 = vadd.f32 %v5953, %v6296
    %v6367 = vadd.f32 %v5954, %v6300
    %v6368 = vadd.f32 %v5955, %v6304
    %v6369 = vadd.f32 %v5956, %v6292
    %v6370 = vadd.f32 %v5957, %v6296
    %v6371 = vadd.f32 %v5958, %v6300
    %v6372 = vadd.f32 %v5959, %v6304
    %v6373 = vadd.f32 %v5960, %v6292
    %v6374 = vadd.f32 %v5961, %v6296
    %v6375 = vadd.f32 %v5962, %v6300
    %v6376 = vadd.f32 %v5963, %v6304
    %v6377 = vadd.f32 %v5964, %v6292
    %v6378 = vadd.f32 %v5965, %v6296
    %v6379 = vadd.f32 %v5966, %v6300
    %v6380 = vadd.f32 %v5967, %v6304
    %v6381 = vadd.f32 %v5968, %v6292
    %v6382 = vadd.f32 %v5969, %v6296
    %v6383 = vadd.f32 %v5970, %v6300
    %v6384 = vadd.f32 %v5971, %v6304
    %v6385 = vadd.f32 %v5972, %v6292
    %v6386 = vadd.f32 %v5973, %v6296
    %v6387 = vadd.f32 %v5974, %v6300
    %v6388 = vadd.f32 %v5975, %v6304
    %v6389 = vadd.f32 %v5976, %v6292
    %v6390 = vadd.f32 %v5977, %v6296
    %v6391 = vadd.f32 %v5978, %v6300
    %v6392 = vadd.f32 %v5979, %v6304
    %v6393 = vadd.f32 %v5980, %v6292
    %v6394 = vadd.f32 %v5981, %v6296
    %v6395 = vadd.f32 %v5982, %v6300
    %v6396 = vadd.f32 %v5983, %v6304
    %v6397 = vadd.f32 %v5984, %v6292
    %v6398 = vadd.f32 %v5985, %v6296
    %v6399 = vadd.f32 %v5986, %v6300
    %v6400 = vadd.f32 %v5987, %v6304
    %v6401 = vadd.f32 %v5988, %v6292
    %v6402 = vadd.f32 %v5989, %v6296
    %v6403 = vadd.f32 %v5990, %v6300
    %v6404 = vadd.f32 %v5991, %v6304
    %v6405 = vadd.f32 %v5992, %v6292
    %v6406 = vadd.f32 %v5993, %v6296
    %v6407 = vadd.f32 %v5994, %v6300
    %v6408 = vadd.f32 %v5995, %v6304
    %v6409 = vadd.f32 %v5996, %v6292
    %v6410 = vadd.f32 %v5997, %v6296
    %v6411 = vadd.f32 %v5998, %v6300
    %v6412 = vadd.f32 %v5999, %v6304
    %v6413 = vadd.f32 %v6000, %v6292
    %v6414 = vadd.f32 %v6001, %v6296
    %v6415 = vadd.f32 %v6002, %v6300
    %v6416 = vadd.f32 %v6003, %v6304
    %v6417 = vadd.f32 %v6004, %v6292
    %v6418 = vadd.f32 %v6005, %v6296
    %v6419 = vadd.f32 %v6006, %v6300
    %v6420 = vadd.f32 %v6007, %v6304
    %v6421 = vadd.f32 %v6008, %v6292
    %v6422 = vadd.f32 %v6009, %v6296
    %v6423 = vadd.f32 %v6010, %v6300
    %v6424 = vadd.f32 %v6011, %v6304
    %v6425 = vadd.f32 %v6012, %v6292
    %v6426 = vadd.f32 %v6013, %v6296
    %v6427 = vadd.f32 %v6014, %v6300
    %v6428 = vadd.f32 %v6015, %v6304
    %v6429 = vadd.f32 %v6016, %v6292
    %v6430 = vadd.f32 %v6017, %v6296
    %v6431 = vadd.f32 %v6018, %v6300
    %v6432 = vadd.f32 %v6019, %v6304
    %v6433 = vadd.f32 %v6020, %v6292
    %v6434 = vadd.f32 %v6021, %v6296
    %v6435 = vadd.f32 %v6022, %v6300
    %v6436 = vadd.f32 %v6023, %v6304
    %v6437 = vadd.f32 %v6024, %v6292
    %v6438 = vadd.f32 %v6025, %v6296
    %v6439 = vadd.f32 %v6026, %v6300
    %v6440 = vadd.f32 %v6027, %v6304
    %v6441 = vadd.f32 %v6028, %v6292
    %v6442 = vadd.f32 %v6029, %v6296
    %v6443 = vadd.f32 %v6030, %v6300
    %v6444 = vadd.f32 %v6031, %v6304
    %v6445 = vadd.f32 %v6032, %v6292
    %v6446 = vadd.f32 %v6033, %v6296
    %v6447 = vadd.f32 %v6034, %v6300
    %v6448 = vadd.f32 %v6035, %v6304
    %v6449 = vadd.f32 %v6036, %v6292
    %v6450 = vadd.f32 %v6037, %v6296
    %v6451 = vadd.f32 %v6038, %v6300
    %v6452 = vadd.f32 %v6039, %v6304
    %v6453 = vadd.f32 %v6040, %v6292
    %v6454 = vadd.f32 %v6041, %v6296
    %v6455 = vadd.f32 %v6042, %v6300
    %v6456 = vadd.f32 %v6043, %v6304
    %v6457 = vadd.f32 %v6044, %v6292
    %v6458 = vadd.f32 %v6045, %v6296
    %v6459 = vadd.f32 %v6046, %v6300
    %v6460 = vadd.f32 %v6047, %v6304
    %v6461 = vadd.f32 %v6048, %v6292
    %v6462 = vadd.f32 %v6049, %v6296
    %v6463 = vadd.f32 %v6050, %v6300
    %v6464 = vadd.f32 %v6051, %v6304
    %v6465 = vadd.f32 %v6052, %v6292
    %v6466 = vadd.f32 %v6053, %v6296
    %v6467 = vadd.f32 %v6054, %v6300
    %v6468 = vadd.f32 %v6055, %v6304
    %v6469 = vadd.f32 %v6056, %v6292
    %v6470 = vadd.f32 %v6057, %v6296
    %v6471 = vadd.f32 %v6058, %v6300
    %v6472 = vadd.f32 %v6059, %v6304
    %v6473 = vadd.f32 %v6060, %v6292
    %v6474 = vadd.f32 %v6061, %v6296
    %v6475 = vadd.f32 %v6062, %v6300
    %v6476 = vadd.f32 %v6063, %v6304
    %v6477 = vadd.f32 %v6064, %v6292
    %v6478 = vadd.f32 %v6065, %v6296
    %v6479 = vadd.f32 %v6066, %v6300
    %v6480 = vadd.f32 %v6067, %v6304
    %v6481 = vadd.f32 %v6068, %v6292
    %v6482 = vadd.f32 %v6069, %v6296
    %v6483 = vadd.f32 %v6070, %v6300
    %v6484 = vadd.f32 %v6071, %v6304
    %v6485 = vadd.f32 %v6072, %v6292
    %v6486 = vadd.f32 %v6073, %v6296
    %v6487 = vadd.f32 %v6074, %v6300
    %v6488 = vadd.f32 %v6075, %v6304
    %v6489 = vadd.f32 %v6076, %v6292
    %v6490 = vadd.f32 %v6077, %v6296
    %v6491 = vadd.f32 %v6078, %v6300
    %v6492 = vadd.f32 %v6079, %v6304
    %v6493 = vadd.f32 %v6080, %v6292
    %v6494 = vadd.f32 %v6081, %v6296
    %v6495 = vadd.f32 %v6082, %v6300
    %v6496 = vadd.f32 %v6083, %v6304
    %v6497 = vadd.f32 %v6084, %v6292
    %v6498 = vadd.f32 %v6085, %v6296
    %v6499 = vadd.f32 %v6086, %v6300
    %v6500 = vadd.f32 %v6087, %v6304
    %v6501 = vadd.f32 %v6088, %v6292
    %v6502 = vadd.f32 %v6089, %v6296
    %v6503 = vadd.f32 %v6090, %v6300
    %v6504 = vadd.f32 %v6091, %v6304
    %v6505 = vadd.f32 %v6092, %v6292
    %v6506 = vadd.f32 %v6093, %v6296
    %v6507 = vadd.f32 %v6094, %v6300
    %v6508 = vadd.f32 %v6095, %v6304
    %v6509 = vadd.f32 %v6096, %v6292
    %v6510 = vadd.f32 %v6097, %v6296
    %v6511 = vadd.f32 %v6098, %v6300
    %v6512 = vadd.f32 %v6099, %v6304
    %v6513 = vadd.f32 %v6100, %v6292
    %v6514 = vadd.f32 %v6101, %v6296
    %v6515 = vadd.f32 %v6102, %v6300
    %v6516 = vadd.f32 %v6103, %v6304
    %v6517 = vadd.f32 %v6104, %v6292
    %v6518 = vadd.f32 %v6105, %v6296
    %v6519 = vadd.f32 %v6106, %v6300
    %v6520 = vadd.f32 %v6107, %v6304
    %v6521 = vadd.f32 %v6108, %v6292
    %v6522 = vadd.f32 %v6109, %v6296
    %v6523 = vadd.f32 %v6110, %v6300
    %v6524 = vadd.f32 %v6111, %v6304
    %v6525 = vadd.f32 %v6112, %v6292
    %v6526 = vadd.f32 %v6113, %v6296
    %v6527 = vadd.f32 %v6114, %v6300
    %v6528 = vadd.f32 %v6115, %v6304
    %v6529 = vadd.f32 %v6116, %v6292
    %v6530 = vadd.f32 %v6117, %v6296
    %v6531 = vadd.f32 %v6118, %v6300
    %v6532 = vadd.f32 %v6119, %v6304
    %v6533 = vadd.f32 %v6120, %v6292
    %v6534 = vadd.f32 %v6121, %v6296
    %v6535 = vadd.f32 %v6122, %v6300
    %v6536 = vadd.f32 %v6123, %v6304
    %v6537 = vadd.f32 %v6124, %v6292
    %v6538 = vadd.f32 %v6125, %v6296
    %v6539 = vadd.f32 %v6126, %v6300
    %v6540 = vadd.f32 %v6127, %v6304
    %v6541 = vadd.f32 %v6128, %v6292
    %v6542 = vadd.f32 %v6129, %v6296
    %v6543 = vadd.f32 %v6130, %v6300
    %v6544 = vadd.f32 %v6131, %v6304
    %v6545 = vadd.f32 %v6132, %v6292
    %v6546 = vadd.f32 %v6133, %v6296
    %v6547 = vadd.f32 %v6134, %v6300
    %v6548 = vadd.f32 %v6135, %v6304
    %v6549 = vadd.f32 %v6136, %v6292
    %v6550 = vadd.f32 %v6137, %v6296
    %v6551 = vadd.f32 %v6138, %v6300
    %v6552 = vadd.f32 %v6139, %v6304
    %v6553 = vadd.f32 %v6140, %v6292
    %v6554 = vadd.f32 %v6141, %v6296
    %v6555 = vadd.f32 %v6142, %v6300
    %v6556 = vadd.f32 %v6143, %v6304
    %v6557 = vadd.f32 %v6144, %v6292
    %v6558 = vadd.f32 %v6145, %v6296
    %v6559 = vadd.f32 %v6146, %v6300
    %v6560 = vadd.f32 %v6147, %v6304
    %v6561 = vadd.f32 %v6148, %v6292
    %v6562 = vadd.f32 %v6149, %v6296
    %v6563 = vadd.f32 %v6150, %v6300
    %v6564 = vadd.f32 %v6151, %v6304
    %v6565 = vadd.f32 %v6152, %v6292
    %v6566 = vadd.f32 %v6153, %v6296
    %v6567 = vadd.f32 %v6154, %v6300
    %v6568 = vadd.f32 %v6155, %v6304
    %v6569 = vadd.f32 %v6156, %v6292
    %v6570 = vadd.f32 %v6157, %v6296
    %v6571 = vadd.f32 %v6158, %v6300
    %v6572 = vadd.f32 %v6159, %v6304
    %v6573 = vadd.f32 %v6160, %v6292
    %v6574 = vadd.f32 %v6161, %v6296
    %v6575 = vadd.f32 %v6162, %v6300
    %v6576 = vadd.f32 %v6163, %v6304
    %v6577 = vadd.f32 %v6164, %v6292
    %v6578 = vadd.f32 %v6165, %v6296
    %v6579 = vadd.f32 %v6166, %v6300
    %v6580 = vadd.f32 %v6167, %v6304
    %v6581 = vadd.f32 %v6168, %v6292
    %v6582 = vadd.f32 %v6169, %v6296
    %v6583 = vadd.f32 %v6170, %v6300
    %v6584 = vadd.f32 %v6171, %v6304
    %v6585 = vadd.f32 %v6172, %v6292
    %v6586 = vadd.f32 %v6173, %v6296
    %v6587 = vadd.f32 %v6174, %v6300
    %v6588 = vadd.f32 %v6175, %v6304
    %v6589 = vadd.f32 %v6176, %v6292
    %v6590 = vadd.f32 %v6177, %v6296
    %v6591 = vadd.f32 %v6178, %v6300
    %v6592 = vadd.f32 %v6179, %v6304
    %v6593 = vadd.f32 %v6180, %v6292
    %v6594 = vadd.f32 %v6181, %v6296
    %v6595 = vadd.f32 %v6182, %v6300
    %v6596 = vadd.f32 %v6183, %v6304
    %v6597 = vadd.f32 %v6184, %v6292
    %v6598 = vadd.f32 %v6185, %v6296
    %v6599 = vadd.f32 %v6186, %v6300
    %v6600 = vadd.f32 %v6187, %v6304
    %v6601 = vadd.f32 %v6188, %v6292
    %v6602 = vadd.f32 %v6189, %v6296
    %v6603 = vadd.f32 %v6190, %v6300
    %v6604 = vadd.f32 %v6191, %v6304
    %v6605 = vadd.f32 %v6192, %v6292
    %v6606 = vadd.f32 %v6193, %v6296
    %v6607 = vadd.f32 %v6194, %v6300
    %v6608 = vadd.f32 %v6195, %v6304
    %v6609 = vadd.f32 %v6196, %v6292
    %v6610 = vadd.f32 %v6197, %v6296
    %v6611 = vadd.f32 %v6198, %v6300
    %v6612 = vadd.f32 %v6199, %v6304
    %v6613 = vadd.f32 %v6200, %v6292
    %v6614 = vadd.f32 %v6201, %v6296
    %v6615 = vadd.f32 %v6202, %v6300
    %v6616 = vadd.f32 %v6203, %v6304
    %v6617 = vadd.f32 %v6204, %v6292
    %v6618 = vadd.f32 %v6205, %v6296
    %v6619 = vadd.f32 %v6206, %v6300
    %v6620 = vadd.f32 %v6207, %v6304
    %v6621 = vadd.f32 %v6208, %v6292
    %v6622 = vadd.f32 %v6209, %v6296
    %v6623 = vadd.f32 %v6210, %v6300
    %v6624 = vadd.f32 %v6211, %v6304
    %v6625 = vadd.f32 %v6212, %v6292
    %v6626 = vadd.f32 %v6213, %v6296
    %v6627 = vadd.f32 %v6214, %v6300
    %v6628 = vadd.f32 %v6215, %v6304
    %v6629 = vadd.f32 %v6216, %v6292
    %v6630 = vadd.f32 %v6217, %v6296
    %v6631 = vadd.f32 %v6218, %v6300
    %v6632 = vadd.f32 %v6219, %v6304
    %v6633 = vadd.f32 %v6220, %v6292
    %v6634 = vadd.f32 %v6221, %v6296
    %v6635 = vadd.f32 %v6222, %v6300
    %v6636 = vadd.f32 %v6223, %v6304
    %v6637 = vadd.f32 %v6224, %v6292
    %v6638 = vadd.f32 %v6225, %v6296
    %v6639 = vadd.f32 %v6226, %v6300
    %v6640 = vadd.f32 %v6227, %v6304
    %v6641 = vadd.f32 %v6228, %v6292
    %v6642 = vadd.f32 %v6229, %v6296
    %v6643 = vadd.f32 %v6230, %v6300
    %v6644 = vadd.f32 %v6231, %v6304
    %v6645 = vadd.f32 %v6232, %v6292
    %v6646 = vadd.f32 %v6233, %v6296
    %v6647 = vadd.f32 %v6234, %v6300
    %v6648 = vadd.f32 %v6235, %v6304
    %v6649 = vadd.f32 %v6236, %v6292
    %v6650 = vadd.f32 %v6237, %v6296
    %v6651 = vadd.f32 %v6238, %v6300
    %v6652 = vadd.f32 %v6239, %v6304
    %v6653 = vadd.f32 %v6240, %v6292
    %v6654 = vadd.f32 %v6241, %v6296
    %v6655 = vadd.f32 %v6242, %v6300
    %v6656 = vadd.f32 %v6243, %v6304
    %v6657 = vadd.f32 %v6244, %v6292
    %v6658 = vadd.f32 %v6245, %v6296
    %v6659 = vadd.f32 %v6246, %v6300
    %v6660 = vadd.f32 %v6247, %v6304
    %v6661 = vadd.f32 %v6248, %v6292
    %v6662 = vadd.f32 %v6249, %v6296
    %v6663 = vadd.f32 %v6250, %v6300
    %v6664 = vadd.f32 %v6251, %v6304
    %v6665 = vadd.f32 %v6252, %v6292
    %v6666 = vadd.f32 %v6253, %v6296
    %v6667 = vadd.f32 %v6254, %v6300
    %v6668 = vadd.f32 %v6255, %v6304
    %v6669 = vadd.f32 %v6256, %v6292
    %v6670 = vadd.f32 %v6257, %v6296
    %v6671 = vadd.f32 %v6258, %v6300
    %v6672 = vadd.f32 %v6259, %v6304
    %v6673 = vadd.f32 %v6260, %v6292
    %v6674 = vadd.f32 %v6261, %v6296
    %v6675 = vadd.f32 %v6262, %v6300
    %v6676 = vadd.f32 %v6263, %v6304
    %v6677 = vadd.f32 %v6264, %v6292
    %v6678 = vadd.f32 %v6265, %v6296
    %v6679 = vadd.f32 %v6266, %v6300
    %v6680 = vadd.f32 %v6267, %v6304
    %v6681 = vadd.f32 %v6268, %v6292
    %v6682 = vadd.f32 %v6269, %v6296
    %v6683 = vadd.f32 %v6270, %v6300
    %v6684 = vadd.f32 %v6271, %v6304
    %v6685 = vadd.f32 %v6272, %v6292
    %v6686 = vadd.f32 %v6273, %v6296
    %v6687 = vadd.f32 %v6274, %v6300
    %v6688 = vadd.f32 %v6275, %v6304
    %v6689 = vadd.f32 %v6276, %v6292
    %v6690 = vadd.f32 %v6277, %v6296
    %v6691 = vadd.f32 %v6278, %v6300
    %v6692 = vadd.f32 %v6279, %v6304
    %v6693 = vadd.f32 %v6280, %v6292
    %v6694 = vadd.f32 %v6281, %v6296
    %v6695 = vadd.f32 %v6282, %v6300
    %v6696 = vadd.f32 %v6283, %v6304
    %v6697 = vadd.f32 %v6284, %v6292
    %v6698 = vadd.f32 %v6285, %v6296
    %v6699 = vadd.f32 %v6286, %v6300
    %v6700 = vadd.f32 %v6287, %v6304
    %6701 = vst [vmem:[#allocation13] sm:$0xff] %v6309
    %6702 = vst [vmem:[#allocation13 + $0x8] sm:$0xff] %v6310
    %6703 = vst [vmem:[#allocation13 + $0x10] sm:$0xff] %v6311
    %6704 = vst.msk [vmem:[#allocation13 + $0x18] sm:$0xff] %vm1471, %v6312
    %6705 = vst [vmem:[#allocation13 + $0x20] sm:$0xff] %v6313
    %6706 = vst [vmem:[#allocation13 + $0x28] sm:$0xff] %v6314
    %6707 = vst [vmem:[#allocation13 + $0x30] sm:$0xff] %v6315
    %6708 = vst.msk [vmem:[#allocation13 + $0x38] sm:$0xff] %vm1471, %v6316
    %6709 = vst [vmem:[#allocation13 + $0x40] sm:$0xff] %v6317
    %6710 = vst [vmem:[#allocation13 + $0x48] sm:$0xff] %v6318
    %6711 = vst [vmem:[#allocation13 + $0x50] sm:$0xff] %v6319
    %6712 = vst.msk [vmem:[#allocation13 + $0x58] sm:$0xff] %vm1471, %v6320
    %6713 = vst [vmem:[#allocation13 + $0x60] sm:$0xff] %v6321
    %6714 = vst [vmem:[#allocation13 + $0x68] sm:$0xff] %v6322
    %6715 = vst [vmem:[#allocation13 + $0x70] sm:$0xff] %v6323
    %6716 = vst.msk [vmem:[#allocation13 + $0x78] sm:$0xff] %vm1471, %v6324
    %6717 = vst [vmem:[#allocation13 + $0x80] sm:$0xff] %v6325
    %6718 = vst [vmem:[#allocation13 + $0x88] sm:$0xff] %v6326
    %6719 = vst [vmem:[#allocation13 + $0x90] sm:$0xff] %v6327
    %6720 = vst.msk [vmem:[#allocation13 + $0x98] sm:$0xff] %vm1471, %v6328
    %6721 = vst [vmem:[#allocation13 + $0xa0] sm:$0xff] %v6329
    %6722 = vst [vmem:[#allocation13 + $0xa8] sm:$0xff] %v6330
    %6723 = vst [vmem:[#allocation13 + $0xb0] sm:$0xff] %v6331
    %6724 = vst.msk [vmem:[#allocation13 + $0xb8] sm:$0xff] %vm1471, %v6332
    %6725 = vst [vmem:[#allocation13 + $0xc0] sm:$0xff] %v6333
    %6726 = vst [vmem:[#allocation13 + $0xc8] sm:$0xff] %v6334
    %6727 = vst [vmem:[#allocation13 + $0xd0] sm:$0xff] %v6335
    %6728 = vst.msk [vmem:[#allocation13 + $0xd8] sm:$0xff] %vm1471, %v6336
    %6729 = vst [vmem:[#allocation13 + $0xe0] sm:$0xff] %v6337
    %6730 = vst [vmem:[#allocation13 + $0xe8] sm:$0xff] %v6338
    %6731 = vst [vmem:[#allocation13 + $0xf0] sm:$0xff] %v6339
    %6732 = vst.msk [vmem:[#allocation13 + $0xf8] sm:$0xff] %vm1471, %v6340
    %6733 = vst [vmem:[#allocation13 + $0x100] sm:$0xff] %v6341
    %6734 = vst [vmem:[#allocation13 + $0x108] sm:$0xff] %v6342
    %6735 = vst [vmem:[#allocation13 + $0x110] sm:$0xff] %v6343
    %6736 = vst.msk [vmem:[#allocation13 + $0x118] sm:$0xff] %vm1471, %v6344
    %6737 = vst [vmem:[#allocation13 + $0x120] sm:$0xff] %v6345
    %6738 = vst [vmem:[#allocation13 + $0x128] sm:$0xff] %v6346
    %6739 = vst [vmem:[#allocation13 + $0x130] sm:$0xff] %v6347
    %6740 = vst.msk [vmem:[#allocation13 + $0x138] sm:$0xff] %vm1471, %v6348
    %6741 = vst [vmem:[#allocation13 + $0x140] sm:$0xff] %v6349
    %6742 = vst [vmem:[#allocation13 + $0x148] sm:$0xff] %v6350
    %6743 = vst [vmem:[#allocation13 + $0x150] sm:$0xff] %v6351
    %6744 = vst.msk [vmem:[#allocation13 + $0x158] sm:$0xff] %vm1471, %v6352
    %6745 = vst [vmem:[#allocation13 + $0x160] sm:$0xff] %v6353
    %6746 = vst [vmem:[#allocation13 + $0x168] sm:$0xff] %v6354
    %6747 = vst [vmem:[#allocation13 + $0x170] sm:$0xff] %v6355
    %6748 = vst.msk [vmem:[#allocation13 + $0x178] sm:$0xff] %vm1471, %v6356
    %6749 = vst [vmem:[#allocation13 + $0x180] sm:$0xff] %v6357
    %6750 = vst [vmem:[#allocation13 + $0x188] sm:$0xff] %v6358
    %6751 = vst [vmem:[#allocation13 + $0x190] sm:$0xff] %v6359
    %6752 = vst.msk [vmem:[#allocation13 + $0x198] sm:$0xff] %vm1471, %v6360
    %6753 = vst [vmem:[#allocation13 + $0x1a0] sm:$0xff] %v6361
    %6754 = vst [vmem:[#allocation13 + $0x1a8] sm:$0xff] %v6362
    %6755 = vst [vmem:[#allocation13 + $0x1b0] sm:$0xff] %v6363
    %6756 = vst.msk [vmem:[#allocation13 + $0x1b8] sm:$0xff] %vm1471, %v6364
    %6757 = vst [vmem:[#allocation13 + $0x1c0] sm:$0xff] %v6365
    %6758 = vst [vmem:[#allocation13 + $0x1c8] sm:$0xff] %v6366
    %6759 = vst [vmem:[#allocation13 + $0x1d0] sm:$0xff] %v6367
    %6760 = vst.msk [vmem:[#allocation13 + $0x1d8] sm:$0xff] %vm1471, %v6368
    %6761 = vst [vmem:[#allocation13 + $0x1e0] sm:$0xff] %v6369
    %6762 = vst [vmem:[#allocation13 + $0x1e8] sm:$0xff] %v6370
    %6763 = vst [vmem:[#allocation13 + $0x1f0] sm:$0xff] %v6371
    %6764 = vst.msk [vmem:[#allocation13 + $0x1f8] sm:$0xff] %vm1471, %v6372
    %6765 = vst [vmem:[#allocation13 + $0x200] sm:$0xff] %v6373
    %6766 = vst [vmem:[#allocation13 + $0x208] sm:$0xff] %v6374
    %6767 = vst [vmem:[#allocation13 + $0x210] sm:$0xff] %v6375
    %6768 = vst.msk [vmem:[#allocation13 + $0x218] sm:$0xff] %vm1471, %v6376
    %6769 = vst [vmem:[#allocation13 + $0x220] sm:$0xff] %v6377
    %6770 = vst [vmem:[#allocation13 + $0x228] sm:$0xff] %v6378
    %6771 = vst [vmem:[#allocation13 + $0x230] sm:$0xff] %v6379
    %6772 = vst.msk [vmem:[#allocation13 + $0x238] sm:$0xff] %vm1471, %v6380
    %6773 = vst [vmem:[#allocation13 + $0x240] sm:$0xff] %v6381
    %6774 = vst [vmem:[#allocation13 + $0x248] sm:$0xff] %v6382
    %6775 = vst [vmem:[#allocation13 + $0x250] sm:$0xff] %v6383
    %6776 = vst.msk [vmem:[#allocation13 + $0x258] sm:$0xff] %vm1471, %v6384
    %6777 = vst [vmem:[#allocation13 + $0x260] sm:$0xff] %v6385
    %6778 = vst [vmem:[#allocation13 + $0x268] sm:$0xff] %v6386
    %6779 = vst [vmem:[#allocation13 + $0x270] sm:$0xff] %v6387
    %6780 = vst.msk [vmem:[#allocation13 + $0x278] sm:$0xff] %vm1471, %v6388
    %6781 = vst [vmem:[#allocation13 + $0x280] sm:$0xff] %v6389
    %6782 = vst [vmem:[#allocation13 + $0x288] sm:$0xff] %v6390
    %6783 = vst [vmem:[#allocation13 + $0x290] sm:$0xff] %v6391
    %6784 = vst.msk [vmem:[#allocation13 + $0x298] sm:$0xff] %vm1471, %v6392
    %6785 = vst [vmem:[#allocation13 + $0x2a0] sm:$0xff] %v6393
    %6786 = vst [vmem:[#allocation13 + $0x2a8] sm:$0xff] %v6394
    %6787 = vst [vmem:[#allocation13 + $0x2b0] sm:$0xff] %v6395
    %6788 = vst.msk [vmem:[#allocation13 + $0x2b8] sm:$0xff] %vm1471, %v6396
    %6789 = vst [vmem:[#allocation13 + $0x2c0] sm:$0xff] %v6397
    %6790 = vst [vmem:[#allocation13 + $0x2c8] sm:$0xff] %v6398
    %6791 = vst [vmem:[#allocation13 + $0x2d0] sm:$0xff] %v6399
    %6792 = vst.msk [vmem:[#allocation13 + $0x2d8] sm:$0xff] %vm1471, %v6400
    %6793 = vst [vmem:[#allocation13 + $0x2e0] sm:$0xff] %v6401
    %6794 = vst [vmem:[#allocation13 + $0x2e8] sm:$0xff] %v6402
    %6795 = vst [vmem:[#allocation13 + $0x2f0] sm:$0xff] %v6403
    %6796 = vst.msk [vmem:[#allocation13 + $0x2f8] sm:$0xff] %vm1471, %v6404
    %6797 = vst [vmem:[#allocation13 + $0x300] sm:$0xff] %v6405
    %6798 = vst [vmem:[#allocation13 + $0x308] sm:$0xff] %v6406
    %6799 = vst [vmem:[#allocation13 + $0x310] sm:$0xff] %v6407
    %6800 = vst.msk [vmem:[#allocation13 + $0x318] sm:$0xff] %vm1471, %v6408
    %6801 = vst [vmem:[#allocation13 + $0x320] sm:$0xff] %v6409
    %6802 = vst [vmem:[#allocation13 + $0x328] sm:$0xff] %v6410
    %6803 = vst [vmem:[#allocation13 + $0x330] sm:$0xff] %v6411
    %6804 = vst.msk [vmem:[#allocation13 + $0x338] sm:$0xff] %vm1471, %v6412
    %6805 = vst [vmem:[#allocation13 + $0x340] sm:$0xff] %v6413
    %6806 = vst [vmem:[#allocation13 + $0x348] sm:$0xff] %v6414
    %6807 = vst [vmem:[#allocation13 + $0x350] sm:$0xff] %v6415
    %6808 = vst.msk [vmem:[#allocation13 + $0x358] sm:$0xff] %vm1471, %v6416
    %6809 = vst [vmem:[#allocation13 + $0x360] sm:$0xff] %v6417
    %6810 = vst [vmem:[#allocation13 + $0x368] sm:$0xff] %v6418
    %6811 = vst [vmem:[#allocation13 + $0x370] sm:$0xff] %v6419
    %6812 = vst.msk [vmem:[#allocation13 + $0x378] sm:$0xff] %vm1471, %v6420
    %6813 = vst [vmem:[#allocation13 + $0x380] sm:$0xff] %v6421
    %6814 = vst [vmem:[#allocation13 + $0x388] sm:$0xff] %v6422
    %6815 = vst [vmem:[#allocation13 + $0x390] sm:$0xff] %v6423
    %6816 = vst.msk [vmem:[#allocation13 + $0x398] sm:$0xff] %vm1471, %v6424
    %6817 = vst [vmem:[#allocation13 + $0x3a0] sm:$0xff] %v6425
    %6818 = vst [vmem:[#allocation13 + $0x3a8] sm:$0xff] %v6426
    %6819 = vst [vmem:[#allocation13 + $0x3b0] sm:$0xff] %v6427
    %6820 = vst.msk [vmem:[#allocation13 + $0x3b8] sm:$0xff] %vm1471, %v6428
    %6821 = vst [vmem:[#allocation13 + $0x3c0] sm:$0xff] %v6429
    %6822 = vst [vmem:[#allocation13 + $0x3c8] sm:$0xff] %v6430
    %6823 = vst [vmem:[#allocation13 + $0x3d0] sm:$0xff] %v6431
    %6824 = vst.msk [vmem:[#allocation13 + $0x3d8] sm:$0xff] %vm1471, %v6432
    %6825 = vst [vmem:[#allocation13 + $0x3e0] sm:$0xff] %v6433
    %6826 = vst [vmem:[#allocation13 + $0x3e8] sm:$0xff] %v6434
    %6827 = vst [vmem:[#allocation13 + $0x3f0] sm:$0xff] %v6435
    %6828 = vst.msk [vmem:[#allocation13 + $0x3f8] sm:$0xff] %vm1471, %v6436
    %6829 = vst [vmem:[#allocation13 + $0x400] sm:$0xff] %v6437
    %6830 = vst [vmem:[#allocation13 + $0x408] sm:$0xff] %v6438
    %6831 = vst [vmem:[#allocation13 + $0x410] sm:$0xff] %v6439
    %6832 = vst.msk [vmem:[#allocation13 + $0x418] sm:$0xff] %vm1471, %v6440
    %6833 = vst [vmem:[#allocation13 + $0x420] sm:$0xff] %v6441
    %6834 = vst [vmem:[#allocation13 + $0x428] sm:$0xff] %v6442
    %6835 = vst [vmem:[#allocation13 + $0x430] sm:$0xff] %v6443
    %6836 = vst.msk [vmem:[#allocation13 + $0x438] sm:$0xff] %vm1471, %v6444
    %6837 = vst [vmem:[#allocation13 + $0x440] sm:$0xff] %v6445
    %6838 = vst [vmem:[#allocation13 + $0x448] sm:$0xff] %v6446
    %6839 = vst [vmem:[#allocation13 + $0x450] sm:$0xff] %v6447
    %6840 = vst.msk [vmem:[#allocation13 + $0x458] sm:$0xff] %vm1471, %v6448
    %6841 = vst [vmem:[#allocation13 + $0x460] sm:$0xff] %v6449
    %6842 = vst [vmem:[#allocation13 + $0x468] sm:$0xff] %v6450
    %6843 = vst [vmem:[#allocation13 + $0x470] sm:$0xff] %v6451
    %6844 = vst.msk [vmem:[#allocation13 + $0x478] sm:$0xff] %vm1471, %v6452
    %6845 = vst [vmem:[#allocation13 + $0x480] sm:$0xff] %v6453
    %6846 = vst [vmem:[#allocation13 + $0x488] sm:$0xff] %v6454
    %6847 = vst [vmem:[#allocation13 + $0x490] sm:$0xff] %v6455
    %6848 = vst.msk [vmem:[#allocation13 + $0x498] sm:$0xff] %vm1471, %v6456
    %6849 = vst [vmem:[#allocation13 + $0x4a0] sm:$0xff] %v6457
    %6850 = vst [vmem:[#allocation13 + $0x4a8] sm:$0xff] %v6458
    %6851 = vst [vmem:[#allocation13 + $0x4b0] sm:$0xff] %v6459
    %6852 = vst.msk [vmem:[#allocation13 + $0x4b8] sm:$0xff] %vm1471, %v6460
    %6853 = vst [vmem:[#allocation13 + $0x4c0] sm:$0xff] %v6461
    %6854 = vst [vmem:[#allocation13 + $0x4c8] sm:$0xff] %v6462
    %6855 = vst [vmem:[#allocation13 + $0x4d0] sm:$0xff] %v6463
    %6856 = vst.msk [vmem:[#allocation13 + $0x4d8] sm:$0xff] %vm1471, %v6464
    %6857 = vst [vmem:[#allocation13 + $0x4e0] sm:$0xff] %v6465
    %6858 = vst [vmem:[#allocation13 + $0x4e8] sm:$0xff] %v6466
    %6859 = vst [vmem:[#allocation13 + $0x4f0] sm:$0xff] %v6467
    %6860 = vst.msk [vmem:[#allocation13 + $0x4f8] sm:$0xff] %vm1471, %v6468
    %6861 = vst [vmem:[#allocation13 + $0x500] sm:$0xff] %v6469
    %6862 = vst [vmem:[#allocation13 + $0x508] sm:$0xff] %v6470
    %6863 = vst [vmem:[#allocation13 + $0x510] sm:$0xff] %v6471
    %6864 = vst.msk [vmem:[#allocation13 + $0x518] sm:$0xff] %vm1471, %v6472
    %6865 = vst [vmem:[#allocation13 + $0x520] sm:$0xff] %v6473
    %6866 = vst [vmem:[#allocation13 + $0x528] sm:$0xff] %v6474
    %6867 = vst [vmem:[#allocation13 + $0x530] sm:$0xff] %v6475
    %6868 = vst.msk [vmem:[#allocation13 + $0x538] sm:$0xff] %vm1471, %v6476
    %6869 = vst [vmem:[#allocation13 + $0x540] sm:$0xff] %v6477
    %6870 = vst [vmem:[#allocation13 + $0x548] sm:$0xff] %v6478
    %6871 = vst [vmem:[#allocation13 + $0x550] sm:$0xff] %v6479
    %6872 = vst.msk [vmem:[#allocation13 + $0x558] sm:$0xff] %vm1471, %v6480
    %6873 = vst [vmem:[#allocation13 + $0x560] sm:$0xff] %v6481
    %6874 = vst [vmem:[#allocation13 + $0x568] sm:$0xff] %v6482
    %6875 = vst [vmem:[#allocation13 + $0x570] sm:$0xff] %v6483
    %6876 = vst.msk [vmem:[#allocation13 + $0x578] sm:$0xff] %vm1471, %v6484
    %6877 = vst [vmem:[#allocation13 + $0x580] sm:$0xff] %v6485
    %6878 = vst [vmem:[#allocation13 + $0x588] sm:$0xff] %v6486
    %6879 = vst [vmem:[#allocation13 + $0x590] sm:$0xff] %v6487
    %6880 = vst.msk [vmem:[#allocation13 + $0x598] sm:$0xff] %vm1471, %v6488
    %6881 = vst [vmem:[#allocation13 + $0x5a0] sm:$0xff] %v6489
    %6882 = vst [vmem:[#allocation13 + $0x5a8] sm:$0xff] %v6490
    %6883 = vst [vmem:[#allocation13 + $0x5b0] sm:$0xff] %v6491
    %6884 = vst.msk [vmem:[#allocation13 + $0x5b8] sm:$0xff] %vm1471, %v6492
    %6885 = vst [vmem:[#allocation13 + $0x5c0] sm:$0xff] %v6493
    %6886 = vst [vmem:[#allocation13 + $0x5c8] sm:$0xff] %v6494
    %6887 = vst [vmem:[#allocation13 + $0x5d0] sm:$0xff] %v6495
    %6888 = vst.msk [vmem:[#allocation13 + $0x5d8] sm:$0xff] %vm1471, %v6496
    %6889 = vst [vmem:[#allocation13 + $0x5e0] sm:$0xff] %v6497
    %6890 = vst [vmem:[#allocation13 + $0x5e8] sm:$0xff] %v6498
    %6891 = vst [vmem:[#allocation13 + $0x5f0] sm:$0xff] %v6499
    %6892 = vst.msk [vmem:[#allocation13 + $0x5f8] sm:$0xff] %vm1471, %v6500
    %6893 = vst [vmem:[#allocation13 + $0x600] sm:$0xff] %v6501
    %6894 = vst [vmem:[#allocation13 + $0x608] sm:$0xff] %v6502
    %6895 = vst [vmem:[#allocation13 + $0x610] sm:$0xff] %v6503
    %6896 = vst.msk [vmem:[#allocation13 + $0x618] sm:$0xff] %vm1471, %v6504
    %6897 = vst [vmem:[#allocation13 + $0x620] sm:$0xff] %v6505
    %6898 = vst [vmem:[#allocation13 + $0x628] sm:$0xff] %v6506
    %6899 = vst [vmem:[#allocation13 + $0x630] sm:$0xff] %v6507
    %6900 = vst.msk [vmem:[#allocation13 + $0x638] sm:$0xff] %vm1471, %v6508
    %6901 = vst [vmem:[#allocation13 + $0x640] sm:$0xff] %v6509
    %6902 = vst [vmem:[#allocation13 + $0x648] sm:$0xff] %v6510
    %6903 = vst [vmem:[#allocation13 + $0x650] sm:$0xff] %v6511
    %6904 = vst.msk [vmem:[#allocation13 + $0x658] sm:$0xff] %vm1471, %v6512
    %6905 = vst [vmem:[#allocation13 + $0x660] sm:$0xff] %v6513
    %6906 = vst [vmem:[#allocation13 + $0x668] sm:$0xff] %v6514
    %6907 = vst [vmem:[#allocation13 + $0x670] sm:$0xff] %v6515
    %6908 = vst.msk [vmem:[#allocation13 + $0x678] sm:$0xff] %vm1471, %v6516
    %6909 = vst [vmem:[#allocation13 + $0x680] sm:$0xff] %v6517
    %6910 = vst [vmem:[#allocation13 + $0x688] sm:$0xff] %v6518
    %6911 = vst [vmem:[#allocation13 + $0x690] sm:$0xff] %v6519
    %6912 = vst.msk [vmem:[#allocation13 + $0x698] sm:$0xff] %vm1471, %v6520
    %6913 = vst [vmem:[#allocation13 + $0x6a0] sm:$0xff] %v6521
    %6914 = vst [vmem:[#allocation13 + $0x6a8] sm:$0xff] %v6522
    %6915 = vst [vmem:[#allocation13 + $0x6b0] sm:$0xff] %v6523
    %6916 = vst.msk [vmem:[#allocation13 + $0x6b8] sm:$0xff] %vm1471, %v6524
    %6917 = vst [vmem:[#allocation13 + $0x6c0] sm:$0xff] %v6525
    %6918 = vst [vmem:[#allocation13 + $0x6c8] sm:$0xff] %v6526
    %6919 = vst [vmem:[#allocation13 + $0x6d0] sm:$0xff] %v6527
    %6920 = vst.msk [vmem:[#allocation13 + $0x6d8] sm:$0xff] %vm1471, %v6528
    %6921 = vst [vmem:[#allocation13 + $0x6e0] sm:$0xff] %v6529
    %6922 = vst [vmem:[#allocation13 + $0x6e8] sm:$0xff] %v6530
    %6923 = vst [vmem:[#allocation13 + $0x6f0] sm:$0xff] %v6531
    %6924 = vst.msk [vmem:[#allocation13 + $0x6f8] sm:$0xff] %vm1471, %v6532
    %6925 = vst [vmem:[#allocation13 + $0x700] sm:$0xff] %v6533
    %6926 = vst [vmem:[#allocation13 + $0x708] sm:$0xff] %v6534
    %6927 = vst [vmem:[#allocation13 + $0x710] sm:$0xff] %v6535
    %6928 = vst.msk [vmem:[#allocation13 + $0x718] sm:$0xff] %vm1471, %v6536
    %6929 = vst [vmem:[#allocation13 + $0x720] sm:$0xff] %v6537
    %6930 = vst [vmem:[#allocation13 + $0x728] sm:$0xff] %v6538
    %6931 = vst [vmem:[#allocation13 + $0x730] sm:$0xff] %v6539
    %6932 = vst.msk [vmem:[#allocation13 + $0x738] sm:$0xff] %vm1471, %v6540
    %6933 = vst [vmem:[#allocation13 + $0x740] sm:$0xff] %v6541
    %6934 = vst [vmem:[#allocation13 + $0x748] sm:$0xff] %v6542
    %6935 = vst [vmem:[#allocation13 + $0x750] sm:$0xff] %v6543
    %6936 = vst.msk [vmem:[#allocation13 + $0x758] sm:$0xff] %vm1471, %v6544
    %6937 = vst [vmem:[#allocation13 + $0x760] sm:$0xff] %v6545
    %6938 = vst [vmem:[#allocation13 + $0x768] sm:$0xff] %v6546
    %6939 = vst [vmem:[#allocation13 + $0x770] sm:$0xff] %v6547
    %6940 = vst.msk [vmem:[#allocation13 + $0x778] sm:$0xff] %vm1471, %v6548
    %6941 = vst [vmem:[#allocation13 + $0x780] sm:$0xff] %v6549
    %6942 = vst [vmem:[#allocation13 + $0x788] sm:$0xff] %v6550
    %6943 = vst [vmem:[#allocation13 + $0x790] sm:$0xff] %v6551
    %6944 = vst.msk [vmem:[#allocation13 + $0x798] sm:$0xff] %vm1471, %v6552
    %6945 = vst [vmem:[#allocation13 + $0x7a0] sm:$0xff] %v6553
    %6946 = vst [vmem:[#allocation13 + $0x7a8] sm:$0xff] %v6554
    %6947 = vst [vmem:[#allocation13 + $0x7b0] sm:$0xff] %v6555
    %6948 = vst.msk [vmem:[#allocation13 + $0x7b8] sm:$0xff] %vm1471, %v6556
    %6949 = vst [vmem:[#allocation13 + $0x7c0] sm:$0xff] %v6557
    %6950 = vst [vmem:[#allocation13 + $0x7c8] sm:$0xff] %v6558
    %6951 = vst [vmem:[#allocation13 + $0x7d0] sm:$0xff] %v6559
    %6952 = vst.msk [vmem:[#allocation13 + $0x7d8] sm:$0xff] %vm1471, %v6560
    %6953 = vst [vmem:[#allocation13 + $0x7e0] sm:$0xff] %v6561
    %6954 = vst [vmem:[#allocation13 + $0x7e8] sm:$0xff] %v6562
    %6955 = vst [vmem:[#allocation13 + $0x7f0] sm:$0xff] %v6563
    %6956 = vst.msk [vmem:[#allocation13 + $0x7f8] sm:$0xff] %vm1471, %v6564
    %6957 = vst [vmem:[#allocation13 + $0x800] sm:$0xff] %v6565
    %6958 = vst [vmem:[#allocation13 + $0x808] sm:$0xff] %v6566
    %6959 = vst [vmem:[#allocation13 + $0x810] sm:$0xff] %v6567
    %6960 = vst.msk [vmem:[#allocation13 + $0x818] sm:$0xff] %vm1471, %v6568
    %6961 = vst [vmem:[#allocation13 + $0x820] sm:$0xff] %v6569
    %6962 = vst [vmem:[#allocation13 + $0x828] sm:$0xff] %v6570
    %6963 = vst [vmem:[#allocation13 + $0x830] sm:$0xff] %v6571
    %6964 = vst.msk [vmem:[#allocation13 + $0x838] sm:$0xff] %vm1471, %v6572
    %6965 = vst [vmem:[#allocation13 + $0x840] sm:$0xff] %v6573
    %6966 = vst [vmem:[#allocation13 + $0x848] sm:$0xff] %v6574
    %6967 = vst [vmem:[#allocation13 + $0x850] sm:$0xff] %v6575
    %6968 = vst.msk [vmem:[#allocation13 + $0x858] sm:$0xff] %vm1471, %v6576
    %6969 = vst [vmem:[#allocation13 + $0x860] sm:$0xff] %v6577
    %6970 = vst [vmem:[#allocation13 + $0x868] sm:$0xff] %v6578
    %6971 = vst [vmem:[#allocation13 + $0x870] sm:$0xff] %v6579
    %6972 = vst.msk [vmem:[#allocation13 + $0x878] sm:$0xff] %vm1471, %v6580
    %6973 = vst [vmem:[#allocation13 + $0x880] sm:$0xff] %v6581
    %6974 = vst [vmem:[#allocation13 + $0x888] sm:$0xff] %v6582
    %6975 = vst [vmem:[#allocation13 + $0x890] sm:$0xff] %v6583
    %6976 = vst.msk [vmem:[#allocation13 + $0x898] sm:$0xff] %vm1471, %v6584
    %6977 = vst [vmem:[#allocation13 + $0x8a0] sm:$0xff] %v6585
    %6978 = vst [vmem:[#allocation13 + $0x8a8] sm:$0xff] %v6586
    %6979 = vst [vmem:[#allocation13 + $0x8b0] sm:$0xff] %v6587
    %6980 = vst.msk [vmem:[#allocation13 + $0x8b8] sm:$0xff] %vm1471, %v6588
    %6981 = vst [vmem:[#allocation13 + $0x8c0] sm:$0xff] %v6589
    %6982 = vst [vmem:[#allocation13 + $0x8c8] sm:$0xff] %v6590
    %6983 = vst [vmem:[#allocation13 + $0x8d0] sm:$0xff] %v6591
    %6984 = vst.msk [vmem:[#allocation13 + $0x8d8] sm:$0xff] %vm1471, %v6592
    %6985 = vst [vmem:[#allocation13 + $0x8e0] sm:$0xff] %v6593
    %6986 = vst [vmem:[#allocation13 + $0x8e8] sm:$0xff] %v6594
    %6987 = vst [vmem:[#allocation13 + $0x8f0] sm:$0xff] %v6595
    %6988 = vst.msk [vmem:[#allocation13 + $0x8f8] sm:$0xff] %vm1471, %v6596
    %6989 = vst [vmem:[#allocation13 + $0x900] sm:$0xff] %v6597
    %6990 = vst [vmem:[#allocation13 + $0x908] sm:$0xff] %v6598
    %6991 = vst [vmem:[#allocation13 + $0x910] sm:$0xff] %v6599
    %6992 = vst.msk [vmem:[#allocation13 + $0x918] sm:$0xff] %vm1471, %v6600
    %6993 = vst [vmem:[#allocation13 + $0x920] sm:$0xff] %v6601
    %6994 = vst [vmem:[#allocation13 + $0x928] sm:$0xff] %v6602
    %6995 = vst [vmem:[#allocation13 + $0x930] sm:$0xff] %v6603
    %6996 = vst.msk [vmem:[#allocation13 + $0x938] sm:$0xff] %vm1471, %v6604
    %6997 = vst [vmem:[#allocation13 + $0x940] sm:$0xff] %v6605
    %6998 = vst [vmem:[#allocation13 + $0x948] sm:$0xff] %v6606
    %6999 = vst [vmem:[#allocation13 + $0x950] sm:$0xff] %v6607
    %7000 = vst.msk [vmem:[#allocation13 + $0x958] sm:$0xff] %vm1471, %v6608
    %7001 = vst [vmem:[#allocation13 + $0x960] sm:$0xff] %v6609
    %7002 = vst [vmem:[#allocation13 + $0x968] sm:$0xff] %v6610
    %7003 = vst [vmem:[#allocation13 + $0x970] sm:$0xff] %v6611
    %7004 = vst.msk [vmem:[#allocation13 + $0x978] sm:$0xff] %vm1471, %v6612
    %7005 = vst [vmem:[#allocation13 + $0x980] sm:$0xff] %v6613
    %7006 = vst [vmem:[#allocation13 + $0x988] sm:$0xff] %v6614
    %7007 = vst [vmem:[#allocation13 + $0x990] sm:$0xff] %v6615
    %7008 = vst.msk [vmem:[#allocation13 + $0x998] sm:$0xff] %vm1471, %v6616
    %7009 = vst [vmem:[#allocation13 + $0x9a0] sm:$0xff] %v6617
    %7010 = vst [vmem:[#allocation13 + $0x9a8] sm:$0xff] %v6618
    %7011 = vst [vmem:[#allocation13 + $0x9b0] sm:$0xff] %v6619
    %7012 = vst.msk [vmem:[#allocation13 + $0x9b8] sm:$0xff] %vm1471, %v6620
    %7013 = vst [vmem:[#allocation13 + $0x9c0] sm:$0xff] %v6621
    %7014 = vst [vmem:[#allocation13 + $0x9c8] sm:$0xff] %v6622
    %7015 = vst [vmem:[#allocation13 + $0x9d0] sm:$0xff] %v6623
    %7016 = vst.msk [vmem:[#allocation13 + $0x9d8] sm:$0xff] %vm1471, %v6624
    %7017 = vst [vmem:[#allocation13 + $0x9e0] sm:$0xff] %v6625
    %7018 = vst [vmem:[#allocation13 + $0x9e8] sm:$0xff] %v6626
    %7019 = vst [vmem:[#allocation13 + $0x9f0] sm:$0xff] %v6627
    %7020 = vst.msk [vmem:[#allocation13 + $0x9f8] sm:$0xff] %vm1471, %v6628
    %7021 = vst [vmem:[#allocation13 + $0xa00] sm:$0xff] %v6629
    %7022 = vst [vmem:[#allocation13 + $0xa08] sm:$0xff] %v6630
    %7023 = vst [vmem:[#allocation13 + $0xa10] sm:$0xff] %v6631
    %7024 = vst.msk [vmem:[#allocation13 + $0xa18] sm:$0xff] %vm1471, %v6632
    %7025 = vst [vmem:[#allocation13 + $0xa20] sm:$0xff] %v6633
    %7026 = vst [vmem:[#allocation13 + $0xa28] sm:$0xff] %v6634
    %7027 = vst [vmem:[#allocation13 + $0xa30] sm:$0xff] %v6635
    %7028 = vst.msk [vmem:[#allocation13 + $0xa38] sm:$0xff] %vm1471, %v6636
    %7029 = vst [vmem:[#allocation13 + $0xa40] sm:$0xff] %v6637
    %7030 = vst [vmem:[#allocation13 + $0xa48] sm:$0xff] %v6638
    %7031 = vst [vmem:[#allocation13 + $0xa50] sm:$0xff] %v6639
    %7032 = vst.msk [vmem:[#allocation13 + $0xa58] sm:$0xff] %vm1471, %v6640
    %7033 = vst [vmem:[#allocation13 + $0xa60] sm:$0xff] %v6641
    %7034 = vst [vmem:[#allocation13 + $0xa68] sm:$0xff] %v6642
    %7035 = vst [vmem:[#allocation13 + $0xa70] sm:$0xff] %v6643
    %7036 = vst.msk [vmem:[#allocation13 + $0xa78] sm:$0xff] %vm1471, %v6644
    %7037 = vst [vmem:[#allocation13 + $0xa80] sm:$0xff] %v6645
    %7038 = vst [vmem:[#allocation13 + $0xa88] sm:$0xff] %v6646
    %7039 = vst [vmem:[#allocation13 + $0xa90] sm:$0xff] %v6647
    %7040 = vst.msk [vmem:[#allocation13 + $0xa98] sm:$0xff] %vm1471, %v6648
    %7041 = vst [vmem:[#allocation13 + $0xaa0] sm:$0xff] %v6649
    %7042 = vst [vmem:[#allocation13 + $0xaa8] sm:$0xff] %v6650
    %7043 = vst [vmem:[#allocation13 + $0xab0] sm:$0xff] %v6651
    %7044 = vst.msk [vmem:[#allocation13 + $0xab8] sm:$0xff] %vm1471, %v6652
    %7045 = vst [vmem:[#allocation13 + $0xac0] sm:$0xff] %v6653
    %7046 = vst [vmem:[#allocation13 + $0xac8] sm:$0xff] %v6654
    %7047 = vst [vmem:[#allocation13 + $0xad0] sm:$0xff] %v6655
    %7048 = vst.msk [vmem:[#allocation13 + $0xad8] sm:$0xff] %vm1471, %v6656
    %7049 = vst [vmem:[#allocation13 + $0xae0] sm:$0xff] %v6657
    %7050 = vst [vmem:[#allocation13 + $0xae8] sm:$0xff] %v6658
    %7051 = vst [vmem:[#allocation13 + $0xaf0] sm:$0xff] %v6659
    %7052 = vst.msk [vmem:[#allocation13 + $0xaf8] sm:$0xff] %vm1471, %v6660
    %7053 = vst [vmem:[#allocation13 + $0xb00] sm:$0xff] %v6661
    %7054 = vst [vmem:[#allocation13 + $0xb08] sm:$0xff] %v6662
    %7055 = vst [vmem:[#allocation13 + $0xb10] sm:$0xff] %v6663
    %7056 = vst.msk [vmem:[#allocation13 + $0xb18] sm:$0xff] %vm1471, %v6664
    %7057 = vst [vmem:[#allocation13 + $0xb20] sm:$0xff] %v6665
    %7058 = vst [vmem:[#allocation13 + $0xb28] sm:$0xff] %v6666
    %7059 = vst [vmem:[#allocation13 + $0xb30] sm:$0xff] %v6667
    %7060 = vst.msk [vmem:[#allocation13 + $0xb38] sm:$0xff] %vm1471, %v6668
    %7061 = vst [vmem:[#allocation13 + $0xb40] sm:$0xff] %v6669
    %7062 = vst [vmem:[#allocation13 + $0xb48] sm:$0xff] %v6670
    %7063 = vst [vmem:[#allocation13 + $0xb50] sm:$0xff] %v6671
    %7064 = vst.msk [vmem:[#allocation13 + $0xb58] sm:$0xff] %vm1471, %v6672
    %7065 = vst [vmem:[#allocation13 + $0xb60] sm:$0xff] %v6673
    %7066 = vst [vmem:[#allocation13 + $0xb68] sm:$0xff] %v6674
    %7067 = vst [vmem:[#allocation13 + $0xb70] sm:$0xff] %v6675
    %7068 = vst.msk [vmem:[#allocation13 + $0xb78] sm:$0xff] %vm1471, %v6676
    %7069 = vst [vmem:[#allocation13 + $0xb80] sm:$0xff] %v6677
    %7070 = vst [vmem:[#allocation13 + $0xb88] sm:$0xff] %v6678
    %7071 = vst [vmem:[#allocation13 + $0xb90] sm:$0xff] %v6679
    %7072 = vst.msk [vmem:[#allocation13 + $0xb98] sm:$0xff] %vm1471, %v6680
    %7073 = vst [vmem:[#allocation13 + $0xba0] sm:$0xff] %v6681
    %7074 = vst [vmem:[#allocation13 + $0xba8] sm:$0xff] %v6682
    %7075 = vst [vmem:[#allocation13 + $0xbb0] sm:$0xff] %v6683
    %7076 = vst.msk [vmem:[#allocation13 + $0xbb8] sm:$0xff] %vm1471, %v6684
    %7077 = vst [vmem:[#allocation13 + $0xbc0] sm:$0xff] %v6685
    %7078 = vst [vmem:[#allocation13 + $0xbc8] sm:$0xff] %v6686
    %7079 = vst [vmem:[#allocation13 + $0xbd0] sm:$0xff] %v6687
    %7080 = vst.msk [vmem:[#allocation13 + $0xbd8] sm:$0xff] %vm1471, %v6688
    %7081 = vst [vmem:[#allocation13 + $0xbe0] sm:$0xff] %v6689
    %7082 = vst [vmem:[#allocation13 + $0xbe8] sm:$0xff] %v6690
    %7083 = vst [vmem:[#allocation13 + $0xbf0] sm:$0xff] %v6691
    %7084 = vst.msk [vmem:[#allocation13 + $0xbf8] sm:$0xff] %vm1471, %v6692
    %7085 = vst [vmem:[#allocation13 + $0xc00] sm:$0xff] %v6693
    %7086 = vst [vmem:[#allocation13 + $0xc08] sm:$0xff] %v6694
    %7087 = vst [vmem:[#allocation13 + $0xc10] sm:$0xff] %v6695
    %7088 = vst.msk [vmem:[#allocation13 + $0xc18] sm:$0xff] %vm1471, %v6696
    %7089 = vst [vmem:[#allocation13 + $0xc20] sm:$0xff] %v6697
    %7090 = vst [vmem:[#allocation13 + $0xc28] sm:$0xff] %v6698
    %7091 = vst [vmem:[#allocation13 + $0xc30] sm:$0xff] %v6699
    %7092 = vst.msk [vmem:[#allocation13 + $0xc38] sm:$0xff] %vm1471, %v6700
    // Predicated region
    $region54: #{tpu_custom_call.1} parent=1 // pred_check
      _
    $region55: #{tpu_custom_call.1} parent=1 // pred_check_branch
      %7094 = sbr.rel (0) target = $region57
    $region56: #{tpu_custom_call.1} parent=1 // pred_region
      %s7096 = ssub.s32 50176, 50176
      %7097 = vsyncadd [#allocation4], %s7096
      %s7098 = sshll.u32 [#allocation13], 4
      %s7099 = int_to_ptr.vmem [resolvable:$true] %s7098
      %7104 = dma.vmem_to_hbm [thread:$0]  %s7099, 50176, %s7, [#allocation4], 512, 512, 32
    $region57: #{tpu_custom_call.1} parent=1 // pred_fallthru
      _
    // Predicated region
    $region58: #{tpu_custom_call.1} parent=1 // pred_check
      _
    $region59: #{tpu_custom_call.1} parent=1 // pred_check_branch
      %7106 = sbr.rel (0) target = $region61
    $region60: #{tpu_custom_call.1} parent=1 // pred_region
      %7107 = dma.done [#allocation4], 50176
    $region61: #{tpu_custom_call.1} parent=1 // pred_fallthru
      _
    %7108 = vsyncpa [#allocation3], 1
    %7109 = vsyncpa [#allocation6], 1
    %7110 = vsyncpa [#allocation9], 1
    %7111 = vsyncpa [#allocation12], 1
    %7112 = vsyncpa [#allocation4], 1

</llo_original>
